<compile_context>
chip_gen: v6e
topology: v6e:2x2x1
jax: 0.10.0
libtpu: 0.0.40
codegen_flags: <defaults>
</compile_context>

<pallas_src>
import functools

import jax
import jax.numpy as jnp
import numpy as np
from jax.experimental import pallas as pl
from jax.experimental.pallas import tpu as pltpu

_EPS = 1e-5
_SQRT_2_OVER_PI = 0.7978845608028654


def _gelu_tanh(x):
    return 0.5 * x * (1.0 + jnp.tanh(_SQRT_2_OVER_PI * (x + 0.044715 * x * x * x)))


def _layernorm(x, g, b):
    mu = jnp.mean(x, axis=-1, keepdims=True)
    xc = x - mu
    var = jnp.mean(xc * xc, axis=-1, keepdims=True)
    return xc * jax.lax.rsqrt(var + _EPS) * g + b


# ---------------------------------------------------------------------------
# Fused kernel: LN + QKV + both cross-attention directions + out-proj
#               + coefficient residual + block LN + MLP + coefficient residual
# One grid step == one batch element (both modalities).
# ---------------------------------------------------------------------------
def _fused_block_kernel(rgb_ref, ir_ref, attg_ref, attb_ref, wqkv_ref, bqkv_ref,
                        wo_ref, bo_ref, blkg_ref, blkb_ref, w1_ref, b1_ref,
                        w2_ref, b2_ref, coef_ref, rgb_out_ref, ir_out_ref,
                        *, h, dk, scale, mm_dtype):
    nx = rgb_ref.shape[1]
    d = h * dk

    def dot(a, b):  # MXU matmul, f32 accumulation, operands in mm_dtype
        return jnp.dot(a.astype(mm_dtype), b.astype(mm_dtype),
                       preferred_element_type=jnp.float32)

    def dot_nt(a, b):  # a @ b.T without materializing a transpose
        return jax.lax.dot_general(a.astype(mm_dtype), b.astype(mm_dtype),
                                   (((1,), (1,)), ((), ())),
                                   preferred_element_type=jnp.float32)

    # Modality 0 = vis/rgb, 1 = ir.
    x = (rgb_ref[0].astype(jnp.float32), ir_ref[0].astype(jnp.float32))      # (nx, d)

    # Attention-input LayerNorms (LN1 -> vis, LN2 -> ir). Vector math stays f32.
    ln_att = tuple(_layernorm(x[m], attg_ref[m], attb_ref[m]) for m in range(2))

    # Per-head weight block index in the host-flattened (2*3*h, d, dk) layout.
    def qkv_idx(mod, proj, head):
        return (mod * 3 + proj) * h + head

    # Both cross-attention directions; stream m receives queries from modality 1-m,
    # keys/values from modality m, projected by out_proj of modality m.
    att_out = []
    for m in range(2):
        ln_q, ln_kv = ln_att[1 - m], ln_att[m]
        acc = jnp.zeros((nx, d), jnp.float32)
        for head in range(h):
            q = dot(ln_q, wqkv_ref[qkv_idx(1 - m, 0, head)]) + bqkv_ref[qkv_idx(1 - m, 0, head)]
            k = dot(ln_kv, wqkv_ref[qkv_idx(m, 1, head)]) + bqkv_ref[qkv_idx(m, 1, head)]
            v = dot(ln_kv, wqkv_ref[qkv_idx(m, 2, head)]) + bqkv_ref[qkv_idx(m, 2, head)]
            s = dot_nt(q, k) * scale                                          # (nx, nx)
            s = s - jnp.max(s, axis=-1, keepdims=True)
            p = jnp.exp(s)
            p = p * pl.reciprocal(jnp.sum(p, axis=-1, keepdims=True), approx=True)
            hv = dot(p, v)                                                    # (nx, dk)
            # head-merge folded into a per-head (dk, d) slice of the output projection
            acc = acc + dot(hv, wo_ref[m * h + head])                         # (nx, d)
        att_out.append(acc + bo_ref[m])

    # Learnable-coefficient residual + shared block LN + per-modality MLP (GELU) + residual.
    out_refs = (rgb_out_ref, ir_out_ref)
    for m in range(2):
        c_in, c_att = coef_ref[4 * m + 0], coef_ref[4 * m + 1]
        c_res, c_mlp = coef_ref[4 * m + 2], coef_ref[4 * m + 3]
        att = c_in * x[m] + c_att * att_out[m]
        ln = _layernorm(att, blkg_ref[...], blkb_ref[...])
        hid = dot(ln, w1_ref[m]) + b1_ref[m]
        hid = _gelu_tanh(hid)
        mlp = dot(hid, w2_ref[m]) + b2_ref[m]
        out_refs[m][0] = (c_res * att + c_mlp * mlp).astype(out_refs[m].dtype)


# ---------------------------------------------------------------------------
# Wrapper: host-side parameter packing + single pallas_call per loop iteration
# ---------------------------------------------------------------------------
def cross_transformer_block(rgb, ir, params, *, h, loops=1, mm_dtype=jnp.float32):
    bs, nx, d = rgb.shape
    assert ir.shape == (bs, nx, d) and d % h == 0
    dk = d // h
    dh = params["w1_vis"].shape[1]
    scale = 1.0 / float(np.sqrt(dk))

    # ---- host-side parameter packing (pure layout, done once outside the kernel) ----
    def split_qkv_w(w):   # (d, 3d) -> (3, h, d, dk) : per-projection, per-head blocks
        return jnp.transpose(w.reshape(d, 3, h, dk), (1, 2, 0, 3))

    def split_qkv_b(b):   # (3d,) -> (3, h, 1, dk)
        return b.reshape(3, h, 1, dk)

    att_g = jnp.stack([params["att_ln1_g"], params["att_ln2_g"]]).reshape(2, 1, d)
    att_b = jnp.stack([params["att_ln1_b"], params["att_ln2_b"]]).reshape(2, 1, d)
    wqkv = jnp.stack([split_qkv_w(params["w_qkv_vis"]),
                      split_qkv_w(params["w_qkv_ir"])]).reshape(2 * 3 * h, d, dk).astype(mm_dtype)
    bqkv = jnp.stack([split_qkv_b(params["b_qkv_vis"]),
                      split_qkv_b(params["b_qkv_ir"])]).reshape(2 * 3 * h, 1, dk).astype(jnp.float32)
    wo = jnp.stack([params["wo_vis"].reshape(h, dk, d),
                    params["wo_ir"].reshape(h, dk, d)]).reshape(2 * h, dk, d).astype(mm_dtype)
    bo = jnp.stack([params["bo_vis"], params["bo_ir"]]).reshape(2, 1, d).astype(jnp.float32)
    blk_g = params["blk_ln2_g"].reshape(1, d)
    blk_b = params["blk_ln2_b"].reshape(1, d)
    w1 = jnp.stack([params["w1_vis"], params["w1_ir"]]).astype(mm_dtype)              # (2, d, dh)
    b1 = jnp.stack([params["b1_vis"], params["b1_ir"]]).reshape(2, 1, dh).astype(jnp.float32)
    w2 = jnp.stack([params["w2_vis"], params["w2_ir"]]).astype(mm_dtype)              # (2, dh, d)
    b2 = jnp.stack([params["b2_vis"], params["b2_ir"]]).reshape(2, 1, d).astype(jnp.float32)
    coefs = jnp.concatenate([params["coef_vis"], params["coef_ir"]]).astype(jnp.float32)  # (8,)

    kern = functools.partial(_fused_block_kernel, h=h, dk=dk, scale=scale, mm_dtype=mm_dtype)

    grid_spec = pltpu.PrefetchScalarGridSpec(
        num_scalar_prefetch=0,
        grid=(bs,),                                                   # v7x: 2 parallel steps -> 2 TCs
        in_specs=[
            pl.BlockSpec((1, nx, d), lambda b: (b, 0, 0)),            # rgb batch tile
            pl.BlockSpec((1, nx, d), lambda b: (b, 0, 0)),            # ir  batch tile
            pl.BlockSpec((2, 1, d), lambda b: (0, 0, 0)),             # attention LN gammas (resident)
            pl.BlockSpec((2, 1, d), lambda b: (0, 0, 0)),             # attention LN betas
            pl.BlockSpec((2 * 3 * h, d, dk), lambda b: (0, 0, 0)),    # per-head QKV weights
            pl.BlockSpec((2 * 3 * h, 1, dk), lambda b: (0, 0, 0)),    # per-head QKV biases
            pl.BlockSpec((2 * h, dk, d), lambda b: (0, 0, 0)),        # per-head out-proj weights
            pl.BlockSpec((2, 1, d), lambda b: (0, 0, 0)),             # out-proj biases
            pl.BlockSpec((1, d), lambda b: (0, 0)),                   # block LN gamma (shared)
            pl.BlockSpec((1, d), lambda b: (0, 0)),                   # block LN beta
            pl.BlockSpec((2, d, dh), lambda b: (0, 0, 0)),            # MLP W1 (vis, ir)
            pl.BlockSpec((2, 1, dh), lambda b: (0, 0, 0)),            # MLP b1
            pl.BlockSpec((2, dh, d), lambda b: (0, 0, 0)),            # MLP W2
            pl.BlockSpec((2, 1, d), lambda b: (0, 0, 0)),             # MLP b2
            pl.BlockSpec(memory_space=pltpu.MemorySpace.SMEM),        # 8 learnable coefficients
        ],
        out_specs=(
            pl.BlockSpec((1, nx, d), lambda b: (b, 0, 0)),
            pl.BlockSpec((1, nx, d), lambda b: (b, 0, 0)),
        ),
    )

    fused = pl.pallas_call(
        kern,
        out_shape=(jax.ShapeDtypeStruct((bs, nx, d), rgb.dtype),
                   jax.ShapeDtypeStruct((bs, nx, d), ir.dtype)),
        grid_spec=grid_spec,
        compiler_params=pltpu.CompilerParams(dimension_semantics=("parallel",)),
    )

    for _ in range(loops):
        rgb, ir = fused(rgb, ir, att_g, att_b, wqkv, bqkv, wo, bo,
                        blk_g, blk_b, w1, b1, w2, b2, coefs)
    return rgb, ir


# ---------------------------------------------------------------------------
# Pure-JAX reference (mirrors the PyTorch forward, inference mode)
# ---------------------------------------------------------------------------
def _reference(rgb, ir, p, *, h, loops=1):
    d = rgb.shape[-1]
    dk = d // h

    def ln(x, g, b):
        mu = jnp.mean(x, axis=-1, keepdims=True)
        var = jnp.mean((x - mu) ** 2, axis=-1, keepdims=True)
        return (x - mu) / jnp.sqrt(var + _EPS) * g + b

    def split_heads(x):
        bs, nx, _ = x.shape
        return jnp.transpose(x.reshape(bs, nx, h, dk), (0, 2, 1, 3))

    def merge_heads(x):
        bs, hh, nx, dd = x.shape
        return jnp.transpose(x, (0, 2, 1, 3)).reshape(bs, nx, hh * dd)

    def mlp(x, w1, b1, w2, b2):
        return _gelu_tanh(x @ w1 + b1) @ w2 + b2

    scale = 1.0 / np.sqrt(dk)
    for _ in range(loops):
        rgb_ln = ln(rgb, p["att_ln1_g"], p["att_ln1_b"])
        ir_ln = ln(ir, p["att_ln2_g"], p["att_ln2_b"])
        qv, kv, vv = jnp.split(rgb_ln @ p["w_qkv_vis"] + p["b_qkv_vis"], 3, axis=-1)
        qi, ki, vi = jnp.split(ir_ln @ p["w_qkv_ir"] + p["b_qkv_ir"], 3, axis=-1)
        qv, kv, vv = map(split_heads, (qv, kv, vv))
        qi, ki, vi = map(split_heads, (qi, ki, vi))
        att_vis = jax.nn.softmax(jnp.einsum("bhqd,bhkd->bhqk", qi, kv) * scale, axis=-1)
        att_ir = jax.nn.softmax(jnp.einsum("bhqd,bhkd->bhqk", qv, ki) * scale, axis=-1)
        out_vis = merge_heads(jnp.einsum("bhqk,bhkd->bhqd", att_vis, vv)) @ p["wo_vis"] + p["bo_vis"]
        out_ir = merge_heads(jnp.einsum("bhqk,bhkd->bhqd", att_ir, vi)) @ p["wo_ir"] + p["bo_ir"]
        cv, ci = p["coef_vis"], p["coef_ir"]
        rgb_att = cv[0] * rgb + cv[1] * out_vis
        ir_att = ci[0] * ir + ci[1] * out_ir
        rgb = cv[2] * rgb_att + cv[3] * mlp(ln(rgb_att, p["blk_ln2_g"], p["blk_ln2_b"]),
                                            p["w1_vis"], p["b1_vis"], p["w2_vis"], p["b2_vis"])
        ir = ci[2] * ir_att + ci[3] * mlp(ln(ir_att, p["blk_ln2_g"], p["blk_ln2_b"]),
                                          p["w1_ir"], p["b1_ir"], p["w2_ir"], p["b2_ir"])
    return rgb, ir


if __name__ == "__main__":
    # Small shapes consistent with the module: bs=2, nx=64 (8x8 feature map), d_model=32,
    # h=4 heads, block_exp=4, loops_num=1.
    bs, nx, d_model, heads, block_exp, loops = 2, 64, 32, 4, 4, 1
    dh = block_exp * d_model

    key = jax.random.PRNGKey(0)
    keys = iter(jax.random.split(key, 40))

    def nrm(shape, s):
        return s * jax.random.normal(next(keys), shape, dtype=jnp.float32)

    rgb = jax.random.normal(next(keys), (bs, nx, d_model), dtype=jnp.float32)
    ir = jax.random.normal(next(keys), (bs, nx, d_model), dtype=jnp.float32)

    params = {
        # CrossAttention LN1 (vis) / LN2 (ir)
        "att_ln1_g": 1.0 + nrm((d_model,), 0.1), "att_ln1_b": nrm((d_model,), 0.05),
        "att_ln2_g": 1.0 + nrm((d_model,), 0.1), "att_ln2_b": nrm((d_model,), 0.05),
        # fused QKV projections, (d, 3d) = concat([Wq^T, Wk^T, Wv^T], axis=1)
        "w_qkv_vis": nrm((d_model, 3 * d_model), 0.05), "b_qkv_vis": nrm((3 * d_model,), 0.02),
        "w_qkv_ir": nrm((d_model, 3 * d_model), 0.05), "b_qkv_ir": nrm((3 * d_model,), 0.02),
        # output projections
        "wo_vis": nrm((d_model, d_model), 0.05), "bo_vis": nrm((d_model,), 0.02),
        "wo_ir": nrm((d_model, d_model), 0.05), "bo_ir": nrm((d_model,), 0.02),
        # block LN2 (shared by both MLP branches, as in the PyTorch code)
        "blk_ln2_g": 1.0 + nrm((d_model,), 0.1), "blk_ln2_b": nrm((d_model,), 0.05),
        # MLPs
        "w1_vis": nrm((d_model, dh), 0.05), "b1_vis": nrm((dh,), 0.02),
        "w2_vis": nrm((dh, d_model), 0.05), "b2_vis": nrm((d_model,), 0.02),
        "w1_ir": nrm((d_model, dh), 0.05), "b1_ir": nrm((dh,), 0.02),
        "w2_ir": nrm((dh, d_model), 0.05), "b2_ir": nrm((d_model,), 0.02),
        # learnable coefficients: [c1,c2,c5,c6] for vis, [c3,c4,c7,c8] for ir
        "coef_vis": 1.0 + nrm((4,), 0.1),
        "coef_ir": 1.0 + nrm((4,), 0.1),
    }

    rgb_ref, ir_ref = _reference(rgb, ir, params, h=heads, loops=loops)

    # f32 MXU operand path (tight tolerance against the f32 reference).
    fwd = jax.jit(functools.partial(cross_transformer_block, h=heads, loops=loops))
    rgb_out, ir_out = fwd(rgb, ir, params)
    rgb_out = jax.block_until_ready(rgb_out)
    ir_out = jax.block_until_ready(ir_out)
    np.testing.assert_allclose(np.asarray(rgb_out), np.asarray(rgb_ref), rtol=1e-4, atol=1e-4)
    np.testing.assert_allclose(np.asarray(ir_out), np.asarray(ir_ref), rtol=1e-4, atol=1e-4)

    # bf16 MXU operand path (review item): f32 accumulation, looser tolerance.
    fwd_bf16 = jax.jit(functools.partial(cross_transformer_block, h=heads, loops=loops,
                                         mm_dtype=jnp.bfloat16))
    rgb_bf, ir_bf = fwd_bf16(rgb, ir, params)
    rgb_bf = jax.block_until_ready(rgb_bf)
    ir_bf = jax.block_until_ready(ir_bf)
    np.testing.assert_allclose(np.asarray(rgb_bf), np.asarray(rgb_ref), rtol=2e-2, atol=2e-2)
    np.testing.assert_allclose(np.asarray(ir_bf), np.asarray(ir_ref), rtol=2e-2, atol=2e-2)

    assert rgb_out.shape == (bs, nx, d_model) and ir_out.shape == (bs, nx, d_model)
    print("KERNEL_OK")
</pallas_src>

<mosaic_0001>
module attributes {stable_mosaic.version = 11 : i64} {
  func.func @_fused_block_kernel(%arg0: i32, %arg1: memref<1x64x32xf32, #tpu.memory_space<vmem>>, %arg2: memref<1x64x32xf32, #tpu.memory_space<vmem>>, %arg3: memref<2x1x32xf32, #tpu.memory_space<vmem>>, %arg4: memref<2x1x32xf32, #tpu.memory_space<vmem>>, %arg5: memref<24x32x8xf32, #tpu.memory_space<vmem>>, %arg6: memref<24x1x8xf32, #tpu.memory_space<vmem>>, %arg7: memref<8x8x32xf32, #tpu.memory_space<vmem>>, %arg8: memref<2x1x32xf32, #tpu.memory_space<vmem>>, %arg9: memref<1x32xf32, #tpu.memory_space<vmem>>, %arg10: memref<1x32xf32, #tpu.memory_space<vmem>>, %arg11: memref<2x32x128xf32, #tpu.memory_space<vmem>>, %arg12: memref<2x1x128xf32, #tpu.memory_space<vmem>>, %arg13: memref<2x128x32xf32, #tpu.memory_space<vmem>>, %arg14: memref<2x1x32xf32, #tpu.memory_space<vmem>>, %arg15: memref<8xf32, #tpu.memory_space<smem>>, %arg16: memref<1x64x32xf32, #tpu.memory_space<vmem>>, %arg17: memref<1x64x32xf32, #tpu.memory_space<vmem>>) attributes {dimension_semantics = [#tpu.dimension_semantics<parallel>], iteration_bounds = array<i64: 2>, scalar_prefetch = 0 : i64, scratch_operands = 0 : i64, tpu.core_type = #tpu.core_type<tc>, window_params = [{transform_indices = @transform_0, window_bounds = array<i64: 1, 64, 32>}, {transform_indices = @transform_1, window_bounds = array<i64: 1, 64, 32>}, {pipeline_mode = #tpu.pipeline_mode<synchronous>, transform_indices = @transform_2, window_bounds = array<i64: 2, 1, 32>}, {pipeline_mode = #tpu.pipeline_mode<synchronous>, transform_indices = @transform_3, window_bounds = array<i64: 2, 1, 32>}, {pipeline_mode = #tpu.pipeline_mode<synchronous>, transform_indices = @transform_4, window_bounds = array<i64: 24, 32, 8>}, {pipeline_mode = #tpu.pipeline_mode<synchronous>, transform_indices = @transform_5, window_bounds = array<i64: 24, 1, 8>}, {pipeline_mode = #tpu.pipeline_mode<synchronous>, transform_indices = @transform_6, window_bounds = array<i64: 8, 8, 32>}, {pipeline_mode = #tpu.pipeline_mode<synchronous>, transform_indices = @transform_7, window_bounds = array<i64: 2, 1, 32>}, {pipeline_mode = #tpu.pipeline_mode<synchronous>, transform_indices = @transform_8, window_bounds = array<i64: 1, 32>}, {pipeline_mode = #tpu.pipeline_mode<synchronous>, transform_indices = @transform_9, window_bounds = array<i64: 1, 32>}, {pipeline_mode = #tpu.pipeline_mode<synchronous>, transform_indices = @transform_10, window_bounds = array<i64: 2, 32, 128>}, {pipeline_mode = #tpu.pipeline_mode<synchronous>, transform_indices = @transform_11, window_bounds = array<i64: 2, 1, 128>}, {pipeline_mode = #tpu.pipeline_mode<synchronous>, transform_indices = @transform_12, window_bounds = array<i64: 2, 128, 32>}, {pipeline_mode = #tpu.pipeline_mode<synchronous>, transform_indices = @transform_13, window_bounds = array<i64: 2, 1, 32>}, {transform_indices = @transform_14, window_bounds = array<i64: 8>}, {transform_indices = @transform_15, window_bounds = array<i64: 1, 64, 32>}, {transform_indices = @transform_16, window_bounds = array<i64: 1, 64, 32>}]} {
    %c0 = arith.constant 0 : index
    %c0_0 = arith.constant 0 : index
    %c0_1 = arith.constant 0 : index
    %0 = vector.load %arg1[%c0, %c0_0, %c0_1] : memref<1x64x32xf32, #tpu.memory_space<vmem>>, vector<1x64x32xf32>
    %1 = vector.shape_cast %0 : vector<1x64x32xf32> to vector<64x32xf32>
    %c0_2 = arith.constant 0 : index
    %c0_3 = arith.constant 0 : index
    %c0_4 = arith.constant 0 : index
    %2 = vector.load %arg2[%c0_2, %c0_3, %c0_4] : memref<1x64x32xf32, #tpu.memory_space<vmem>>, vector<1x64x32xf32>
    %3 = vector.shape_cast %2 : vector<1x64x32xf32> to vector<64x32xf32>
    %c0_5 = arith.constant 0 : index
    %c0_6 = arith.constant 0 : index
    %c0_7 = arith.constant 0 : index
    %4 = vector.load %arg3[%c0_5, %c0_6, %c0_7] : memref<2x1x32xf32, #tpu.memory_space<vmem>>, vector<1x1x32xf32>
    %5 = vector.shape_cast %4 : vector<1x1x32xf32> to vector<1x32xf32>
    %c0_8 = arith.constant 0 : index
    %c0_9 = arith.constant 0 : index
    %c0_10 = arith.constant 0 : index
    %6 = vector.load %arg4[%c0_8, %c0_9, %c0_10] : memref<2x1x32xf32, #tpu.memory_space<vmem>>, vector<1x1x32xf32>
    %7 = vector.shape_cast %6 : vector<1x1x32xf32> to vector<1x32xf32>
    %cst = arith.constant dense<0.000000e+00> : vector<64xf32>
    %8 = vector.multi_reduction <add>, %1, %cst [1] : vector<64x32xf32> to vector<64xf32>
    %9 = vector.shape_cast %8 : vector<64xf32> to vector<64x1xf32>
    %cst_11 = arith.constant 3.200000e+01 : f32
    %10 = vector.broadcast %cst_11 : f32 to vector<64x1xf32>
    %11 = arith.divf %9, %10 : vector<64x1xf32>
    %12 = vector.broadcast %11 : vector<64x1xf32> to vector<64x32xf32>
    %13 = arith.subf %1, %12 : vector<64x32xf32>
    %14 = arith.mulf %13, %13 : vector<64x32xf32>
    %cst_12 = arith.constant dense<0.000000e+00> : vector<64xf32>
    %15 = vector.multi_reduction <add>, %14, %cst_12 [1] : vector<64x32xf32> to vector<64xf32>
    %16 = vector.shape_cast %15 : vector<64xf32> to vector<64x1xf32>
    %cst_13 = arith.constant 3.200000e+01 : f32
    %17 = vector.broadcast %cst_13 : f32 to vector<64x1xf32>
    %18 = arith.divf %16, %17 : vector<64x1xf32>
    %cst_14 = arith.constant 9.99999974E-6 : f32
    %19 = vector.broadcast %cst_14 : f32 to vector<64x1xf32>
    %20 = arith.addf %18, %19 : vector<64x1xf32>
    %21 = math.rsqrt %20 : vector<64x1xf32>
    %22 = vector.broadcast %21 : vector<64x1xf32> to vector<64x32xf32>
    %23 = arith.mulf %13, %22 : vector<64x32xf32>
    %24 = vector.broadcast %5 : vector<1x32xf32> to vector<64x32xf32>
    %25 = arith.mulf %23, %24 : vector<64x32xf32>
    %26 = vector.broadcast %7 : vector<1x32xf32> to vector<64x32xf32>
    %27 = arith.addf %25, %26 : vector<64x32xf32>
    %c1 = arith.constant 1 : index
    %c0_15 = arith.constant 0 : index
    %c0_16 = arith.constant 0 : index
    %28 = vector.load %arg3[%c1, %c0_15, %c0_16] : memref<2x1x32xf32, #tpu.memory_space<vmem>>, vector<1x1x32xf32>
    %29 = vector.shape_cast %28 : vector<1x1x32xf32> to vector<1x32xf32>
    %c1_17 = arith.constant 1 : index
    %c0_18 = arith.constant 0 : index
    %c0_19 = arith.constant 0 : index
    %30 = vector.load %arg4[%c1_17, %c0_18, %c0_19] : memref<2x1x32xf32, #tpu.memory_space<vmem>>, vector<1x1x32xf32>
    %31 = vector.shape_cast %30 : vector<1x1x32xf32> to vector<1x32xf32>
    %cst_20 = arith.constant dense<0.000000e+00> : vector<64xf32>
    %32 = vector.multi_reduction <add>, %3, %cst_20 [1] : vector<64x32xf32> to vector<64xf32>
    %33 = vector.shape_cast %32 : vector<64xf32> to vector<64x1xf32>
    %cst_21 = arith.constant 3.200000e+01 : f32
    %34 = vector.broadcast %cst_21 : f32 to vector<64x1xf32>
    %35 = arith.divf %33, %34 : vector<64x1xf32>
    %36 = vector.broadcast %35 : vector<64x1xf32> to vector<64x32xf32>
    %37 = arith.subf %3, %36 : vector<64x32xf32>
    %38 = arith.mulf %37, %37 : vector<64x32xf32>
    %cst_22 = arith.constant dense<0.000000e+00> : vector<64xf32>
    %39 = vector.multi_reduction <add>, %38, %cst_22 [1] : vector<64x32xf32> to vector<64xf32>
    %40 = vector.shape_cast %39 : vector<64xf32> to vector<64x1xf32>
    %cst_23 = arith.constant 3.200000e+01 : f32
    %41 = vector.broadcast %cst_23 : f32 to vector<64x1xf32>
    %42 = arith.divf %40, %41 : vector<64x1xf32>
    %cst_24 = arith.constant 9.99999974E-6 : f32
    %43 = vector.broadcast %cst_24 : f32 to vector<64x1xf32>
    %44 = arith.addf %42, %43 : vector<64x1xf32>
    %45 = math.rsqrt %44 : vector<64x1xf32>
    %46 = vector.broadcast %45 : vector<64x1xf32> to vector<64x32xf32>
    %47 = arith.mulf %37, %46 : vector<64x32xf32>
    %48 = vector.broadcast %29 : vector<1x32xf32> to vector<64x32xf32>
    %49 = arith.mulf %47, %48 : vector<64x32xf32>
    %50 = vector.broadcast %31 : vector<1x32xf32> to vector<64x32xf32>
    %51 = arith.addf %49, %50 : vector<64x32xf32>
    %cst_25 = arith.constant 0.000000e+00 : f32
    %52 = vector.broadcast %cst_25 : f32 to vector<64x32xf32>
    %c12 = arith.constant 12 : index
    %c0_26 = arith.constant 0 : index
    %c0_27 = arith.constant 0 : index
    %53 = vector.load %arg5[%c12, %c0_26, %c0_27] : memref<24x32x8xf32, #tpu.memory_space<vmem>>, vector<1x32x8xf32>
    %54 = vector.shape_cast %53 : vector<1x32x8xf32> to vector<32x8xf32>
    %cst_28 = arith.constant dense<0.000000e+00> : vector<64x8xf32>
    %55 = tpu.matmul %51, %54, %cst_28 {dimension_numbers = #tpu.dot_dimension_numbers<[1], [0], [0], [1], [0, 0, 1, 1], [], []>} : vector<64x32xf32>, vector<32x8xf32>, vector<64x8xf32> -> vector<64x8xf32>
    %c12_29 = arith.constant 12 : index
    %c0_30 = arith.constant 0 : index
    %c0_31 = arith.constant 0 : index
    %56 = vector.load %arg6[%c12_29, %c0_30, %c0_31] : memref<24x1x8xf32, #tpu.memory_space<vmem>>, vector<1x1x8xf32>
    %57 = vector.shape_cast %56 : vector<1x1x8xf32> to vector<1x8xf32>
    %58 = vector.broadcast %57 : vector<1x8xf32> to vector<64x8xf32>
    %59 = arith.addf %55, %58 : vector<64x8xf32>
    %c4 = arith.constant 4 : index
    %c0_32 = arith.constant 0 : index
    %c0_33 = arith.constant 0 : index
    %60 = vector.load %arg5[%c4, %c0_32, %c0_33] : memref<24x32x8xf32, #tpu.memory_space<vmem>>, vector<1x32x8xf32>
    %61 = vector.shape_cast %60 : vector<1x32x8xf32> to vector<32x8xf32>
    %cst_34 = arith.constant dense<0.000000e+00> : vector<64x8xf32>
    %62 = tpu.matmul %27, %61, %cst_34 {dimension_numbers = #tpu.dot_dimension_numbers<[1], [0], [0], [1], [0, 0, 1, 1], [], []>} : vector<64x32xf32>, vector<32x8xf32>, vector<64x8xf32> -> vector<64x8xf32>
    %c4_35 = arith.constant 4 : index
    %c0_36 = arith.constant 0 : index
    %c0_37 = arith.constant 0 : index
    %63 = vector.load %arg6[%c4_35, %c0_36, %c0_37] : memref<24x1x8xf32, #tpu.memory_space<vmem>>, vector<1x1x8xf32>
    %64 = vector.shape_cast %63 : vector<1x1x8xf32> to vector<1x8xf32>
    %65 = vector.broadcast %64 : vector<1x8xf32> to vector<64x8xf32>
    %66 = arith.addf %62, %65 : vector<64x8xf32>
    %c8 = arith.constant 8 : index
    %c0_38 = arith.constant 0 : index
    %c0_39 = arith.constant 0 : index
    %67 = vector.load %arg5[%c8, %c0_38, %c0_39] : memref<24x32x8xf32, #tpu.memory_space<vmem>>, vector<1x32x8xf32>
    %68 = vector.shape_cast %67 : vector<1x32x8xf32> to vector<32x8xf32>
    %cst_40 = arith.constant dense<0.000000e+00> : vector<64x8xf32>
    %69 = tpu.matmul %27, %68, %cst_40 {dimension_numbers = #tpu.dot_dimension_numbers<[1], [0], [0], [1], [0, 0, 1, 1], [], []>} : vector<64x32xf32>, vector<32x8xf32>, vector<64x8xf32> -> vector<64x8xf32>
    %c8_41 = arith.constant 8 : index
    %c0_42 = arith.constant 0 : index
    %c0_43 = arith.constant 0 : index
    %70 = vector.load %arg6[%c8_41, %c0_42, %c0_43] : memref<24x1x8xf32, #tpu.memory_space<vmem>>, vector<1x1x8xf32>
    %71 = vector.shape_cast %70 : vector<1x1x8xf32> to vector<1x8xf32>
    %72 = vector.broadcast %71 : vector<1x8xf32> to vector<64x8xf32>
    %73 = arith.addf %69, %72 : vector<64x8xf32>
    %cst_44 = arith.constant dense<0.000000e+00> : vector<64x64xf32>
    %74 = tpu.matmul %59, %66, %cst_44 {dimension_numbers = #tpu.dot_dimension_numbers<[1], [1], [0], [0], [0, 0, 1, 0], [], []>} : vector<64x8xf32>, vector<64x8xf32>, vector<64x64xf32> -> vector<64x64xf32>
    %cst_45 = arith.constant 0.353553385 : f32
    %75 = vector.broadcast %cst_45 : f32 to vector<64x64xf32>
    %76 = arith.mulf %74, %75 : vector<64x64xf32>
    %cst_46 = arith.constant dense<0xFF800000> : vector<64xf32>
    %77 = vector.multi_reduction <maximumf>, %76, %cst_46 [1] : vector<64x64xf32> to vector<64xf32>
    %78 = vector.shape_cast %77 : vector<64xf32> to vector<64x1xf32>
    %79 = vector.broadcast %78 : vector<64x1xf32> to vector<64x64xf32>
    %80 = arith.subf %76, %79 : vector<64x64xf32>
    %81 = math.exp %80 : vector<64x64xf32>
    %cst_47 = arith.constant dense<0.000000e+00> : vector<64xf32>
    %82 = vector.multi_reduction <add>, %81, %cst_47 [1] : vector<64x64xf32> to vector<64xf32>
    %83 = vector.shape_cast %82 : vector<64xf32> to vector<64x1xf32>
    %84 = tpu.reciprocal %83 {approx = true} : vector<64x1xf32> -> vector<64x1xf32>
    %85 = vector.broadcast %84 : vector<64x1xf32> to vector<64x64xf32>
    %86 = arith.mulf %81, %85 : vector<64x64xf32>
    %cst_48 = arith.constant dense<0.000000e+00> : vector<64x8xf32>
    %87 = tpu.matmul %86, %73, %cst_48 {dimension_numbers = #tpu.dot_dimension_numbers<[1], [0], [0], [1], [0, 0, 1, 1], [], []>} : vector<64x64xf32>, vector<64x8xf32>, vector<64x8xf32> -> vector<64x8xf32>
    %c0_49 = arith.constant 0 : index
    %c0_50 = arith.constant 0 : index
    %c0_51 = arith.constant 0 : index
    %88 = vector.load %arg7[%c0_49, %c0_50, %c0_51] : memref<8x8x32xf32, #tpu.memory_space<vmem>>, vector<1x8x32xf32>
    %89 = vector.shape_cast %88 : vector<1x8x32xf32> to vector<8x32xf32>
    %cst_52 = arith.constant dense<0.000000e+00> : vector<64x32xf32>
    %90 = tpu.matmul %87, %89, %cst_52 {dimension_numbers = #tpu.dot_dimension_numbers<[1], [0], [0], [1], [0, 0, 1, 1], [], []>} : vector<64x8xf32>, vector<8x32xf32>, vector<64x32xf32> -> vector<64x32xf32>
    %91 = arith.addf %52, %90 : vector<64x32xf32>
    %c13 = arith.constant 13 : index
    %c0_53 = arith.constant 0 : index
    %c0_54 = arith.constant 0 : index
    %92 = vector.load %arg5[%c13, %c0_53, %c0_54] : memref<24x32x8xf32, #tpu.memory_space<vmem>>, vector<1x32x8xf32>
    %93 = vector.shape_cast %92 : vector<1x32x8xf32> to vector<32x8xf32>
    %cst_55 = arith.constant dense<0.000000e+00> : vector<64x8xf32>
    %94 = tpu.matmul %51, %93, %cst_55 {dimension_numbers = #tpu.dot_dimension_numbers<[1], [0], [0], [1], [0, 0, 1, 1], [], []>} : vector<64x32xf32>, vector<32x8xf32>, vector<64x8xf32> -> vector<64x8xf32>
    %c13_56 = arith.constant 13 : index
    %c0_57 = arith.constant 0 : index
    %c0_58 = arith.constant 0 : index
    %95 = vector.load %arg6[%c13_56, %c0_57, %c0_58] : memref<24x1x8xf32, #tpu.memory_space<vmem>>, vector<1x1x8xf32>
    %96 = vector.shape_cast %95 : vector<1x1x8xf32> to vector<1x8xf32>
    %97 = vector.broadcast %96 : vector<1x8xf32> to vector<64x8xf32>
    %98 = arith.addf %94, %97 : vector<64x8xf32>
    %c5 = arith.constant 5 : index
    %c0_59 = arith.constant 0 : index
    %c0_60 = arith.constant 0 : index
    %99 = vector.load %arg5[%c5, %c0_59, %c0_60] : memref<24x32x8xf32, #tpu.memory_space<vmem>>, vector<1x32x8xf32>
    %100 = vector.shape_cast %99 : vector<1x32x8xf32> to vector<32x8xf32>
    %cst_61 = arith.constant dense<0.000000e+00> : vector<64x8xf32>
    %101 = tpu.matmul %27, %100, %cst_61 {dimension_numbers = #tpu.dot_dimension_numbers<[1], [0], [0], [1], [0, 0, 1, 1], [], []>} : vector<64x32xf32>, vector<32x8xf32>, vector<64x8xf32> -> vector<64x8xf32>
    %c5_62 = arith.constant 5 : index
    %c0_63 = arith.constant 0 : index
    %c0_64 = arith.constant 0 : index
    %102 = vector.load %arg6[%c5_62, %c0_63, %c0_64] : memref<24x1x8xf32, #tpu.memory_space<vmem>>, vector<1x1x8xf32>
    %103 = vector.shape_cast %102 : vector<1x1x8xf32> to vector<1x8xf32>
    %104 = vector.broadcast %103 : vector<1x8xf32> to vector<64x8xf32>
    %105 = arith.addf %101, %104 : vector<64x8xf32>
    %c9 = arith.constant 9 : index
    %c0_65 = arith.constant 0 : index
    %c0_66 = arith.constant 0 : index
    %106 = vector.load %arg5[%c9, %c0_65, %c0_66] : memref<24x32x8xf32, #tpu.memory_space<vmem>>, vector<1x32x8xf32>
    %107 = vector.shape_cast %106 : vector<1x32x8xf32> to vector<32x8xf32>
    %cst_67 = arith.constant dense<0.000000e+00> : vector<64x8xf32>
    %108 = tpu.matmul %27, %107, %cst_67 {dimension_numbers = #tpu.dot_dimension_numbers<[1], [0], [0], [1], [0, 0, 1, 1], [], []>} : vector<64x32xf32>, vector<32x8xf32>, vector<64x8xf32> -> vector<64x8xf32>
    %c9_68 = arith.constant 9 : index
    %c0_69 = arith.constant 0 : index
    %c0_70 = arith.constant 0 : index
    %109 = vector.load %arg6[%c9_68, %c0_69, %c0_70] : memref<24x1x8xf32, #tpu.memory_space<vmem>>, vector<1x1x8xf32>
    %110 = vector.shape_cast %109 : vector<1x1x8xf32> to vector<1x8xf32>
    %111 = vector.broadcast %110 : vector<1x8xf32> to vector<64x8xf32>
    %112 = arith.addf %108, %111 : vector<64x8xf32>
    %cst_71 = arith.constant dense<0.000000e+00> : vector<64x64xf32>
    %113 = tpu.matmul %98, %105, %cst_71 {dimension_numbers = #tpu.dot_dimension_numbers<[1], [1], [0], [0], [0, 0, 1, 0], [], []>} : vector<64x8xf32>, vector<64x8xf32>, vector<64x64xf32> -> vector<64x64xf32>
    %cst_72 = arith.constant 0.353553385 : f32
    %114 = vector.broadcast %cst_72 : f32 to vector<64x64xf32>
    %115 = arith.mulf %113, %114 : vector<64x64xf32>
    %cst_73 = arith.constant dense<0xFF800000> : vector<64xf32>
    %116 = vector.multi_reduction <maximumf>, %115, %cst_73 [1] : vector<64x64xf32> to vector<64xf32>
    %117 = vector.shape_cast %116 : vector<64xf32> to vector<64x1xf32>
    %118 = vector.broadcast %117 : vector<64x1xf32> to vector<64x64xf32>
    %119 = arith.subf %115, %118 : vector<64x64xf32>
    %120 = math.exp %119 : vector<64x64xf32>
    %cst_74 = arith.constant dense<0.000000e+00> : vector<64xf32>
    %121 = vector.multi_reduction <add>, %120, %cst_74 [1] : vector<64x64xf32> to vector<64xf32>
    %122 = vector.shape_cast %121 : vector<64xf32> to vector<64x1xf32>
    %123 = tpu.reciprocal %122 {approx = true} : vector<64x1xf32> -> vector<64x1xf32>
    %124 = vector.broadcast %123 : vector<64x1xf32> to vector<64x64xf32>
    %125 = arith.mulf %120, %124 : vector<64x64xf32>
    %cst_75 = arith.constant dense<0.000000e+00> : vector<64x8xf32>
    %126 = tpu.matmul %125, %112, %cst_75 {dimension_numbers = #tpu.dot_dimension_numbers<[1], [0], [0], [1], [0, 0, 1, 1], [], []>} : vector<64x64xf32>, vector<64x8xf32>, vector<64x8xf32> -> vector<64x8xf32>
    %c1_76 = arith.constant 1 : index
    %c0_77 = arith.constant 0 : index
    %c0_78 = arith.constant 0 : index
    %127 = vector.load %arg7[%c1_76, %c0_77, %c0_78] : memref<8x8x32xf32, #tpu.memory_space<vmem>>, vector<1x8x32xf32>
    %128 = vector.shape_cast %127 : vector<1x8x32xf32> to vector<8x32xf32>
    %cst_79 = arith.constant dense<0.000000e+00> : vector<64x32xf32>
    %129 = tpu.matmul %126, %128, %cst_79 {dimension_numbers = #tpu.dot_dimension_numbers<[1], [0], [0], [1], [0, 0, 1, 1], [], []>} : vector<64x8xf32>, vector<8x32xf32>, vector<64x32xf32> -> vector<64x32xf32>
    %130 = arith.addf %91, %129 : vector<64x32xf32>
    %c14 = arith.constant 14 : index
    %c0_80 = arith.constant 0 : index
    %c0_81 = arith.constant 0 : index
    %131 = vector.load %arg5[%c14, %c0_80, %c0_81] : memref<24x32x8xf32, #tpu.memory_space<vmem>>, vector<1x32x8xf32>
    %132 = vector.shape_cast %131 : vector<1x32x8xf32> to vector<32x8xf32>
    %cst_82 = arith.constant dense<0.000000e+00> : vector<64x8xf32>
    %133 = tpu.matmul %51, %132, %cst_82 {dimension_numbers = #tpu.dot_dimension_numbers<[1], [0], [0], [1], [0, 0, 1, 1], [], []>} : vector<64x32xf32>, vector<32x8xf32>, vector<64x8xf32> -> vector<64x8xf32>
    %c14_83 = arith.constant 14 : index
    %c0_84 = arith.constant 0 : index
    %c0_85 = arith.constant 0 : index
    %134 = vector.load %arg6[%c14_83, %c0_84, %c0_85] : memref<24x1x8xf32, #tpu.memory_space<vmem>>, vector<1x1x8xf32>
    %135 = vector.shape_cast %134 : vector<1x1x8xf32> to vector<1x8xf32>
    %136 = vector.broadcast %135 : vector<1x8xf32> to vector<64x8xf32>
    %137 = arith.addf %133, %136 : vector<64x8xf32>
    %c6 = arith.constant 6 : index
    %c0_86 = arith.constant 0 : index
    %c0_87 = arith.constant 0 : index
    %138 = vector.load %arg5[%c6, %c0_86, %c0_87] : memref<24x32x8xf32, #tpu.memory_space<vmem>>, vector<1x32x8xf32>
    %139 = vector.shape_cast %138 : vector<1x32x8xf32> to vector<32x8xf32>
    %cst_88 = arith.constant dense<0.000000e+00> : vector<64x8xf32>
    %140 = tpu.matmul %27, %139, %cst_88 {dimension_numbers = #tpu.dot_dimension_numbers<[1], [0], [0], [1], [0, 0, 1, 1], [], []>} : vector<64x32xf32>, vector<32x8xf32>, vector<64x8xf32> -> vector<64x8xf32>
    %c6_89 = arith.constant 6 : index
    %c0_90 = arith.constant 0 : index
    %c0_91 = arith.constant 0 : index
    %141 = vector.load %arg6[%c6_89, %c0_90, %c0_91] : memref<24x1x8xf32, #tpu.memory_space<vmem>>, vector<1x1x8xf32>
    %142 = vector.shape_cast %141 : vector<1x1x8xf32> to vector<1x8xf32>
    %143 = vector.broadcast %142 : vector<1x8xf32> to vector<64x8xf32>
    %144 = arith.addf %140, %143 : vector<64x8xf32>
    %c10 = arith.constant 10 : index
    %c0_92 = arith.constant 0 : index
    %c0_93 = arith.constant 0 : index
    %145 = vector.load %arg5[%c10, %c0_92, %c0_93] : memref<24x32x8xf32, #tpu.memory_space<vmem>>, vector<1x32x8xf32>
    %146 = vector.shape_cast %145 : vector<1x32x8xf32> to vector<32x8xf32>
    %cst_94 = arith.constant dense<0.000000e+00> : vector<64x8xf32>
    %147 = tpu.matmul %27, %146, %cst_94 {dimension_numbers = #tpu.dot_dimension_numbers<[1], [0], [0], [1], [0, 0, 1, 1], [], []>} : vector<64x32xf32>, vector<32x8xf32>, vector<64x8xf32> -> vector<64x8xf32>
    %c10_95 = arith.constant 10 : index
    %c0_96 = arith.constant 0 : index
    %c0_97 = arith.constant 0 : index
    %148 = vector.load %arg6[%c10_95, %c0_96, %c0_97] : memref<24x1x8xf32, #tpu.memory_space<vmem>>, vector<1x1x8xf32>
    %149 = vector.shape_cast %148 : vector<1x1x8xf32> to vector<1x8xf32>
    %150 = vector.broadcast %149 : vector<1x8xf32> to vector<64x8xf32>
    %151 = arith.addf %147, %150 : vector<64x8xf32>
    %cst_98 = arith.constant dense<0.000000e+00> : vector<64x64xf32>
    %152 = tpu.matmul %137, %144, %cst_98 {dimension_numbers = #tpu.dot_dimension_numbers<[1], [1], [0], [0], [0, 0, 1, 0], [], []>} : vector<64x8xf32>, vector<64x8xf32>, vector<64x64xf32> -> vector<64x64xf32>
    %cst_99 = arith.constant 0.353553385 : f32
    %153 = vector.broadcast %cst_99 : f32 to vector<64x64xf32>
    %154 = arith.mulf %152, %153 : vector<64x64xf32>
    %cst_100 = arith.constant dense<0xFF800000> : vector<64xf32>
    %155 = vector.multi_reduction <maximumf>, %154, %cst_100 [1] : vector<64x64xf32> to vector<64xf32>
    %156 = vector.shape_cast %155 : vector<64xf32> to vector<64x1xf32>
    %157 = vector.broadcast %156 : vector<64x1xf32> to vector<64x64xf32>
    %158 = arith.subf %154, %157 : vector<64x64xf32>
    %159 = math.exp %158 : vector<64x64xf32>
    %cst_101 = arith.constant dense<0.000000e+00> : vector<64xf32>
    %160 = vector.multi_reduction <add>, %159, %cst_101 [1] : vector<64x64xf32> to vector<64xf32>
    %161 = vector.shape_cast %160 : vector<64xf32> to vector<64x1xf32>
    %162 = tpu.reciprocal %161 {approx = true} : vector<64x1xf32> -> vector<64x1xf32>
    %163 = vector.broadcast %162 : vector<64x1xf32> to vector<64x64xf32>
    %164 = arith.mulf %159, %163 : vector<64x64xf32>
    %cst_102 = arith.constant dense<0.000000e+00> : vector<64x8xf32>
    %165 = tpu.matmul %164, %151, %cst_102 {dimension_numbers = #tpu.dot_dimension_numbers<[1], [0], [0], [1], [0, 0, 1, 1], [], []>} : vector<64x64xf32>, vector<64x8xf32>, vector<64x8xf32> -> vector<64x8xf32>
    %c2 = arith.constant 2 : index
    %c0_103 = arith.constant 0 : index
    %c0_104 = arith.constant 0 : index
    %166 = vector.load %arg7[%c2, %c0_103, %c0_104] : memref<8x8x32xf32, #tpu.memory_space<vmem>>, vector<1x8x32xf32>
    %167 = vector.shape_cast %166 : vector<1x8x32xf32> to vector<8x32xf32>
    %cst_105 = arith.constant dense<0.000000e+00> : vector<64x32xf32>
    %168 = tpu.matmul %165, %167, %cst_105 {dimension_numbers = #tpu.dot_dimension_numbers<[1], [0], [0], [1], [0, 0, 1, 1], [], []>} : vector<64x8xf32>, vector<8x32xf32>, vector<64x32xf32> -> vector<64x32xf32>
    %169 = arith.addf %130, %168 : vector<64x32xf32>
    %c15 = arith.constant 15 : index
    %c0_106 = arith.constant 0 : index
    %c0_107 = arith.constant 0 : index
    %170 = vector.load %arg5[%c15, %c0_106, %c0_107] : memref<24x32x8xf32, #tpu.memory_space<vmem>>, vector<1x32x8xf32>
    %171 = vector.shape_cast %170 : vector<1x32x8xf32> to vector<32x8xf32>
    %cst_108 = arith.constant dense<0.000000e+00> : vector<64x8xf32>
    %172 = tpu.matmul %51, %171, %cst_108 {dimension_numbers = #tpu.dot_dimension_numbers<[1], [0], [0], [1], [0, 0, 1, 1], [], []>} : vector<64x32xf32>, vector<32x8xf32>, vector<64x8xf32> -> vector<64x8xf32>
    %c15_109 = arith.constant 15 : index
    %c0_110 = arith.constant 0 : index
    %c0_111 = arith.constant 0 : index
    %173 = vector.load %arg6[%c15_109, %c0_110, %c0_111] : memref<24x1x8xf32, #tpu.memory_space<vmem>>, vector<1x1x8xf32>
    %174 = vector.shape_cast %173 : vector<1x1x8xf32> to vector<1x8xf32>
    %175 = vector.broadcast %174 : vector<1x8xf32> to vector<64x8xf32>
    %176 = arith.addf %172, %175 : vector<64x8xf32>
    %c7 = arith.constant 7 : index
    %c0_112 = arith.constant 0 : index
    %c0_113 = arith.constant 0 : index
    %177 = vector.load %arg5[%c7, %c0_112, %c0_113] : memref<24x32x8xf32, #tpu.memory_space<vmem>>, vector<1x32x8xf32>
    %178 = vector.shape_cast %177 : vector<1x32x8xf32> to vector<32x8xf32>
    %cst_114 = arith.constant dense<0.000000e+00> : vector<64x8xf32>
    %179 = tpu.matmul %27, %178, %cst_114 {dimension_numbers = #tpu.dot_dimension_numbers<[1], [0], [0], [1], [0, 0, 1, 1], [], []>} : vector<64x32xf32>, vector<32x8xf32>, vector<64x8xf32> -> vector<64x8xf32>
    %c7_115 = arith.constant 7 : index
    %c0_116 = arith.constant 0 : index
    %c0_117 = arith.constant 0 : index
    %180 = vector.load %arg6[%c7_115, %c0_116, %c0_117] : memref<24x1x8xf32, #tpu.memory_space<vmem>>, vector<1x1x8xf32>
    %181 = vector.shape_cast %180 : vector<1x1x8xf32> to vector<1x8xf32>
    %182 = vector.broadcast %181 : vector<1x8xf32> to vector<64x8xf32>
    %183 = arith.addf %179, %182 : vector<64x8xf32>
    %c11 = arith.constant 11 : index
    %c0_118 = arith.constant 0 : index
    %c0_119 = arith.constant 0 : index
    %184 = vector.load %arg5[%c11, %c0_118, %c0_119] : memref<24x32x8xf32, #tpu.memory_space<vmem>>, vector<1x32x8xf32>
    %185 = vector.shape_cast %184 : vector<1x32x8xf32> to vector<32x8xf32>
    %cst_120 = arith.constant dense<0.000000e+00> : vector<64x8xf32>
    %186 = tpu.matmul %27, %185, %cst_120 {dimension_numbers = #tpu.dot_dimension_numbers<[1], [0], [0], [1], [0, 0, 1, 1], [], []>} : vector<64x32xf32>, vector<32x8xf32>, vector<64x8xf32> -> vector<64x8xf32>
    %c11_121 = arith.constant 11 : index
    %c0_122 = arith.constant 0 : index
    %c0_123 = arith.constant 0 : index
    %187 = vector.load %arg6[%c11_121, %c0_122, %c0_123] : memref<24x1x8xf32, #tpu.memory_space<vmem>>, vector<1x1x8xf32>
    %188 = vector.shape_cast %187 : vector<1x1x8xf32> to vector<1x8xf32>
    %189 = vector.broadcast %188 : vector<1x8xf32> to vector<64x8xf32>
    %190 = arith.addf %186, %189 : vector<64x8xf32>
    %cst_124 = arith.constant dense<0.000000e+00> : vector<64x64xf32>
    %191 = tpu.matmul %176, %183, %cst_124 {dimension_numbers = #tpu.dot_dimension_numbers<[1], [1], [0], [0], [0, 0, 1, 0], [], []>} : vector<64x8xf32>, vector<64x8xf32>, vector<64x64xf32> -> vector<64x64xf32>
    %cst_125 = arith.constant 0.353553385 : f32
    %192 = vector.broadcast %cst_125 : f32 to vector<64x64xf32>
    %193 = arith.mulf %191, %192 : vector<64x64xf32>
    %cst_126 = arith.constant dense<0xFF800000> : vector<64xf32>
    %194 = vector.multi_reduction <maximumf>, %193, %cst_126 [1] : vector<64x64xf32> to vector<64xf32>
    %195 = vector.shape_cast %194 : vector<64xf32> to vector<64x1xf32>
    %196 = vector.broadcast %195 : vector<64x1xf32> to vector<64x64xf32>
    %197 = arith.subf %193, %196 : vector<64x64xf32>
    %198 = math.exp %197 : vector<64x64xf32>
    %cst_127 = arith.constant dense<0.000000e+00> : vector<64xf32>
    %199 = vector.multi_reduction <add>, %198, %cst_127 [1] : vector<64x64xf32> to vector<64xf32>
    %200 = vector.shape_cast %199 : vector<64xf32> to vector<64x1xf32>
    %201 = tpu.reciprocal %200 {approx = true} : vector<64x1xf32> -> vector<64x1xf32>
    %202 = vector.broadcast %201 : vector<64x1xf32> to vector<64x64xf32>
    %203 = arith.mulf %198, %202 : vector<64x64xf32>
    %cst_128 = arith.constant dense<0.000000e+00> : vector<64x8xf32>
    %204 = tpu.matmul %203, %190, %cst_128 {dimension_numbers = #tpu.dot_dimension_numbers<[1], [0], [0], [1], [0, 0, 1, 1], [], []>} : vector<64x64xf32>, vector<64x8xf32>, vector<64x8xf32> -> vector<64x8xf32>
    %c3 = arith.constant 3 : index
    %c0_129 = arith.constant 0 : index
    %c0_130 = arith.constant 0 : index
    %205 = vector.load %arg7[%c3, %c0_129, %c0_130] : memref<8x8x32xf32, #tpu.memory_space<vmem>>, vector<1x8x32xf32>
    %206 = vector.shape_cast %205 : vector<1x8x32xf32> to vector<8x32xf32>
    %cst_131 = arith.constant dense<0.000000e+00> : vector<64x32xf32>
    %207 = tpu.matmul %204, %206, %cst_131 {dimension_numbers = #tpu.dot_dimension_numbers<[1], [0], [0], [1], [0, 0, 1, 1], [], []>} : vector<64x8xf32>, vector<8x32xf32>, vector<64x32xf32> -> vector<64x32xf32>
    %208 = arith.addf %169, %207 : vector<64x32xf32>
    %c0_132 = arith.constant 0 : index
    %c0_133 = arith.constant 0 : index
    %c0_134 = arith.constant 0 : index
    %209 = vector.load %arg8[%c0_132, %c0_133, %c0_134] : memref<2x1x32xf32, #tpu.memory_space<vmem>>, vector<1x1x32xf32>
    %210 = vector.shape_cast %209 : vector<1x1x32xf32> to vector<1x32xf32>
    %211 = vector.broadcast %210 : vector<1x32xf32> to vector<64x32xf32>
    %212 = arith.addf %208, %211 : vector<64x32xf32>
    %cst_135 = arith.constant 0.000000e+00 : f32
    %213 = vector.broadcast %cst_135 : f32 to vector<64x32xf32>
    %c0_136 = arith.constant 0 : index
    %c0_137 = arith.constant 0 : index
    %c0_138 = arith.constant 0 : index
    %214 = vector.load %arg5[%c0_136, %c0_137, %c0_138] : memref<24x32x8xf32, #tpu.memory_space<vmem>>, vector<1x32x8xf32>
    %215 = vector.shape_cast %214 : vector<1x32x8xf32> to vector<32x8xf32>
    %cst_139 = arith.constant dense<0.000000e+00> : vector<64x8xf32>
    %216 = tpu.matmul %27, %215, %cst_139 {dimension_numbers = #tpu.dot_dimension_numbers<[1], [0], [0], [1], [0, 0, 1, 1], [], []>} : vector<64x32xf32>, vector<32x8xf32>, vector<64x8xf32> -> vector<64x8xf32>
    %c0_140 = arith.constant 0 : index
    %c0_141 = arith.constant 0 : index
    %c0_142 = arith.constant 0 : index
    %217 = vector.load %arg6[%c0_140, %c0_141, %c0_142] : memref<24x1x8xf32, #tpu.memory_space<vmem>>, vector<1x1x8xf32>
    %218 = vector.shape_cast %217 : vector<1x1x8xf32> to vector<1x8xf32>
    %219 = vector.broadcast %218 : vector<1x8xf32> to vector<64x8xf32>
    %220 = arith.addf %216, %219 : vector<64x8xf32>
    %c16 = arith.constant 16 : index
    %c0_143 = arith.constant 0 : index
    %c0_144 = arith.constant 0 : index
    %221 = vector.load %arg5[%c16, %c0_143, %c0_144] : memref<24x32x8xf32, #tpu.memory_space<vmem>>, vector<1x32x8xf32>
    %222 = vector.shape_cast %221 : vector<1x32x8xf32> to vector<32x8xf32>
    %cst_145 = arith.constant dense<0.000000e+00> : vector<64x8xf32>
    %223 = tpu.matmul %51, %222, %cst_145 {dimension_numbers = #tpu.dot_dimension_numbers<[1], [0], [0], [1], [0, 0, 1, 1], [], []>} : vector<64x32xf32>, vector<32x8xf32>, vector<64x8xf32> -> vector<64x8xf32>
    %c16_146 = arith.constant 16 : index
    %c0_147 = arith.constant 0 : index
    %c0_148 = arith.constant 0 : index
    %224 = vector.load %arg6[%c16_146, %c0_147, %c0_148] : memref<24x1x8xf32, #tpu.memory_space<vmem>>, vector<1x1x8xf32>
    %225 = vector.shape_cast %224 : vector<1x1x8xf32> to vector<1x8xf32>
    %226 = vector.broadcast %225 : vector<1x8xf32> to vector<64x8xf32>
    %227 = arith.addf %223, %226 : vector<64x8xf32>
    %c20 = arith.constant 20 : index
    %c0_149 = arith.constant 0 : index
    %c0_150 = arith.constant 0 : index
    %228 = vector.load %arg5[%c20, %c0_149, %c0_150] : memref<24x32x8xf32, #tpu.memory_space<vmem>>, vector<1x32x8xf32>
    %229 = vector.shape_cast %228 : vector<1x32x8xf32> to vector<32x8xf32>
    %cst_151 = arith.constant dense<0.000000e+00> : vector<64x8xf32>
    %230 = tpu.matmul %51, %229, %cst_151 {dimension_numbers = #tpu.dot_dimension_numbers<[1], [0], [0], [1], [0, 0, 1, 1], [], []>} : vector<64x32xf32>, vector<32x8xf32>, vector<64x8xf32> -> vector<64x8xf32>
    %c20_152 = arith.constant 20 : index
    %c0_153 = arith.constant 0 : index
    %c0_154 = arith.constant 0 : index
    %231 = vector.load %arg6[%c20_152, %c0_153, %c0_154] : memref<24x1x8xf32, #tpu.memory_space<vmem>>, vector<1x1x8xf32>
    %232 = vector.shape_cast %231 : vector<1x1x8xf32> to vector<1x8xf32>
    %233 = vector.broadcast %232 : vector<1x8xf32> to vector<64x8xf32>
    %234 = arith.addf %230, %233 : vector<64x8xf32>
    %cst_155 = arith.constant dense<0.000000e+00> : vector<64x64xf32>
    %235 = tpu.matmul %220, %227, %cst_155 {dimension_numbers = #tpu.dot_dimension_numbers<[1], [1], [0], [0], [0, 0, 1, 0], [], []>} : vector<64x8xf32>, vector<64x8xf32>, vector<64x64xf32> -> vector<64x64xf32>
    %cst_156 = arith.constant 0.353553385 : f32
    %236 = vector.broadcast %cst_156 : f32 to vector<64x64xf32>
    %237 = arith.mulf %235, %236 : vector<64x64xf32>
    %cst_157 = arith.constant dense<0xFF800000> : vector<64xf32>
    %238 = vector.multi_reduction <maximumf>, %237, %cst_157 [1] : vector<64x64xf32> to vector<64xf32>
    %239 = vector.shape_cast %238 : vector<64xf32> to vector<64x1xf32>
    %240 = vector.broadcast %239 : vector<64x1xf32> to vector<64x64xf32>
    %241 = arith.subf %237, %240 : vector<64x64xf32>
    %242 = math.exp %241 : vector<64x64xf32>
    %cst_158 = arith.constant dense<0.000000e+00> : vector<64xf32>
    %243 = vector.multi_reduction <add>, %242, %cst_158 [1] : vector<64x64xf32> to vector<64xf32>
    %244 = vector.shape_cast %243 : vector<64xf32> to vector<64x1xf32>
    %245 = tpu.reciprocal %244 {approx = true} : vector<64x1xf32> -> vector<64x1xf32>
    %246 = vector.broadcast %245 : vector<64x1xf32> to vector<64x64xf32>
    %247 = arith.mulf %242, %246 : vector<64x64xf32>
    %cst_159 = arith.constant dense<0.000000e+00> : vector<64x8xf32>
    %248 = tpu.matmul %247, %234, %cst_159 {dimension_numbers = #tpu.dot_dimension_numbers<[1], [0], [0], [1], [0, 0, 1, 1], [], []>} : vector<64x64xf32>, vector<64x8xf32>, vector<64x8xf32> -> vector<64x8xf32>
    %c4_160 = arith.constant 4 : index
    %c0_161 = arith.constant 0 : index
    %c0_162 = arith.constant 0 : index
    %249 = vector.load %arg7[%c4_160, %c0_161, %c0_162] : memref<8x8x32xf32, #tpu.memory_space<vmem>>, vector<1x8x32xf32>
    %250 = vector.shape_cast %249 : vector<1x8x32xf32> to vector<8x32xf32>
    %cst_163 = arith.constant dense<0.000000e+00> : vector<64x32xf32>
    %251 = tpu.matmul %248, %250, %cst_163 {dimension_numbers = #tpu.dot_dimension_numbers<[1], [0], [0], [1], [0, 0, 1, 1], [], []>} : vector<64x8xf32>, vector<8x32xf32>, vector<64x32xf32> -> vector<64x32xf32>
    %252 = arith.addf %213, %251 : vector<64x32xf32>
    %c1_164 = arith.constant 1 : index
    %c0_165 = arith.constant 0 : index
    %c0_166 = arith.constant 0 : index
    %253 = vector.load %arg5[%c1_164, %c0_165, %c0_166] : memref<24x32x8xf32, #tpu.memory_space<vmem>>, vector<1x32x8xf32>
    %254 = vector.shape_cast %253 : vector<1x32x8xf32> to vector<32x8xf32>
    %cst_167 = arith.constant dense<0.000000e+00> : vector<64x8xf32>
    %255 = tpu.matmul %27, %254, %cst_167 {dimension_numbers = #tpu.dot_dimension_numbers<[1], [0], [0], [1], [0, 0, 1, 1], [], []>} : vector<64x32xf32>, vector<32x8xf32>, vector<64x8xf32> -> vector<64x8xf32>
    %c1_168 = arith.constant 1 : index
    %c0_169 = arith.constant 0 : index
    %c0_170 = arith.constant 0 : index
    %256 = vector.load %arg6[%c1_168, %c0_169, %c0_170] : memref<24x1x8xf32, #tpu.memory_space<vmem>>, vector<1x1x8xf32>
    %257 = vector.shape_cast %256 : vector<1x1x8xf32> to vector<1x8xf32>
    %258 = vector.broadcast %257 : vector<1x8xf32> to vector<64x8xf32>
    %259 = arith.addf %255, %258 : vector<64x8xf32>
    %c17 = arith.constant 17 : index
    %c0_171 = arith.constant 0 : index
    %c0_172 = arith.constant 0 : index
    %260 = vector.load %arg5[%c17, %c0_171, %c0_172] : memref<24x32x8xf32, #tpu.memory_space<vmem>>, vector<1x32x8xf32>
    %261 = vector.shape_cast %260 : vector<1x32x8xf32> to vector<32x8xf32>
    %cst_173 = arith.constant dense<0.000000e+00> : vector<64x8xf32>
    %262 = tpu.matmul %51, %261, %cst_173 {dimension_numbers = #tpu.dot_dimension_numbers<[1], [0], [0], [1], [0, 0, 1, 1], [], []>} : vector<64x32xf32>, vector<32x8xf32>, vector<64x8xf32> -> vector<64x8xf32>
    %c17_174 = arith.constant 17 : index
    %c0_175 = arith.constant 0 : index
    %c0_176 = arith.constant 0 : index
    %263 = vector.load %arg6[%c17_174, %c0_175, %c0_176] : memref<24x1x8xf32, #tpu.memory_space<vmem>>, vector<1x1x8xf32>
    %264 = vector.shape_cast %263 : vector<1x1x8xf32> to vector<1x8xf32>
    %265 = vector.broadcast %264 : vector<1x8xf32> to vector<64x8xf32>
    %266 = arith.addf %262, %265 : vector<64x8xf32>
    %c21 = arith.constant 21 : index
    %c0_177 = arith.constant 0 : index
    %c0_178 = arith.constant 0 : index
    %267 = vector.load %arg5[%c21, %c0_177, %c0_178] : memref<24x32x8xf32, #tpu.memory_space<vmem>>, vector<1x32x8xf32>
    %268 = vector.shape_cast %267 : vector<1x32x8xf32> to vector<32x8xf32>
    %cst_179 = arith.constant dense<0.000000e+00> : vector<64x8xf32>
    %269 = tpu.matmul %51, %268, %cst_179 {dimension_numbers = #tpu.dot_dimension_numbers<[1], [0], [0], [1], [0, 0, 1, 1], [], []>} : vector<64x32xf32>, vector<32x8xf32>, vector<64x8xf32> -> vector<64x8xf32>
    %c21_180 = arith.constant 21 : index
    %c0_181 = arith.constant 0 : index
    %c0_182 = arith.constant 0 : index
    %270 = vector.load %arg6[%c21_180, %c0_181, %c0_182] : memref<24x1x8xf32, #tpu.memory_space<vmem>>, vector<1x1x8xf32>
    %271 = vector.shape_cast %270 : vector<1x1x8xf32> to vector<1x8xf32>
    %272 = vector.broadcast %271 : vector<1x8xf32> to vector<64x8xf32>
    %273 = arith.addf %269, %272 : vector<64x8xf32>
    %cst_183 = arith.constant dense<0.000000e+00> : vector<64x64xf32>
    %274 = tpu.matmul %259, %266, %cst_183 {dimension_numbers = #tpu.dot_dimension_numbers<[1], [1], [0], [0], [0, 0, 1, 0], [], []>} : vector<64x8xf32>, vector<64x8xf32>, vector<64x64xf32> -> vector<64x64xf32>
    %cst_184 = arith.constant 0.353553385 : f32
    %275 = vector.broadcast %cst_184 : f32 to vector<64x64xf32>
    %276 = arith.mulf %274, %275 : vector<64x64xf32>
    %cst_185 = arith.constant dense<0xFF800000> : vector<64xf32>
    %277 = vector.multi_reduction <maximumf>, %276, %cst_185 [1] : vector<64x64xf32> to vector<64xf32>
    %278 = vector.shape_cast %277 : vector<64xf32> to vector<64x1xf32>
    %279 = vector.broadcast %278 : vector<64x1xf32> to vector<64x64xf32>
    %280 = arith.subf %276, %279 : vector<64x64xf32>
    %281 = math.exp %280 : vector<64x64xf32>
    %cst_186 = arith.constant dense<0.000000e+00> : vector<64xf32>
    %282 = vector.multi_reduction <add>, %281, %cst_186 [1] : vector<64x64xf32> to vector<64xf32>
    %283 = vector.shape_cast %282 : vector<64xf32> to vector<64x1xf32>
    %284 = tpu.reciprocal %283 {approx = true} : vector<64x1xf32> -> vector<64x1xf32>
    %285 = vector.broadcast %284 : vector<64x1xf32> to vector<64x64xf32>
    %286 = arith.mulf %281, %285 : vector<64x64xf32>
    %cst_187 = arith.constant dense<0.000000e+00> : vector<64x8xf32>
    %287 = tpu.matmul %286, %273, %cst_187 {dimension_numbers = #tpu.dot_dimension_numbers<[1], [0], [0], [1], [0, 0, 1, 1], [], []>} : vector<64x64xf32>, vector<64x8xf32>, vector<64x8xf32> -> vector<64x8xf32>
    %c5_188 = arith.constant 5 : index
    %c0_189 = arith.constant 0 : index
    %c0_190 = arith.constant 0 : index
    %288 = vector.load %arg7[%c5_188, %c0_189, %c0_190] : memref<8x8x32xf32, #tpu.memory_space<vmem>>, vector<1x8x32xf32>
    %289 = vector.shape_cast %288 : vector<1x8x32xf32> to vector<8x32xf32>
    %cst_191 = arith.constant dense<0.000000e+00> : vector<64x32xf32>
    %290 = tpu.matmul %287, %289, %cst_191 {dimension_numbers = #tpu.dot_dimension_numbers<[1], [0], [0], [1], [0, 0, 1, 1], [], []>} : vector<64x8xf32>, vector<8x32xf32>, vector<64x32xf32> -> vector<64x32xf32>
    %291 = arith.addf %252, %290 : vector<64x32xf32>
    %c2_192 = arith.constant 2 : index
    %c0_193 = arith.constant 0 : index
    %c0_194 = arith.constant 0 : index
    %292 = vector.load %arg5[%c2_192, %c0_193, %c0_194] : memref<24x32x8xf32, #tpu.memory_space<vmem>>, vector<1x32x8xf32>
    %293 = vector.shape_cast %292 : vector<1x32x8xf32> to vector<32x8xf32>
    %cst_195 = arith.constant dense<0.000000e+00> : vector<64x8xf32>
    %294 = tpu.matmul %27, %293, %cst_195 {dimension_numbers = #tpu.dot_dimension_numbers<[1], [0], [0], [1], [0, 0, 1, 1], [], []>} : vector<64x32xf32>, vector<32x8xf32>, vector<64x8xf32> -> vector<64x8xf32>
    %c2_196 = arith.constant 2 : index
    %c0_197 = arith.constant 0 : index
    %c0_198 = arith.constant 0 : index
    %295 = vector.load %arg6[%c2_196, %c0_197, %c0_198] : memref<24x1x8xf32, #tpu.memory_space<vmem>>, vector<1x1x8xf32>
    %296 = vector.shape_cast %295 : vector<1x1x8xf32> to vector<1x8xf32>
    %297 = vector.broadcast %296 : vector<1x8xf32> to vector<64x8xf32>
    %298 = arith.addf %294, %297 : vector<64x8xf32>
    %c18 = arith.constant 18 : index
    %c0_199 = arith.constant 0 : index
    %c0_200 = arith.constant 0 : index
    %299 = vector.load %arg5[%c18, %c0_199, %c0_200] : memref<24x32x8xf32, #tpu.memory_space<vmem>>, vector<1x32x8xf32>
    %300 = vector.shape_cast %299 : vector<1x32x8xf32> to vector<32x8xf32>
    %cst_201 = arith.constant dense<0.000000e+00> : vector<64x8xf32>
    %301 = tpu.matmul %51, %300, %cst_201 {dimension_numbers = #tpu.dot_dimension_numbers<[1], [0], [0], [1], [0, 0, 1, 1], [], []>} : vector<64x32xf32>, vector<32x8xf32>, vector<64x8xf32> -> vector<64x8xf32>
    %c18_202 = arith.constant 18 : index
    %c0_203 = arith.constant 0 : index
    %c0_204 = arith.constant 0 : index
    %302 = vector.load %arg6[%c18_202, %c0_203, %c0_204] : memref<24x1x8xf32, #tpu.memory_space<vmem>>, vector<1x1x8xf32>
    %303 = vector.shape_cast %302 : vector<1x1x8xf32> to vector<1x8xf32>
    %304 = vector.broadcast %303 : vector<1x8xf32> to vector<64x8xf32>
    %305 = arith.addf %301, %304 : vector<64x8xf32>
    %c22 = arith.constant 22 : index
    %c0_205 = arith.constant 0 : index
    %c0_206 = arith.constant 0 : index
    %306 = vector.load %arg5[%c22, %c0_205, %c0_206] : memref<24x32x8xf32, #tpu.memory_space<vmem>>, vector<1x32x8xf32>
    %307 = vector.shape_cast %306 : vector<1x32x8xf32> to vector<32x8xf32>
    %cst_207 = arith.constant dense<0.000000e+00> : vector<64x8xf32>
    %308 = tpu.matmul %51, %307, %cst_207 {dimension_numbers = #tpu.dot_dimension_numbers<[1], [0], [0], [1], [0, 0, 1, 1], [], []>} : vector<64x32xf32>, vector<32x8xf32>, vector<64x8xf32> -> vector<64x8xf32>
    %c22_208 = arith.constant 22 : index
    %c0_209 = arith.constant 0 : index
    %c0_210 = arith.constant 0 : index
    %309 = vector.load %arg6[%c22_208, %c0_209, %c0_210] : memref<24x1x8xf32, #tpu.memory_space<vmem>>, vector<1x1x8xf32>
    %310 = vector.shape_cast %309 : vector<1x1x8xf32> to vector<1x8xf32>
    %311 = vector.broadcast %310 : vector<1x8xf32> to vector<64x8xf32>
    %312 = arith.addf %308, %311 : vector<64x8xf32>
    %cst_211 = arith.constant dense<0.000000e+00> : vector<64x64xf32>
    %313 = tpu.matmul %298, %305, %cst_211 {dimension_numbers = #tpu.dot_dimension_numbers<[1], [1], [0], [0], [0, 0, 1, 0], [], []>} : vector<64x8xf32>, vector<64x8xf32>, vector<64x64xf32> -> vector<64x64xf32>
    %cst_212 = arith.constant 0.353553385 : f32
    %314 = vector.broadcast %cst_212 : f32 to vector<64x64xf32>
    %315 = arith.mulf %313, %314 : vector<64x64xf32>
    %cst_213 = arith.constant dense<0xFF800000> : vector<64xf32>
    %316 = vector.multi_reduction <maximumf>, %315, %cst_213 [1] : vector<64x64xf32> to vector<64xf32>
    %317 = vector.shape_cast %316 : vector<64xf32> to vector<64x1xf32>
    %318 = vector.broadcast %317 : vector<64x1xf32> to vector<64x64xf32>
    %319 = arith.subf %315, %318 : vector<64x64xf32>
    %320 = math.exp %319 : vector<64x64xf32>
    %cst_214 = arith.constant dense<0.000000e+00> : vector<64xf32>
    %321 = vector.multi_reduction <add>, %320, %cst_214 [1] : vector<64x64xf32> to vector<64xf32>
    %322 = vector.shape_cast %321 : vector<64xf32> to vector<64x1xf32>
    %323 = tpu.reciprocal %322 {approx = true} : vector<64x1xf32> -> vector<64x1xf32>
    %324 = vector.broadcast %323 : vector<64x1xf32> to vector<64x64xf32>
    %325 = arith.mulf %320, %324 : vector<64x64xf32>
    %cst_215 = arith.constant dense<0.000000e+00> : vector<64x8xf32>
    %326 = tpu.matmul %325, %312, %cst_215 {dimension_numbers = #tpu.dot_dimension_numbers<[1], [0], [0], [1], [0, 0, 1, 1], [], []>} : vector<64x64xf32>, vector<64x8xf32>, vector<64x8xf32> -> vector<64x8xf32>
    %c6_216 = arith.constant 6 : index
    %c0_217 = arith.constant 0 : index
    %c0_218 = arith.constant 0 : index
    %327 = vector.load %arg7[%c6_216, %c0_217, %c0_218] : memref<8x8x32xf32, #tpu.memory_space<vmem>>, vector<1x8x32xf32>
    %328 = vector.shape_cast %327 : vector<1x8x32xf32> to vector<8x32xf32>
    %cst_219 = arith.constant dense<0.000000e+00> : vector<64x32xf32>
    %329 = tpu.matmul %326, %328, %cst_219 {dimension_numbers = #tpu.dot_dimension_numbers<[1], [0], [0], [1], [0, 0, 1, 1], [], []>} : vector<64x8xf32>, vector<8x32xf32>, vector<64x32xf32> -> vector<64x32xf32>
    %330 = arith.addf %291, %329 : vector<64x32xf32>
    %c3_220 = arith.constant 3 : index
    %c0_221 = arith.constant 0 : index
    %c0_222 = arith.constant 0 : index
    %331 = vector.load %arg5[%c3_220, %c0_221, %c0_222] : memref<24x32x8xf32, #tpu.memory_space<vmem>>, vector<1x32x8xf32>
    %332 = vector.shape_cast %331 : vector<1x32x8xf32> to vector<32x8xf32>
    %cst_223 = arith.constant dense<0.000000e+00> : vector<64x8xf32>
    %333 = tpu.matmul %27, %332, %cst_223 {dimension_numbers = #tpu.dot_dimension_numbers<[1], [0], [0], [1], [0, 0, 1, 1], [], []>} : vector<64x32xf32>, vector<32x8xf32>, vector<64x8xf32> -> vector<64x8xf32>
    %c3_224 = arith.constant 3 : index
    %c0_225 = arith.constant 0 : index
    %c0_226 = arith.constant 0 : index
    %334 = vector.load %arg6[%c3_224, %c0_225, %c0_226] : memref<24x1x8xf32, #tpu.memory_space<vmem>>, vector<1x1x8xf32>
    %335 = vector.shape_cast %334 : vector<1x1x8xf32> to vector<1x8xf32>
    %336 = vector.broadcast %335 : vector<1x8xf32> to vector<64x8xf32>
    %337 = arith.addf %333, %336 : vector<64x8xf32>
    %c19 = arith.constant 19 : index
    %c0_227 = arith.constant 0 : index
    %c0_228 = arith.constant 0 : index
    %338 = vector.load %arg5[%c19, %c0_227, %c0_228] : memref<24x32x8xf32, #tpu.memory_space<vmem>>, vector<1x32x8xf32>
    %339 = vector.shape_cast %338 : vector<1x32x8xf32> to vector<32x8xf32>
    %cst_229 = arith.constant dense<0.000000e+00> : vector<64x8xf32>
    %340 = tpu.matmul %51, %339, %cst_229 {dimension_numbers = #tpu.dot_dimension_numbers<[1], [0], [0], [1], [0, 0, 1, 1], [], []>} : vector<64x32xf32>, vector<32x8xf32>, vector<64x8xf32> -> vector<64x8xf32>
    %c19_230 = arith.constant 19 : index
    %c0_231 = arith.constant 0 : index
    %c0_232 = arith.constant 0 : index
    %341 = vector.load %arg6[%c19_230, %c0_231, %c0_232] : memref<24x1x8xf32, #tpu.memory_space<vmem>>, vector<1x1x8xf32>
    %342 = vector.shape_cast %341 : vector<1x1x8xf32> to vector<1x8xf32>
    %343 = vector.broadcast %342 : vector<1x8xf32> to vector<64x8xf32>
    %344 = arith.addf %340, %343 : vector<64x8xf32>
    %c23 = arith.constant 23 : index
    %c0_233 = arith.constant 0 : index
    %c0_234 = arith.constant 0 : index
    %345 = vector.load %arg5[%c23, %c0_233, %c0_234] : memref<24x32x8xf32, #tpu.memory_space<vmem>>, vector<1x32x8xf32>
    %346 = vector.shape_cast %345 : vector<1x32x8xf32> to vector<32x8xf32>
    %cst_235 = arith.constant dense<0.000000e+00> : vector<64x8xf32>
    %347 = tpu.matmul %51, %346, %cst_235 {dimension_numbers = #tpu.dot_dimension_numbers<[1], [0], [0], [1], [0, 0, 1, 1], [], []>} : vector<64x32xf32>, vector<32x8xf32>, vector<64x8xf32> -> vector<64x8xf32>
    %c23_236 = arith.constant 23 : index
    %c0_237 = arith.constant 0 : index
    %c0_238 = arith.constant 0 : index
    %348 = vector.load %arg6[%c23_236, %c0_237, %c0_238] : memref<24x1x8xf32, #tpu.memory_space<vmem>>, vector<1x1x8xf32>
    %349 = vector.shape_cast %348 : vector<1x1x8xf32> to vector<1x8xf32>
    %350 = vector.broadcast %349 : vector<1x8xf32> to vector<64x8xf32>
    %351 = arith.addf %347, %350 : vector<64x8xf32>
    %cst_239 = arith.constant dense<0.000000e+00> : vector<64x64xf32>
    %352 = tpu.matmul %337, %344, %cst_239 {dimension_numbers = #tpu.dot_dimension_numbers<[1], [1], [0], [0], [0, 0, 1, 0], [], []>} : vector<64x8xf32>, vector<64x8xf32>, vector<64x64xf32> -> vector<64x64xf32>
    %cst_240 = arith.constant 0.353553385 : f32
    %353 = vector.broadcast %cst_240 : f32 to vector<64x64xf32>
    %354 = arith.mulf %352, %353 : vector<64x64xf32>
    %cst_241 = arith.constant dense<0xFF800000> : vector<64xf32>
    %355 = vector.multi_reduction <maximumf>, %354, %cst_241 [1] : vector<64x64xf32> to vector<64xf32>
    %356 = vector.shape_cast %355 : vector<64xf32> to vector<64x1xf32>
    %357 = vector.broadcast %356 : vector<64x1xf32> to vector<64x64xf32>
    %358 = arith.subf %354, %357 : vector<64x64xf32>
    %359 = math.exp %358 : vector<64x64xf32>
    %cst_242 = arith.constant dense<0.000000e+00> : vector<64xf32>
    %360 = vector.multi_reduction <add>, %359, %cst_242 [1] : vector<64x64xf32> to vector<64xf32>
    %361 = vector.shape_cast %360 : vector<64xf32> to vector<64x1xf32>
    %362 = tpu.reciprocal %361 {approx = true} : vector<64x1xf32> -> vector<64x1xf32>
    %363 = vector.broadcast %362 : vector<64x1xf32> to vector<64x64xf32>
    %364 = arith.mulf %359, %363 : vector<64x64xf32>
    %cst_243 = arith.constant dense<0.000000e+00> : vector<64x8xf32>
    %365 = tpu.matmul %364, %351, %cst_243 {dimension_numbers = #tpu.dot_dimension_numbers<[1], [0], [0], [1], [0, 0, 1, 1], [], []>} : vector<64x64xf32>, vector<64x8xf32>, vector<64x8xf32> -> vector<64x8xf32>
    %c7_244 = arith.constant 7 : index
    %c0_245 = arith.constant 0 : index
    %c0_246 = arith.constant 0 : index
    %366 = vector.load %arg7[%c7_244, %c0_245, %c0_246] : memref<8x8x32xf32, #tpu.memory_space<vmem>>, vector<1x8x32xf32>
    %367 = vector.shape_cast %366 : vector<1x8x32xf32> to vector<8x32xf32>
    %cst_247 = arith.constant dense<0.000000e+00> : vector<64x32xf32>
    %368 = tpu.matmul %365, %367, %cst_247 {dimension_numbers = #tpu.dot_dimension_numbers<[1], [0], [0], [1], [0, 0, 1, 1], [], []>} : vector<64x8xf32>, vector<8x32xf32>, vector<64x32xf32> -> vector<64x32xf32>
    %369 = arith.addf %330, %368 : vector<64x32xf32>
    %c1_248 = arith.constant 1 : index
    %c0_249 = arith.constant 0 : index
    %c0_250 = arith.constant 0 : index
    %370 = vector.load %arg8[%c1_248, %c0_249, %c0_250] : memref<2x1x32xf32, #tpu.memory_space<vmem>>, vector<1x1x32xf32>
    %371 = vector.shape_cast %370 : vector<1x1x32xf32> to vector<1x32xf32>
    %372 = vector.broadcast %371 : vector<1x32xf32> to vector<64x32xf32>
    %373 = arith.addf %369, %372 : vector<64x32xf32>
    %c0_251 = arith.constant 0 : index
    %374 = memref.load %arg15[%c0_251] : memref<8xf32, #tpu.memory_space<smem>>
    %c1_252 = arith.constant 1 : index
    %375 = memref.load %arg15[%c1_252] : memref<8xf32, #tpu.memory_space<smem>>
    %c2_253 = arith.constant 2 : index
    %376 = memref.load %arg15[%c2_253] : memref<8xf32, #tpu.memory_space<smem>>
    %c3_254 = arith.constant 3 : index
    %377 = memref.load %arg15[%c3_254] : memref<8xf32, #tpu.memory_space<smem>>
    %378 = vector.broadcast %374 : f32 to vector<64x32xf32>
    %379 = arith.mulf %378, %1 : vector<64x32xf32>
    %380 = vector.broadcast %375 : f32 to vector<64x32xf32>
    %381 = arith.mulf %380, %212 : vector<64x32xf32>
    %382 = arith.addf %379, %381 : vector<64x32xf32>
    %c0_255 = arith.constant 0 : index
    %c0_256 = arith.constant 0 : index
    %383 = vector.load %arg9[%c0_255, %c0_256] : memref<1x32xf32, #tpu.memory_space<vmem>>, vector<1x32xf32>
    %c0_257 = arith.constant 0 : index
    %c0_258 = arith.constant 0 : index
    %384 = vector.load %arg10[%c0_257, %c0_258] : memref<1x32xf32, #tpu.memory_space<vmem>>, vector<1x32xf32>
    %cst_259 = arith.constant dense<0.000000e+00> : vector<64xf32>
    %385 = vector.multi_reduction <add>, %382, %cst_259 [1] : vector<64x32xf32> to vector<64xf32>
    %386 = vector.shape_cast %385 : vector<64xf32> to vector<64x1xf32>
    %cst_260 = arith.constant 3.200000e+01 : f32
    %387 = vector.broadcast %cst_260 : f32 to vector<64x1xf32>
    %388 = arith.divf %386, %387 : vector<64x1xf32>
    %389 = vector.broadcast %388 : vector<64x1xf32> to vector<64x32xf32>
    %390 = arith.subf %382, %389 : vector<64x32xf32>
    %391 = arith.mulf %390, %390 : vector<64x32xf32>
    %cst_261 = arith.constant dense<0.000000e+00> : vector<64xf32>
    %392 = vector.multi_reduction <add>, %391, %cst_261 [1] : vector<64x32xf32> to vector<64xf32>
    %393 = vector.shape_cast %392 : vector<64xf32> to vector<64x1xf32>
    %cst_262 = arith.constant 3.200000e+01 : f32
    %394 = vector.broadcast %cst_262 : f32 to vector<64x1xf32>
    %395 = arith.divf %393, %394 : vector<64x1xf32>
    %cst_263 = arith.constant 9.99999974E-6 : f32
    %396 = vector.broadcast %cst_263 : f32 to vector<64x1xf32>
    %397 = arith.addf %395, %396 : vector<64x1xf32>
    %398 = math.rsqrt %397 : vector<64x1xf32>
    %399 = vector.broadcast %398 : vector<64x1xf32> to vector<64x32xf32>
    %400 = arith.mulf %390, %399 : vector<64x32xf32>
    %401 = vector.broadcast %383 : vector<1x32xf32> to vector<64x32xf32>
    %402 = arith.mulf %400, %401 : vector<64x32xf32>
    %403 = vector.broadcast %384 : vector<1x32xf32> to vector<64x32xf32>
    %404 = arith.addf %402, %403 : vector<64x32xf32>
    %c0_264 = arith.constant 0 : index
    %c0_265 = arith.constant 0 : index
    %c0_266 = arith.constant 0 : index
    %405 = vector.load %arg11[%c0_264, %c0_265, %c0_266] : memref<2x32x128xf32, #tpu.memory_space<vmem>>, vector<1x32x128xf32>
    %406 = vector.shape_cast %405 : vector<1x32x128xf32> to vector<32x128xf32>
    %cst_267 = arith.constant dense<0.000000e+00> : vector<64x128xf32>
    %407 = tpu.matmul %404, %406, %cst_267 {dimension_numbers = #tpu.dot_dimension_numbers<[1], [0], [0], [1], [0, 0, 1, 1], [], []>} : vector<64x32xf32>, vector<32x128xf32>, vector<64x128xf32> -> vector<64x128xf32>
    %c0_268 = arith.constant 0 : index
    %c0_269 = arith.constant 0 : index
    %c0_270 = arith.constant 0 : index
    %408 = vector.load %arg12[%c0_268, %c0_269, %c0_270] : memref<2x1x128xf32, #tpu.memory_space<vmem>>, vector<1x1x128xf32>
    %409 = vector.shape_cast %408 : vector<1x1x128xf32> to vector<1x128xf32>
    %410 = vector.broadcast %409 : vector<1x128xf32> to vector<64x128xf32>
    %411 = arith.addf %407, %410 : vector<64x128xf32>
    %cst_271 = arith.constant 5.000000e-01 : f32
    %412 = vector.broadcast %cst_271 : f32 to vector<64x128xf32>
    %413 = arith.mulf %412, %411 : vector<64x128xf32>
    %cst_272 = arith.constant 4.471500e-02 : f32
    %414 = vector.broadcast %cst_272 : f32 to vector<64x128xf32>
    %415 = arith.mulf %414, %411 : vector<64x128xf32>
    %416 = arith.mulf %415, %411 : vector<64x128xf32>
    %417 = arith.mulf %416, %411 : vector<64x128xf32>
    %418 = arith.addf %411, %417 : vector<64x128xf32>
    %cst_273 = arith.constant 0.797884583 : f32
    %419 = vector.broadcast %cst_273 : f32 to vector<64x128xf32>
    %420 = arith.mulf %419, %418 : vector<64x128xf32>
    %421 = math.tanh %420 : vector<64x128xf32>
    %cst_274 = arith.constant 1.000000e+00 : f32
    %422 = vector.broadcast %cst_274 : f32 to vector<64x128xf32>
    %423 = arith.addf %422, %421 : vector<64x128xf32>
    %424 = arith.mulf %413, %423 : vector<64x128xf32>
    %c0_275 = arith.constant 0 : index
    %c0_276 = arith.constant 0 : index
    %c0_277 = arith.constant 0 : index
    %425 = vector.load %arg13[%c0_275, %c0_276, %c0_277] : memref<2x128x32xf32, #tpu.memory_space<vmem>>, vector<1x128x32xf32>
    %426 = vector.shape_cast %425 : vector<1x128x32xf32> to vector<128x32xf32>
    %cst_278 = arith.constant dense<0.000000e+00> : vector<64x32xf32>
    %427 = tpu.matmul %424, %426, %cst_278 {dimension_numbers = #tpu.dot_dimension_numbers<[1], [0], [0], [1], [0, 0, 1, 1], [], []>} : vector<64x128xf32>, vector<128x32xf32>, vector<64x32xf32> -> vector<64x32xf32>
    %c0_279 = arith.constant 0 : index
    %c0_280 = arith.constant 0 : index
    %c0_281 = arith.constant 0 : index
    %428 = vector.load %arg14[%c0_279, %c0_280, %c0_281] : memref<2x1x32xf32, #tpu.memory_space<vmem>>, vector<1x1x32xf32>
    %429 = vector.shape_cast %428 : vector<1x1x32xf32> to vector<1x32xf32>
    %430 = vector.broadcast %429 : vector<1x32xf32> to vector<64x32xf32>
    %431 = arith.addf %427, %430 : vector<64x32xf32>
    %432 = vector.broadcast %376 : f32 to vector<64x32xf32>
    %433 = arith.mulf %432, %382 : vector<64x32xf32>
    %434 = vector.broadcast %377 : f32 to vector<64x32xf32>
    %435 = arith.mulf %434, %431 : vector<64x32xf32>
    %436 = arith.addf %433, %435 : vector<64x32xf32>
    %c0_282 = arith.constant 0 : index
    %c0_283 = arith.constant 0 : index
    %c0_284 = arith.constant 0 : index
    %437 = vector.load %arg16[%c0_282, %c0_283, %c0_284] : memref<1x64x32xf32, #tpu.memory_space<vmem>>, vector<1x64x32xf32>
    %438 = vector.shape_cast %437 : vector<1x64x32xf32> to vector<64x32xf32>
    %439 = vector.shape_cast %436 : vector<64x32xf32> to vector<1x64x32xf32>
    tpu.vector_store %arg16[%c0_282, %c0_283, %c0_284], %439 {strides = array<i32>} : memref<1x64x32xf32, #tpu.memory_space<vmem>>, vector<1x64x32xf32>,
    %c4_285 = arith.constant 4 : index
    %440 = memref.load %arg15[%c4_285] : memref<8xf32, #tpu.memory_space<smem>>
    %c5_286 = arith.constant 5 : index
    %441 = memref.load %arg15[%c5_286] : memref<8xf32, #tpu.memory_space<smem>>
    %c6_287 = arith.constant 6 : index
    %442 = memref.load %arg15[%c6_287] : memref<8xf32, #tpu.memory_space<smem>>
    %c7_288 = arith.constant 7 : index
    %443 = memref.load %arg15[%c7_288] : memref<8xf32, #tpu.memory_space<smem>>
    %444 = vector.broadcast %440 : f32 to vector<64x32xf32>
    %445 = arith.mulf %444, %3 : vector<64x32xf32>
    %446 = vector.broadcast %441 : f32 to vector<64x32xf32>
    %447 = arith.mulf %446, %373 : vector<64x32xf32>
    %448 = arith.addf %445, %447 : vector<64x32xf32>
    %c0_289 = arith.constant 0 : index
    %c0_290 = arith.constant 0 : index
    %449 = vector.load %arg9[%c0_289, %c0_290] : memref<1x32xf32, #tpu.memory_space<vmem>>, vector<1x32xf32>
    %c0_291 = arith.constant 0 : index
    %c0_292 = arith.constant 0 : index
    %450 = vector.load %arg10[%c0_291, %c0_292] : memref<1x32xf32, #tpu.memory_space<vmem>>, vector<1x32xf32>
    %cst_293 = arith.constant dense<0.000000e+00> : vector<64xf32>
    %451 = vector.multi_reduction <add>, %448, %cst_293 [1] : vector<64x32xf32> to vector<64xf32>
    %452 = vector.shape_cast %451 : vector<64xf32> to vector<64x1xf32>
    %cst_294 = arith.constant 3.200000e+01 : f32
    %453 = vector.broadcast %cst_294 : f32 to vector<64x1xf32>
    %454 = arith.divf %452, %453 : vector<64x1xf32>
    %455 = vector.broadcast %454 : vector<64x1xf32> to vector<64x32xf32>
    %456 = arith.subf %448, %455 : vector<64x32xf32>
    %457 = arith.mulf %456, %456 : vector<64x32xf32>
    %cst_295 = arith.constant dense<0.000000e+00> : vector<64xf32>
    %458 = vector.multi_reduction <add>, %457, %cst_295 [1] : vector<64x32xf32> to vector<64xf32>
    %459 = vector.shape_cast %458 : vector<64xf32> to vector<64x1xf32>
    %cst_296 = arith.constant 3.200000e+01 : f32
    %460 = vector.broadcast %cst_296 : f32 to vector<64x1xf32>
    %461 = arith.divf %459, %460 : vector<64x1xf32>
    %cst_297 = arith.constant 9.99999974E-6 : f32
    %462 = vector.broadcast %cst_297 : f32 to vector<64x1xf32>
    %463 = arith.addf %461, %462 : vector<64x1xf32>
    %464 = math.rsqrt %463 : vector<64x1xf32>
    %465 = vector.broadcast %464 : vector<64x1xf32> to vector<64x32xf32>
    %466 = arith.mulf %456, %465 : vector<64x32xf32>
    %467 = vector.broadcast %449 : vector<1x32xf32> to vector<64x32xf32>
    %468 = arith.mulf %466, %467 : vector<64x32xf32>
    %469 = vector.broadcast %450 : vector<1x32xf32> to vector<64x32xf32>
    %470 = arith.addf %468, %469 : vector<64x32xf32>
    %c1_298 = arith.constant 1 : index
    %c0_299 = arith.constant 0 : index
    %c0_300 = arith.constant 0 : index
    %471 = vector.load %arg11[%c1_298, %c0_299, %c0_300] : memref<2x32x128xf32, #tpu.memory_space<vmem>>, vector<1x32x128xf32>
    %472 = vector.shape_cast %471 : vector<1x32x128xf32> to vector<32x128xf32>
    %cst_301 = arith.constant dense<0.000000e+00> : vector<64x128xf32>
    %473 = tpu.matmul %470, %472, %cst_301 {dimension_numbers = #tpu.dot_dimension_numbers<[1], [0], [0], [1], [0, 0, 1, 1], [], []>} : vector<64x32xf32>, vector<32x128xf32>, vector<64x128xf32> -> vector<64x128xf32>
    %c1_302 = arith.constant 1 : index
    %c0_303 = arith.constant 0 : index
    %c0_304 = arith.constant 0 : index
    %474 = vector.load %arg12[%c1_302, %c0_303, %c0_304] : memref<2x1x128xf32, #tpu.memory_space<vmem>>, vector<1x1x128xf32>
    %475 = vector.shape_cast %474 : vector<1x1x128xf32> to vector<1x128xf32>
    %476 = vector.broadcast %475 : vector<1x128xf32> to vector<64x128xf32>
    %477 = arith.addf %473, %476 : vector<64x128xf32>
    %cst_305 = arith.constant 5.000000e-01 : f32
    %478 = vector.broadcast %cst_305 : f32 to vector<64x128xf32>
    %479 = arith.mulf %478, %477 : vector<64x128xf32>
    %cst_306 = arith.constant 4.471500e-02 : f32
    %480 = vector.broadcast %cst_306 : f32 to vector<64x128xf32>
    %481 = arith.mulf %480, %477 : vector<64x128xf32>
    %482 = arith.mulf %481, %477 : vector<64x128xf32>
    %483 = arith.mulf %482, %477 : vector<64x128xf32>
    %484 = arith.addf %477, %483 : vector<64x128xf32>
    %cst_307 = arith.constant 0.797884583 : f32
    %485 = vector.broadcast %cst_307 : f32 to vector<64x128xf32>
    %486 = arith.mulf %485, %484 : vector<64x128xf32>
    %487 = math.tanh %486 : vector<64x128xf32>
    %cst_308 = arith.constant 1.000000e+00 : f32
    %488 = vector.broadcast %cst_308 : f32 to vector<64x128xf32>
    %489 = arith.addf %488, %487 : vector<64x128xf32>
    %490 = arith.mulf %479, %489 : vector<64x128xf32>
    %c1_309 = arith.constant 1 : index
    %c0_310 = arith.constant 0 : index
    %c0_311 = arith.constant 0 : index
    %491 = vector.load %arg13[%c1_309, %c0_310, %c0_311] : memref<2x128x32xf32, #tpu.memory_space<vmem>>, vector<1x128x32xf32>
    %492 = vector.shape_cast %491 : vector<1x128x32xf32> to vector<128x32xf32>
    %cst_312 = arith.constant dense<0.000000e+00> : vector<64x32xf32>
    %493 = tpu.matmul %490, %492, %cst_312 {dimension_numbers = #tpu.dot_dimension_numbers<[1], [0], [0], [1], [0, 0, 1, 1], [], []>} : vector<64x128xf32>, vector<128x32xf32>, vector<64x32xf32> -> vector<64x32xf32>
    %c1_313 = arith.constant 1 : index
    %c0_314 = arith.constant 0 : index
    %c0_315 = arith.constant 0 : index
    %494 = vector.load %arg14[%c1_313, %c0_314, %c0_315] : memref<2x1x32xf32, #tpu.memory_space<vmem>>, vector<1x1x32xf32>
    %495 = vector.shape_cast %494 : vector<1x1x32xf32> to vector<1x32xf32>
    %496 = vector.broadcast %495 : vector<1x32xf32> to vector<64x32xf32>
    %497 = arith.addf %493, %496 : vector<64x32xf32>
    %498 = vector.broadcast %442 : f32 to vector<64x32xf32>
    %499 = arith.mulf %498, %448 : vector<64x32xf32>
    %500 = vector.broadcast %443 : f32 to vector<64x32xf32>
    %501 = arith.mulf %500, %497 : vector<64x32xf32>
    %502 = arith.addf %499, %501 : vector<64x32xf32>
    %c0_316 = arith.constant 0 : index
    %c0_317 = arith.constant 0 : index
    %c0_318 = arith.constant 0 : index
    %503 = vector.load %arg17[%c0_316, %c0_317, %c0_318] : memref<1x64x32xf32, #tpu.memory_space<vmem>>, vector<1x64x32xf32>
    %504 = vector.shape_cast %503 : vector<1x64x32xf32> to vector<64x32xf32>
    %505 = vector.shape_cast %502 : vector<64x32xf32> to vector<1x64x32xf32>
    tpu.vector_store %arg17[%c0_316, %c0_317, %c0_318], %505 {strides = array<i32>} : memref<1x64x32xf32, #tpu.memory_space<vmem>>, vector<1x64x32xf32>,
    return
  }
  func.func @transform_0(%arg0: i32) -> (i32, i32, i32) {
    %c0_i32 = arith.constant 0 : i32
    %c0_i32_0 = arith.constant 0 : i32
    %c0_i32_1 = arith.constant 0 : i32
    return %arg0, %c0_i32, %c0_i32_0 : i32, i32, i32
  }
  func.func @transform_1(%arg0: i32) -> (i32, i32, i32) {
    %c0_i32 = arith.constant 0 : i32
    %c0_i32_0 = arith.constant 0 : i32
    %c0_i32_1 = arith.constant 0 : i32
    return %arg0, %c0_i32, %c0_i32_0 : i32, i32, i32
  }
  func.func @transform_2(%arg0: i32) -> (i32, i32, i32) {
    %c0_i32 = arith.constant 0 : i32
    %c0_i32_0 = arith.constant 0 : i32
    %c0_i32_1 = arith.constant 0 : i32
    %c0_i32_2 = arith.constant 0 : i32
    return %c0_i32, %c0_i32_0, %c0_i32_1 : i32, i32, i32
  }
  func.func @transform_3(%arg0: i32) -> (i32, i32, i32) {
    %c0_i32 = arith.constant 0 : i32
    %c0_i32_0 = arith.constant 0 : i32
    %c0_i32_1 = arith.constant 0 : i32
    %c0_i32_2 = arith.constant 0 : i32
    return %c0_i32, %c0_i32_0, %c0_i32_1 : i32, i32, i32
  }
  func.func @transform_4(%arg0: i32) -> (i32, i32, i32) {
    %c0_i32 = arith.constant 0 : i32
    %c0_i32_0 = arith.constant 0 : i32
    %c0_i32_1 = arith.constant 0 : i32
    %c0_i32_2 = arith.constant 0 : i32
    return %c0_i32, %c0_i32_0, %c0_i32_1 : i32, i32, i32
  }
  func.func @transform_5(%arg0: i32) -> (i32, i32, i32) {
    %c0_i32 = arith.constant 0 : i32
    %c0_i32_0 = arith.constant 0 : i32
    %c0_i32_1 = arith.constant 0 : i32
    %c0_i32_2 = arith.constant 0 : i32
    return %c0_i32, %c0_i32_0, %c0_i32_1 : i32, i32, i32
  }
  func.func @transform_6(%arg0: i32) -> (i32, i32, i32) {
    %c0_i32 = arith.constant 0 : i32
    %c0_i32_0 = arith.constant 0 : i32
    %c0_i32_1 = arith.constant 0 : i32
    %c0_i32_2 = arith.constant 0 : i32
    return %c0_i32, %c0_i32_0, %c0_i32_1 : i32, i32, i32
  }
  func.func @transform_7(%arg0: i32) -> (i32, i32, i32) {
    %c0_i32 = arith.constant 0 : i32
    %c0_i32_0 = arith.constant 0 : i32
    %c0_i32_1 = arith.constant 0 : i32
    %c0_i32_2 = arith.constant 0 : i32
    return %c0_i32, %c0_i32_0, %c0_i32_1 : i32, i32, i32
  }
  func.func @transform_8(%arg0: i32) -> (i32, i32) {
    %c0_i32 = arith.constant 0 : i32
    %c0_i32_0 = arith.constant 0 : i32
    %c0_i32_1 = arith.constant 0 : i32
    return %c0_i32, %c0_i32_0 : i32, i32
  }
  func.func @transform_9(%arg0: i32) -> (i32, i32) {
    %c0_i32 = arith.constant 0 : i32
    %c0_i32_0 = arith.constant 0 : i32
    %c0_i32_1 = arith.constant 0 : i32
    return %c0_i32, %c0_i32_0 : i32, i32
  }
  func.func @transform_10(%arg0: i32) -> (i32, i32, i32) {
    %c0_i32 = arith.constant 0 : i32
    %c0_i32_0 = arith.constant 0 : i32
    %c0_i32_1 = arith.constant 0 : i32
    %c0_i32_2 = arith.constant 0 : i32
    return %c0_i32, %c0_i32_0, %c0_i32_1 : i32, i32, i32
  }
  func.func @transform_11(%arg0: i32) -> (i32, i32, i32) {
    %c0_i32 = arith.constant 0 : i32
    %c0_i32_0 = arith.constant 0 : i32
    %c0_i32_1 = arith.constant 0 : i32
    %c0_i32_2 = arith.constant 0 : i32
    return %c0_i32, %c0_i32_0, %c0_i32_1 : i32, i32, i32
  }
  func.func @transform_12(%arg0: i32) -> (i32, i32, i32) {
    %c0_i32 = arith.constant 0 : i32
    %c0_i32_0 = arith.constant 0 : i32
    %c0_i32_1 = arith.constant 0 : i32
    %c0_i32_2 = arith.constant 0 : i32
    return %c0_i32, %c0_i32_0, %c0_i32_1 : i32, i32, i32
  }
  func.func @transform_13(%arg0: i32) -> (i32, i32, i32) {
    %c0_i32 = arith.constant 0 : i32
    %c0_i32_0 = arith.constant 0 : i32
    %c0_i32_1 = arith.constant 0 : i32
    %c0_i32_2 = arith.constant 0 : i32
    return %c0_i32, %c0_i32_0, %c0_i32_1 : i32, i32, i32
  }
  func.func @transform_14(%arg0: i32) -> i32 {
    %c0_i32 = arith.constant 0 : i32
    %c0_i32_0 = arith.constant 0 : i32
    return %c0_i32 : i32
  }
  func.func @transform_15(%arg0: i32) -> (i32, i32, i32) {
    %c0_i32 = arith.constant 0 : i32
    %c0_i32_0 = arith.constant 0 : i32
    %c0_i32_1 = arith.constant 0 : i32
    return %arg0, %c0_i32, %c0_i32_0 : i32, i32, i32
  }
  func.func @transform_16(%arg0: i32) -> (i32, i32, i32) {
    %c0_i32 = arith.constant 0 : i32
    %c0_i32_0 = arith.constant 0 : i32
    %c0_i32_1 = arith.constant 0 : i32
    return %arg0, %c0_i32, %c0_i32_0 : i32, i32, i32
  }
}

</mosaic_0001>

<llo_original>
// kernel: cross_transformer_block.1
$region0: #{cross_transformer_block.1}
  #allocation0 [shape = 'u32[]', space=smem, size = 0x4, offset = 0x4, fixed_abs, tag = 'smem constant byte address 0x4 - core index']
  #allocation1 [shape = 'u32[144,128]{1,0:T(1,128)}', space=vmem, size = 0x12000, scoped, tag = 'internal scratch']
  %s0 = inlined_call_operand.vmem [shape: f32[2,64,32], index: 0, kind: input, shape index: {}]
  %s1 = inlined_call_operand.vmem [shape: f32[2,64,32], index: 1, kind: input, shape index: {}]
  %s2 = inlined_call_operand.vmem [shape: f32[2,1,32], index: 2, kind: input, shape index: {}]
  %s3 = inlined_call_operand.vmem [shape: f32[2,1,32], index: 3, kind: input, shape index: {}]
  %s4 = inlined_call_operand.vmem [shape: f32[24,32,8], index: 4, kind: input, shape index: {}]
  %s5 = inlined_call_operand.vmem [shape: f32[24,1,8], index: 5, kind: input, shape index: {}]
  %s6 = inlined_call_operand.vmem [shape: f32[8,8,32], index: 6, kind: input, shape index: {}]
  %s7 = inlined_call_operand.vmem [shape: f32[2,1,32], index: 7, kind: input, shape index: {}]
  %s8 = inlined_call_operand.vmem [shape: f32[1,32], index: 8, kind: input, shape index: {}]
  %s9 = inlined_call_operand.vmem [shape: f32[1,32], index: 9, kind: input, shape index: {}]
  %s10 = inlined_call_operand.vmem [shape: f32[2,32,128], index: 10, kind: input, shape index: {}]
  %s11 = inlined_call_operand.vmem [shape: f32[2,1,128], index: 11, kind: input, shape index: {}]
  %s12 = inlined_call_operand.vmem [shape: f32[2,128,32], index: 12, kind: input, shape index: {}]
  %s13 = inlined_call_operand.vmem [shape: f32[2,1,32], index: 13, kind: input, shape index: {}]
  %s14 = inlined_call_operand.vmem [shape: f32[8], index: 14, kind: input, shape index: {}]
  %s15 = inlined_call_operand.vmem [shape: f32[2,64,32], index: 15, kind: output, shape index: {0}]
  %s16 = inlined_call_operand.vmem [shape: f32[2,64,32], index: 16, kind: output, shape index: {1}]
  %17 = xla_tuple %s15, %s16
  %s18 = sld [smem:[#allocation0]]
  $region105: #{cross_transformer_block.1} parent=0
    _
  %s20 = ssub.s32 1, %s18
  %s21 = scalar_select 0, %s20, %s18
  $region1: #{cross_transformer_block.1} parent=0
    #allocation2 [shape = 'u8[512]{0}', space=smem, size = 0x200, scoped, tag = 'input window, operand 14, single buffered']
    #allocation3 [shape = 's32[2]{0}', space=sflag, size = 0x8, scoped, tag = 'scoped memory for cross_transformer_block.1']
    %22 = vsyncpa [#allocation3], 0
    loop: start=0, step=1, limit=4
    $region2: #{cross_transformer_block.1} parent=1 // loop_pre_header
      _
    $region3: #{cross_transformer_block.1} parent=1 // loop_header
      %s24 = sphi 0, %s28
      %p25 = scmp.ge.s32.totalorder %s24, 4
      %s34 = sphi 0, %s36
      %s37 = sphi 0, %s34
      %s38 = sphi 0, %s37
      %s54 = sphi 0, %s38
      %s60 = sphi 0, %s62
      %s63 = sphi 0, %s60
      %s64 = sphi 0, %s63
      %s80 = sphi 0, %s64
      %s84 = sphi 0, %s84
      %s86 = sphi 0, %s84
      %s87 = sphi 0, %s86
      %s101 = sphi 0, %s87
      %s105 = sphi 0, %s105
      %s107 = sphi 0, %s105
      %s108 = sphi 0, %s107
      %s122 = sphi 0, %s108
      %s126 = sphi 0, %s126
      %s128 = sphi 0, %s126
      %s129 = sphi 0, %s128
      %s143 = sphi 0, %s129
      %s147 = sphi 0, %s147
      %s149 = sphi 0, %s147
      %s150 = sphi 0, %s149
      %s164 = sphi 0, %s150
      %s168 = sphi 0, %s168
      %s170 = sphi 0, %s168
      %s171 = sphi 0, %s170
      %s185 = sphi 0, %s171
      %s189 = sphi 0, %s189
      %s191 = sphi 0, %s189
      %s192 = sphi 0, %s191
      %s206 = sphi 0, %s192
      %s210 = sphi 0, %s210
      %s212 = sphi 0, %s210
      %s213 = sphi 0, %s212
      %s227 = sphi 0, %s213
      %s231 = sphi 0, %s231
      %s233 = sphi 0, %s231
      %s234 = sphi 0, %s233
      %s248 = sphi 0, %s234
      %s252 = sphi 0, %s252
      %s254 = sphi 0, %s252
      %s255 = sphi 0, %s254
      %s269 = sphi 0, %s255
      %s273 = sphi 0, %s273
      %s275 = sphi 0, %s273
      %s276 = sphi 0, %s275
      %s290 = sphi 0, %s276
      %s294 = sphi 0, %s294
      %s296 = sphi 0, %s294
      %s297 = sphi 0, %s296
      %s311 = sphi 0, %s297
      %s315 = sphi 0, %s315
      %s317 = sphi 0, %s315
      %s318 = sphi 0, %s317
      %s332 = sphi 0, %s318
      %s336 = sphi 0, %s336
      %s338 = sphi 0, %s336
      %s339 = sphi 0, %s338
      %s353 = sphi 0, %s339
      %s359 = sphi 0, %s361
      %s362 = sphi 0, %s359
      %s363 = sphi 0, %s362
      %s379 = sphi 0, %s363
      %s385 = sphi 0, %s387
      %s388 = sphi 0, %s385
      %s389 = sphi 0, %s388
      %s405 = sphi 0, %s389
    $region4: #{cross_transformer_block.1} parent=1 // loop_header_branch
      %27 = sbr.rel (%p25) target = $region8
    $region5: #{cross_transformer_block.1} parent=1 // loop_body
      %s29 = ssub.s32 %s24, 1
      %s30 = ssub.s32 %s24, 2
      %s31 = sadd.s32 %s24, 1
      %s32 = ssub.s32 %s24, %s31
      %p33 = scmp.eq.s32.totalorder %s32, 0
      %s35 = sadd.s32 %s34, 1
      %s36 = scalar_select %p33, %s34, %s35
      %p39 = pneg %p33
      %p40 = scmp.eq.s32.totalorder %s24, 1
      %p41 = por %p39, %p40
      %p42 = scmp.ne.s32.totalorder %s34, %s37
      %p43 = scmp.eq.s32.totalorder %s24, 0
      %p44 = por %p42, %p43
      %p45 = scmp.ne.s32.totalorder %s34, %s37
      %p46 = scmp.eq.s32.totalorder %s29, 1
      %p47 = por %p45, %p46
      %p48 = scmp.ne.s32.totalorder %s37, %s38
      %p49 = scmp.eq.s32.totalorder %s29, 0
      %p50 = por %p48, %p49
      %p51 = scmp.ne.s32.totalorder %s37, %s38
      %p52 = scmp.eq.s32.totalorder %s30, 1
      %p53 = por %p51, %p52
      %p55 = scmp.ne.s32.totalorder %s38, %s54
      %p56 = scmp.eq.s32.totalorder %s30, 0
      %p57 = por %p55, %p56
      %s58 = ssub.s32 %s24, %s31
      %p59 = scmp.eq.s32.totalorder %s58, 0
      %s61 = sadd.s32 %s60, 1
      %s62 = scalar_select %p59, %s60, %s61
      %p65 = pneg %p59
      %p66 = scmp.eq.s32.totalorder %s24, 1
      %p67 = por %p65, %p66
      %p68 = scmp.ne.s32.totalorder %s60, %s63
      %p69 = scmp.eq.s32.totalorder %s24, 0
      %p70 = por %p68, %p69
      %p71 = scmp.ne.s32.totalorder %s60, %s63
      %p72 = scmp.eq.s32.totalorder %s29, 1
      %p73 = por %p71, %p72
      %p74 = scmp.ne.s32.totalorder %s63, %s64
      %p75 = scmp.eq.s32.totalorder %s29, 0
      %p76 = por %p74, %p75
      %p77 = scmp.ne.s32.totalorder %s63, %s64
      %p78 = scmp.eq.s32.totalorder %s30, 1
      %p79 = por %p77, %p78
      %p81 = scmp.ne.s32.totalorder %s64, %s80
      %p82 = scmp.eq.s32.totalorder %s30, 0
      %p83 = por %p81, %p82
      %s85 = sadd.s32 %s84, 1
      %p88 = scmp.eq.s32.totalorder %s24, 1
      %p89 = scmp.ne.s32.totalorder %s84, %s86
      %p90 = scmp.eq.s32.totalorder %s24, 0
      %p91 = por %p89, %p90
      %p92 = scmp.ne.s32.totalorder %s84, %s86
      %p93 = scmp.eq.s32.totalorder %s29, 1
      %p94 = por %p92, %p93
      %p95 = scmp.ne.s32.totalorder %s86, %s87
      %p96 = scmp.eq.s32.totalorder %s29, 0
      %p97 = por %p95, %p96
      %p98 = scmp.ne.s32.totalorder %s86, %s87
      %p99 = scmp.eq.s32.totalorder %s30, 1
      %p100 = por %p98, %p99
      %p102 = scmp.ne.s32.totalorder %s87, %s101
      %p103 = scmp.eq.s32.totalorder %s30, 0
      %p104 = por %p102, %p103
      %s106 = sadd.s32 %s105, 1
      %p109 = scmp.eq.s32.totalorder %s24, 1
      %p110 = scmp.ne.s32.totalorder %s105, %s107
      %p111 = scmp.eq.s32.totalorder %s24, 0
      %p112 = por %p110, %p111
      %p113 = scmp.ne.s32.totalorder %s105, %s107
      %p114 = scmp.eq.s32.totalorder %s29, 1
      %p115 = por %p113, %p114
      %p116 = scmp.ne.s32.totalorder %s107, %s108
      %p117 = scmp.eq.s32.totalorder %s29, 0
      %p118 = por %p116, %p117
      %p119 = scmp.ne.s32.totalorder %s107, %s108
      %p120 = scmp.eq.s32.totalorder %s30, 1
      %p121 = por %p119, %p120
      %p123 = scmp.ne.s32.totalorder %s108, %s122
      %p124 = scmp.eq.s32.totalorder %s30, 0
      %p125 = por %p123, %p124
      %s127 = sadd.s32 %s126, 1
      %p130 = scmp.eq.s32.totalorder %s24, 1
      %p131 = scmp.ne.s32.totalorder %s126, %s128
      %p132 = scmp.eq.s32.totalorder %s24, 0
      %p133 = por %p131, %p132
      %p134 = scmp.ne.s32.totalorder %s126, %s128
      %p135 = scmp.eq.s32.totalorder %s29, 1
      %p136 = por %p134, %p135
      %p137 = scmp.ne.s32.totalorder %s128, %s129
      %p138 = scmp.eq.s32.totalorder %s29, 0
      %p139 = por %p137, %p138
      %p140 = scmp.ne.s32.totalorder %s128, %s129
      %p141 = scmp.eq.s32.totalorder %s30, 1
      %p142 = por %p140, %p141
      %p144 = scmp.ne.s32.totalorder %s129, %s143
      %p145 = scmp.eq.s32.totalorder %s30, 0
      %p146 = por %p144, %p145
      %s148 = sadd.s32 %s147, 1
      %p151 = scmp.eq.s32.totalorder %s24, 1
      %p152 = scmp.ne.s32.totalorder %s147, %s149
      %p153 = scmp.eq.s32.totalorder %s24, 0
      %p154 = por %p152, %p153
      %p155 = scmp.ne.s32.totalorder %s147, %s149
      %p156 = scmp.eq.s32.totalorder %s29, 1
      %p157 = por %p155, %p156
      %p158 = scmp.ne.s32.totalorder %s149, %s150
      %p159 = scmp.eq.s32.totalorder %s29, 0
      %p160 = por %p158, %p159
      %p161 = scmp.ne.s32.totalorder %s149, %s150
      %p162 = scmp.eq.s32.totalorder %s30, 1
      %p163 = por %p161, %p162
      %p165 = scmp.ne.s32.totalorder %s150, %s164
      %p166 = scmp.eq.s32.totalorder %s30, 0
      %p167 = por %p165, %p166
      %s169 = sadd.s32 %s168, 1
      %p172 = scmp.eq.s32.totalorder %s24, 1
      %p173 = scmp.ne.s32.totalorder %s168, %s170
      %p174 = scmp.eq.s32.totalorder %s24, 0
      %p175 = por %p173, %p174
      %p176 = scmp.ne.s32.totalorder %s168, %s170
      %p177 = scmp.eq.s32.totalorder %s29, 1
      %p178 = por %p176, %p177
      %p179 = scmp.ne.s32.totalorder %s170, %s171
      %p180 = scmp.eq.s32.totalorder %s29, 0
      %p181 = por %p179, %p180
      %p182 = scmp.ne.s32.totalorder %s170, %s171
      %p183 = scmp.eq.s32.totalorder %s30, 1
      %p184 = por %p182, %p183
      %p186 = scmp.ne.s32.totalorder %s171, %s185
      %p187 = scmp.eq.s32.totalorder %s30, 0
      %p188 = por %p186, %p187
      %s190 = sadd.s32 %s189, 1
      %p193 = scmp.eq.s32.totalorder %s24, 1
      %p194 = scmp.ne.s32.totalorder %s189, %s191
      %p195 = scmp.eq.s32.totalorder %s24, 0
      %p196 = por %p194, %p195
      %p197 = scmp.ne.s32.totalorder %s189, %s191
      %p198 = scmp.eq.s32.totalorder %s29, 1
      %p199 = por %p197, %p198
      %p200 = scmp.ne.s32.totalorder %s191, %s192
      %p201 = scmp.eq.s32.totalorder %s29, 0
      %p202 = por %p200, %p201
      %p203 = scmp.ne.s32.totalorder %s191, %s192
      %p204 = scmp.eq.s32.totalorder %s30, 1
      %p205 = por %p203, %p204
      %p207 = scmp.ne.s32.totalorder %s192, %s206
      %p208 = scmp.eq.s32.totalorder %s30, 0
      %p209 = por %p207, %p208
      %s211 = sadd.s32 %s210, 1
      %p214 = scmp.eq.s32.totalorder %s24, 1
      %p215 = scmp.ne.s32.totalorder %s210, %s212
      %p216 = scmp.eq.s32.totalorder %s24, 0
      %p217 = por %p215, %p216
      %p218 = scmp.ne.s32.totalorder %s210, %s212
      %p219 = scmp.eq.s32.totalorder %s29, 1
      %p220 = por %p218, %p219
      %p221 = scmp.ne.s32.totalorder %s212, %s213
      %p222 = scmp.eq.s32.totalorder %s29, 0
      %p223 = por %p221, %p222
      %p224 = scmp.ne.s32.totalorder %s212, %s213
      %p225 = scmp.eq.s32.totalorder %s30, 1
      %p226 = por %p224, %p225
      %p228 = scmp.ne.s32.totalorder %s213, %s227
      %p229 = scmp.eq.s32.totalorder %s30, 0
      %p230 = por %p228, %p229
      %s232 = sadd.s32 %s231, 1
      %p235 = scmp.eq.s32.totalorder %s24, 1
      %p236 = scmp.ne.s32.totalorder %s231, %s233
      %p237 = scmp.eq.s32.totalorder %s24, 0
      %p238 = por %p236, %p237
      %p239 = scmp.ne.s32.totalorder %s231, %s233
      %p240 = scmp.eq.s32.totalorder %s29, 1
      %p241 = por %p239, %p240
      %p242 = scmp.ne.s32.totalorder %s233, %s234
      %p243 = scmp.eq.s32.totalorder %s29, 0
      %p244 = por %p242, %p243
      %p245 = scmp.ne.s32.totalorder %s233, %s234
      %p246 = scmp.eq.s32.totalorder %s30, 1
      %p247 = por %p245, %p246
      %p249 = scmp.ne.s32.totalorder %s234, %s248
      %p250 = scmp.eq.s32.totalorder %s30, 0
      %p251 = por %p249, %p250
      %s253 = sadd.s32 %s252, 1
      %p256 = scmp.eq.s32.totalorder %s24, 1
      %p257 = scmp.ne.s32.totalorder %s252, %s254
      %p258 = scmp.eq.s32.totalorder %s24, 0
      %p259 = por %p257, %p258
      %p260 = scmp.ne.s32.totalorder %s252, %s254
      %p261 = scmp.eq.s32.totalorder %s29, 1
      %p262 = por %p260, %p261
      %p263 = scmp.ne.s32.totalorder %s254, %s255
      %p264 = scmp.eq.s32.totalorder %s29, 0
      %p265 = por %p263, %p264
      %p266 = scmp.ne.s32.totalorder %s254, %s255
      %p267 = scmp.eq.s32.totalorder %s30, 1
      %p268 = por %p266, %p267
      %p270 = scmp.ne.s32.totalorder %s255, %s269
      %p271 = scmp.eq.s32.totalorder %s30, 0
      %p272 = por %p270, %p271
      %s274 = sadd.s32 %s273, 1
      %p277 = scmp.eq.s32.totalorder %s24, 1
      %p278 = scmp.ne.s32.totalorder %s273, %s275
      %p279 = scmp.eq.s32.totalorder %s24, 0
      %p280 = por %p278, %p279
      %p281 = scmp.ne.s32.totalorder %s273, %s275
      %p282 = scmp.eq.s32.totalorder %s29, 1
      %p283 = por %p281, %p282
      %p284 = scmp.ne.s32.totalorder %s275, %s276
      %p285 = scmp.eq.s32.totalorder %s29, 0
      %p286 = por %p284, %p285
      %p287 = scmp.ne.s32.totalorder %s275, %s276
      %p288 = scmp.eq.s32.totalorder %s30, 1
      %p289 = por %p287, %p288
      %p291 = scmp.ne.s32.totalorder %s276, %s290
      %p292 = scmp.eq.s32.totalorder %s30, 0
      %p293 = por %p291, %p292
      %s295 = sadd.s32 %s294, 1
      %p298 = scmp.eq.s32.totalorder %s24, 1
      %p299 = scmp.ne.s32.totalorder %s294, %s296
      %p300 = scmp.eq.s32.totalorder %s24, 0
      %p301 = por %p299, %p300
      %p302 = scmp.ne.s32.totalorder %s294, %s296
      %p303 = scmp.eq.s32.totalorder %s29, 1
      %p304 = por %p302, %p303
      %p305 = scmp.ne.s32.totalorder %s296, %s297
      %p306 = scmp.eq.s32.totalorder %s29, 0
      %p307 = por %p305, %p306
      %p308 = scmp.ne.s32.totalorder %s296, %s297
      %p309 = scmp.eq.s32.totalorder %s30, 1
      %p310 = por %p308, %p309
      %p312 = scmp.ne.s32.totalorder %s297, %s311
      %p313 = scmp.eq.s32.totalorder %s30, 0
      %p314 = por %p312, %p313
      %s316 = sadd.s32 %s315, 1
      %p319 = scmp.eq.s32.totalorder %s24, 1
      %p320 = scmp.ne.s32.totalorder %s315, %s317
      %p321 = scmp.eq.s32.totalorder %s24, 0
      %p322 = por %p320, %p321
      %p323 = scmp.ne.s32.totalorder %s315, %s317
      %p324 = scmp.eq.s32.totalorder %s29, 1
      %p325 = por %p323, %p324
      %p326 = scmp.ne.s32.totalorder %s317, %s318
      %p327 = scmp.eq.s32.totalorder %s29, 0
      %p328 = por %p326, %p327
      %p329 = scmp.ne.s32.totalorder %s317, %s318
      %p330 = scmp.eq.s32.totalorder %s30, 1
      %p331 = por %p329, %p330
      %p333 = scmp.ne.s32.totalorder %s318, %s332
      %p334 = scmp.eq.s32.totalorder %s30, 0
      %p335 = por %p333, %p334
      %s337 = sadd.s32 %s336, 1
      %p340 = scmp.eq.s32.totalorder %s24, 1
      %p341 = scmp.ne.s32.totalorder %s336, %s338
      %p342 = scmp.eq.s32.totalorder %s24, 0
      %p343 = por %p341, %p342
      %p344 = scmp.ne.s32.totalorder %s336, %s338
      %p345 = scmp.eq.s32.totalorder %s29, 1
      %p346 = por %p344, %p345
      %p347 = scmp.ne.s32.totalorder %s338, %s339
      %p348 = scmp.eq.s32.totalorder %s29, 0
      %p349 = por %p347, %p348
      %p350 = scmp.ne.s32.totalorder %s338, %s339
      %p351 = scmp.eq.s32.totalorder %s30, 1
      %p352 = por %p350, %p351
      %p354 = scmp.ne.s32.totalorder %s339, %s353
      %p355 = scmp.eq.s32.totalorder %s30, 0
      %p356 = por %p354, %p355
      %s357 = ssub.s32 %s24, %s31
      %p358 = scmp.eq.s32.totalorder %s357, 0
      %s360 = sadd.s32 %s359, 1
      %s361 = scalar_select %p358, %s359, %s360
      %p364 = pneg %p358
      %p365 = scmp.eq.s32.totalorder %s24, 1
      %p366 = por %p364, %p365
      %p367 = scmp.ne.s32.totalorder %s359, %s362
      %p368 = scmp.eq.s32.totalorder %s24, 0
      %p369 = por %p367, %p368
      %p370 = scmp.ne.s32.totalorder %s359, %s362
      %p371 = scmp.eq.s32.totalorder %s29, 1
      %p372 = por %p370, %p371
      %p373 = scmp.ne.s32.totalorder %s362, %s363
      %p374 = scmp.eq.s32.totalorder %s29, 0
      %p375 = por %p373, %p374
      %p376 = scmp.ne.s32.totalorder %s362, %s363
      %p377 = scmp.eq.s32.totalorder %s30, 1
      %p378 = por %p376, %p377
      %p380 = scmp.ne.s32.totalorder %s363, %s379
      %p381 = scmp.eq.s32.totalorder %s30, 0
      %p382 = por %p380, %p381
      %s383 = ssub.s32 %s24, %s31
      %p384 = scmp.eq.s32.totalorder %s383, 0
      %s386 = sadd.s32 %s385, 1
      %s387 = scalar_select %p384, %s385, %s386
      %p390 = pneg %p384
      %p391 = scmp.eq.s32.totalorder %s24, 1
      %p392 = por %p390, %p391
      %p393 = scmp.ne.s32.totalorder %s385, %s388
      %p394 = scmp.eq.s32.totalorder %s24, 0
      %p395 = por %p393, %p394
      %p396 = scmp.ne.s32.totalorder %s385, %s388
      %p397 = scmp.eq.s32.totalorder %s29, 1
      %p398 = por %p396, %p397
      %p399 = scmp.ne.s32.totalorder %s388, %s389
      %p400 = scmp.eq.s32.totalorder %s29, 0
      %p401 = por %p399, %p400
      %p402 = scmp.ne.s32.totalorder %s388, %s389
      %p403 = scmp.eq.s32.totalorder %s30, 1
      %p404 = por %p402, %p403
      %p406 = scmp.ne.s32.totalorder %s389, %s405
      %p407 = scmp.eq.s32.totalorder %s30, 0
      %p408 = por %p406, %p407
      %p409 = scmp.le.s32.totalorder 1, %s24
      %p410 = scmp.lt.s32.totalorder %s24, 3
      %p411 = pnand %p409, %p410
      %p412 = pneg %p411
      // Predicated region
      $region9: #{cross_transformer_block.1} parent=5 // pred_check
        _
      $region10: #{cross_transformer_block.1} parent=5 // pred_check_branch
        %414 = sbr.rel (%p411) target = $region12
      $region11: #{cross_transformer_block.1} parent=5 // pred_region
        %s415 = ssub.s32 %s24, 1
        // Predicated region
        $region13: #{cross_transformer_block.1} parent=11 // pred_check
          %p416 = pneg %p97
        $region14: #{cross_transformer_block.1} parent=11 // pred_check_branch
          %418 = sbr.rel (%p416) target = $region16
        $region15: #{cross_transformer_block.1} parent=11 // pred_region
          _
        $region16: #{cross_transformer_block.1} parent=11 // pred_fallthru
          _
        // Predicated region
        $region17: #{cross_transformer_block.1} parent=11 // pred_check
          %p419 = pneg %p118
        $region18: #{cross_transformer_block.1} parent=11 // pred_check_branch
          %421 = sbr.rel (%p419) target = $region20
        $region19: #{cross_transformer_block.1} parent=11 // pred_region
          _
        $region20: #{cross_transformer_block.1} parent=11 // pred_fallthru
          _
        // Predicated region
        $region21: #{cross_transformer_block.1} parent=11 // pred_check
          %p422 = pneg %p139
        $region22: #{cross_transformer_block.1} parent=11 // pred_check_branch
          %424 = sbr.rel (%p422) target = $region24
        $region23: #{cross_transformer_block.1} parent=11 // pred_region
          _
        $region24: #{cross_transformer_block.1} parent=11 // pred_fallthru
          _
        // Predicated region
        $region25: #{cross_transformer_block.1} parent=11 // pred_check
          %p425 = pneg %p160
        $region26: #{cross_transformer_block.1} parent=11 // pred_check_branch
          %427 = sbr.rel (%p425) target = $region28
        $region27: #{cross_transformer_block.1} parent=11 // pred_region
          _
        $region28: #{cross_transformer_block.1} parent=11 // pred_fallthru
          _
        // Predicated region
        $region29: #{cross_transformer_block.1} parent=11 // pred_check
          %p428 = pneg %p181
        $region30: #{cross_transformer_block.1} parent=11 // pred_check_branch
          %430 = sbr.rel (%p428) target = $region32
        $region31: #{cross_transformer_block.1} parent=11 // pred_region
          _
        $region32: #{cross_transformer_block.1} parent=11 // pred_fallthru
          _
        // Predicated region
        $region33: #{cross_transformer_block.1} parent=11 // pred_check
          %p431 = pneg %p202
        $region34: #{cross_transformer_block.1} parent=11 // pred_check_branch
          %433 = sbr.rel (%p431) target = $region36
        $region35: #{cross_transformer_block.1} parent=11 // pred_region
          _
        $region36: #{cross_transformer_block.1} parent=11 // pred_fallthru
          _
        // Predicated region
        $region37: #{cross_transformer_block.1} parent=11 // pred_check
          %p434 = pneg %p223
        $region38: #{cross_transformer_block.1} parent=11 // pred_check_branch
          %436 = sbr.rel (%p434) target = $region40
        $region39: #{cross_transformer_block.1} parent=11 // pred_region
          _
        $region40: #{cross_transformer_block.1} parent=11 // pred_fallthru
          _
        // Predicated region
        $region41: #{cross_transformer_block.1} parent=11 // pred_check
          %p437 = pneg %p244
        $region42: #{cross_transformer_block.1} parent=11 // pred_check_branch
          %439 = sbr.rel (%p437) target = $region44
        $region43: #{cross_transformer_block.1} parent=11 // pred_region
          _
        $region44: #{cross_transformer_block.1} parent=11 // pred_fallthru
          _
        // Predicated region
        $region45: #{cross_transformer_block.1} parent=11 // pred_check
          %p440 = pneg %p265
        $region46: #{cross_transformer_block.1} parent=11 // pred_check_branch
          %442 = sbr.rel (%p440) target = $region48
        $region47: #{cross_transformer_block.1} parent=11 // pred_region
          _
        $region48: #{cross_transformer_block.1} parent=11 // pred_fallthru
          _
        // Predicated region
        $region49: #{cross_transformer_block.1} parent=11 // pred_check
          %p443 = pneg %p286
        $region50: #{cross_transformer_block.1} parent=11 // pred_check_branch
          %445 = sbr.rel (%p443) target = $region52
        $region51: #{cross_transformer_block.1} parent=11 // pred_region
          _
        $region52: #{cross_transformer_block.1} parent=11 // pred_fallthru
          _
        // Predicated region
        $region53: #{cross_transformer_block.1} parent=11 // pred_check
          %p446 = pneg %p307
        $region54: #{cross_transformer_block.1} parent=11 // pred_check_branch
          %448 = sbr.rel (%p446) target = $region56
        $region55: #{cross_transformer_block.1} parent=11 // pred_region
          _
        $region56: #{cross_transformer_block.1} parent=11 // pred_fallthru
          _
        // Predicated region
        $region57: #{cross_transformer_block.1} parent=11 // pred_check
          %p449 = pneg %p328
        $region58: #{cross_transformer_block.1} parent=11 // pred_check_branch
          %451 = sbr.rel (%p449) target = $region60
        $region59: #{cross_transformer_block.1} parent=11 // pred_region
          _
        $region60: #{cross_transformer_block.1} parent=11 // pred_fallthru
          _
        // Predicated region
        $region61: #{cross_transformer_block.1} parent=11 // pred_check
          %p452 = pneg %p349
        $region62: #{cross_transformer_block.1} parent=11 // pred_check_branch
          %454 = sbr.rel (%p452) target = $region64
        $region63: #{cross_transformer_block.1} parent=11 // pred_region
          %s456 = ssub.s32 16, 16
          %457 = vsyncadd [#allocation3], %s456
          %s459 = sshll.u32 %s14, 4
          %s460 = int_to_ptr.vmem [resolvable:$true] %s459
          %462 = dma.vmem_to_smem %s460, 16, [#allocation2], [#allocation3]
        $region64: #{cross_transformer_block.1} parent=11 // pred_fallthru
          _
      $region12: #{cross_transformer_block.1} parent=5 // pred_fallthru
        _
      %p463 = scmp.lt.s32.totalorder %s24, 2
      // Predicated region
      $region65: #{cross_transformer_block.1} parent=5 // pred_check
        %p464 = pneg %p463
      $region66: #{cross_transformer_block.1} parent=5 // pred_check_branch
        %466 = sbr.rel (%p464) target = $region68
      $region67: #{cross_transformer_block.1} parent=5 // pred_region
        // Predicated region
        $region69: #{cross_transformer_block.1} parent=67 // pred_check
          %p467 = pneg %p44
        $region70: #{cross_transformer_block.1} parent=67 // pred_check_branch
          %469 = sbr.rel (%p467) target = $region72
        $region71: #{cross_transformer_block.1} parent=67 // pred_region
          %p470 = scmp.lt.s32.totalorder %s24, 1
          %s471 = scalar_select %p470, %s24, 1
          %s472 = smul.addr %s471, 8
          %s473 = smul.addr %s472, 8
          %s474 = scalar_lea.vmem %s0, %s473
        $region72: #{cross_transformer_block.1} parent=67 // pred_fallthru
          _
        // Predicated region
        $region73: #{cross_transformer_block.1} parent=67 // pred_check
          %p475 = pneg %p70
        $region74: #{cross_transformer_block.1} parent=67 // pred_check_branch
          %477 = sbr.rel (%p475) target = $region76
        $region75: #{cross_transformer_block.1} parent=67 // pred_region
          %p478 = scmp.lt.s32.totalorder %s24, 1
          %s479 = scalar_select %p478, %s24, 1
          %s480 = smul.addr %s479, 8
          %s481 = smul.addr %s480, 8
          %s482 = scalar_lea.vmem %s1, %s481
        $region76: #{cross_transformer_block.1} parent=67 // pred_fallthru
          _
      $region68: #{cross_transformer_block.1} parent=5 // pred_fallthru
        _
      %p483 = scmp.le.s32.totalorder 1, %s24
      %p484 = scmp.lt.s32.totalorder %s24, 3
      %p485 = pnand %p483, %p484
      %p486 = pneg %p485
      // Predicated region
      $region77: #{cross_transformer_block.1} parent=5 // pred_check
        _
      $region78: #{cross_transformer_block.1} parent=5 // pred_check_branch
        %488 = sbr.rel (%p485) target = $region80
      $region79: #{cross_transformer_block.1} parent=5 // pred_region
        %s489 = ssub.s32 %s24, 1
        // Predicated region
        $region81: #{cross_transformer_block.1} parent=79 // pred_check
          %p490 = pneg %p349
        $region82: #{cross_transformer_block.1} parent=79 // pred_check_branch
          %492 = sbr.rel (%p490) target = $region84
        $region83: #{cross_transformer_block.1} parent=79 // pred_region
          %493 = dma.done [#allocation3], 16
        $region84: #{cross_transformer_block.1} parent=79 // pred_fallthru
          _
        %494 = sfence
        %p495 = scmp.lt.s32.totalorder %s29, 1
        %s496 = scalar_select %p495, %s29, 1
        %s497 = smul.addr %s496, 8
        %s498 = smul.addr %s497, 8
        %s499 = scalar_lea.vmem %s0, %s498
        %p500 = pneg %p50
        %p501 = pneg %p47
        %p502 = scmp.lt.s32.totalorder %s29, 1
        %s503 = scalar_select %p502, %s29, 1
        %s504 = smul.addr %s503, 8
        %s505 = smul.addr %s504, 8
        %s506 = scalar_lea.vmem %s1, %s505
        %p507 = pneg %p76
        %p508 = pneg %p73
        %p509 = pneg %p97
        %p510 = pneg %p94
        %p511 = pneg %p118
        %p512 = pneg %p115
        %p513 = pneg %p139
        %p514 = pneg %p136
        %p515 = pneg %p160
        %p516 = pneg %p157
        %p517 = pneg %p181
        %p518 = pneg %p178
        %p519 = pneg %p202
        %p520 = pneg %p199
        %p521 = pneg %p223
        %p522 = pneg %p220
        %p523 = pneg %p244
        %p524 = pneg %p241
        %p525 = pneg %p265
        %p526 = pneg %p262
        %p527 = pneg %p286
        %p528 = pneg %p283
        %p529 = pneg %p307
        %p530 = pneg %p304
        %p531 = pneg %p328
        %p532 = pneg %p325
        %p533 = pneg %p349
        %p534 = pneg %p346
        %p535 = pneg %p375
        %p536 = pneg %p372
        %p537 = scmp.lt.s32.totalorder %s29, 1
        %s538 = scalar_select %p537, %s29, 1
        %s539 = smul.addr %s538, 8
        %s540 = smul.addr %s539, 8
        %s541 = scalar_lea.vmem %s15, %s540
        %p542 = pneg %p401
        %p543 = pneg %p398
        %p544 = scmp.lt.s32.totalorder %s29, 1
        %s545 = scalar_select %p544, %s29, 1
        %s546 = smul.addr %s545, 8
        %s547 = smul.addr %s546, 8
        %s548 = scalar_lea.vmem %s16, %s547
        %p549 = scmp.lt.s32.totalorder %s29, 1
        %s550 = scalar_select %p549, %s29, 1
        %s551 = smul.addr %s550, 8
        %s552 = smul.addr %s551, 8
        %s553 = scalar_lea.vmem %s0, %s552
        %p554 = scmp.lt.s32.totalorder %s29, 1
        %s555 = scalar_select %p554, %s29, 1
        %s556 = smul.addr %s555, 8
        %s557 = smul.addr %s556, 8
        %s558 = scalar_lea.vmem %s1, %s557
        %p559 = scmp.lt.s32.totalorder %s29, 1
        %s560 = scalar_select %p559, %s29, 1
        %s561 = smul.addr %s560, 8
        %s562 = smul.addr %s561, 8
        %s563 = scalar_lea.vmem %s15, %s562
        %p564 = scmp.lt.s32.totalorder %s29, 1
        %s565 = scalar_select %p564, %s29, 1
        %s566 = smul.addr %s565, 8
        %s567 = smul.addr %s566, 8
        %s568 = scalar_lea.vmem %s16, %s567
        %v569 = vld [vmem:[%s553] sm:$0xff]
        %v570 = vld [vmem:[%s553 + $0x8] sm:$0xff]
        %v571 = vld [vmem:[%s553 + $0x10] sm:$0xff]
        %v572 = vld [vmem:[%s553 + $0x18] sm:$0xff]
        %v573 = vld [vmem:[%s553 + $0x20] sm:$0xff]
        %v574 = vld [vmem:[%s553 + $0x28] sm:$0xff]
        %v575 = vld [vmem:[%s553 + $0x30] sm:$0xff]
        %v576 = vld [vmem:[%s553 + $0x38] sm:$0xff]
        %v577 = vld [vmem:[%s558] sm:$0xff]
        %v578 = vld [vmem:[%s558 + $0x8] sm:$0xff]
        %v579 = vld [vmem:[%s558 + $0x10] sm:$0xff]
        %v580 = vld [vmem:[%s558 + $0x18] sm:$0xff]
        %v581 = vld [vmem:[%s558 + $0x20] sm:$0xff]
        %v582 = vld [vmem:[%s558 + $0x28] sm:$0xff]
        %v583 = vld [vmem:[%s558 + $0x30] sm:$0xff]
        %v584 = vld [vmem:[%s558 + $0x38] sm:$0xff]
        %v585 = vld [vmem:[%s2] sm:$0x1]
        %v586 = vld [vmem:[%s3] sm:$0x1]
        %vm587 = vcmask 261120
        %v588 = vsel %vm587, %v569, 0.0
        %589 = vadd.xlane.f32.xlu0 %v588
        %v590 = vpop.xlane.xlu0 %589
        %v591 = vsel %vm587, %v570, 0.0
        %592 = vadd.xlane.f32.xlu0 %v591
        %v593 = vpop.xlane.xlu0 %592
        %v594 = vsel %vm587, %v571, 0.0
        %595 = vadd.xlane.f32.xlu0 %v594
        %v596 = vpop.xlane.xlu0 %595
        %v597 = vsel %vm587, %v572, 0.0
        %598 = vadd.xlane.f32.xlu0 %v597
        %v599 = vpop.xlane.xlu0 %598
        %v600 = vsel %vm587, %v573, 0.0
        %601 = vadd.xlane.f32.xlu0 %v600
        %v602 = vpop.xlane.xlu0 %601
        %v603 = vsel %vm587, %v574, 0.0
        %604 = vadd.xlane.f32.xlu0 %v603
        %v605 = vpop.xlane.xlu0 %604
        %v606 = vsel %vm587, %v575, 0.0
        %607 = vadd.xlane.f32.xlu0 %v606
        %v608 = vpop.xlane.xlu0 %607
        %v609 = vsel %vm587, %v576, 0.0
        %610 = vadd.xlane.f32.xlu0 %v609
        %v611 = vpop.xlane.xlu0 %610
        %v612 = vrcp.pop 32.0
        %v613 = vmul.f32 %v590, %v612
        %v614 = vmul.f32 %v593, %v612
        %v615 = vmul.f32 %v596, %v612
        %v616 = vmul.f32 %v599, %v612
        %v617 = vmul.f32 %v602, %v612
        %v618 = vmul.f32 %v605, %v612
        %v619 = vmul.f32 %v608, %v612
        %v620 = vmul.f32 %v611, %v612
        %v621 = vsub.f32 %v569, %v613
        %v622 = vsub.f32 %v570, %v614
        %v623 = vsub.f32 %v571, %v615
        %v624 = vsub.f32 %v572, %v616
        %v625 = vsub.f32 %v573, %v617
        %v626 = vsub.f32 %v574, %v618
        %v627 = vsub.f32 %v575, %v619
        %v628 = vsub.f32 %v576, %v620
        %v629 = vmul.f32 %v621, %v621
        %v630 = vmul.f32 %v622, %v622
        %v631 = vmul.f32 %v623, %v623
        %v632 = vmul.f32 %v624, %v624
        %v633 = vmul.f32 %v625, %v625
        %v634 = vmul.f32 %v626, %v626
        %v635 = vmul.f32 %v627, %v627
        %v636 = vmul.f32 %v628, %v628
        %v637 = vsel %vm587, %v629, 0.0
        %638 = vadd.xlane.f32.xlu0 %v637
        %v639 = vpop.xlane.xlu0 %638
        %v640 = vsel %vm587, %v630, 0.0
        %641 = vadd.xlane.f32.xlu0 %v640
        %v642 = vpop.xlane.xlu0 %641
        %v643 = vsel %vm587, %v631, 0.0
        %644 = vadd.xlane.f32.xlu0 %v643
        %v645 = vpop.xlane.xlu0 %644
        %v646 = vsel %vm587, %v632, 0.0
        %647 = vadd.xlane.f32.xlu0 %v646
        %v648 = vpop.xlane.xlu0 %647
        %v649 = vsel %vm587, %v633, 0.0
        %650 = vadd.xlane.f32.xlu0 %v649
        %v651 = vpop.xlane.xlu0 %650
        %v652 = vsel %vm587, %v634, 0.0
        %653 = vadd.xlane.f32.xlu0 %v652
        %v654 = vpop.xlane.xlu0 %653
        %v655 = vsel %vm587, %v635, 0.0
        %656 = vadd.xlane.f32.xlu0 %v655
        %v657 = vpop.xlane.xlu0 %656
        %v658 = vsel %vm587, %v636, 0.0
        %659 = vadd.xlane.f32.xlu0 %v658
        %v660 = vpop.xlane.xlu0 %659
        %v661 = vmul.f32 %v639, %v612
        %v662 = vmul.f32 %v642, %v612
        %v663 = vmul.f32 %v645, %v612
        %v664 = vmul.f32 %v648, %v612
        %v665 = vmul.f32 %v651, %v612
        %v666 = vmul.f32 %v654, %v612
        %v667 = vmul.f32 %v657, %v612
        %v668 = vmul.f32 %v660, %v612
        %v669 = vadd.f32 %v661, 1e-05
        %v670 = vadd.f32 %v662, 1e-05
        %v671 = vadd.f32 %v663, 1e-05
        %v672 = vadd.f32 %v664, 1e-05
        %v673 = vadd.f32 %v665, 1e-05
        %v674 = vadd.f32 %v666, 1e-05
        %v675 = vadd.f32 %v667, 1e-05
        %v676 = vadd.f32 %v668, 1e-05
        %v677 = vrsqrt.pop %v669
        %v678 = vrsqrt.pop %v670
        %v679 = vrsqrt.pop %v671
        %v680 = vrsqrt.pop %v672
        %v681 = vrsqrt.pop %v673
        %v682 = vrsqrt.pop %v674
        %v683 = vrsqrt.pop %v675
        %v684 = vrsqrt.pop %v676
        %v685 = vmul.f32 %v621, %v677
        %v686 = vmul.f32 %v622, %v678
        %v687 = vmul.f32 %v623, %v679
        %v688 = vmul.f32 %v624, %v680
        %v689 = vmul.f32 %v625, %v681
        %v690 = vmul.f32 %v626, %v682
        %v691 = vmul.f32 %v627, %v683
        %v692 = vmul.f32 %v628, %v684
        %v694 = vlaneseq
        %v695 = vshrl.u32 %v694, 7
        %v696 = vsub.s32 0, %v695
        %v697 = vrot.slane %v585, %v696
        %v699 = vmul.f32 %v685, %v697
        %v700 = vmul.f32 %v686, %v697
        %v701 = vmul.f32 %v687, %v697
        %v702 = vmul.f32 %v688, %v697
        %v703 = vmul.f32 %v689, %v697
        %v704 = vmul.f32 %v690, %v697
        %v705 = vmul.f32 %v691, %v697
        %v706 = vmul.f32 %v692, %v697
        %v708 = vlaneseq
        %v709 = vshrl.u32 %v708, 7
        %v710 = vsub.s32 0, %v709
        %v711 = vrot.slane %v586, %v710
        %v713 = vadd.f32 %v699, %v711
        %v714 = vadd.f32 %v700, %v711
        %v715 = vadd.f32 %v701, %v711
        %v716 = vadd.f32 %v702, %v711
        %v717 = vadd.f32 %v703, %v711
        %v718 = vadd.f32 %v704, %v711
        %v719 = vadd.f32 %v705, %v711
        %v720 = vadd.f32 %v706, %v711
        %s721 = scalar_lea.vmem %s2, 1
        %v722 = vld [vmem:[%s721] sm:$0x1]
        %s723 = scalar_lea.vmem %s3, 1
        %v724 = vld [vmem:[%s723] sm:$0x1]
        %v725 = vsel %vm587, %v577, 0.0
        %726 = vadd.xlane.f32.xlu0 %v725
        %v727 = vpop.xlane.xlu0 %726
        %v728 = vsel %vm587, %v578, 0.0
        %729 = vadd.xlane.f32.xlu0 %v728
        %v730 = vpop.xlane.xlu0 %729
        %v731 = vsel %vm587, %v579, 0.0
        %732 = vadd.xlane.f32.xlu0 %v731
        %v733 = vpop.xlane.xlu0 %732
        %v734 = vsel %vm587, %v580, 0.0
        %735 = vadd.xlane.f32.xlu0 %v734
        %v736 = vpop.xlane.xlu0 %735
        %v737 = vsel %vm587, %v581, 0.0
        %738 = vadd.xlane.f32.xlu0 %v737
        %v739 = vpop.xlane.xlu0 %738
        %v740 = vsel %vm587, %v582, 0.0
        %741 = vadd.xlane.f32.xlu0 %v740
        %v742 = vpop.xlane.xlu0 %741
        %v743 = vsel %vm587, %v583, 0.0
        %744 = vadd.xlane.f32.xlu0 %v743
        %v745 = vpop.xlane.xlu0 %744
        %v746 = vsel %vm587, %v584, 0.0
        %747 = vadd.xlane.f32.xlu0 %v746
        %v748 = vpop.xlane.xlu0 %747
        %v749 = vmul.f32 %v727, %v612
        %v750 = vmul.f32 %v730, %v612
        %v751 = vmul.f32 %v733, %v612
        %v752 = vmul.f32 %v736, %v612
        %v753 = vmul.f32 %v739, %v612
        %v754 = vmul.f32 %v742, %v612
        %v755 = vmul.f32 %v745, %v612
        %v756 = vmul.f32 %v748, %v612
        %v757 = vsub.f32 %v577, %v749
        %v758 = vsub.f32 %v578, %v750
        %v759 = vsub.f32 %v579, %v751
        %v760 = vsub.f32 %v580, %v752
        %v761 = vsub.f32 %v581, %v753
        %v762 = vsub.f32 %v582, %v754
        %v763 = vsub.f32 %v583, %v755
        %v764 = vsub.f32 %v584, %v756
        %v765 = vmul.f32 %v757, %v757
        %v766 = vmul.f32 %v758, %v758
        %v767 = vmul.f32 %v759, %v759
        %v768 = vmul.f32 %v760, %v760
        %v769 = vmul.f32 %v761, %v761
        %v770 = vmul.f32 %v762, %v762
        %v771 = vmul.f32 %v763, %v763
        %v772 = vmul.f32 %v764, %v764
        %v773 = vsel %vm587, %v765, 0.0
        %774 = vadd.xlane.f32.xlu0 %v773
        %v775 = vpop.xlane.xlu0 %774
        %v776 = vsel %vm587, %v766, 0.0
        %777 = vadd.xlane.f32.xlu0 %v776
        %v778 = vpop.xlane.xlu0 %777
        %v779 = vsel %vm587, %v767, 0.0
        %780 = vadd.xlane.f32.xlu0 %v779
        %v781 = vpop.xlane.xlu0 %780
        %v782 = vsel %vm587, %v768, 0.0
        %783 = vadd.xlane.f32.xlu0 %v782
        %v784 = vpop.xlane.xlu0 %783
        %v785 = vsel %vm587, %v769, 0.0
        %786 = vadd.xlane.f32.xlu0 %v785
        %v787 = vpop.xlane.xlu0 %786
        %v788 = vsel %vm587, %v770, 0.0
        %789 = vadd.xlane.f32.xlu0 %v788
        %v790 = vpop.xlane.xlu0 %789
        %v791 = vsel %vm587, %v771, 0.0
        %792 = vadd.xlane.f32.xlu0 %v791
        %v793 = vpop.xlane.xlu0 %792
        %v794 = vsel %vm587, %v772, 0.0
        %795 = vadd.xlane.f32.xlu0 %v794
        %v796 = vpop.xlane.xlu0 %795
        %v797 = vmul.f32 %v775, %v612
        %v798 = vmul.f32 %v778, %v612
        %v799 = vmul.f32 %v781, %v612
        %v800 = vmul.f32 %v784, %v612
        %v801 = vmul.f32 %v787, %v612
        %v802 = vmul.f32 %v790, %v612
        %v803 = vmul.f32 %v793, %v612
        %v804 = vmul.f32 %v796, %v612
        %v805 = vadd.f32 %v797, 1e-05
        %v806 = vadd.f32 %v798, 1e-05
        %v807 = vadd.f32 %v799, 1e-05
        %v808 = vadd.f32 %v800, 1e-05
        %v809 = vadd.f32 %v801, 1e-05
        %v810 = vadd.f32 %v802, 1e-05
        %v811 = vadd.f32 %v803, 1e-05
        %v812 = vadd.f32 %v804, 1e-05
        %v813 = vrsqrt.pop %v805
        %v814 = vrsqrt.pop %v806
        %v815 = vrsqrt.pop %v807
        %v816 = vrsqrt.pop %v808
        %v817 = vrsqrt.pop %v809
        %v818 = vrsqrt.pop %v810
        %v819 = vrsqrt.pop %v811
        %v820 = vrsqrt.pop %v812
        %v821 = vmul.f32 %v757, %v813
        %v822 = vmul.f32 %v758, %v814
        %v823 = vmul.f32 %v759, %v815
        %v824 = vmul.f32 %v760, %v816
        %v825 = vmul.f32 %v761, %v817
        %v826 = vmul.f32 %v762, %v818
        %v827 = vmul.f32 %v763, %v819
        %v828 = vmul.f32 %v764, %v820
        %v830 = vlaneseq
        %v831 = vshrl.u32 %v830, 7
        %v832 = vsub.s32 0, %v831
        %v833 = vrot.slane %v722, %v832
        %v835 = vmul.f32 %v821, %v833
        %v836 = vmul.f32 %v822, %v833
        %v837 = vmul.f32 %v823, %v833
        %v838 = vmul.f32 %v824, %v833
        %v839 = vmul.f32 %v825, %v833
        %v840 = vmul.f32 %v826, %v833
        %v841 = vmul.f32 %v827, %v833
        %v842 = vmul.f32 %v828, %v833
        %v844 = vlaneseq
        %v845 = vshrl.u32 %v844, 7
        %v846 = vsub.s32 0, %v845
        %v847 = vrot.slane %v724, %v846
        %v849 = vadd.f32 %v835, %v847
        %v850 = vadd.f32 %v836, %v847
        %v851 = vadd.f32 %v837, %v847
        %v852 = vadd.f32 %v838, %v847
        %v853 = vadd.f32 %v839, %v847
        %v854 = vadd.f32 %v840, %v847
        %v855 = vadd.f32 %v841, %v847
        %v856 = vadd.f32 %v842, %v847
        %s857 = scalar_lea.vmem %s4, 384
        %v858 = vld [vmem:[%s857] sm:$0xff]
        %v859 = vld [vmem:[%s857 + $0x8] sm:$0xff]
        %v860 = vld [vmem:[%s857 + $0x10] sm:$0xff]
        %v861 = vld [vmem:[%s857 + $0x18] sm:$0xff]
        %s862 = scalar_lea.vmem %s5, 12
        %v863 = vld [vmem:[%s862] sm:$0x1]
        %v865 = vlaneseq
        %v866 = vshrl.u32 %v865, 7
        %v867 = vsub.s32 0, %v866
        %v868 = vrot.slane %v863, %v867
        %v871 = vsel %vm587, %v849, 0
        %v874 = vsel %vm587, %v850, 0
        %v877 = vsel %vm587, %v851, 0
        %v880 = vsel %vm587, %v852, 0
        %v883 = vsel %vm587, %v853, 0
        %v886 = vsel %vm587, %v854, 0
        %v889 = vsel %vm587, %v855, 0
        %v892 = vsel %vm587, %v856, 0
        %894 = vmatprep.subr.mxu0 0.0
        %895 = vmatpush1.msra.mxu0 0.0
        %896 = vmatprep.subr.mxu0 0.0
        %897 = vmatpush1.msra.mxu0 0.0
        %898 = vmatprep.subr.mxu0 0.0
        %899 = vmatpush1.msra.mxu0 0.0
        %900 = vmatprep.subr.mxu0 0.0
        %901 = vmatpush1.msra.mxu0 0.0
        %902 = vmatprep.subr.mxu0 0.0
        %903 = vmatpush1.msra.mxu0 0.0
        %904 = vmatprep.subr.mxu0 0.0
        %905 = vmatpush1.msra.mxu0 0.0
        %906 = vmatprep.subr.mxu0 0.0
        %907 = vmatpush1.msra.mxu0 0.0
        %908 = vmatprep.subr.mxu0 0.0
        %909 = vmatpush1.msra.mxu0 0.0
        %910 = vmatprep.subr.mxu0 0.0
        %911 = vmatpush1.msra.mxu0 0.0
        %912 = vmatprep.subr.mxu0 0.0
        %913 = vmatpush1.msra.mxu0 0.0
        %914 = vmatprep.subr.mxu0 0.0
        %915 = vmatpush1.msra.mxu0 0.0
        %916 = vmatprep.subr.mxu0 0.0
        %917 = vmatpush1.msra.mxu0 0.0
        %918 = vmatprep.subr.mxu0 0.0
        %919 = vmatpush1.msra.mxu0 %v861
        %920 = vmatprep.subr.mxu0 0.0
        %921 = vmatpush1.msra.mxu0 %v860
        %922 = vmatprep.subr.mxu0 0.0
        %923 = vmatpush1.msra.mxu0 %v859
        %924 = vmatprep.subr.mxu0 0.0
        %925 = vmatpush1.msra.mxu0 %v858
        %926 = vmatprep.subr.mxu0 0.0
        %927 = vmatpush2.msra.mxu0 0.0
        %928 = vmatprep.subr.mxu0 0.0
        %929 = vmatpush2.msra.mxu0 0.0
        %930 = vmatprep.subr.mxu0 0.0
        %931 = vmatpush2.msra.mxu0 0.0
        %932 = vmatprep.subr.mxu0 0.0
        %933 = vmatpush2.msra.mxu0 0.0
        %934 = vmatprep.subr.mxu0 0.0
        %935 = vmatpush2.msra.mxu0 0.0
        %936 = vmatprep.subr.mxu0 0.0
        %937 = vmatpush2.msra.mxu0 0.0
        %938 = vmatprep.subr.mxu0 0.0
        %939 = vmatpush2.msra.mxu0 0.0
        %940 = vmatprep.subr.mxu0 0.0
        %941 = vmatpush2.msra.mxu0 0.0
        %942 = vmatprep.subr.mxu0 0.0
        %943 = vmatpush2.msra.mxu0 0.0
        %944 = vmatprep.subr.mxu0 0.0
        %945 = vmatpush2.msra.mxu0 0.0
        %946 = vmatprep.subr.mxu0 0.0
        %947 = vmatpush2.msra.mxu0 0.0
        %948 = vmatprep.subr.mxu0 0.0
        %949 = vmatpush2.msra.mxu0 0.0
        %950 = vmatprep.subr.mxu0 0.0
        %951 = vmatpush2.msra.mxu0 0.0
        %952 = vmatprep.subr.mxu0 0.0
        %953 = vmatpush2.msra.mxu0 0.0
        %954 = vmatprep.subr.mxu0 0.0
        %955 = vmatpush2.msra.mxu0 0.0
        %956 = vmatprep.subr.mxu0 0.0
        %957 = vmatpush2.msra.mxu0 0.0
        %958 = vmatprep.mubr.f32.mxu0 0.0
        %959 = vmatmul.mubr.f32.gmra.mxu0 %v871
        %v960 = vpop.f32.mrf.mxu0
        %v961 = vadd.f32 %v868, %v960
        %v962 = vpop.f32.mrf.mxu0
        %963 = vmatprep.mubr.f32.mxu0 0.0
        %964 = vmatmul.mubr.f32.gmra.mxu0 %v874
        %v965 = vpop.f32.mrf.mxu0
        %v966 = vadd.f32 %v868, %v965
        %v967 = vpop.f32.mrf.mxu0
        %968 = vmatprep.mubr.f32.mxu0 0.0
        %969 = vmatmul.mubr.f32.gmra.mxu0 %v877
        %v970 = vpop.f32.mrf.mxu0
        %v971 = vadd.f32 %v868, %v970
        %v972 = vpop.f32.mrf.mxu0
        %973 = vmatprep.mubr.f32.mxu0 0.0
        %974 = vmatmul.mubr.f32.gmra.mxu0 %v880
        %v975 = vpop.f32.mrf.mxu0
        %v976 = vadd.f32 %v868, %v975
        %v977 = vpop.f32.mrf.mxu0
        %978 = vmatprep.mubr.f32.mxu0 0.0
        %979 = vmatmul.mubr.f32.gmra.mxu0 %v883
        %v980 = vpop.f32.mrf.mxu0
        %v981 = vadd.f32 %v868, %v980
        %v982 = vpop.f32.mrf.mxu0
        %983 = vmatprep.mubr.f32.mxu0 0.0
        %984 = vmatmul.mubr.f32.gmra.mxu0 %v886
        %v985 = vpop.f32.mrf.mxu0
        %v986 = vadd.f32 %v868, %v985
        %v987 = vpop.f32.mrf.mxu0
        %988 = vmatprep.mubr.f32.mxu0 0.0
        %989 = vmatmul.mubr.f32.gmra.mxu0 %v889
        %v990 = vpop.f32.mrf.mxu0
        %v991 = vadd.f32 %v868, %v990
        %v992 = vpop.f32.mrf.mxu0
        %993 = vmatprep.mubr.f32.mxu0 0.0
        %994 = vmatmul.mubr.f32.gmra.mxu0 %v892
        %v995 = vpop.f32.mrf.mxu0
        %v996 = vadd.f32 %v868, %v995
        %v997 = vpop.f32.mrf.mxu0
        %998 = vdwg.mxu0
        %s999 = scalar_lea.vmem %s4, 128
        %v1000 = vld [vmem:[%s999] sm:$0xff]
        %v1001 = vld [vmem:[%s999 + $0x8] sm:$0xff]
        %v1002 = vld [vmem:[%s999 + $0x10] sm:$0xff]
        %v1003 = vld [vmem:[%s999 + $0x18] sm:$0xff]
        %s1004 = scalar_lea.vmem %s5, 4
        %v1005 = vld [vmem:[%s1004] sm:$0x1]
        %v1007 = vlaneseq
        %v1008 = vshrl.u32 %v1007, 7
        %v1009 = vsub.s32 0, %v1008
        %v1010 = vrot.slane %v1005, %v1009
        %v1013 = vsel %vm587, %v713, 0
        %v1016 = vsel %vm587, %v714, 0
        %v1019 = vsel %vm587, %v715, 0
        %v1022 = vsel %vm587, %v716, 0
        %v1025 = vsel %vm587, %v717, 0
        %v1028 = vsel %vm587, %v718, 0
        %v1031 = vsel %vm587, %v719, 0
        %v1034 = vsel %vm587, %v720, 0
        %1036 = vmatprep.subr.mxu0 0.0
        %1037 = vmatpush1.msra.mxu0 0.0
        %1038 = vmatprep.subr.mxu0 0.0
        %1039 = vmatpush1.msra.mxu0 0.0
        %1040 = vmatprep.subr.mxu0 0.0
        %1041 = vmatpush1.msra.mxu0 0.0
        %1042 = vmatprep.subr.mxu0 0.0
        %1043 = vmatpush1.msra.mxu0 0.0
        %1044 = vmatprep.subr.mxu0 0.0
        %1045 = vmatpush1.msra.mxu0 0.0
        %1046 = vmatprep.subr.mxu0 0.0
        %1047 = vmatpush1.msra.mxu0 0.0
        %1048 = vmatprep.subr.mxu0 0.0
        %1049 = vmatpush1.msra.mxu0 0.0
        %1050 = vmatprep.subr.mxu0 0.0
        %1051 = vmatpush1.msra.mxu0 0.0
        %1052 = vmatprep.subr.mxu0 0.0
        %1053 = vmatpush1.msra.mxu0 0.0
        %1054 = vmatprep.subr.mxu0 0.0
        %1055 = vmatpush1.msra.mxu0 0.0
        %1056 = vmatprep.subr.mxu0 0.0
        %1057 = vmatpush1.msra.mxu0 0.0
        %1058 = vmatprep.subr.mxu0 0.0
        %1059 = vmatpush1.msra.mxu0 0.0
        %1060 = vmatprep.subr.mxu0 0.0
        %1061 = vmatpush1.msra.mxu0 %v1003
        %1062 = vmatprep.subr.mxu0 0.0
        %1063 = vmatpush1.msra.mxu0 %v1002
        %1064 = vmatprep.subr.mxu0 0.0
        %1065 = vmatpush1.msra.mxu0 %v1001
        %1066 = vmatprep.subr.mxu0 0.0
        %1067 = vmatpush1.msra.mxu0 %v1000
        %1068 = vmatprep.subr.mxu0 0.0
        %1069 = vmatpush2.msra.mxu0 0.0
        %1070 = vmatprep.subr.mxu0 0.0
        %1071 = vmatpush2.msra.mxu0 0.0
        %1072 = vmatprep.subr.mxu0 0.0
        %1073 = vmatpush2.msra.mxu0 0.0
        %1074 = vmatprep.subr.mxu0 0.0
        %1075 = vmatpush2.msra.mxu0 0.0
        %1076 = vmatprep.subr.mxu0 0.0
        %1077 = vmatpush2.msra.mxu0 0.0
        %1078 = vmatprep.subr.mxu0 0.0
        %1079 = vmatpush2.msra.mxu0 0.0
        %1080 = vmatprep.subr.mxu0 0.0
        %1081 = vmatpush2.msra.mxu0 0.0
        %1082 = vmatprep.subr.mxu0 0.0
        %1083 = vmatpush2.msra.mxu0 0.0
        %1084 = vmatprep.subr.mxu0 0.0
        %1085 = vmatpush2.msra.mxu0 0.0
        %1086 = vmatprep.subr.mxu0 0.0
        %1087 = vmatpush2.msra.mxu0 0.0
        %1088 = vmatprep.subr.mxu0 0.0
        %1089 = vmatpush2.msra.mxu0 0.0
        %1090 = vmatprep.subr.mxu0 0.0
        %1091 = vmatpush2.msra.mxu0 0.0
        %1092 = vmatprep.subr.mxu0 0.0
        %1093 = vmatpush2.msra.mxu0 0.0
        %1094 = vmatprep.subr.mxu0 0.0
        %1095 = vmatpush2.msra.mxu0 0.0
        %1096 = vmatprep.subr.mxu0 0.0
        %1097 = vmatpush2.msra.mxu0 0.0
        %1098 = vmatprep.subr.mxu0 0.0
        %1099 = vmatpush2.msra.mxu0 0.0
        %1100 = vmatprep.mubr.f32.mxu0 0.0
        %1101 = vmatmul.mubr.f32.gmra.mxu0 %v1013
        %v1102 = vpop.f32.mrf.mxu0
        %v1103 = vadd.f32 %v1010, %v1102
        %v1104 = vpop.f32.mrf.mxu0
        %1105 = vmatprep.mubr.f32.mxu0 0.0
        %1106 = vmatmul.mubr.f32.gmra.mxu0 %v1016
        %v1107 = vpop.f32.mrf.mxu0
        %v1108 = vadd.f32 %v1010, %v1107
        %v1109 = vpop.f32.mrf.mxu0
        %1110 = vmatprep.mubr.f32.mxu0 0.0
        %1111 = vmatmul.mubr.f32.gmra.mxu0 %v1019
        %v1112 = vpop.f32.mrf.mxu0
        %v1113 = vadd.f32 %v1010, %v1112
        %v1114 = vpop.f32.mrf.mxu0
        %1115 = vmatprep.mubr.f32.mxu0 0.0
        %1116 = vmatmul.mubr.f32.gmra.mxu0 %v1022
        %v1117 = vpop.f32.mrf.mxu0
        %v1118 = vadd.f32 %v1010, %v1117
        %v1119 = vpop.f32.mrf.mxu0
        %1120 = vmatprep.mubr.f32.mxu0 0.0
        %1121 = vmatmul.mubr.f32.gmra.mxu0 %v1025
        %v1122 = vpop.f32.mrf.mxu0
        %v1123 = vadd.f32 %v1010, %v1122
        %v1124 = vpop.f32.mrf.mxu0
        %1125 = vmatprep.mubr.f32.mxu0 0.0
        %1126 = vmatmul.mubr.f32.gmra.mxu0 %v1028
        %v1127 = vpop.f32.mrf.mxu0
        %v1128 = vadd.f32 %v1010, %v1127
        %v1129 = vpop.f32.mrf.mxu0
        %1130 = vmatprep.mubr.f32.mxu0 0.0
        %1131 = vmatmul.mubr.f32.gmra.mxu0 %v1031
        %v1132 = vpop.f32.mrf.mxu0
        %v1133 = vadd.f32 %v1010, %v1132
        %v1134 = vpop.f32.mrf.mxu0
        %1135 = vmatprep.mubr.f32.mxu0 0.0
        %1136 = vmatmul.mubr.f32.gmra.mxu0 %v1034
        %v1137 = vpop.f32.mrf.mxu0
        %v1138 = vadd.f32 %v1010, %v1137
        %v1139 = vpop.f32.mrf.mxu0
        %1140 = vdwg.mxu0
        %s1141 = scalar_lea.vmem %s4, 256
        %v1142 = vld [vmem:[%s1141] sm:$0xff]
        %v1143 = vld [vmem:[%s1141 + $0x8] sm:$0xff]
        %v1144 = vld [vmem:[%s1141 + $0x10] sm:$0xff]
        %v1145 = vld [vmem:[%s1141 + $0x18] sm:$0xff]
        %s1146 = scalar_lea.vmem %s5, 8
        %v1147 = vld [vmem:[%s1146] sm:$0x1]
        %v1149 = vlaneseq
        %v1150 = vshrl.u32 %v1149, 7
        %v1151 = vsub.s32 0, %v1150
        %v1152 = vrot.slane %v1147, %v1151
        %1154 = vmatprep.subr.mxu0 0.0
        %1155 = vmatpush1.msra.mxu0 0.0
        %1156 = vmatprep.subr.mxu0 0.0
        %1157 = vmatpush1.msra.mxu0 0.0
        %1158 = vmatprep.subr.mxu0 0.0
        %1159 = vmatpush1.msra.mxu0 0.0
        %1160 = vmatprep.subr.mxu0 0.0
        %1161 = vmatpush1.msra.mxu0 0.0
        %1162 = vmatprep.subr.mxu0 0.0
        %1163 = vmatpush1.msra.mxu0 0.0
        %1164 = vmatprep.subr.mxu0 0.0
        %1165 = vmatpush1.msra.mxu0 0.0
        %1166 = vmatprep.subr.mxu0 0.0
        %1167 = vmatpush1.msra.mxu0 0.0
        %1168 = vmatprep.subr.mxu0 0.0
        %1169 = vmatpush1.msra.mxu0 0.0
        %1170 = vmatprep.subr.mxu0 0.0
        %1171 = vmatpush1.msra.mxu0 0.0
        %1172 = vmatprep.subr.mxu0 0.0
        %1173 = vmatpush1.msra.mxu0 0.0
        %1174 = vmatprep.subr.mxu0 0.0
        %1175 = vmatpush1.msra.mxu0 0.0
        %1176 = vmatprep.subr.mxu0 0.0
        %1177 = vmatpush1.msra.mxu0 0.0
        %1178 = vmatprep.subr.mxu0 0.0
        %1179 = vmatpush1.msra.mxu0 %v1145
        %1180 = vmatprep.subr.mxu0 0.0
        %1181 = vmatpush1.msra.mxu0 %v1144
        %1182 = vmatprep.subr.mxu0 0.0
        %1183 = vmatpush1.msra.mxu0 %v1143
        %1184 = vmatprep.subr.mxu0 0.0
        %1185 = vmatpush1.msra.mxu0 %v1142
        %1186 = vmatprep.subr.mxu0 0.0
        %1187 = vmatpush2.msra.mxu0 0.0
        %1188 = vmatprep.subr.mxu0 0.0
        %1189 = vmatpush2.msra.mxu0 0.0
        %1190 = vmatprep.subr.mxu0 0.0
        %1191 = vmatpush2.msra.mxu0 0.0
        %1192 = vmatprep.subr.mxu0 0.0
        %1193 = vmatpush2.msra.mxu0 0.0
        %1194 = vmatprep.subr.mxu0 0.0
        %1195 = vmatpush2.msra.mxu0 0.0
        %1196 = vmatprep.subr.mxu0 0.0
        %1197 = vmatpush2.msra.mxu0 0.0
        %1198 = vmatprep.subr.mxu0 0.0
        %1199 = vmatpush2.msra.mxu0 0.0
        %1200 = vmatprep.subr.mxu0 0.0
        %1201 = vmatpush2.msra.mxu0 0.0
        %1202 = vmatprep.subr.mxu0 0.0
        %1203 = vmatpush2.msra.mxu0 0.0
        %1204 = vmatprep.subr.mxu0 0.0
        %1205 = vmatpush2.msra.mxu0 0.0
        %1206 = vmatprep.subr.mxu0 0.0
        %1207 = vmatpush2.msra.mxu0 0.0
        %1208 = vmatprep.subr.mxu0 0.0
        %1209 = vmatpush2.msra.mxu0 0.0
        %1210 = vmatprep.subr.mxu0 0.0
        %1211 = vmatpush2.msra.mxu0 0.0
        %1212 = vmatprep.subr.mxu0 0.0
        %1213 = vmatpush2.msra.mxu0 0.0
        %1214 = vmatprep.subr.mxu0 0.0
        %1215 = vmatpush2.msra.mxu0 0.0
        %1216 = vmatprep.subr.mxu0 0.0
        %1217 = vmatpush2.msra.mxu0 0.0
        %1218 = vmatprep.mubr.f32.mxu0 0.0
        %1219 = vmatmul.mubr.f32.gmra.mxu0 %v1013
        %v1220 = vpop.f32.mrf.mxu0
        %v1221 = vadd.f32 %v1152, %v1220
        %v1222 = vpop.f32.mrf.mxu0
        %1223 = vmatprep.mubr.f32.mxu0 0.0
        %1224 = vmatmul.mubr.f32.gmra.mxu0 %v1016
        %v1225 = vpop.f32.mrf.mxu0
        %v1226 = vadd.f32 %v1152, %v1225
        %v1227 = vpop.f32.mrf.mxu0
        %1228 = vmatprep.mubr.f32.mxu0 0.0
        %1229 = vmatmul.mubr.f32.gmra.mxu0 %v1019
        %v1230 = vpop.f32.mrf.mxu0
        %v1231 = vadd.f32 %v1152, %v1230
        %v1232 = vpop.f32.mrf.mxu0
        %1233 = vmatprep.mubr.f32.mxu0 0.0
        %1234 = vmatmul.mubr.f32.gmra.mxu0 %v1022
        %v1235 = vpop.f32.mrf.mxu0
        %v1236 = vadd.f32 %v1152, %v1235
        %v1237 = vpop.f32.mrf.mxu0
        %1238 = vmatprep.mubr.f32.mxu0 0.0
        %1239 = vmatmul.mubr.f32.gmra.mxu0 %v1025
        %v1240 = vpop.f32.mrf.mxu0
        %v1241 = vadd.f32 %v1152, %v1240
        %v1242 = vpop.f32.mrf.mxu0
        %1243 = vmatprep.mubr.f32.mxu0 0.0
        %1244 = vmatmul.mubr.f32.gmra.mxu0 %v1028
        %v1245 = vpop.f32.mrf.mxu0
        %v1246 = vadd.f32 %v1152, %v1245
        %v1247 = vpop.f32.mrf.mxu0
        %1248 = vmatprep.mubr.f32.mxu0 0.0
        %1249 = vmatmul.mubr.f32.gmra.mxu0 %v1031
        %v1250 = vpop.f32.mrf.mxu0
        %v1251 = vadd.f32 %v1152, %v1250
        %v1252 = vpop.f32.mrf.mxu0
        %1253 = vmatprep.mubr.f32.mxu0 0.0
        %1254 = vmatmul.mubr.f32.gmra.mxu0 %v1034
        %v1255 = vpop.f32.mrf.mxu0
        %v1256 = vadd.f32 %v1152, %v1255
        %v1257 = vpop.f32.mrf.mxu0
        %1258 = vdwg.mxu0
        %vm1259 = vcmask 64512
        %v1261 = vsel %vm1259, %v961, 0
        %v1264 = vsel %vm1259, %v966, 0
        %v1267 = vsel %vm1259, %v971, 0
        %v1270 = vsel %vm1259, %v976, 0
        %v1273 = vsel %vm1259, %v981, 0
        %v1276 = vsel %vm1259, %v986, 0
        %v1279 = vsel %vm1259, %v991, 0
        %v1282 = vsel %vm1259, %v996, 0
        %v1285 = vsel %vm1259, %v1103, 0
        %v1288 = vsel %vm1259, %v1108, 0
        %v1291 = vsel %vm1259, %v1113, 0
        %v1294 = vsel %vm1259, %v1118, 0
        %v1297 = vsel %vm1259, %v1123, 0
        %v1300 = vsel %vm1259, %v1128, 0
        %v1303 = vsel %vm1259, %v1133, 0
        %v1306 = vsel %vm1259, %v1138, 0
        %1308 = vmatprep.subr.mxu0 0.0
        %1309 = vmatpush1.xpose.msra.mxu0 0.0
        %1310 = vmatprep.subr.mxu0 0.0
        %1311 = vmatpush1.xpose.msra.mxu0 0.0
        %1312 = vmatprep.subr.mxu0 0.0
        %1313 = vmatpush1.xpose.msra.mxu0 0.0
        %1314 = vmatprep.subr.mxu0 0.0
        %1315 = vmatpush1.xpose.msra.mxu0 0.0
        %1316 = vmatprep.subr.mxu0 0.0
        %1317 = vmatpush1.xpose.msra.mxu0 0.0
        %1318 = vmatprep.subr.mxu0 0.0
        %1319 = vmatpush1.xpose.msra.mxu0 0.0
        %1320 = vmatprep.subr.mxu0 0.0
        %1321 = vmatpush1.xpose.msra.mxu0 0.0
        %1322 = vmatprep.subr.mxu0 0.0
        %1323 = vmatpush1.xpose.msra.mxu0 0.0
        %1324 = vmatprep.subr.mxu0 0.0
        %1325 = vmatpush1.xpose.msra.mxu0 %v1306
        %1326 = vmatprep.subr.mxu0 0.0
        %1327 = vmatpush1.xpose.msra.mxu0 %v1303
        %1328 = vmatprep.subr.mxu0 0.0
        %1329 = vmatpush1.xpose.msra.mxu0 %v1300
        %1330 = vmatprep.subr.mxu0 0.0
        %1331 = vmatpush1.xpose.msra.mxu0 %v1297
        %1332 = vmatprep.subr.mxu0 0.0
        %1333 = vmatpush1.xpose.msra.mxu0 %v1294
        %1334 = vmatprep.subr.mxu0 0.0
        %1335 = vmatpush1.xpose.msra.mxu0 %v1291
        %1336 = vmatprep.subr.mxu0 0.0
        %1337 = vmatpush1.xpose.msra.mxu0 %v1288
        %1338 = vmatprep.subr.mxu0 0.0
        %1339 = vmatpush1.xpose.msra.mxu0 %v1285
        %1340 = vmatprep.subr.mxu0 0.0
        %1341 = vmatpush2.xpose.msra.mxu0 0.0
        %1342 = vmatprep.subr.mxu0 0.0
        %1343 = vmatpush2.xpose.msra.mxu0 0.0
        %1344 = vmatprep.subr.mxu0 0.0
        %1345 = vmatpush2.xpose.msra.mxu0 0.0
        %1346 = vmatprep.subr.mxu0 0.0
        %1347 = vmatpush2.xpose.msra.mxu0 0.0
        %1348 = vmatprep.subr.mxu0 0.0
        %1349 = vmatpush2.xpose.msra.mxu0 0.0
        %1350 = vmatprep.subr.mxu0 0.0
        %1351 = vmatpush2.xpose.msra.mxu0 0.0
        %1352 = vmatprep.subr.mxu0 0.0
        %1353 = vmatpush2.xpose.msra.mxu0 0.0
        %1354 = vmatprep.subr.mxu0 0.0
        %1355 = vmatpush2.xpose.msra.mxu0 0.0
        %1356 = vmatprep.subr.mxu0 0.0
        %1357 = vmatpush2.xpose.msra.mxu0 0.0
        %1358 = vmatprep.subr.mxu0 0.0
        %1359 = vmatpush2.xpose.msra.mxu0 0.0
        %1360 = vmatprep.subr.mxu0 0.0
        %1361 = vmatpush2.xpose.msra.mxu0 0.0
        %1362 = vmatprep.subr.mxu0 0.0
        %1363 = vmatpush2.xpose.msra.mxu0 0.0
        %1364 = vmatprep.subr.mxu0 0.0
        %1365 = vmatpush2.xpose.msra.mxu0 0.0
        %1366 = vmatprep.subr.mxu0 0.0
        %1367 = vmatpush2.xpose.msra.mxu0 0.0
        %1368 = vmatprep.subr.mxu0 0.0
        %1369 = vmatpush2.xpose.msra.mxu0 0.0
        %1370 = vmatprep.subr.mxu0 0.0
        %1371 = vmatpush2.xpose.msra.mxu0 0.0
        %1372 = vmatprep.mubr.f32.mxu0 0.0
        %1373 = vmatmul.mubr.f32.gmra.mxu0 %v1261
        %v1374 = vpop.f32.mrf.mxu0
        %v1375 = vadd.f32 0.0, %v1374
        %v1376 = vpop.f32.mrf.mxu0
        %1377 = vmatprep.mubr.f32.mxu0 0.0
        %1378 = vmatmul.mubr.f32.gmra.mxu0 %v1264
        %v1379 = vpop.f32.mrf.mxu0
        %v1380 = vadd.f32 0.0, %v1379
        %v1381 = vpop.f32.mrf.mxu0
        %1382 = vmatprep.mubr.f32.mxu0 0.0
        %1383 = vmatmul.mubr.f32.gmra.mxu0 %v1267
        %v1384 = vpop.f32.mrf.mxu0
        %v1385 = vadd.f32 0.0, %v1384
        %v1386 = vpop.f32.mrf.mxu0
        %1387 = vmatprep.mubr.f32.mxu0 0.0
        %1388 = vmatmul.mubr.f32.gmra.mxu0 %v1270
        %v1389 = vpop.f32.mrf.mxu0
        %v1390 = vadd.f32 0.0, %v1389
        %v1391 = vpop.f32.mrf.mxu0
        %1392 = vmatprep.mubr.f32.mxu0 0.0
        %1393 = vmatmul.mubr.f32.gmra.mxu0 %v1273
        %v1394 = vpop.f32.mrf.mxu0
        %v1395 = vadd.f32 0.0, %v1394
        %v1396 = vpop.f32.mrf.mxu0
        %1397 = vmatprep.mubr.f32.mxu0 0.0
        %1398 = vmatmul.mubr.f32.gmra.mxu0 %v1276
        %v1399 = vpop.f32.mrf.mxu0
        %v1400 = vadd.f32 0.0, %v1399
        %v1401 = vpop.f32.mrf.mxu0
        %1402 = vmatprep.mubr.f32.mxu0 0.0
        %1403 = vmatmul.mubr.f32.gmra.mxu0 %v1279
        %v1404 = vpop.f32.mrf.mxu0
        %v1405 = vadd.f32 0.0, %v1404
        %v1406 = vpop.f32.mrf.mxu0
        %1407 = vmatprep.mubr.f32.mxu0 0.0
        %1408 = vmatmul.mubr.f32.gmra.mxu0 %v1282
        %v1409 = vpop.f32.mrf.mxu0
        %v1410 = vadd.f32 0.0, %v1409
        %v1411 = vpop.f32.mrf.mxu0
        %1412 = vdwg.mxu0
        %v1413 = vmul.f32 %v1375, 0.35355338
        %v1414 = vmul.f32 %v1380, 0.35355338
        %v1415 = vmul.f32 %v1385, 0.35355338
        %v1416 = vmul.f32 %v1390, 0.35355338
        %v1417 = vmul.f32 %v1395, 0.35355338
        %v1418 = vmul.f32 %v1400, 0.35355338
        %v1419 = vmul.f32 %v1405, 0.35355338
        %v1420 = vmul.f32 %v1410, 0.35355338
        %vm1421 = vcmask 523264
        %v1422 = vsel %vm1421, %v1413, -inf
        %1423 = vmax.xlane.f32.xlu0 %v1422
        %v1424 = vpop.xlane.xlu0 %1423
        %v1425 = vsel %vm1421, %v1414, -inf
        %1426 = vmax.xlane.f32.xlu0 %v1425
        %v1427 = vpop.xlane.xlu0 %1426
        %v1428 = vsel %vm1421, %v1415, -inf
        %1429 = vmax.xlane.f32.xlu0 %v1428
        %v1430 = vpop.xlane.xlu0 %1429
        %v1431 = vsel %vm1421, %v1416, -inf
        %1432 = vmax.xlane.f32.xlu0 %v1431
        %v1433 = vpop.xlane.xlu0 %1432
        %v1434 = vsel %vm1421, %v1417, -inf
        %1435 = vmax.xlane.f32.xlu0 %v1434
        %v1436 = vpop.xlane.xlu0 %1435
        %v1437 = vsel %vm1421, %v1418, -inf
        %1438 = vmax.xlane.f32.xlu0 %v1437
        %v1439 = vpop.xlane.xlu0 %1438
        %v1440 = vsel %vm1421, %v1419, -inf
        %1441 = vmax.xlane.f32.xlu0 %v1440
        %v1442 = vpop.xlane.xlu0 %1441
        %v1443 = vsel %vm1421, %v1420, -inf
        %1444 = vmax.xlane.f32.xlu0 %v1443
        %v1445 = vpop.xlane.xlu0 %1444
        %v1446 = vsub.f32 %v1413, %v1424
        %v1447 = vsub.f32 %v1414, %v1427
        %v1448 = vsub.f32 %v1415, %v1430
        %v1449 = vsub.f32 %v1416, %v1433
        %v1450 = vsub.f32 %v1417, %v1436
        %v1451 = vsub.f32 %v1418, %v1439
        %v1452 = vsub.f32 %v1419, %v1442
        %v1453 = vsub.f32 %v1420, %v1445
        %v1454 = vmul.f32 %v1446, 1.442695
        %v1455 = vpow.pop %v1454
        %v1456 = vmul.f32 %v1447, 1.442695
        %v1457 = vpow.pop %v1456
        %v1458 = vmul.f32 %v1448, 1.442695
        %v1459 = vpow.pop %v1458
        %v1460 = vmul.f32 %v1449, 1.442695
        %v1461 = vpow.pop %v1460
        %v1462 = vmul.f32 %v1450, 1.442695
        %v1463 = vpow.pop %v1462
        %v1464 = vmul.f32 %v1451, 1.442695
        %v1465 = vpow.pop %v1464
        %v1466 = vmul.f32 %v1452, 1.442695
        %v1467 = vpow.pop %v1466
        %v1468 = vmul.f32 %v1453, 1.442695
        %v1469 = vpow.pop %v1468
        %v1470 = vsel %vm1421, %v1455, 0.0
        %1471 = vadd.xlane.f32.xlu0 %v1470
        %v1472 = vpop.xlane.xlu0 %1471
        %v1473 = vsel %vm1421, %v1457, 0.0
        %1474 = vadd.xlane.f32.xlu0 %v1473
        %v1475 = vpop.xlane.xlu0 %1474
        %v1476 = vsel %vm1421, %v1459, 0.0
        %1477 = vadd.xlane.f32.xlu0 %v1476
        %v1478 = vpop.xlane.xlu0 %1477
        %v1479 = vsel %vm1421, %v1461, 0.0
        %1480 = vadd.xlane.f32.xlu0 %v1479
        %v1481 = vpop.xlane.xlu0 %1480
        %v1482 = vsel %vm1421, %v1463, 0.0
        %1483 = vadd.xlane.f32.xlu0 %v1482
        %v1484 = vpop.xlane.xlu0 %1483
        %v1485 = vsel %vm1421, %v1465, 0.0
        %1486 = vadd.xlane.f32.xlu0 %v1485
        %v1487 = vpop.xlane.xlu0 %1486
        %v1488 = vsel %vm1421, %v1467, 0.0
        %1489 = vadd.xlane.f32.xlu0 %v1488
        %v1490 = vpop.xlane.xlu0 %1489
        %v1491 = vsel %vm1421, %v1469, 0.0
        %1492 = vadd.xlane.f32.xlu0 %v1491
        %v1493 = vpop.xlane.xlu0 %1492
        %v1494 = vrcp.pop %v1472
        %v1495 = vrcp.pop %v1475
        %v1496 = vrcp.pop %v1478
        %v1497 = vrcp.pop %v1481
        %v1498 = vrcp.pop %v1484
        %v1499 = vrcp.pop %v1487
        %v1500 = vrcp.pop %v1490
        %v1501 = vrcp.pop %v1493
        %v1502 = vmul.f32 %v1455, %v1494
        %v1503 = vmul.f32 %v1457, %v1495
        %v1504 = vmul.f32 %v1459, %v1496
        %v1505 = vmul.f32 %v1461, %v1497
        %v1506 = vmul.f32 %v1463, %v1498
        %v1507 = vmul.f32 %v1465, %v1499
        %v1508 = vmul.f32 %v1467, %v1500
        %v1509 = vmul.f32 %v1469, %v1501
        %v1511 = vsel %vm1421, %v1502, 0
        %v1514 = vsel %vm1421, %v1503, 0
        %v1517 = vsel %vm1421, %v1504, 0
        %v1520 = vsel %vm1421, %v1505, 0
        %v1523 = vsel %vm1421, %v1506, 0
        %v1526 = vsel %vm1421, %v1507, 0
        %v1529 = vsel %vm1421, %v1508, 0
        %v1532 = vsel %vm1421, %v1509, 0
        %1534 = vmatprep.subr.mxu0 0.0
        %1535 = vmatpush1.msra.mxu0 0.0
        %1536 = vmatprep.subr.mxu0 0.0
        %1537 = vmatpush1.msra.mxu0 0.0
        %1538 = vmatprep.subr.mxu0 0.0
        %1539 = vmatpush1.msra.mxu0 0.0
        %1540 = vmatprep.subr.mxu0 0.0
        %1541 = vmatpush1.msra.mxu0 0.0
        %1542 = vmatprep.subr.mxu0 0.0
        %1543 = vmatpush1.msra.mxu0 0.0
        %1544 = vmatprep.subr.mxu0 0.0
        %1545 = vmatpush1.msra.mxu0 0.0
        %1546 = vmatprep.subr.mxu0 0.0
        %1547 = vmatpush1.msra.mxu0 0.0
        %1548 = vmatprep.subr.mxu0 0.0
        %1549 = vmatpush1.msra.mxu0 0.0
        %1550 = vmatprep.subr.mxu0 0.0
        %1551 = vmatpush1.msra.mxu0 %v1256
        %1552 = vmatprep.subr.mxu0 0.0
        %1553 = vmatpush1.msra.mxu0 %v1251
        %1554 = vmatprep.subr.mxu0 0.0
        %1555 = vmatpush1.msra.mxu0 %v1246
        %1556 = vmatprep.subr.mxu0 0.0
        %1557 = vmatpush1.msra.mxu0 %v1241
        %1558 = vmatprep.subr.mxu0 0.0
        %1559 = vmatpush1.msra.mxu0 %v1236
        %1560 = vmatprep.subr.mxu0 0.0
        %1561 = vmatpush1.msra.mxu0 %v1231
        %1562 = vmatprep.subr.mxu0 0.0
        %1563 = vmatpush1.msra.mxu0 %v1226
        %1564 = vmatprep.subr.mxu0 0.0
        %1565 = vmatpush1.msra.mxu0 %v1221
        %1566 = vmatprep.subr.mxu0 0.0
        %1567 = vmatpush2.msra.mxu0 0.0
        %1568 = vmatprep.subr.mxu0 0.0
        %1569 = vmatpush2.msra.mxu0 0.0
        %1570 = vmatprep.subr.mxu0 0.0
        %1571 = vmatpush2.msra.mxu0 0.0
        %1572 = vmatprep.subr.mxu0 0.0
        %1573 = vmatpush2.msra.mxu0 0.0
        %1574 = vmatprep.subr.mxu0 0.0
        %1575 = vmatpush2.msra.mxu0 0.0
        %1576 = vmatprep.subr.mxu0 0.0
        %1577 = vmatpush2.msra.mxu0 0.0
        %1578 = vmatprep.subr.mxu0 0.0
        %1579 = vmatpush2.msra.mxu0 0.0
        %1580 = vmatprep.subr.mxu0 0.0
        %1581 = vmatpush2.msra.mxu0 0.0
        %1582 = vmatprep.subr.mxu0 0.0
        %1583 = vmatpush2.msra.mxu0 0.0
        %1584 = vmatprep.subr.mxu0 0.0
        %1585 = vmatpush2.msra.mxu0 0.0
        %1586 = vmatprep.subr.mxu0 0.0
        %1587 = vmatpush2.msra.mxu0 0.0
        %1588 = vmatprep.subr.mxu0 0.0
        %1589 = vmatpush2.msra.mxu0 0.0
        %1590 = vmatprep.subr.mxu0 0.0
        %1591 = vmatpush2.msra.mxu0 0.0
        %1592 = vmatprep.subr.mxu0 0.0
        %1593 = vmatpush2.msra.mxu0 0.0
        %1594 = vmatprep.subr.mxu0 0.0
        %1595 = vmatpush2.msra.mxu0 0.0
        %1596 = vmatprep.subr.mxu0 0.0
        %1597 = vmatpush2.msra.mxu0 0.0
        %1598 = vmatprep.mubr.f32.mxu0 0.0
        %1599 = vmatmul.mubr.f32.gmra.mxu0 %v1511
        %v1600 = vpop.f32.mrf.mxu0
        %v1601 = vadd.f32 0.0, %v1600
        %v1602 = vpop.f32.mrf.mxu0
        %1603 = vmatprep.mubr.f32.mxu0 0.0
        %1604 = vmatmul.mubr.f32.gmra.mxu0 %v1514
        %v1605 = vpop.f32.mrf.mxu0
        %v1606 = vadd.f32 0.0, %v1605
        %v1607 = vpop.f32.mrf.mxu0
        %1608 = vmatprep.mubr.f32.mxu0 0.0
        %1609 = vmatmul.mubr.f32.gmra.mxu0 %v1517
        %v1610 = vpop.f32.mrf.mxu0
        %v1611 = vadd.f32 0.0, %v1610
        %v1612 = vpop.f32.mrf.mxu0
        %1613 = vmatprep.mubr.f32.mxu0 0.0
        %1614 = vmatmul.mubr.f32.gmra.mxu0 %v1520
        %v1615 = vpop.f32.mrf.mxu0
        %v1616 = vadd.f32 0.0, %v1615
        %v1617 = vpop.f32.mrf.mxu0
        %1618 = vmatprep.mubr.f32.mxu0 0.0
        %1619 = vmatmul.mubr.f32.gmra.mxu0 %v1523
        %v1620 = vpop.f32.mrf.mxu0
        %v1621 = vadd.f32 0.0, %v1620
        %v1622 = vpop.f32.mrf.mxu0
        %1623 = vmatprep.mubr.f32.mxu0 0.0
        %1624 = vmatmul.mubr.f32.gmra.mxu0 %v1526
        %v1625 = vpop.f32.mrf.mxu0
        %v1626 = vadd.f32 0.0, %v1625
        %v1627 = vpop.f32.mrf.mxu0
        %1628 = vmatprep.mubr.f32.mxu0 0.0
        %1629 = vmatmul.mubr.f32.gmra.mxu0 %v1529
        %v1630 = vpop.f32.mrf.mxu0
        %v1631 = vadd.f32 0.0, %v1630
        %v1632 = vpop.f32.mrf.mxu0
        %1633 = vmatprep.mubr.f32.mxu0 0.0
        %1634 = vmatmul.mubr.f32.gmra.mxu0 %v1532
        %v1635 = vpop.f32.mrf.mxu0
        %v1636 = vadd.f32 0.0, %v1635
        %v1637 = vpop.f32.mrf.mxu0
        %1638 = vdwg.mxu0
        %v1639 = vld [vmem:[%s6] sm:$0xff]
        %s1640 = scalar_lea.vmem %s4, 416
        %v1641 = vld [vmem:[%s1640] sm:$0xff]
        %v1642 = vld [vmem:[%s1640 + $0x8] sm:$0xff]
        %v1643 = vld [vmem:[%s1640 + $0x10] sm:$0xff]
        %v1644 = vld [vmem:[%s1640 + $0x18] sm:$0xff]
        %s1645 = scalar_lea.vmem %s5, 13
        %v1646 = vld [vmem:[%s1645] sm:$0x1]
        %v1648 = vlaneseq
        %v1649 = vshrl.u32 %v1648, 7
        %v1650 = vsub.s32 0, %v1649
        %v1651 = vrot.slane %v1646, %v1650
        %1653 = vmatprep.subr.mxu0 0.0
        %1654 = vmatpush1.msra.mxu0 0.0
        %1655 = vmatprep.subr.mxu0 0.0
        %1656 = vmatpush1.msra.mxu0 0.0
        %1657 = vmatprep.subr.mxu0 0.0
        %1658 = vmatpush1.msra.mxu0 0.0
        %1659 = vmatprep.subr.mxu0 0.0
        %1660 = vmatpush1.msra.mxu0 0.0
        %1661 = vmatprep.subr.mxu0 0.0
        %1662 = vmatpush1.msra.mxu0 0.0
        %1663 = vmatprep.subr.mxu0 0.0
        %1664 = vmatpush1.msra.mxu0 0.0
        %1665 = vmatprep.subr.mxu0 0.0
        %1666 = vmatpush1.msra.mxu0 0.0
        %1667 = vmatprep.subr.mxu0 0.0
        %1668 = vmatpush1.msra.mxu0 0.0
        %1669 = vmatprep.subr.mxu0 0.0
        %1670 = vmatpush1.msra.mxu0 0.0
        %1671 = vmatprep.subr.mxu0 0.0
        %1672 = vmatpush1.msra.mxu0 0.0
        %1673 = vmatprep.subr.mxu0 0.0
        %1674 = vmatpush1.msra.mxu0 0.0
        %1675 = vmatprep.subr.mxu0 0.0
        %1676 = vmatpush1.msra.mxu0 0.0
        %1677 = vmatprep.subr.mxu0 0.0
        %1678 = vmatpush1.msra.mxu0 %v1644
        %1679 = vmatprep.subr.mxu0 0.0
        %1680 = vmatpush1.msra.mxu0 %v1643
        %1681 = vmatprep.subr.mxu0 0.0
        %1682 = vmatpush1.msra.mxu0 %v1642
        %1683 = vmatprep.subr.mxu0 0.0
        %1684 = vmatpush1.msra.mxu0 %v1641
        %1685 = vmatprep.subr.mxu0 0.0
        %1686 = vmatpush2.msra.mxu0 0.0
        %1687 = vmatprep.subr.mxu0 0.0
        %1688 = vmatpush2.msra.mxu0 0.0
        %1689 = vmatprep.subr.mxu0 0.0
        %1690 = vmatpush2.msra.mxu0 0.0
        %1691 = vmatprep.subr.mxu0 0.0
        %1692 = vmatpush2.msra.mxu0 0.0
        %1693 = vmatprep.subr.mxu0 0.0
        %1694 = vmatpush2.msra.mxu0 0.0
        %1695 = vmatprep.subr.mxu0 0.0
        %1696 = vmatpush2.msra.mxu0 0.0
        %1697 = vmatprep.subr.mxu0 0.0
        %1698 = vmatpush2.msra.mxu0 0.0
        %1699 = vmatprep.subr.mxu0 0.0
        %1700 = vmatpush2.msra.mxu0 0.0
        %1701 = vmatprep.subr.mxu0 0.0
        %1702 = vmatpush2.msra.mxu0 0.0
        %1703 = vmatprep.subr.mxu0 0.0
        %1704 = vmatpush2.msra.mxu0 0.0
        %1705 = vmatprep.subr.mxu0 0.0
        %1706 = vmatpush2.msra.mxu0 0.0
        %1707 = vmatprep.subr.mxu0 0.0
        %1708 = vmatpush2.msra.mxu0 0.0
        %1709 = vmatprep.subr.mxu0 0.0
        %1710 = vmatpush2.msra.mxu0 0.0
        %1711 = vmatprep.subr.mxu0 0.0
        %1712 = vmatpush2.msra.mxu0 0.0
        %1713 = vmatprep.subr.mxu0 0.0
        %1714 = vmatpush2.msra.mxu0 0.0
        %1715 = vmatprep.subr.mxu0 0.0
        %1716 = vmatpush2.msra.mxu0 0.0
        %1717 = vmatprep.mubr.f32.mxu0 0.0
        %1718 = vmatmul.mubr.f32.gmra.mxu0 %v871
        %v1719 = vpop.f32.mrf.mxu0
        %v1720 = vadd.f32 %v1651, %v1719
        %v1721 = vpop.f32.mrf.mxu0
        %1722 = vmatprep.mubr.f32.mxu0 0.0
        %1723 = vmatmul.mubr.f32.gmra.mxu0 %v874
        %v1724 = vpop.f32.mrf.mxu0
        %v1725 = vadd.f32 %v1651, %v1724
        %v1726 = vpop.f32.mrf.mxu0
        %1727 = vmatprep.mubr.f32.mxu0 0.0
        %1728 = vmatmul.mubr.f32.gmra.mxu0 %v877
        %v1729 = vpop.f32.mrf.mxu0
        %v1730 = vadd.f32 %v1651, %v1729
        %v1731 = vpop.f32.mrf.mxu0
        %1732 = vmatprep.mubr.f32.mxu0 0.0
        %1733 = vmatmul.mubr.f32.gmra.mxu0 %v880
        %v1734 = vpop.f32.mrf.mxu0
        %v1735 = vadd.f32 %v1651, %v1734
        %v1736 = vpop.f32.mrf.mxu0
        %1737 = vmatprep.mubr.f32.mxu0 0.0
        %1738 = vmatmul.mubr.f32.gmra.mxu0 %v883
        %v1739 = vpop.f32.mrf.mxu0
        %v1740 = vadd.f32 %v1651, %v1739
        %v1741 = vpop.f32.mrf.mxu0
        %1742 = vmatprep.mubr.f32.mxu0 0.0
        %1743 = vmatmul.mubr.f32.gmra.mxu0 %v886
        %v1744 = vpop.f32.mrf.mxu0
        %v1745 = vadd.f32 %v1651, %v1744
        %v1746 = vpop.f32.mrf.mxu0
        %1747 = vmatprep.mubr.f32.mxu0 0.0
        %1748 = vmatmul.mubr.f32.gmra.mxu0 %v889
        %v1749 = vpop.f32.mrf.mxu0
        %v1750 = vadd.f32 %v1651, %v1749
        %v1751 = vpop.f32.mrf.mxu0
        %1752 = vmatprep.mubr.f32.mxu0 0.0
        %1753 = vmatmul.mubr.f32.gmra.mxu0 %v892
        %v1754 = vpop.f32.mrf.mxu0
        %v1755 = vadd.f32 %v1651, %v1754
        %v1756 = vpop.f32.mrf.mxu0
        %1757 = vdwg.mxu0
        %s1758 = scalar_lea.vmem %s4, 160
        %v1759 = vld [vmem:[%s1758] sm:$0xff]
        %v1760 = vld [vmem:[%s1758 + $0x8] sm:$0xff]
        %v1761 = vld [vmem:[%s1758 + $0x10] sm:$0xff]
        %v1762 = vld [vmem:[%s1758 + $0x18] sm:$0xff]
        %s1763 = scalar_lea.vmem %s5, 5
        %v1764 = vld [vmem:[%s1763] sm:$0x1]
        %v1766 = vlaneseq
        %v1767 = vshrl.u32 %v1766, 7
        %v1768 = vsub.s32 0, %v1767
        %v1769 = vrot.slane %v1764, %v1768
        %1771 = vmatprep.subr.mxu0 0.0
        %1772 = vmatpush1.msra.mxu0 0.0
        %1773 = vmatprep.subr.mxu0 0.0
        %1774 = vmatpush1.msra.mxu0 0.0
        %1775 = vmatprep.subr.mxu0 0.0
        %1776 = vmatpush1.msra.mxu0 0.0
        %1777 = vmatprep.subr.mxu0 0.0
        %1778 = vmatpush1.msra.mxu0 0.0
        %1779 = vmatprep.subr.mxu0 0.0
        %1780 = vmatpush1.msra.mxu0 0.0
        %1781 = vmatprep.subr.mxu0 0.0
        %1782 = vmatpush1.msra.mxu0 0.0
        %1783 = vmatprep.subr.mxu0 0.0
        %1784 = vmatpush1.msra.mxu0 0.0
        %1785 = vmatprep.subr.mxu0 0.0
        %1786 = vmatpush1.msra.mxu0 0.0
        %1787 = vmatprep.subr.mxu0 0.0
        %1788 = vmatpush1.msra.mxu0 0.0
        %1789 = vmatprep.subr.mxu0 0.0
        %1790 = vmatpush1.msra.mxu0 0.0
        %1791 = vmatprep.subr.mxu0 0.0
        %1792 = vmatpush1.msra.mxu0 0.0
        %1793 = vmatprep.subr.mxu0 0.0
        %1794 = vmatpush1.msra.mxu0 0.0
        %1795 = vmatprep.subr.mxu0 0.0
        %1796 = vmatpush1.msra.mxu0 %v1762
        %1797 = vmatprep.subr.mxu0 0.0
        %1798 = vmatpush1.msra.mxu0 %v1761
        %1799 = vmatprep.subr.mxu0 0.0
        %1800 = vmatpush1.msra.mxu0 %v1760
        %1801 = vmatprep.subr.mxu0 0.0
        %1802 = vmatpush1.msra.mxu0 %v1759
        %1803 = vmatprep.subr.mxu0 0.0
        %1804 = vmatpush2.msra.mxu0 0.0
        %1805 = vmatprep.subr.mxu0 0.0
        %1806 = vmatpush2.msra.mxu0 0.0
        %1807 = vmatprep.subr.mxu0 0.0
        %1808 = vmatpush2.msra.mxu0 0.0
        %1809 = vmatprep.subr.mxu0 0.0
        %1810 = vmatpush2.msra.mxu0 0.0
        %1811 = vmatprep.subr.mxu0 0.0
        %1812 = vmatpush2.msra.mxu0 0.0
        %1813 = vmatprep.subr.mxu0 0.0
        %1814 = vmatpush2.msra.mxu0 0.0
        %1815 = vmatprep.subr.mxu0 0.0
        %1816 = vmatpush2.msra.mxu0 0.0
        %1817 = vmatprep.subr.mxu0 0.0
        %1818 = vmatpush2.msra.mxu0 0.0
        %1819 = vmatprep.subr.mxu0 0.0
        %1820 = vmatpush2.msra.mxu0 0.0
        %1821 = vmatprep.subr.mxu0 0.0
        %1822 = vmatpush2.msra.mxu0 0.0
        %1823 = vmatprep.subr.mxu0 0.0
        %1824 = vmatpush2.msra.mxu0 0.0
        %1825 = vmatprep.subr.mxu0 0.0
        %1826 = vmatpush2.msra.mxu0 0.0
        %1827 = vmatprep.subr.mxu0 0.0
        %1828 = vmatpush2.msra.mxu0 0.0
        %1829 = vmatprep.subr.mxu0 0.0
        %1830 = vmatpush2.msra.mxu0 0.0
        %1831 = vmatprep.subr.mxu0 0.0
        %1832 = vmatpush2.msra.mxu0 0.0
        %1833 = vmatprep.subr.mxu0 0.0
        %1834 = vmatpush2.msra.mxu0 0.0
        %1835 = vmatprep.mubr.f32.mxu0 0.0
        %1836 = vmatmul.mubr.f32.gmra.mxu0 %v1013
        %v1837 = vpop.f32.mrf.mxu0
        %v1838 = vadd.f32 %v1769, %v1837
        %v1839 = vpop.f32.mrf.mxu0
        %1840 = vmatprep.mubr.f32.mxu0 0.0
        %1841 = vmatmul.mubr.f32.gmra.mxu0 %v1016
        %v1842 = vpop.f32.mrf.mxu0
        %v1843 = vadd.f32 %v1769, %v1842
        %v1844 = vpop.f32.mrf.mxu0
        %1845 = vmatprep.mubr.f32.mxu0 0.0
        %1846 = vmatmul.mubr.f32.gmra.mxu0 %v1019
        %v1847 = vpop.f32.mrf.mxu0
        %v1848 = vadd.f32 %v1769, %v1847
        %v1849 = vpop.f32.mrf.mxu0
        %1850 = vmatprep.mubr.f32.mxu0 0.0
        %1851 = vmatmul.mubr.f32.gmra.mxu0 %v1022
        %v1852 = vpop.f32.mrf.mxu0
        %v1853 = vadd.f32 %v1769, %v1852
        %v1854 = vpop.f32.mrf.mxu0
        %1855 = vmatprep.mubr.f32.mxu0 0.0
        %1856 = vmatmul.mubr.f32.gmra.mxu0 %v1025
        %v1857 = vpop.f32.mrf.mxu0
        %v1858 = vadd.f32 %v1769, %v1857
        %v1859 = vpop.f32.mrf.mxu0
        %1860 = vmatprep.mubr.f32.mxu0 0.0
        %1861 = vmatmul.mubr.f32.gmra.mxu0 %v1028
        %v1862 = vpop.f32.mrf.mxu0
        %v1863 = vadd.f32 %v1769, %v1862
        %v1864 = vpop.f32.mrf.mxu0
        %1865 = vmatprep.mubr.f32.mxu0 0.0
        %1866 = vmatmul.mubr.f32.gmra.mxu0 %v1031
        %v1867 = vpop.f32.mrf.mxu0
        %v1868 = vadd.f32 %v1769, %v1867
        %v1869 = vpop.f32.mrf.mxu0
        %1870 = vmatprep.mubr.f32.mxu0 0.0
        %1871 = vmatmul.mubr.f32.gmra.mxu0 %v1034
        %v1872 = vpop.f32.mrf.mxu0
        %v1873 = vadd.f32 %v1769, %v1872
        %v1874 = vpop.f32.mrf.mxu0
        %1875 = vdwg.mxu0
        %s1876 = scalar_lea.vmem %s4, 288
        %v1877 = vld [vmem:[%s1876] sm:$0xff]
        %v1878 = vld [vmem:[%s1876 + $0x8] sm:$0xff]
        %v1879 = vld [vmem:[%s1876 + $0x10] sm:$0xff]
        %v1880 = vld [vmem:[%s1876 + $0x18] sm:$0xff]
        %s1881 = scalar_lea.vmem %s5, 9
        %v1882 = vld [vmem:[%s1881] sm:$0x1]
        %v1884 = vlaneseq
        %v1885 = vshrl.u32 %v1884, 7
        %v1886 = vsub.s32 0, %v1885
        %v1887 = vrot.slane %v1882, %v1886
        %1889 = vmatprep.subr.mxu0 0.0
        %1890 = vmatpush1.msra.mxu0 0.0
        %1891 = vmatprep.subr.mxu0 0.0
        %1892 = vmatpush1.msra.mxu0 0.0
        %1893 = vmatprep.subr.mxu0 0.0
        %1894 = vmatpush1.msra.mxu0 0.0
        %1895 = vmatprep.subr.mxu0 0.0
        %1896 = vmatpush1.msra.mxu0 0.0
        %1897 = vmatprep.subr.mxu0 0.0
        %1898 = vmatpush1.msra.mxu0 0.0
        %1899 = vmatprep.subr.mxu0 0.0
        %1900 = vmatpush1.msra.mxu0 0.0
        %1901 = vmatprep.subr.mxu0 0.0
        %1902 = vmatpush1.msra.mxu0 0.0
        %1903 = vmatprep.subr.mxu0 0.0
        %1904 = vmatpush1.msra.mxu0 0.0
        %1905 = vmatprep.subr.mxu0 0.0
        %1906 = vmatpush1.msra.mxu0 0.0
        %1907 = vmatprep.subr.mxu0 0.0
        %1908 = vmatpush1.msra.mxu0 0.0
        %1909 = vmatprep.subr.mxu0 0.0
        %1910 = vmatpush1.msra.mxu0 0.0
        %1911 = vmatprep.subr.mxu0 0.0
        %1912 = vmatpush1.msra.mxu0 0.0
        %1913 = vmatprep.subr.mxu0 0.0
        %1914 = vmatpush1.msra.mxu0 %v1880
        %1915 = vmatprep.subr.mxu0 0.0
        %1916 = vmatpush1.msra.mxu0 %v1879
        %1917 = vmatprep.subr.mxu0 0.0
        %1918 = vmatpush1.msra.mxu0 %v1878
        %1919 = vmatprep.subr.mxu0 0.0
        %1920 = vmatpush1.msra.mxu0 %v1877
        %1921 = vmatprep.subr.mxu0 0.0
        %1922 = vmatpush2.msra.mxu0 0.0
        %1923 = vmatprep.subr.mxu0 0.0
        %1924 = vmatpush2.msra.mxu0 0.0
        %1925 = vmatprep.subr.mxu0 0.0
        %1926 = vmatpush2.msra.mxu0 0.0
        %1927 = vmatprep.subr.mxu0 0.0
        %1928 = vmatpush2.msra.mxu0 0.0
        %1929 = vmatprep.subr.mxu0 0.0
        %1930 = vmatpush2.msra.mxu0 0.0
        %1931 = vmatprep.subr.mxu0 0.0
        %1932 = vmatpush2.msra.mxu0 0.0
        %1933 = vmatprep.subr.mxu0 0.0
        %1934 = vmatpush2.msra.mxu0 0.0
        %1935 = vmatprep.subr.mxu0 0.0
        %1936 = vmatpush2.msra.mxu0 0.0
        %1937 = vmatprep.subr.mxu0 0.0
        %1938 = vmatpush2.msra.mxu0 0.0
        %1939 = vmatprep.subr.mxu0 0.0
        %1940 = vmatpush2.msra.mxu0 0.0
        %1941 = vmatprep.subr.mxu0 0.0
        %1942 = vmatpush2.msra.mxu0 0.0
        %1943 = vmatprep.subr.mxu0 0.0
        %1944 = vmatpush2.msra.mxu0 0.0
        %1945 = vmatprep.subr.mxu0 0.0
        %1946 = vmatpush2.msra.mxu0 0.0
        %1947 = vmatprep.subr.mxu0 0.0
        %1948 = vmatpush2.msra.mxu0 0.0
        %1949 = vmatprep.subr.mxu0 0.0
        %1950 = vmatpush2.msra.mxu0 0.0
        %1951 = vmatprep.subr.mxu0 0.0
        %1952 = vmatpush2.msra.mxu0 0.0
        %1953 = vmatprep.mubr.f32.mxu0 0.0
        %1954 = vmatmul.mubr.f32.gmra.mxu0 %v1013
        %v1955 = vpop.f32.mrf.mxu0
        %v1956 = vadd.f32 %v1887, %v1955
        %v1957 = vpop.f32.mrf.mxu0
        %1958 = vmatprep.mubr.f32.mxu0 0.0
        %1959 = vmatmul.mubr.f32.gmra.mxu0 %v1016
        %v1960 = vpop.f32.mrf.mxu0
        %v1961 = vadd.f32 %v1887, %v1960
        %v1962 = vpop.f32.mrf.mxu0
        %1963 = vmatprep.mubr.f32.mxu0 0.0
        %1964 = vmatmul.mubr.f32.gmra.mxu0 %v1019
        %v1965 = vpop.f32.mrf.mxu0
        %v1966 = vadd.f32 %v1887, %v1965
        %v1967 = vpop.f32.mrf.mxu0
        %1968 = vmatprep.mubr.f32.mxu0 0.0
        %1969 = vmatmul.mubr.f32.gmra.mxu0 %v1022
        %v1970 = vpop.f32.mrf.mxu0
        %v1971 = vadd.f32 %v1887, %v1970
        %v1972 = vpop.f32.mrf.mxu0
        %1973 = vmatprep.mubr.f32.mxu0 0.0
        %1974 = vmatmul.mubr.f32.gmra.mxu0 %v1025
        %v1975 = vpop.f32.mrf.mxu0
        %v1976 = vadd.f32 %v1887, %v1975
        %v1977 = vpop.f32.mrf.mxu0
        %1978 = vmatprep.mubr.f32.mxu0 0.0
        %1979 = vmatmul.mubr.f32.gmra.mxu0 %v1028
        %v1980 = vpop.f32.mrf.mxu0
        %v1981 = vadd.f32 %v1887, %v1980
        %v1982 = vpop.f32.mrf.mxu0
        %1983 = vmatprep.mubr.f32.mxu0 0.0
        %1984 = vmatmul.mubr.f32.gmra.mxu0 %v1031
        %v1985 = vpop.f32.mrf.mxu0
        %v1986 = vadd.f32 %v1887, %v1985
        %v1987 = vpop.f32.mrf.mxu0
        %1988 = vmatprep.mubr.f32.mxu0 0.0
        %1989 = vmatmul.mubr.f32.gmra.mxu0 %v1034
        %v1990 = vpop.f32.mrf.mxu0
        %v1991 = vadd.f32 %v1887, %v1990
        %v1992 = vpop.f32.mrf.mxu0
        %1993 = vdwg.mxu0
        %v1995 = vsel %vm1259, %v1720, 0
        %v1998 = vsel %vm1259, %v1725, 0
        %v2001 = vsel %vm1259, %v1730, 0
        %v2004 = vsel %vm1259, %v1735, 0
        %v2007 = vsel %vm1259, %v1740, 0
        %v2010 = vsel %vm1259, %v1745, 0
        %v2013 = vsel %vm1259, %v1750, 0
        %v2016 = vsel %vm1259, %v1755, 0
        %v2019 = vsel %vm1259, %v1838, 0
        %v2022 = vsel %vm1259, %v1843, 0
        %v2025 = vsel %vm1259, %v1848, 0
        %v2028 = vsel %vm1259, %v1853, 0
        %v2031 = vsel %vm1259, %v1858, 0
        %v2034 = vsel %vm1259, %v1863, 0
        %v2037 = vsel %vm1259, %v1868, 0
        %v2040 = vsel %vm1259, %v1873, 0
        %2042 = vmatprep.subr.mxu0 0.0
        %2043 = vmatpush1.xpose.msra.mxu0 0.0
        %2044 = vmatprep.subr.mxu0 0.0
        %2045 = vmatpush1.xpose.msra.mxu0 0.0
        %2046 = vmatprep.subr.mxu0 0.0
        %2047 = vmatpush1.xpose.msra.mxu0 0.0
        %2048 = vmatprep.subr.mxu0 0.0
        %2049 = vmatpush1.xpose.msra.mxu0 0.0
        %2050 = vmatprep.subr.mxu0 0.0
        %2051 = vmatpush1.xpose.msra.mxu0 0.0
        %2052 = vmatprep.subr.mxu0 0.0
        %2053 = vmatpush1.xpose.msra.mxu0 0.0
        %2054 = vmatprep.subr.mxu0 0.0
        %2055 = vmatpush1.xpose.msra.mxu0 0.0
        %2056 = vmatprep.subr.mxu0 0.0
        %2057 = vmatpush1.xpose.msra.mxu0 0.0
        %2058 = vmatprep.subr.mxu0 0.0
        %2059 = vmatpush1.xpose.msra.mxu0 %v2040
        %2060 = vmatprep.subr.mxu0 0.0
        %2061 = vmatpush1.xpose.msra.mxu0 %v2037
        %2062 = vmatprep.subr.mxu0 0.0
        %2063 = vmatpush1.xpose.msra.mxu0 %v2034
        %2064 = vmatprep.subr.mxu0 0.0
        %2065 = vmatpush1.xpose.msra.mxu0 %v2031
        %2066 = vmatprep.subr.mxu0 0.0
        %2067 = vmatpush1.xpose.msra.mxu0 %v2028
        %2068 = vmatprep.subr.mxu0 0.0
        %2069 = vmatpush1.xpose.msra.mxu0 %v2025
        %2070 = vmatprep.subr.mxu0 0.0
        %2071 = vmatpush1.xpose.msra.mxu0 %v2022
        %2072 = vmatprep.subr.mxu0 0.0
        %2073 = vmatpush1.xpose.msra.mxu0 %v2019
        %2074 = vmatprep.subr.mxu0 0.0
        %2075 = vmatpush2.xpose.msra.mxu0 0.0
        %2076 = vmatprep.subr.mxu0 0.0
        %2077 = vmatpush2.xpose.msra.mxu0 0.0
        %2078 = vmatprep.subr.mxu0 0.0
        %2079 = vmatpush2.xpose.msra.mxu0 0.0
        %2080 = vmatprep.subr.mxu0 0.0
        %2081 = vmatpush2.xpose.msra.mxu0 0.0
        %2082 = vmatprep.subr.mxu0 0.0
        %2083 = vmatpush2.xpose.msra.mxu0 0.0
        %2084 = vmatprep.subr.mxu0 0.0
        %2085 = vmatpush2.xpose.msra.mxu0 0.0
        %2086 = vmatprep.subr.mxu0 0.0
        %2087 = vmatpush2.xpose.msra.mxu0 0.0
        %2088 = vmatprep.subr.mxu0 0.0
        %2089 = vmatpush2.xpose.msra.mxu0 0.0
        %2090 = vmatprep.subr.mxu0 0.0
        %2091 = vmatpush2.xpose.msra.mxu0 0.0
        %2092 = vmatprep.subr.mxu0 0.0
        %2093 = vmatpush2.xpose.msra.mxu0 0.0
        %2094 = vmatprep.subr.mxu0 0.0
        %2095 = vmatpush2.xpose.msra.mxu0 0.0
        %2096 = vmatprep.subr.mxu0 0.0
        %2097 = vmatpush2.xpose.msra.mxu0 0.0
        %2098 = vmatprep.subr.mxu0 0.0
        %2099 = vmatpush2.xpose.msra.mxu0 0.0
        %2100 = vmatprep.subr.mxu0 0.0
        %2101 = vmatpush2.xpose.msra.mxu0 0.0
        %2102 = vmatprep.subr.mxu0 0.0
        %2103 = vmatpush2.xpose.msra.mxu0 0.0
        %2104 = vmatprep.subr.mxu0 0.0
        %2105 = vmatpush2.xpose.msra.mxu0 0.0
        %2106 = vmatprep.mubr.f32.mxu0 0.0
        %2107 = vmatmul.mubr.f32.gmra.mxu0 %v1995
        %v2108 = vpop.f32.mrf.mxu0
        %v2109 = vadd.f32 0.0, %v2108
        %v2110 = vpop.f32.mrf.mxu0
        %2111 = vmatprep.mubr.f32.mxu0 0.0
        %2112 = vmatmul.mubr.f32.gmra.mxu0 %v1998
        %v2113 = vpop.f32.mrf.mxu0
        %v2114 = vadd.f32 0.0, %v2113
        %v2115 = vpop.f32.mrf.mxu0
        %2116 = vmatprep.mubr.f32.mxu0 0.0
        %2117 = vmatmul.mubr.f32.gmra.mxu0 %v2001
        %v2118 = vpop.f32.mrf.mxu0
        %v2119 = vadd.f32 0.0, %v2118
        %v2120 = vpop.f32.mrf.mxu0
        %2121 = vmatprep.mubr.f32.mxu0 0.0
        %2122 = vmatmul.mubr.f32.gmra.mxu0 %v2004
        %v2123 = vpop.f32.mrf.mxu0
        %v2124 = vadd.f32 0.0, %v2123
        %v2125 = vpop.f32.mrf.mxu0
        %2126 = vmatprep.mubr.f32.mxu0 0.0
        %2127 = vmatmul.mubr.f32.gmra.mxu0 %v2007
        %v2128 = vpop.f32.mrf.mxu0
        %v2129 = vadd.f32 0.0, %v2128
        %v2130 = vpop.f32.mrf.mxu0
        %2131 = vmatprep.mubr.f32.mxu0 0.0
        %2132 = vmatmul.mubr.f32.gmra.mxu0 %v2010
        %v2133 = vpop.f32.mrf.mxu0
        %v2134 = vadd.f32 0.0, %v2133
        %v2135 = vpop.f32.mrf.mxu0
        %2136 = vmatprep.mubr.f32.mxu0 0.0
        %2137 = vmatmul.mubr.f32.gmra.mxu0 %v2013
        %v2138 = vpop.f32.mrf.mxu0
        %v2139 = vadd.f32 0.0, %v2138
        %v2140 = vpop.f32.mrf.mxu0
        %2141 = vmatprep.mubr.f32.mxu0 0.0
        %2142 = vmatmul.mubr.f32.gmra.mxu0 %v2016
        %v2143 = vpop.f32.mrf.mxu0
        %v2144 = vadd.f32 0.0, %v2143
        %v2145 = vpop.f32.mrf.mxu0
        %2146 = vdwg.mxu0
        %v2147 = vmul.f32 %v2109, 0.35355338
        %v2148 = vmul.f32 %v2114, 0.35355338
        %v2149 = vmul.f32 %v2119, 0.35355338
        %v2150 = vmul.f32 %v2124, 0.35355338
        %v2151 = vmul.f32 %v2129, 0.35355338
        %v2152 = vmul.f32 %v2134, 0.35355338
        %v2153 = vmul.f32 %v2139, 0.35355338
        %v2154 = vmul.f32 %v2144, 0.35355338
        %v2155 = vsel %vm1421, %v2147, -inf
        %2156 = vmax.xlane.f32.xlu0 %v2155
        %v2157 = vpop.xlane.xlu0 %2156
        %v2158 = vsel %vm1421, %v2148, -inf
        %2159 = vmax.xlane.f32.xlu0 %v2158
        %v2160 = vpop.xlane.xlu0 %2159
        %v2161 = vsel %vm1421, %v2149, -inf
        %2162 = vmax.xlane.f32.xlu0 %v2161
        %v2163 = vpop.xlane.xlu0 %2162
        %v2164 = vsel %vm1421, %v2150, -inf
        %2165 = vmax.xlane.f32.xlu0 %v2164
        %v2166 = vpop.xlane.xlu0 %2165
        %v2167 = vsel %vm1421, %v2151, -inf
        %2168 = vmax.xlane.f32.xlu0 %v2167
        %v2169 = vpop.xlane.xlu0 %2168
        %v2170 = vsel %vm1421, %v2152, -inf
        %2171 = vmax.xlane.f32.xlu0 %v2170
        %v2172 = vpop.xlane.xlu0 %2171
        %v2173 = vsel %vm1421, %v2153, -inf
        %2174 = vmax.xlane.f32.xlu0 %v2173
        %v2175 = vpop.xlane.xlu0 %2174
        %v2176 = vsel %vm1421, %v2154, -inf
        %2177 = vmax.xlane.f32.xlu0 %v2176
        %v2178 = vpop.xlane.xlu0 %2177
        %v2179 = vsub.f32 %v2147, %v2157
        %v2180 = vsub.f32 %v2148, %v2160
        %v2181 = vsub.f32 %v2149, %v2163
        %v2182 = vsub.f32 %v2150, %v2166
        %v2183 = vsub.f32 %v2151, %v2169
        %v2184 = vsub.f32 %v2152, %v2172
        %v2185 = vsub.f32 %v2153, %v2175
        %v2186 = vsub.f32 %v2154, %v2178
        %v2187 = vmul.f32 %v2179, 1.442695
        %v2188 = vpow.pop %v2187
        %v2189 = vmul.f32 %v2180, 1.442695
        %v2190 = vpow.pop %v2189
        %v2191 = vmul.f32 %v2181, 1.442695
        %v2192 = vpow.pop %v2191
        %v2193 = vmul.f32 %v2182, 1.442695
        %v2194 = vpow.pop %v2193
        %v2195 = vmul.f32 %v2183, 1.442695
        %v2196 = vpow.pop %v2195
        %v2197 = vmul.f32 %v2184, 1.442695
        %v2198 = vpow.pop %v2197
        %v2199 = vmul.f32 %v2185, 1.442695
        %v2200 = vpow.pop %v2199
        %v2201 = vmul.f32 %v2186, 1.442695
        %v2202 = vpow.pop %v2201
        %v2203 = vsel %vm1421, %v2188, 0.0
        %2204 = vadd.xlane.f32.xlu0 %v2203
        %v2205 = vpop.xlane.xlu0 %2204
        %v2206 = vsel %vm1421, %v2190, 0.0
        %2207 = vadd.xlane.f32.xlu0 %v2206
        %v2208 = vpop.xlane.xlu0 %2207
        %v2209 = vsel %vm1421, %v2192, 0.0
        %2210 = vadd.xlane.f32.xlu0 %v2209
        %v2211 = vpop.xlane.xlu0 %2210
        %v2212 = vsel %vm1421, %v2194, 0.0
        %2213 = vadd.xlane.f32.xlu0 %v2212
        %v2214 = vpop.xlane.xlu0 %2213
        %v2215 = vsel %vm1421, %v2196, 0.0
        %2216 = vadd.xlane.f32.xlu0 %v2215
        %v2217 = vpop.xlane.xlu0 %2216
        %v2218 = vsel %vm1421, %v2198, 0.0
        %2219 = vadd.xlane.f32.xlu0 %v2218
        %v2220 = vpop.xlane.xlu0 %2219
        %v2221 = vsel %vm1421, %v2200, 0.0
        %2222 = vadd.xlane.f32.xlu0 %v2221
        %v2223 = vpop.xlane.xlu0 %2222
        %v2224 = vsel %vm1421, %v2202, 0.0
        %2225 = vadd.xlane.f32.xlu0 %v2224
        %v2226 = vpop.xlane.xlu0 %2225
        %v2227 = vrcp.pop %v2205
        %v2228 = vrcp.pop %v2208
        %v2229 = vrcp.pop %v2211
        %v2230 = vrcp.pop %v2214
        %v2231 = vrcp.pop %v2217
        %v2232 = vrcp.pop %v2220
        %v2233 = vrcp.pop %v2223
        %v2234 = vrcp.pop %v2226
        %v2235 = vmul.f32 %v2188, %v2227
        %v2236 = vmul.f32 %v2190, %v2228
        %v2237 = vmul.f32 %v2192, %v2229
        %v2238 = vmul.f32 %v2194, %v2230
        %v2239 = vmul.f32 %v2196, %v2231
        %v2240 = vmul.f32 %v2198, %v2232
        %v2241 = vmul.f32 %v2200, %v2233
        %v2242 = vmul.f32 %v2202, %v2234
        %v2244 = vsel %vm1421, %v2235, 0
        %v2247 = vsel %vm1421, %v2236, 0
        %v2250 = vsel %vm1421, %v2237, 0
        %v2253 = vsel %vm1421, %v2238, 0
        %v2256 = vsel %vm1421, %v2239, 0
        %v2259 = vsel %vm1421, %v2240, 0
        %v2262 = vsel %vm1421, %v2241, 0
        %v2265 = vsel %vm1421, %v2242, 0
        %2267 = vmatprep.subr.mxu0 0.0
        %2268 = vmatpush1.msra.mxu0 0.0
        %2269 = vmatprep.subr.mxu0 0.0
        %2270 = vmatpush1.msra.mxu0 0.0
        %2271 = vmatprep.subr.mxu0 0.0
        %2272 = vmatpush1.msra.mxu0 0.0
        %2273 = vmatprep.subr.mxu0 0.0
        %2274 = vmatpush1.msra.mxu0 0.0
        %2275 = vmatprep.subr.mxu0 0.0
        %2276 = vmatpush1.msra.mxu0 0.0
        %2277 = vmatprep.subr.mxu0 0.0
        %2278 = vmatpush1.msra.mxu0 0.0
        %2279 = vmatprep.subr.mxu0 0.0
        %2280 = vmatpush1.msra.mxu0 0.0
        %2281 = vmatprep.subr.mxu0 0.0
        %2282 = vmatpush1.msra.mxu0 0.0
        %2283 = vmatprep.subr.mxu0 0.0
        %2284 = vmatpush1.msra.mxu0 %v1991
        %2285 = vmatprep.subr.mxu0 0.0
        %2286 = vmatpush1.msra.mxu0 %v1986
        %2287 = vmatprep.subr.mxu0 0.0
        %2288 = vmatpush1.msra.mxu0 %v1981
        %2289 = vmatprep.subr.mxu0 0.0
        %2290 = vmatpush1.msra.mxu0 %v1976
        %2291 = vmatprep.subr.mxu0 0.0
        %2292 = vmatpush1.msra.mxu0 %v1971
        %2293 = vmatprep.subr.mxu0 0.0
        %2294 = vmatpush1.msra.mxu0 %v1966
        %2295 = vmatprep.subr.mxu0 0.0
        %2296 = vmatpush1.msra.mxu0 %v1961
        %2297 = vmatprep.subr.mxu0 0.0
        %2298 = vmatpush1.msra.mxu0 %v1956
        %2299 = vmatprep.subr.mxu0 0.0
        %2300 = vmatpush2.msra.mxu0 0.0
        %2301 = vmatprep.subr.mxu0 0.0
        %2302 = vmatpush2.msra.mxu0 0.0
        %2303 = vmatprep.subr.mxu0 0.0
        %2304 = vmatpush2.msra.mxu0 0.0
        %2305 = vmatprep.subr.mxu0 0.0
        %2306 = vmatpush2.msra.mxu0 0.0
        %2307 = vmatprep.subr.mxu0 0.0
        %2308 = vmatpush2.msra.mxu0 0.0
        %2309 = vmatprep.subr.mxu0 0.0
        %2310 = vmatpush2.msra.mxu0 0.0
        %2311 = vmatprep.subr.mxu0 0.0
        %2312 = vmatpush2.msra.mxu0 0.0
        %2313 = vmatprep.subr.mxu0 0.0
        %2314 = vmatpush2.msra.mxu0 0.0
        %2315 = vmatprep.subr.mxu0 0.0
        %2316 = vmatpush2.msra.mxu0 0.0
        %2317 = vmatprep.subr.mxu0 0.0
        %2318 = vmatpush2.msra.mxu0 0.0
        %2319 = vmatprep.subr.mxu0 0.0
        %2320 = vmatpush2.msra.mxu0 0.0
        %2321 = vmatprep.subr.mxu0 0.0
        %2322 = vmatpush2.msra.mxu0 0.0
        %2323 = vmatprep.subr.mxu0 0.0
        %2324 = vmatpush2.msra.mxu0 0.0
        %2325 = vmatprep.subr.mxu0 0.0
        %2326 = vmatpush2.msra.mxu0 0.0
        %2327 = vmatprep.subr.mxu0 0.0
        %2328 = vmatpush2.msra.mxu0 0.0
        %2329 = vmatprep.subr.mxu0 0.0
        %2330 = vmatpush2.msra.mxu0 0.0
        %2331 = vmatprep.mubr.f32.mxu0 0.0
        %2332 = vmatmul.mubr.f32.gmra.mxu0 %v2244
        %v2333 = vpop.f32.mrf.mxu0
        %v2334 = vadd.f32 0.0, %v2333
        %v2335 = vpop.f32.mrf.mxu0
        %2336 = vmatprep.mubr.f32.mxu0 0.0
        %2337 = vmatmul.mubr.f32.gmra.mxu0 %v2247
        %v2338 = vpop.f32.mrf.mxu0
        %v2339 = vadd.f32 0.0, %v2338
        %v2340 = vpop.f32.mrf.mxu0
        %2341 = vmatprep.mubr.f32.mxu0 0.0
        %2342 = vmatmul.mubr.f32.gmra.mxu0 %v2250
        %v2343 = vpop.f32.mrf.mxu0
        %v2344 = vadd.f32 0.0, %v2343
        %v2345 = vpop.f32.mrf.mxu0
        %2346 = vmatprep.mubr.f32.mxu0 0.0
        %2347 = vmatmul.mubr.f32.gmra.mxu0 %v2253
        %v2348 = vpop.f32.mrf.mxu0
        %v2349 = vadd.f32 0.0, %v2348
        %v2350 = vpop.f32.mrf.mxu0
        %2351 = vmatprep.mubr.f32.mxu0 0.0
        %2352 = vmatmul.mubr.f32.gmra.mxu0 %v2256
        %v2353 = vpop.f32.mrf.mxu0
        %v2354 = vadd.f32 0.0, %v2353
        %v2355 = vpop.f32.mrf.mxu0
        %2356 = vmatprep.mubr.f32.mxu0 0.0
        %2357 = vmatmul.mubr.f32.gmra.mxu0 %v2259
        %v2358 = vpop.f32.mrf.mxu0
        %v2359 = vadd.f32 0.0, %v2358
        %v2360 = vpop.f32.mrf.mxu0
        %2361 = vmatprep.mubr.f32.mxu0 0.0
        %2362 = vmatmul.mubr.f32.gmra.mxu0 %v2262
        %v2363 = vpop.f32.mrf.mxu0
        %v2364 = vadd.f32 0.0, %v2363
        %v2365 = vpop.f32.mrf.mxu0
        %2366 = vmatprep.mubr.f32.mxu0 0.0
        %2367 = vmatmul.mubr.f32.gmra.mxu0 %v2265
        %v2368 = vpop.f32.mrf.mxu0
        %v2369 = vadd.f32 0.0, %v2368
        %v2370 = vpop.f32.mrf.mxu0
        %2371 = vdwg.mxu0
        %s2372 = scalar_lea.vmem %s6, 8
        %v2373 = vld [vmem:[%s2372] sm:$0xff]
        %v2375 = vsel %vm1259, %v2334, 0
        %v2378 = vsel %vm1259, %v2339, 0
        %v2381 = vsel %vm1259, %v2344, 0
        %v2384 = vsel %vm1259, %v2349, 0
        %v2387 = vsel %vm1259, %v2354, 0
        %v2390 = vsel %vm1259, %v2359, 0
        %v2393 = vsel %vm1259, %v2364, 0
        %v2396 = vsel %vm1259, %v2369, 0
        %2398 = vmatprep.subr.mxu0 0.0
        %2399 = vmatpush1.msra.mxu0 0.0
        %2400 = vmatprep.subr.mxu0 0.0
        %2401 = vmatpush1.msra.mxu0 0.0
        %2402 = vmatprep.subr.mxu0 0.0
        %2403 = vmatpush1.msra.mxu0 0.0
        %2404 = vmatprep.subr.mxu0 0.0
        %2405 = vmatpush1.msra.mxu0 0.0
        %2406 = vmatprep.subr.mxu0 0.0
        %2407 = vmatpush1.msra.mxu0 0.0
        %2408 = vmatprep.subr.mxu0 0.0
        %2409 = vmatpush1.msra.mxu0 0.0
        %2410 = vmatprep.subr.mxu0 0.0
        %2411 = vmatpush1.msra.mxu0 0.0
        %2412 = vmatprep.subr.mxu0 0.0
        %2413 = vmatpush1.msra.mxu0 0.0
        %2414 = vmatprep.subr.mxu0 0.0
        %2415 = vmatpush1.msra.mxu0 0.0
        %2416 = vmatprep.subr.mxu0 0.0
        %2417 = vmatpush1.msra.mxu0 0.0
        %2418 = vmatprep.subr.mxu0 0.0
        %2419 = vmatpush1.msra.mxu0 0.0
        %2420 = vmatprep.subr.mxu0 0.0
        %2421 = vmatpush1.msra.mxu0 0.0
        %2422 = vmatprep.subr.mxu0 0.0
        %2423 = vmatpush1.msra.mxu0 0.0
        %2424 = vmatprep.subr.mxu0 0.0
        %2425 = vmatpush1.msra.mxu0 0.0
        %2426 = vmatprep.subr.mxu0 0.0
        %2427 = vmatpush1.msra.mxu0 0.0
        %2428 = vmatprep.subr.mxu0 0.0
        %2429 = vmatpush1.msra.mxu0 %v2373
        %2430 = vmatprep.subr.mxu0 0.0
        %2431 = vmatpush2.msra.mxu0 0.0
        %2432 = vmatprep.subr.mxu0 0.0
        %2433 = vmatpush2.msra.mxu0 0.0
        %2434 = vmatprep.subr.mxu0 0.0
        %2435 = vmatpush2.msra.mxu0 0.0
        %2436 = vmatprep.subr.mxu0 0.0
        %2437 = vmatpush2.msra.mxu0 0.0
        %2438 = vmatprep.subr.mxu0 0.0
        %2439 = vmatpush2.msra.mxu0 0.0
        %2440 = vmatprep.subr.mxu0 0.0
        %2441 = vmatpush2.msra.mxu0 0.0
        %2442 = vmatprep.subr.mxu0 0.0
        %2443 = vmatpush2.msra.mxu0 0.0
        %2444 = vmatprep.subr.mxu0 0.0
        %2445 = vmatpush2.msra.mxu0 0.0
        %2446 = vmatprep.subr.mxu0 0.0
        %2447 = vmatpush2.msra.mxu0 0.0
        %2448 = vmatprep.subr.mxu0 0.0
        %2449 = vmatpush2.msra.mxu0 0.0
        %2450 = vmatprep.subr.mxu0 0.0
        %2451 = vmatpush2.msra.mxu0 0.0
        %2452 = vmatprep.subr.mxu0 0.0
        %2453 = vmatpush2.msra.mxu0 0.0
        %2454 = vmatprep.subr.mxu0 0.0
        %2455 = vmatpush2.msra.mxu0 0.0
        %2456 = vmatprep.subr.mxu0 0.0
        %2457 = vmatpush2.msra.mxu0 0.0
        %2458 = vmatprep.subr.mxu0 0.0
        %2459 = vmatpush2.msra.mxu0 0.0
        %2460 = vmatprep.subr.mxu0 0.0
        %2461 = vmatpush2.msra.mxu0 0.0
        %2462 = vmatprep.mubr.f32.mxu0 0.0
        %2463 = vmatmul.mubr.f32.gmra.mxu0 %v2375
        %v2464 = vpop.f32.mrf.mxu0
        %v2465 = vadd.f32 0.0, %v2464
        %v2466 = vpop.f32.mrf.mxu0
        %2467 = vmatprep.mubr.f32.mxu0 0.0
        %2468 = vmatmul.mubr.f32.gmra.mxu0 %v2378
        %v2469 = vpop.f32.mrf.mxu0
        %v2470 = vadd.f32 0.0, %v2469
        %v2471 = vpop.f32.mrf.mxu0
        %2472 = vmatprep.mubr.f32.mxu0 0.0
        %2473 = vmatmul.mubr.f32.gmra.mxu0 %v2381
        %v2474 = vpop.f32.mrf.mxu0
        %v2475 = vadd.f32 0.0, %v2474
        %v2476 = vpop.f32.mrf.mxu0
        %2477 = vmatprep.mubr.f32.mxu0 0.0
        %2478 = vmatmul.mubr.f32.gmra.mxu0 %v2384
        %v2479 = vpop.f32.mrf.mxu0
        %v2480 = vadd.f32 0.0, %v2479
        %v2481 = vpop.f32.mrf.mxu0
        %2482 = vmatprep.mubr.f32.mxu0 0.0
        %2483 = vmatmul.mubr.f32.gmra.mxu0 %v2387
        %v2484 = vpop.f32.mrf.mxu0
        %v2485 = vadd.f32 0.0, %v2484
        %v2486 = vpop.f32.mrf.mxu0
        %2487 = vmatprep.mubr.f32.mxu0 0.0
        %2488 = vmatmul.mubr.f32.gmra.mxu0 %v2390
        %v2489 = vpop.f32.mrf.mxu0
        %v2490 = vadd.f32 0.0, %v2489
        %v2491 = vpop.f32.mrf.mxu0
        %2492 = vmatprep.mubr.f32.mxu0 0.0
        %2493 = vmatmul.mubr.f32.gmra.mxu0 %v2393
        %v2494 = vpop.f32.mrf.mxu0
        %v2495 = vadd.f32 0.0, %v2494
        %v2496 = vpop.f32.mrf.mxu0
        %2497 = vmatprep.mubr.f32.mxu0 0.0
        %2498 = vmatmul.mubr.f32.gmra.mxu0 %v2396
        %v2499 = vpop.f32.mrf.mxu0
        %v2500 = vadd.f32 0.0, %v2499
        %v2501 = vpop.f32.mrf.mxu0
        %2502 = vdwg.mxu0
        %v2504 = vsel %vm1259, %v1601, 0
        %v2507 = vsel %vm1259, %v1606, 0
        %v2510 = vsel %vm1259, %v1611, 0
        %v2513 = vsel %vm1259, %v1616, 0
        %v2516 = vsel %vm1259, %v1621, 0
        %v2519 = vsel %vm1259, %v1626, 0
        %v2522 = vsel %vm1259, %v1631, 0
        %v2525 = vsel %vm1259, %v1636, 0
        %2527 = vmatprep.subr.mxu0 0.0
        %2528 = vmatpush1.msra.mxu0 0.0
        %2529 = vmatprep.subr.mxu0 0.0
        %2530 = vmatpush1.msra.mxu0 0.0
        %2531 = vmatprep.subr.mxu0 0.0
        %2532 = vmatpush1.msra.mxu0 0.0
        %2533 = vmatprep.subr.mxu0 0.0
        %2534 = vmatpush1.msra.mxu0 0.0
        %2535 = vmatprep.subr.mxu0 0.0
        %2536 = vmatpush1.msra.mxu0 0.0
        %2537 = vmatprep.subr.mxu0 0.0
        %2538 = vmatpush1.msra.mxu0 0.0
        %2539 = vmatprep.subr.mxu0 0.0
        %2540 = vmatpush1.msra.mxu0 0.0
        %2541 = vmatprep.subr.mxu0 0.0
        %2542 = vmatpush1.msra.mxu0 0.0
        %2543 = vmatprep.subr.mxu0 0.0
        %2544 = vmatpush1.msra.mxu0 0.0
        %2545 = vmatprep.subr.mxu0 0.0
        %2546 = vmatpush1.msra.mxu0 0.0
        %2547 = vmatprep.subr.mxu0 0.0
        %2548 = vmatpush1.msra.mxu0 0.0
        %2549 = vmatprep.subr.mxu0 0.0
        %2550 = vmatpush1.msra.mxu0 0.0
        %2551 = vmatprep.subr.mxu0 0.0
        %2552 = vmatpush1.msra.mxu0 0.0
        %2553 = vmatprep.subr.mxu0 0.0
        %2554 = vmatpush1.msra.mxu0 0.0
        %2555 = vmatprep.subr.mxu0 0.0
        %2556 = vmatpush1.msra.mxu0 0.0
        %2557 = vmatprep.subr.mxu0 0.0
        %2558 = vmatpush1.msra.mxu0 %v1639
        %2559 = vmatprep.subr.mxu0 0.0
        %2560 = vmatpush2.msra.mxu0 0.0
        %2561 = vmatprep.subr.mxu0 0.0
        %2562 = vmatpush2.msra.mxu0 0.0
        %2563 = vmatprep.subr.mxu0 0.0
        %2564 = vmatpush2.msra.mxu0 0.0
        %2565 = vmatprep.subr.mxu0 0.0
        %2566 = vmatpush2.msra.mxu0 0.0
        %2567 = vmatprep.subr.mxu0 0.0
        %2568 = vmatpush2.msra.mxu0 0.0
        %2569 = vmatprep.subr.mxu0 0.0
        %2570 = vmatpush2.msra.mxu0 0.0
        %2571 = vmatprep.subr.mxu0 0.0
        %2572 = vmatpush2.msra.mxu0 0.0
        %2573 = vmatprep.subr.mxu0 0.0
        %2574 = vmatpush2.msra.mxu0 0.0
        %2575 = vmatprep.subr.mxu0 0.0
        %2576 = vmatpush2.msra.mxu0 0.0
        %2577 = vmatprep.subr.mxu0 0.0
        %2578 = vmatpush2.msra.mxu0 0.0
        %2579 = vmatprep.subr.mxu0 0.0
        %2580 = vmatpush2.msra.mxu0 0.0
        %2581 = vmatprep.subr.mxu0 0.0
        %2582 = vmatpush2.msra.mxu0 0.0
        %2583 = vmatprep.subr.mxu0 0.0
        %2584 = vmatpush2.msra.mxu0 0.0
        %2585 = vmatprep.subr.mxu0 0.0
        %2586 = vmatpush2.msra.mxu0 0.0
        %2587 = vmatprep.subr.mxu0 0.0
        %2588 = vmatpush2.msra.mxu0 0.0
        %2589 = vmatprep.subr.mxu0 0.0
        %2590 = vmatpush2.msra.mxu0 0.0
        %2591 = vmatprep.mubr.f32.mxu0 0.0
        %2592 = vmatmul.mubr.f32.gmra.mxu0 %v2504
        %v2593 = vpop.f32.mrf.mxu0
        %v2594 = vadd.f32 %v2465, %v2593
        %v2595 = vpop.f32.mrf.mxu0
        %2596 = vmatprep.mubr.f32.mxu0 0.0
        %2597 = vmatmul.mubr.f32.gmra.mxu0 %v2507
        %v2598 = vpop.f32.mrf.mxu0
        %v2599 = vadd.f32 %v2470, %v2598
        %v2600 = vpop.f32.mrf.mxu0
        %2601 = vmatprep.mubr.f32.mxu0 0.0
        %2602 = vmatmul.mubr.f32.gmra.mxu0 %v2510
        %v2603 = vpop.f32.mrf.mxu0
        %v2604 = vadd.f32 %v2475, %v2603
        %v2605 = vpop.f32.mrf.mxu0
        %2606 = vmatprep.mubr.f32.mxu0 0.0
        %2607 = vmatmul.mubr.f32.gmra.mxu0 %v2513
        %v2608 = vpop.f32.mrf.mxu0
        %v2609 = vadd.f32 %v2480, %v2608
        %v2610 = vpop.f32.mrf.mxu0
        %2611 = vmatprep.mubr.f32.mxu0 0.0
        %2612 = vmatmul.mubr.f32.gmra.mxu0 %v2516
        %v2613 = vpop.f32.mrf.mxu0
        %v2614 = vadd.f32 %v2485, %v2613
        %v2615 = vpop.f32.mrf.mxu0
        %2616 = vmatprep.mubr.f32.mxu0 0.0
        %2617 = vmatmul.mubr.f32.gmra.mxu0 %v2519
        %v2618 = vpop.f32.mrf.mxu0
        %v2619 = vadd.f32 %v2490, %v2618
        %v2620 = vpop.f32.mrf.mxu0
        %2621 = vmatprep.mubr.f32.mxu0 0.0
        %2622 = vmatmul.mubr.f32.gmra.mxu0 %v2522
        %v2623 = vpop.f32.mrf.mxu0
        %v2624 = vadd.f32 %v2495, %v2623
        %v2625 = vpop.f32.mrf.mxu0
        %2626 = vmatprep.mubr.f32.mxu0 0.0
        %2627 = vmatmul.mubr.f32.gmra.mxu0 %v2525
        %v2628 = vpop.f32.mrf.mxu0
        %v2629 = vadd.f32 %v2500, %v2628
        %v2630 = vpop.f32.mrf.mxu0
        %2631 = vdwg.mxu0
        %s2632 = scalar_lea.vmem %s4, 448
        %v2633 = vld [vmem:[%s2632] sm:$0xff]
        %v2634 = vld [vmem:[%s2632 + $0x8] sm:$0xff]
        %v2635 = vld [vmem:[%s2632 + $0x10] sm:$0xff]
        %v2636 = vld [vmem:[%s2632 + $0x18] sm:$0xff]
        %s2637 = scalar_lea.vmem %s5, 14
        %v2638 = vld [vmem:[%s2637] sm:$0x1]
        %v2640 = vlaneseq
        %v2641 = vshrl.u32 %v2640, 7
        %v2642 = vsub.s32 0, %v2641
        %v2643 = vrot.slane %v2638, %v2642
        %2645 = vmatprep.subr.mxu0 0.0
        %2646 = vmatpush1.msra.mxu0 0.0
        %2647 = vmatprep.subr.mxu0 0.0
        %2648 = vmatpush1.msra.mxu0 0.0
        %2649 = vmatprep.subr.mxu0 0.0
        %2650 = vmatpush1.msra.mxu0 0.0
        %2651 = vmatprep.subr.mxu0 0.0
        %2652 = vmatpush1.msra.mxu0 0.0
        %2653 = vmatprep.subr.mxu0 0.0
        %2654 = vmatpush1.msra.mxu0 0.0
        %2655 = vmatprep.subr.mxu0 0.0
        %2656 = vmatpush1.msra.mxu0 0.0
        %2657 = vmatprep.subr.mxu0 0.0
        %2658 = vmatpush1.msra.mxu0 0.0
        %2659 = vmatprep.subr.mxu0 0.0
        %2660 = vmatpush1.msra.mxu0 0.0
        %2661 = vmatprep.subr.mxu0 0.0
        %2662 = vmatpush1.msra.mxu0 0.0
        %2663 = vmatprep.subr.mxu0 0.0
        %2664 = vmatpush1.msra.mxu0 0.0
        %2665 = vmatprep.subr.mxu0 0.0
        %2666 = vmatpush1.msra.mxu0 0.0
        %2667 = vmatprep.subr.mxu0 0.0
        %2668 = vmatpush1.msra.mxu0 0.0
        %2669 = vmatprep.subr.mxu0 0.0
        %2670 = vmatpush1.msra.mxu0 %v2636
        %2671 = vmatprep.subr.mxu0 0.0
        %2672 = vmatpush1.msra.mxu0 %v2635
        %2673 = vmatprep.subr.mxu0 0.0
        %2674 = vmatpush1.msra.mxu0 %v2634
        %2675 = vmatprep.subr.mxu0 0.0
        %2676 = vmatpush1.msra.mxu0 %v2633
        %2677 = vmatprep.subr.mxu0 0.0
        %2678 = vmatpush2.msra.mxu0 0.0
        %2679 = vmatprep.subr.mxu0 0.0
        %2680 = vmatpush2.msra.mxu0 0.0
        %2681 = vmatprep.subr.mxu0 0.0
        %2682 = vmatpush2.msra.mxu0 0.0
        %2683 = vmatprep.subr.mxu0 0.0
        %2684 = vmatpush2.msra.mxu0 0.0
        %2685 = vmatprep.subr.mxu0 0.0
        %2686 = vmatpush2.msra.mxu0 0.0
        %2687 = vmatprep.subr.mxu0 0.0
        %2688 = vmatpush2.msra.mxu0 0.0
        %2689 = vmatprep.subr.mxu0 0.0
        %2690 = vmatpush2.msra.mxu0 0.0
        %2691 = vmatprep.subr.mxu0 0.0
        %2692 = vmatpush2.msra.mxu0 0.0
        %2693 = vmatprep.subr.mxu0 0.0
        %2694 = vmatpush2.msra.mxu0 0.0
        %2695 = vmatprep.subr.mxu0 0.0
        %2696 = vmatpush2.msra.mxu0 0.0
        %2697 = vmatprep.subr.mxu0 0.0
        %2698 = vmatpush2.msra.mxu0 0.0
        %2699 = vmatprep.subr.mxu0 0.0
        %2700 = vmatpush2.msra.mxu0 0.0
        %2701 = vmatprep.subr.mxu0 0.0
        %2702 = vmatpush2.msra.mxu0 0.0
        %2703 = vmatprep.subr.mxu0 0.0
        %2704 = vmatpush2.msra.mxu0 0.0
        %2705 = vmatprep.subr.mxu0 0.0
        %2706 = vmatpush2.msra.mxu0 0.0
        %2707 = vmatprep.subr.mxu0 0.0
        %2708 = vmatpush2.msra.mxu0 0.0
        %2709 = vmatprep.mubr.f32.mxu0 0.0
        %2710 = vmatmul.mubr.f32.gmra.mxu0 %v871
        %v2711 = vpop.f32.mrf.mxu0
        %v2712 = vadd.f32 %v2643, %v2711
        %v2713 = vpop.f32.mrf.mxu0
        %2714 = vmatprep.mubr.f32.mxu0 0.0
        %2715 = vmatmul.mubr.f32.gmra.mxu0 %v874
        %v2716 = vpop.f32.mrf.mxu0
        %v2717 = vadd.f32 %v2643, %v2716
        %v2718 = vpop.f32.mrf.mxu0
        %2719 = vmatprep.mubr.f32.mxu0 0.0
        %2720 = vmatmul.mubr.f32.gmra.mxu0 %v877
        %v2721 = vpop.f32.mrf.mxu0
        %v2722 = vadd.f32 %v2643, %v2721
        %v2723 = vpop.f32.mrf.mxu0
        %2724 = vmatprep.mubr.f32.mxu0 0.0
        %2725 = vmatmul.mubr.f32.gmra.mxu0 %v880
        %v2726 = vpop.f32.mrf.mxu0
        %v2727 = vadd.f32 %v2643, %v2726
        %v2728 = vpop.f32.mrf.mxu0
        %2729 = vmatprep.mubr.f32.mxu0 0.0
        %2730 = vmatmul.mubr.f32.gmra.mxu0 %v883
        %v2731 = vpop.f32.mrf.mxu0
        %v2732 = vadd.f32 %v2643, %v2731
        %v2733 = vpop.f32.mrf.mxu0
        %2734 = vmatprep.mubr.f32.mxu0 0.0
        %2735 = vmatmul.mubr.f32.gmra.mxu0 %v886
        %v2736 = vpop.f32.mrf.mxu0
        %v2737 = vadd.f32 %v2643, %v2736
        %v2738 = vpop.f32.mrf.mxu0
        %2739 = vmatprep.mubr.f32.mxu0 0.0
        %2740 = vmatmul.mubr.f32.gmra.mxu0 %v889
        %v2741 = vpop.f32.mrf.mxu0
        %v2742 = vadd.f32 %v2643, %v2741
        %v2743 = vpop.f32.mrf.mxu0
        %2744 = vmatprep.mubr.f32.mxu0 0.0
        %2745 = vmatmul.mubr.f32.gmra.mxu0 %v892
        %v2746 = vpop.f32.mrf.mxu0
        %v2747 = vadd.f32 %v2643, %v2746
        %v2748 = vpop.f32.mrf.mxu0
        %2749 = vdwg.mxu0
        %s2750 = scalar_lea.vmem %s4, 192
        %v2751 = vld [vmem:[%s2750] sm:$0xff]
        %v2752 = vld [vmem:[%s2750 + $0x8] sm:$0xff]
        %v2753 = vld [vmem:[%s2750 + $0x10] sm:$0xff]
        %v2754 = vld [vmem:[%s2750 + $0x18] sm:$0xff]
        %s2755 = scalar_lea.vmem %s5, 6
        %v2756 = vld [vmem:[%s2755] sm:$0x1]
        %v2758 = vlaneseq
        %v2759 = vshrl.u32 %v2758, 7
        %v2760 = vsub.s32 0, %v2759
        %v2761 = vrot.slane %v2756, %v2760
        %2763 = vmatprep.subr.mxu0 0.0
        %2764 = vmatpush1.msra.mxu0 0.0
        %2765 = vmatprep.subr.mxu0 0.0
        %2766 = vmatpush1.msra.mxu0 0.0
        %2767 = vmatprep.subr.mxu0 0.0
        %2768 = vmatpush1.msra.mxu0 0.0
        %2769 = vmatprep.subr.mxu0 0.0
        %2770 = vmatpush1.msra.mxu0 0.0
        %2771 = vmatprep.subr.mxu0 0.0
        %2772 = vmatpush1.msra.mxu0 0.0
        %2773 = vmatprep.subr.mxu0 0.0
        %2774 = vmatpush1.msra.mxu0 0.0
        %2775 = vmatprep.subr.mxu0 0.0
        %2776 = vmatpush1.msra.mxu0 0.0
        %2777 = vmatprep.subr.mxu0 0.0
        %2778 = vmatpush1.msra.mxu0 0.0
        %2779 = vmatprep.subr.mxu0 0.0
        %2780 = vmatpush1.msra.mxu0 0.0
        %2781 = vmatprep.subr.mxu0 0.0
        %2782 = vmatpush1.msra.mxu0 0.0
        %2783 = vmatprep.subr.mxu0 0.0
        %2784 = vmatpush1.msra.mxu0 0.0
        %2785 = vmatprep.subr.mxu0 0.0
        %2786 = vmatpush1.msra.mxu0 0.0
        %2787 = vmatprep.subr.mxu0 0.0
        %2788 = vmatpush1.msra.mxu0 %v2754
        %2789 = vmatprep.subr.mxu0 0.0
        %2790 = vmatpush1.msra.mxu0 %v2753
        %2791 = vmatprep.subr.mxu0 0.0
        %2792 = vmatpush1.msra.mxu0 %v2752
        %2793 = vmatprep.subr.mxu0 0.0
        %2794 = vmatpush1.msra.mxu0 %v2751
        %2795 = vmatprep.subr.mxu0 0.0
        %2796 = vmatpush2.msra.mxu0 0.0
        %2797 = vmatprep.subr.mxu0 0.0
        %2798 = vmatpush2.msra.mxu0 0.0
        %2799 = vmatprep.subr.mxu0 0.0
        %2800 = vmatpush2.msra.mxu0 0.0
        %2801 = vmatprep.subr.mxu0 0.0
        %2802 = vmatpush2.msra.mxu0 0.0
        %2803 = vmatprep.subr.mxu0 0.0
        %2804 = vmatpush2.msra.mxu0 0.0
        %2805 = vmatprep.subr.mxu0 0.0
        %2806 = vmatpush2.msra.mxu0 0.0
        %2807 = vmatprep.subr.mxu0 0.0
        %2808 = vmatpush2.msra.mxu0 0.0
        %2809 = vmatprep.subr.mxu0 0.0
        %2810 = vmatpush2.msra.mxu0 0.0
        %2811 = vmatprep.subr.mxu0 0.0
        %2812 = vmatpush2.msra.mxu0 0.0
        %2813 = vmatprep.subr.mxu0 0.0
        %2814 = vmatpush2.msra.mxu0 0.0
        %2815 = vmatprep.subr.mxu0 0.0
        %2816 = vmatpush2.msra.mxu0 0.0
        %2817 = vmatprep.subr.mxu0 0.0
        %2818 = vmatpush2.msra.mxu0 0.0
        %2819 = vmatprep.subr.mxu0 0.0
        %2820 = vmatpush2.msra.mxu0 0.0
        %2821 = vmatprep.subr.mxu0 0.0
        %2822 = vmatpush2.msra.mxu0 0.0
        %2823 = vmatprep.subr.mxu0 0.0
        %2824 = vmatpush2.msra.mxu0 0.0
        %2825 = vmatprep.subr.mxu0 0.0
        %2826 = vmatpush2.msra.mxu0 0.0
        %2827 = vmatprep.mubr.f32.mxu0 0.0
        %2828 = vmatmul.mubr.f32.gmra.mxu0 %v1013
        %v2829 = vpop.f32.mrf.mxu0
        %v2830 = vadd.f32 %v2761, %v2829
        %v2831 = vpop.f32.mrf.mxu0
        %2832 = vmatprep.mubr.f32.mxu0 0.0
        %2833 = vmatmul.mubr.f32.gmra.mxu0 %v1016
        %v2834 = vpop.f32.mrf.mxu0
        %v2835 = vadd.f32 %v2761, %v2834
        %v2836 = vpop.f32.mrf.mxu0
        %2837 = vmatprep.mubr.f32.mxu0 0.0
        %2838 = vmatmul.mubr.f32.gmra.mxu0 %v1019
        %v2839 = vpop.f32.mrf.mxu0
        %v2840 = vadd.f32 %v2761, %v2839
        %v2841 = vpop.f32.mrf.mxu0
        %2842 = vmatprep.mubr.f32.mxu0 0.0
        %2843 = vmatmul.mubr.f32.gmra.mxu0 %v1022
        %v2844 = vpop.f32.mrf.mxu0
        %v2845 = vadd.f32 %v2761, %v2844
        %v2846 = vpop.f32.mrf.mxu0
        %2847 = vmatprep.mubr.f32.mxu0 0.0
        %2848 = vmatmul.mubr.f32.gmra.mxu0 %v1025
        %v2849 = vpop.f32.mrf.mxu0
        %v2850 = vadd.f32 %v2761, %v2849
        %v2851 = vpop.f32.mrf.mxu0
        %2852 = vmatprep.mubr.f32.mxu0 0.0
        %2853 = vmatmul.mubr.f32.gmra.mxu0 %v1028
        %v2854 = vpop.f32.mrf.mxu0
        %v2855 = vadd.f32 %v2761, %v2854
        %v2856 = vpop.f32.mrf.mxu0
        %2857 = vmatprep.mubr.f32.mxu0 0.0
        %2858 = vmatmul.mubr.f32.gmra.mxu0 %v1031
        %v2859 = vpop.f32.mrf.mxu0
        %v2860 = vadd.f32 %v2761, %v2859
        %v2861 = vpop.f32.mrf.mxu0
        %2862 = vmatprep.mubr.f32.mxu0 0.0
        %2863 = vmatmul.mubr.f32.gmra.mxu0 %v1034
        %v2864 = vpop.f32.mrf.mxu0
        %v2865 = vadd.f32 %v2761, %v2864
        %v2866 = vpop.f32.mrf.mxu0
        %2867 = vdwg.mxu0
        %s2868 = scalar_lea.vmem %s4, 320
        %v2869 = vld [vmem:[%s2868] sm:$0xff]
        %v2870 = vld [vmem:[%s2868 + $0x8] sm:$0xff]
        %v2871 = vld [vmem:[%s2868 + $0x10] sm:$0xff]
        %v2872 = vld [vmem:[%s2868 + $0x18] sm:$0xff]
        %s2873 = scalar_lea.vmem %s5, 10
        %v2874 = vld [vmem:[%s2873] sm:$0x1]
        %v2876 = vlaneseq
        %v2877 = vshrl.u32 %v2876, 7
        %v2878 = vsub.s32 0, %v2877
        %v2879 = vrot.slane %v2874, %v2878
        %2881 = vmatprep.subr.mxu0 0.0
        %2882 = vmatpush1.msra.mxu0 0.0
        %2883 = vmatprep.subr.mxu0 0.0
        %2884 = vmatpush1.msra.mxu0 0.0
        %2885 = vmatprep.subr.mxu0 0.0
        %2886 = vmatpush1.msra.mxu0 0.0
        %2887 = vmatprep.subr.mxu0 0.0
        %2888 = vmatpush1.msra.mxu0 0.0
        %2889 = vmatprep.subr.mxu0 0.0
        %2890 = vmatpush1.msra.mxu0 0.0
        %2891 = vmatprep.subr.mxu0 0.0
        %2892 = vmatpush1.msra.mxu0 0.0
        %2893 = vmatprep.subr.mxu0 0.0
        %2894 = vmatpush1.msra.mxu0 0.0
        %2895 = vmatprep.subr.mxu0 0.0
        %2896 = vmatpush1.msra.mxu0 0.0
        %2897 = vmatprep.subr.mxu0 0.0
        %2898 = vmatpush1.msra.mxu0 0.0
        %2899 = vmatprep.subr.mxu0 0.0
        %2900 = vmatpush1.msra.mxu0 0.0
        %2901 = vmatprep.subr.mxu0 0.0
        %2902 = vmatpush1.msra.mxu0 0.0
        %2903 = vmatprep.subr.mxu0 0.0
        %2904 = vmatpush1.msra.mxu0 0.0
        %2905 = vmatprep.subr.mxu0 0.0
        %2906 = vmatpush1.msra.mxu0 %v2872
        %2907 = vmatprep.subr.mxu0 0.0
        %2908 = vmatpush1.msra.mxu0 %v2871
        %2909 = vmatprep.subr.mxu0 0.0
        %2910 = vmatpush1.msra.mxu0 %v2870
        %2911 = vmatprep.subr.mxu0 0.0
        %2912 = vmatpush1.msra.mxu0 %v2869
        %2913 = vmatprep.subr.mxu0 0.0
        %2914 = vmatpush2.msra.mxu0 0.0
        %2915 = vmatprep.subr.mxu0 0.0
        %2916 = vmatpush2.msra.mxu0 0.0
        %2917 = vmatprep.subr.mxu0 0.0
        %2918 = vmatpush2.msra.mxu0 0.0
        %2919 = vmatprep.subr.mxu0 0.0
        %2920 = vmatpush2.msra.mxu0 0.0
        %2921 = vmatprep.subr.mxu0 0.0
        %2922 = vmatpush2.msra.mxu0 0.0
        %2923 = vmatprep.subr.mxu0 0.0
        %2924 = vmatpush2.msra.mxu0 0.0
        %2925 = vmatprep.subr.mxu0 0.0
        %2926 = vmatpush2.msra.mxu0 0.0
        %2927 = vmatprep.subr.mxu0 0.0
        %2928 = vmatpush2.msra.mxu0 0.0
        %2929 = vmatprep.subr.mxu0 0.0
        %2930 = vmatpush2.msra.mxu0 0.0
        %2931 = vmatprep.subr.mxu0 0.0
        %2932 = vmatpush2.msra.mxu0 0.0
        %2933 = vmatprep.subr.mxu0 0.0
        %2934 = vmatpush2.msra.mxu0 0.0
        %2935 = vmatprep.subr.mxu0 0.0
        %2936 = vmatpush2.msra.mxu0 0.0
        %2937 = vmatprep.subr.mxu0 0.0
        %2938 = vmatpush2.msra.mxu0 0.0
        %2939 = vmatprep.subr.mxu0 0.0
        %2940 = vmatpush2.msra.mxu0 0.0
        %2941 = vmatprep.subr.mxu0 0.0
        %2942 = vmatpush2.msra.mxu0 0.0
        %2943 = vmatprep.subr.mxu0 0.0
        %2944 = vmatpush2.msra.mxu0 0.0
        %2945 = vmatprep.mubr.f32.mxu0 0.0
        %2946 = vmatmul.mubr.f32.gmra.mxu0 %v1013
        %v2947 = vpop.f32.mrf.mxu0
        %v2948 = vadd.f32 %v2879, %v2947
        %v2949 = vpop.f32.mrf.mxu0
        %2950 = vmatprep.mubr.f32.mxu0 0.0
        %2951 = vmatmul.mubr.f32.gmra.mxu0 %v1016
        %v2952 = vpop.f32.mrf.mxu0
        %v2953 = vadd.f32 %v2879, %v2952
        %v2954 = vpop.f32.mrf.mxu0
        %2955 = vmatprep.mubr.f32.mxu0 0.0
        %2956 = vmatmul.mubr.f32.gmra.mxu0 %v1019
        %v2957 = vpop.f32.mrf.mxu0
        %v2958 = vadd.f32 %v2879, %v2957
        %v2959 = vpop.f32.mrf.mxu0
        %2960 = vmatprep.mubr.f32.mxu0 0.0
        %2961 = vmatmul.mubr.f32.gmra.mxu0 %v1022
        %v2962 = vpop.f32.mrf.mxu0
        %v2963 = vadd.f32 %v2879, %v2962
        %v2964 = vpop.f32.mrf.mxu0
        %2965 = vmatprep.mubr.f32.mxu0 0.0
        %2966 = vmatmul.mubr.f32.gmra.mxu0 %v1025
        %v2967 = vpop.f32.mrf.mxu0
        %v2968 = vadd.f32 %v2879, %v2967
        %v2969 = vpop.f32.mrf.mxu0
        %2970 = vmatprep.mubr.f32.mxu0 0.0
        %2971 = vmatmul.mubr.f32.gmra.mxu0 %v1028
        %v2972 = vpop.f32.mrf.mxu0
        %v2973 = vadd.f32 %v2879, %v2972
        %v2974 = vpop.f32.mrf.mxu0
        %2975 = vmatprep.mubr.f32.mxu0 0.0
        %2976 = vmatmul.mubr.f32.gmra.mxu0 %v1031
        %v2977 = vpop.f32.mrf.mxu0
        %v2978 = vadd.f32 %v2879, %v2977
        %v2979 = vpop.f32.mrf.mxu0
        %2980 = vmatprep.mubr.f32.mxu0 0.0
        %2981 = vmatmul.mubr.f32.gmra.mxu0 %v1034
        %v2982 = vpop.f32.mrf.mxu0
        %v2983 = vadd.f32 %v2879, %v2982
        %v2984 = vpop.f32.mrf.mxu0
        %2985 = vdwg.mxu0
        %v2987 = vsel %vm1259, %v2712, 0
        %v2990 = vsel %vm1259, %v2717, 0
        %v2993 = vsel %vm1259, %v2722, 0
        %v2996 = vsel %vm1259, %v2727, 0
        %v2999 = vsel %vm1259, %v2732, 0
        %v3002 = vsel %vm1259, %v2737, 0
        %v3005 = vsel %vm1259, %v2742, 0
        %v3008 = vsel %vm1259, %v2747, 0
        %v3011 = vsel %vm1259, %v2830, 0
        %v3014 = vsel %vm1259, %v2835, 0
        %v3017 = vsel %vm1259, %v2840, 0
        %v3020 = vsel %vm1259, %v2845, 0
        %v3023 = vsel %vm1259, %v2850, 0
        %v3026 = vsel %vm1259, %v2855, 0
        %v3029 = vsel %vm1259, %v2860, 0
        %v3032 = vsel %vm1259, %v2865, 0
        %3034 = vmatprep.subr.mxu0 0.0
        %3035 = vmatpush1.xpose.msra.mxu0 0.0
        %3036 = vmatprep.subr.mxu0 0.0
        %3037 = vmatpush1.xpose.msra.mxu0 0.0
        %3038 = vmatprep.subr.mxu0 0.0
        %3039 = vmatpush1.xpose.msra.mxu0 0.0
        %3040 = vmatprep.subr.mxu0 0.0
        %3041 = vmatpush1.xpose.msra.mxu0 0.0
        %3042 = vmatprep.subr.mxu0 0.0
        %3043 = vmatpush1.xpose.msra.mxu0 0.0
        %3044 = vmatprep.subr.mxu0 0.0
        %3045 = vmatpush1.xpose.msra.mxu0 0.0
        %3046 = vmatprep.subr.mxu0 0.0
        %3047 = vmatpush1.xpose.msra.mxu0 0.0
        %3048 = vmatprep.subr.mxu0 0.0
        %3049 = vmatpush1.xpose.msra.mxu0 0.0
        %3050 = vmatprep.subr.mxu0 0.0
        %3051 = vmatpush1.xpose.msra.mxu0 %v3032
        %3052 = vmatprep.subr.mxu0 0.0
        %3053 = vmatpush1.xpose.msra.mxu0 %v3029
        %3054 = vmatprep.subr.mxu0 0.0
        %3055 = vmatpush1.xpose.msra.mxu0 %v3026
        %3056 = vmatprep.subr.mxu0 0.0
        %3057 = vmatpush1.xpose.msra.mxu0 %v3023
        %3058 = vmatprep.subr.mxu0 0.0
        %3059 = vmatpush1.xpose.msra.mxu0 %v3020
        %3060 = vmatprep.subr.mxu0 0.0
        %3061 = vmatpush1.xpose.msra.mxu0 %v3017
        %3062 = vmatprep.subr.mxu0 0.0
        %3063 = vmatpush1.xpose.msra.mxu0 %v3014
        %3064 = vmatprep.subr.mxu0 0.0
        %3065 = vmatpush1.xpose.msra.mxu0 %v3011
        %3066 = vmatprep.subr.mxu0 0.0
        %3067 = vmatpush2.xpose.msra.mxu0 0.0
        %3068 = vmatprep.subr.mxu0 0.0
        %3069 = vmatpush2.xpose.msra.mxu0 0.0
        %3070 = vmatprep.subr.mxu0 0.0
        %3071 = vmatpush2.xpose.msra.mxu0 0.0
        %3072 = vmatprep.subr.mxu0 0.0
        %3073 = vmatpush2.xpose.msra.mxu0 0.0
        %3074 = vmatprep.subr.mxu0 0.0
        %3075 = vmatpush2.xpose.msra.mxu0 0.0
        %3076 = vmatprep.subr.mxu0 0.0
        %3077 = vmatpush2.xpose.msra.mxu0 0.0
        %3078 = vmatprep.subr.mxu0 0.0
        %3079 = vmatpush2.xpose.msra.mxu0 0.0
        %3080 = vmatprep.subr.mxu0 0.0
        %3081 = vmatpush2.xpose.msra.mxu0 0.0
        %3082 = vmatprep.subr.mxu0 0.0
        %3083 = vmatpush2.xpose.msra.mxu0 0.0
        %3084 = vmatprep.subr.mxu0 0.0
        %3085 = vmatpush2.xpose.msra.mxu0 0.0
        %3086 = vmatprep.subr.mxu0 0.0
        %3087 = vmatpush2.xpose.msra.mxu0 0.0
        %3088 = vmatprep.subr.mxu0 0.0
        %3089 = vmatpush2.xpose.msra.mxu0 0.0
        %3090 = vmatprep.subr.mxu0 0.0
        %3091 = vmatpush2.xpose.msra.mxu0 0.0
        %3092 = vmatprep.subr.mxu0 0.0
        %3093 = vmatpush2.xpose.msra.mxu0 0.0
        %3094 = vmatprep.subr.mxu0 0.0
        %3095 = vmatpush2.xpose.msra.mxu0 0.0
        %3096 = vmatprep.subr.mxu0 0.0
        %3097 = vmatpush2.xpose.msra.mxu0 0.0
        %3098 = vmatprep.mubr.f32.mxu0 0.0
        %3099 = vmatmul.mubr.f32.gmra.mxu0 %v2987
        %v3100 = vpop.f32.mrf.mxu0
        %v3101 = vadd.f32 0.0, %v3100
        %v3102 = vpop.f32.mrf.mxu0
        %3103 = vmatprep.mubr.f32.mxu0 0.0
        %3104 = vmatmul.mubr.f32.gmra.mxu0 %v2990
        %v3105 = vpop.f32.mrf.mxu0
        %v3106 = vadd.f32 0.0, %v3105
        %v3107 = vpop.f32.mrf.mxu0
        %3108 = vmatprep.mubr.f32.mxu0 0.0
        %3109 = vmatmul.mubr.f32.gmra.mxu0 %v2993
        %v3110 = vpop.f32.mrf.mxu0
        %v3111 = vadd.f32 0.0, %v3110
        %v3112 = vpop.f32.mrf.mxu0
        %3113 = vmatprep.mubr.f32.mxu0 0.0
        %3114 = vmatmul.mubr.f32.gmra.mxu0 %v2996
        %v3115 = vpop.f32.mrf.mxu0
        %v3116 = vadd.f32 0.0, %v3115
        %v3117 = vpop.f32.mrf.mxu0
        %3118 = vmatprep.mubr.f32.mxu0 0.0
        %3119 = vmatmul.mubr.f32.gmra.mxu0 %v2999
        %v3120 = vpop.f32.mrf.mxu0
        %v3121 = vadd.f32 0.0, %v3120
        %v3122 = vpop.f32.mrf.mxu0
        %3123 = vmatprep.mubr.f32.mxu0 0.0
        %3124 = vmatmul.mubr.f32.gmra.mxu0 %v3002
        %v3125 = vpop.f32.mrf.mxu0
        %v3126 = vadd.f32 0.0, %v3125
        %v3127 = vpop.f32.mrf.mxu0
        %3128 = vmatprep.mubr.f32.mxu0 0.0
        %3129 = vmatmul.mubr.f32.gmra.mxu0 %v3005
        %v3130 = vpop.f32.mrf.mxu0
        %v3131 = vadd.f32 0.0, %v3130
        %v3132 = vpop.f32.mrf.mxu0
        %3133 = vmatprep.mubr.f32.mxu0 0.0
        %3134 = vmatmul.mubr.f32.gmra.mxu0 %v3008
        %v3135 = vpop.f32.mrf.mxu0
        %v3136 = vadd.f32 0.0, %v3135
        %v3137 = vpop.f32.mrf.mxu0
        %3138 = vdwg.mxu0
        %v3139 = vmul.f32 %v3101, 0.35355338
        %v3140 = vmul.f32 %v3106, 0.35355338
        %v3141 = vmul.f32 %v3111, 0.35355338
        %v3142 = vmul.f32 %v3116, 0.35355338
        %v3143 = vmul.f32 %v3121, 0.35355338
        %v3144 = vmul.f32 %v3126, 0.35355338
        %v3145 = vmul.f32 %v3131, 0.35355338
        %v3146 = vmul.f32 %v3136, 0.35355338
        %v3147 = vsel %vm1421, %v3139, -inf
        %3148 = vmax.xlane.f32.xlu0 %v3147
        %v3149 = vpop.xlane.xlu0 %3148
        %v3150 = vsel %vm1421, %v3140, -inf
        %3151 = vmax.xlane.f32.xlu0 %v3150
        %v3152 = vpop.xlane.xlu0 %3151
        %v3153 = vsel %vm1421, %v3141, -inf
        %3154 = vmax.xlane.f32.xlu0 %v3153
        %v3155 = vpop.xlane.xlu0 %3154
        %v3156 = vsel %vm1421, %v3142, -inf
        %3157 = vmax.xlane.f32.xlu0 %v3156
        %v3158 = vpop.xlane.xlu0 %3157
        %v3159 = vsel %vm1421, %v3143, -inf
        %3160 = vmax.xlane.f32.xlu0 %v3159
        %v3161 = vpop.xlane.xlu0 %3160
        %v3162 = vsel %vm1421, %v3144, -inf
        %3163 = vmax.xlane.f32.xlu0 %v3162
        %v3164 = vpop.xlane.xlu0 %3163
        %v3165 = vsel %vm1421, %v3145, -inf
        %3166 = vmax.xlane.f32.xlu0 %v3165
        %v3167 = vpop.xlane.xlu0 %3166
        %v3168 = vsel %vm1421, %v3146, -inf
        %3169 = vmax.xlane.f32.xlu0 %v3168
        %v3170 = vpop.xlane.xlu0 %3169
        %v3171 = vsub.f32 %v3139, %v3149
        %v3172 = vsub.f32 %v3140, %v3152
        %v3173 = vsub.f32 %v3141, %v3155
        %v3174 = vsub.f32 %v3142, %v3158
        %v3175 = vsub.f32 %v3143, %v3161
        %v3176 = vsub.f32 %v3144, %v3164
        %v3177 = vsub.f32 %v3145, %v3167
        %v3178 = vsub.f32 %v3146, %v3170
        %v3179 = vmul.f32 %v3171, 1.442695
        %v3180 = vpow.pop %v3179
        %v3181 = vmul.f32 %v3172, 1.442695
        %v3182 = vpow.pop %v3181
        %v3183 = vmul.f32 %v3173, 1.442695
        %v3184 = vpow.pop %v3183
        %v3185 = vmul.f32 %v3174, 1.442695
        %v3186 = vpow.pop %v3185
        %v3187 = vmul.f32 %v3175, 1.442695
        %v3188 = vpow.pop %v3187
        %v3189 = vmul.f32 %v3176, 1.442695
        %v3190 = vpow.pop %v3189
        %v3191 = vmul.f32 %v3177, 1.442695
        %v3192 = vpow.pop %v3191
        %v3193 = vmul.f32 %v3178, 1.442695
        %v3194 = vpow.pop %v3193
        %v3195 = vsel %vm1421, %v3180, 0.0
        %3196 = vadd.xlane.f32.xlu0 %v3195
        %v3197 = vpop.xlane.xlu0 %3196
        %v3198 = vsel %vm1421, %v3182, 0.0
        %3199 = vadd.xlane.f32.xlu0 %v3198
        %v3200 = vpop.xlane.xlu0 %3199
        %v3201 = vsel %vm1421, %v3184, 0.0
        %3202 = vadd.xlane.f32.xlu0 %v3201
        %v3203 = vpop.xlane.xlu0 %3202
        %v3204 = vsel %vm1421, %v3186, 0.0
        %3205 = vadd.xlane.f32.xlu0 %v3204
        %v3206 = vpop.xlane.xlu0 %3205
        %v3207 = vsel %vm1421, %v3188, 0.0
        %3208 = vadd.xlane.f32.xlu0 %v3207
        %v3209 = vpop.xlane.xlu0 %3208
        %v3210 = vsel %vm1421, %v3190, 0.0
        %3211 = vadd.xlane.f32.xlu0 %v3210
        %v3212 = vpop.xlane.xlu0 %3211
        %v3213 = vsel %vm1421, %v3192, 0.0
        %3214 = vadd.xlane.f32.xlu0 %v3213
        %v3215 = vpop.xlane.xlu0 %3214
        %v3216 = vsel %vm1421, %v3194, 0.0
        %3217 = vadd.xlane.f32.xlu0 %v3216
        %v3218 = vpop.xlane.xlu0 %3217
        %v3219 = vrcp.pop %v3197
        %v3220 = vrcp.pop %v3200
        %v3221 = vrcp.pop %v3203
        %v3222 = vrcp.pop %v3206
        %v3223 = vrcp.pop %v3209
        %v3224 = vrcp.pop %v3212
        %v3225 = vrcp.pop %v3215
        %v3226 = vrcp.pop %v3218
        %v3227 = vmul.f32 %v3180, %v3219
        %v3228 = vmul.f32 %v3182, %v3220
        %v3229 = vmul.f32 %v3184, %v3221
        %v3230 = vmul.f32 %v3186, %v3222
        %v3231 = vmul.f32 %v3188, %v3223
        %v3232 = vmul.f32 %v3190, %v3224
        %v3233 = vmul.f32 %v3192, %v3225
        %v3234 = vmul.f32 %v3194, %v3226
        %v3236 = vsel %vm1421, %v3227, 0
        %v3239 = vsel %vm1421, %v3228, 0
        %v3242 = vsel %vm1421, %v3229, 0
        %v3245 = vsel %vm1421, %v3230, 0
        %v3248 = vsel %vm1421, %v3231, 0
        %v3251 = vsel %vm1421, %v3232, 0
        %v3254 = vsel %vm1421, %v3233, 0
        %v3257 = vsel %vm1421, %v3234, 0
        %3259 = vmatprep.subr.mxu0 0.0
        %3260 = vmatpush1.msra.mxu0 0.0
        %3261 = vmatprep.subr.mxu0 0.0
        %3262 = vmatpush1.msra.mxu0 0.0
        %3263 = vmatprep.subr.mxu0 0.0
        %3264 = vmatpush1.msra.mxu0 0.0
        %3265 = vmatprep.subr.mxu0 0.0
        %3266 = vmatpush1.msra.mxu0 0.0
        %3267 = vmatprep.subr.mxu0 0.0
        %3268 = vmatpush1.msra.mxu0 0.0
        %3269 = vmatprep.subr.mxu0 0.0
        %3270 = vmatpush1.msra.mxu0 0.0
        %3271 = vmatprep.subr.mxu0 0.0
        %3272 = vmatpush1.msra.mxu0 0.0
        %3273 = vmatprep.subr.mxu0 0.0
        %3274 = vmatpush1.msra.mxu0 0.0
        %3275 = vmatprep.subr.mxu0 0.0
        %3276 = vmatpush1.msra.mxu0 %v2983
        %3277 = vmatprep.subr.mxu0 0.0
        %3278 = vmatpush1.msra.mxu0 %v2978
        %3279 = vmatprep.subr.mxu0 0.0
        %3280 = vmatpush1.msra.mxu0 %v2973
        %3281 = vmatprep.subr.mxu0 0.0
        %3282 = vmatpush1.msra.mxu0 %v2968
        %3283 = vmatprep.subr.mxu0 0.0
        %3284 = vmatpush1.msra.mxu0 %v2963
        %3285 = vmatprep.subr.mxu0 0.0
        %3286 = vmatpush1.msra.mxu0 %v2958
        %3287 = vmatprep.subr.mxu0 0.0
        %3288 = vmatpush1.msra.mxu0 %v2953
        %3289 = vmatprep.subr.mxu0 0.0
        %3290 = vmatpush1.msra.mxu0 %v2948
        %3291 = vmatprep.subr.mxu0 0.0
        %3292 = vmatpush2.msra.mxu0 0.0
        %3293 = vmatprep.subr.mxu0 0.0
        %3294 = vmatpush2.msra.mxu0 0.0
        %3295 = vmatprep.subr.mxu0 0.0
        %3296 = vmatpush2.msra.mxu0 0.0
        %3297 = vmatprep.subr.mxu0 0.0
        %3298 = vmatpush2.msra.mxu0 0.0
        %3299 = vmatprep.subr.mxu0 0.0
        %3300 = vmatpush2.msra.mxu0 0.0
        %3301 = vmatprep.subr.mxu0 0.0
        %3302 = vmatpush2.msra.mxu0 0.0
        %3303 = vmatprep.subr.mxu0 0.0
        %3304 = vmatpush2.msra.mxu0 0.0
        %3305 = vmatprep.subr.mxu0 0.0
        %3306 = vmatpush2.msra.mxu0 0.0
        %3307 = vmatprep.subr.mxu0 0.0
        %3308 = vmatpush2.msra.mxu0 0.0
        %3309 = vmatprep.subr.mxu0 0.0
        %3310 = vmatpush2.msra.mxu0 0.0
        %3311 = vmatprep.subr.mxu0 0.0
        %3312 = vmatpush2.msra.mxu0 0.0
        %3313 = vmatprep.subr.mxu0 0.0
        %3314 = vmatpush2.msra.mxu0 0.0
        %3315 = vmatprep.subr.mxu0 0.0
        %3316 = vmatpush2.msra.mxu0 0.0
        %3317 = vmatprep.subr.mxu0 0.0
        %3318 = vmatpush2.msra.mxu0 0.0
        %3319 = vmatprep.subr.mxu0 0.0
        %3320 = vmatpush2.msra.mxu0 0.0
        %3321 = vmatprep.subr.mxu0 0.0
        %3322 = vmatpush2.msra.mxu0 0.0
        %3323 = vmatprep.mubr.f32.mxu0 0.0
        %3324 = vmatmul.mubr.f32.gmra.mxu0 %v3236
        %v3325 = vpop.f32.mrf.mxu0
        %v3326 = vadd.f32 0.0, %v3325
        %v3327 = vpop.f32.mrf.mxu0
        %3328 = vmatprep.mubr.f32.mxu0 0.0
        %3329 = vmatmul.mubr.f32.gmra.mxu0 %v3239
        %v3330 = vpop.f32.mrf.mxu0
        %v3331 = vadd.f32 0.0, %v3330
        %v3332 = vpop.f32.mrf.mxu0
        %3333 = vmatprep.mubr.f32.mxu0 0.0
        %3334 = vmatmul.mubr.f32.gmra.mxu0 %v3242
        %v3335 = vpop.f32.mrf.mxu0
        %v3336 = vadd.f32 0.0, %v3335
        %v3337 = vpop.f32.mrf.mxu0
        %3338 = vmatprep.mubr.f32.mxu0 0.0
        %3339 = vmatmul.mubr.f32.gmra.mxu0 %v3245
        %v3340 = vpop.f32.mrf.mxu0
        %v3341 = vadd.f32 0.0, %v3340
        %v3342 = vpop.f32.mrf.mxu0
        %3343 = vmatprep.mubr.f32.mxu0 0.0
        %3344 = vmatmul.mubr.f32.gmra.mxu0 %v3248
        %v3345 = vpop.f32.mrf.mxu0
        %v3346 = vadd.f32 0.0, %v3345
        %v3347 = vpop.f32.mrf.mxu0
        %3348 = vmatprep.mubr.f32.mxu0 0.0
        %3349 = vmatmul.mubr.f32.gmra.mxu0 %v3251
        %v3350 = vpop.f32.mrf.mxu0
        %v3351 = vadd.f32 0.0, %v3350
        %v3352 = vpop.f32.mrf.mxu0
        %3353 = vmatprep.mubr.f32.mxu0 0.0
        %3354 = vmatmul.mubr.f32.gmra.mxu0 %v3254
        %v3355 = vpop.f32.mrf.mxu0
        %v3356 = vadd.f32 0.0, %v3355
        %v3357 = vpop.f32.mrf.mxu0
        %3358 = vmatprep.mubr.f32.mxu0 0.0
        %3359 = vmatmul.mubr.f32.gmra.mxu0 %v3257
        %v3360 = vpop.f32.mrf.mxu0
        %v3361 = vadd.f32 0.0, %v3360
        %v3362 = vpop.f32.mrf.mxu0
        %3363 = vdwg.mxu0
        %s3364 = scalar_lea.vmem %s6, 16
        %v3365 = vld [vmem:[%s3364] sm:$0xff]
        %v3367 = vsel %vm1259, %v3326, 0
        %v3370 = vsel %vm1259, %v3331, 0
        %v3373 = vsel %vm1259, %v3336, 0
        %v3376 = vsel %vm1259, %v3341, 0
        %v3379 = vsel %vm1259, %v3346, 0
        %v3382 = vsel %vm1259, %v3351, 0
        %v3385 = vsel %vm1259, %v3356, 0
        %v3388 = vsel %vm1259, %v3361, 0
        %3390 = vmatprep.subr.mxu0 0.0
        %3391 = vmatpush1.msra.mxu0 0.0
        %3392 = vmatprep.subr.mxu0 0.0
        %3393 = vmatpush1.msra.mxu0 0.0
        %3394 = vmatprep.subr.mxu0 0.0
        %3395 = vmatpush1.msra.mxu0 0.0
        %3396 = vmatprep.subr.mxu0 0.0
        %3397 = vmatpush1.msra.mxu0 0.0
        %3398 = vmatprep.subr.mxu0 0.0
        %3399 = vmatpush1.msra.mxu0 0.0
        %3400 = vmatprep.subr.mxu0 0.0
        %3401 = vmatpush1.msra.mxu0 0.0
        %3402 = vmatprep.subr.mxu0 0.0
        %3403 = vmatpush1.msra.mxu0 0.0
        %3404 = vmatprep.subr.mxu0 0.0
        %3405 = vmatpush1.msra.mxu0 0.0
        %3406 = vmatprep.subr.mxu0 0.0
        %3407 = vmatpush1.msra.mxu0 0.0
        %3408 = vmatprep.subr.mxu0 0.0
        %3409 = vmatpush1.msra.mxu0 0.0
        %3410 = vmatprep.subr.mxu0 0.0
        %3411 = vmatpush1.msra.mxu0 0.0
        %3412 = vmatprep.subr.mxu0 0.0
        %3413 = vmatpush1.msra.mxu0 0.0
        %3414 = vmatprep.subr.mxu0 0.0
        %3415 = vmatpush1.msra.mxu0 0.0
        %3416 = vmatprep.subr.mxu0 0.0
        %3417 = vmatpush1.msra.mxu0 0.0
        %3418 = vmatprep.subr.mxu0 0.0
        %3419 = vmatpush1.msra.mxu0 0.0
        %3420 = vmatprep.subr.mxu0 0.0
        %3421 = vmatpush1.msra.mxu0 %v3365
        %3422 = vmatprep.subr.mxu0 0.0
        %3423 = vmatpush2.msra.mxu0 0.0
        %3424 = vmatprep.subr.mxu0 0.0
        %3425 = vmatpush2.msra.mxu0 0.0
        %3426 = vmatprep.subr.mxu0 0.0
        %3427 = vmatpush2.msra.mxu0 0.0
        %3428 = vmatprep.subr.mxu0 0.0
        %3429 = vmatpush2.msra.mxu0 0.0
        %3430 = vmatprep.subr.mxu0 0.0
        %3431 = vmatpush2.msra.mxu0 0.0
        %3432 = vmatprep.subr.mxu0 0.0
        %3433 = vmatpush2.msra.mxu0 0.0
        %3434 = vmatprep.subr.mxu0 0.0
        %3435 = vmatpush2.msra.mxu0 0.0
        %3436 = vmatprep.subr.mxu0 0.0
        %3437 = vmatpush2.msra.mxu0 0.0
        %3438 = vmatprep.subr.mxu0 0.0
        %3439 = vmatpush2.msra.mxu0 0.0
        %3440 = vmatprep.subr.mxu0 0.0
        %3441 = vmatpush2.msra.mxu0 0.0
        %3442 = vmatprep.subr.mxu0 0.0
        %3443 = vmatpush2.msra.mxu0 0.0
        %3444 = vmatprep.subr.mxu0 0.0
        %3445 = vmatpush2.msra.mxu0 0.0
        %3446 = vmatprep.subr.mxu0 0.0
        %3447 = vmatpush2.msra.mxu0 0.0
        %3448 = vmatprep.subr.mxu0 0.0
        %3449 = vmatpush2.msra.mxu0 0.0
        %3450 = vmatprep.subr.mxu0 0.0
        %3451 = vmatpush2.msra.mxu0 0.0
        %3452 = vmatprep.subr.mxu0 0.0
        %3453 = vmatpush2.msra.mxu0 0.0
        %3454 = vmatprep.mubr.f32.mxu0 0.0
        %3455 = vmatmul.mubr.f32.gmra.mxu0 %v3367
        %v3456 = vpop.f32.mrf.mxu0
        %v3457 = vadd.f32 0.0, %v3456
        %v3458 = vpop.f32.mrf.mxu0
        %3459 = vmatprep.mubr.f32.mxu0 0.0
        %3460 = vmatmul.mubr.f32.gmra.mxu0 %v3370
        %v3461 = vpop.f32.mrf.mxu0
        %v3462 = vadd.f32 0.0, %v3461
        %v3463 = vpop.f32.mrf.mxu0
        %3464 = vmatprep.mubr.f32.mxu0 0.0
        %3465 = vmatmul.mubr.f32.gmra.mxu0 %v3373
        %v3466 = vpop.f32.mrf.mxu0
        %v3467 = vadd.f32 0.0, %v3466
        %v3468 = vpop.f32.mrf.mxu0
        %3469 = vmatprep.mubr.f32.mxu0 0.0
        %3470 = vmatmul.mubr.f32.gmra.mxu0 %v3376
        %v3471 = vpop.f32.mrf.mxu0
        %v3472 = vadd.f32 0.0, %v3471
        %v3473 = vpop.f32.mrf.mxu0
        %3474 = vmatprep.mubr.f32.mxu0 0.0
        %3475 = vmatmul.mubr.f32.gmra.mxu0 %v3379
        %v3476 = vpop.f32.mrf.mxu0
        %v3477 = vadd.f32 0.0, %v3476
        %v3478 = vpop.f32.mrf.mxu0
        %3479 = vmatprep.mubr.f32.mxu0 0.0
        %3480 = vmatmul.mubr.f32.gmra.mxu0 %v3382
        %v3481 = vpop.f32.mrf.mxu0
        %v3482 = vadd.f32 0.0, %v3481
        %v3483 = vpop.f32.mrf.mxu0
        %3484 = vmatprep.mubr.f32.mxu0 0.0
        %3485 = vmatmul.mubr.f32.gmra.mxu0 %v3385
        %v3486 = vpop.f32.mrf.mxu0
        %v3487 = vadd.f32 0.0, %v3486
        %v3488 = vpop.f32.mrf.mxu0
        %3489 = vmatprep.mubr.f32.mxu0 0.0
        %3490 = vmatmul.mubr.f32.gmra.mxu0 %v3388
        %v3491 = vpop.f32.mrf.mxu0
        %v3492 = vadd.f32 0.0, %v3491
        %v3493 = vpop.f32.mrf.mxu0
        %3494 = vdwg.mxu0
        %v3495 = vadd.f32 %v2594, %v3457
        %v3496 = vadd.f32 %v2599, %v3462
        %v3497 = vadd.f32 %v2604, %v3467
        %v3498 = vadd.f32 %v2609, %v3472
        %v3499 = vadd.f32 %v2614, %v3477
        %v3500 = vadd.f32 %v2619, %v3482
        %v3501 = vadd.f32 %v2624, %v3487
        %v3502 = vadd.f32 %v2629, %v3492
        %s3503 = scalar_lea.vmem %s4, 480
        %v3504 = vld [vmem:[%s3503] sm:$0xff]
        %v3505 = vld [vmem:[%s3503 + $0x8] sm:$0xff]
        %v3506 = vld [vmem:[%s3503 + $0x10] sm:$0xff]
        %v3507 = vld [vmem:[%s3503 + $0x18] sm:$0xff]
        %s3508 = scalar_lea.vmem %s5, 15
        %v3509 = vld [vmem:[%s3508] sm:$0x1]
        %v3511 = vlaneseq
        %v3512 = vshrl.u32 %v3511, 7
        %v3513 = vsub.s32 0, %v3512
        %v3514 = vrot.slane %v3509, %v3513
        %3516 = vmatprep.subr.mxu0 0.0
        %3517 = vmatpush1.msra.mxu0 0.0
        %3518 = vmatprep.subr.mxu0 0.0
        %3519 = vmatpush1.msra.mxu0 0.0
        %3520 = vmatprep.subr.mxu0 0.0
        %3521 = vmatpush1.msra.mxu0 0.0
        %3522 = vmatprep.subr.mxu0 0.0
        %3523 = vmatpush1.msra.mxu0 0.0
        %3524 = vmatprep.subr.mxu0 0.0
        %3525 = vmatpush1.msra.mxu0 0.0
        %3526 = vmatprep.subr.mxu0 0.0
        %3527 = vmatpush1.msra.mxu0 0.0
        %3528 = vmatprep.subr.mxu0 0.0
        %3529 = vmatpush1.msra.mxu0 0.0
        %3530 = vmatprep.subr.mxu0 0.0
        %3531 = vmatpush1.msra.mxu0 0.0
        %3532 = vmatprep.subr.mxu0 0.0
        %3533 = vmatpush1.msra.mxu0 0.0
        %3534 = vmatprep.subr.mxu0 0.0
        %3535 = vmatpush1.msra.mxu0 0.0
        %3536 = vmatprep.subr.mxu0 0.0
        %3537 = vmatpush1.msra.mxu0 0.0
        %3538 = vmatprep.subr.mxu0 0.0
        %3539 = vmatpush1.msra.mxu0 0.0
        %3540 = vmatprep.subr.mxu0 0.0
        %3541 = vmatpush1.msra.mxu0 %v3507
        %3542 = vmatprep.subr.mxu0 0.0
        %3543 = vmatpush1.msra.mxu0 %v3506
        %3544 = vmatprep.subr.mxu0 0.0
        %3545 = vmatpush1.msra.mxu0 %v3505
        %3546 = vmatprep.subr.mxu0 0.0
        %3547 = vmatpush1.msra.mxu0 %v3504
        %3548 = vmatprep.subr.mxu0 0.0
        %3549 = vmatpush2.msra.mxu0 0.0
        %3550 = vmatprep.subr.mxu0 0.0
        %3551 = vmatpush2.msra.mxu0 0.0
        %3552 = vmatprep.subr.mxu0 0.0
        %3553 = vmatpush2.msra.mxu0 0.0
        %3554 = vmatprep.subr.mxu0 0.0
        %3555 = vmatpush2.msra.mxu0 0.0
        %3556 = vmatprep.subr.mxu0 0.0
        %3557 = vmatpush2.msra.mxu0 0.0
        %3558 = vmatprep.subr.mxu0 0.0
        %3559 = vmatpush2.msra.mxu0 0.0
        %3560 = vmatprep.subr.mxu0 0.0
        %3561 = vmatpush2.msra.mxu0 0.0
        %3562 = vmatprep.subr.mxu0 0.0
        %3563 = vmatpush2.msra.mxu0 0.0
        %3564 = vmatprep.subr.mxu0 0.0
        %3565 = vmatpush2.msra.mxu0 0.0
        %3566 = vmatprep.subr.mxu0 0.0
        %3567 = vmatpush2.msra.mxu0 0.0
        %3568 = vmatprep.subr.mxu0 0.0
        %3569 = vmatpush2.msra.mxu0 0.0
        %3570 = vmatprep.subr.mxu0 0.0
        %3571 = vmatpush2.msra.mxu0 0.0
        %3572 = vmatprep.subr.mxu0 0.0
        %3573 = vmatpush2.msra.mxu0 0.0
        %3574 = vmatprep.subr.mxu0 0.0
        %3575 = vmatpush2.msra.mxu0 0.0
        %3576 = vmatprep.subr.mxu0 0.0
        %3577 = vmatpush2.msra.mxu0 0.0
        %3578 = vmatprep.subr.mxu0 0.0
        %3579 = vmatpush2.msra.mxu0 0.0
        %3580 = vmatprep.mubr.f32.mxu0 0.0
        %3581 = vmatmul.mubr.f32.gmra.mxu0 %v871
        %v3582 = vpop.f32.mrf.mxu0
        %v3583 = vadd.f32 %v3514, %v3582
        %v3584 = vpop.f32.mrf.mxu0
        %3585 = vmatprep.mubr.f32.mxu0 0.0
        %3586 = vmatmul.mubr.f32.gmra.mxu0 %v874
        %v3587 = vpop.f32.mrf.mxu0
        %v3588 = vadd.f32 %v3514, %v3587
        %v3589 = vpop.f32.mrf.mxu0
        %3590 = vmatprep.mubr.f32.mxu0 0.0
        %3591 = vmatmul.mubr.f32.gmra.mxu0 %v877
        %v3592 = vpop.f32.mrf.mxu0
        %v3593 = vadd.f32 %v3514, %v3592
        %v3594 = vpop.f32.mrf.mxu0
        %3595 = vmatprep.mubr.f32.mxu0 0.0
        %3596 = vmatmul.mubr.f32.gmra.mxu0 %v880
        %v3597 = vpop.f32.mrf.mxu0
        %v3598 = vadd.f32 %v3514, %v3597
        %v3599 = vpop.f32.mrf.mxu0
        %3600 = vmatprep.mubr.f32.mxu0 0.0
        %3601 = vmatmul.mubr.f32.gmra.mxu0 %v883
        %v3602 = vpop.f32.mrf.mxu0
        %v3603 = vadd.f32 %v3514, %v3602
        %v3604 = vpop.f32.mrf.mxu0
        %3605 = vmatprep.mubr.f32.mxu0 0.0
        %3606 = vmatmul.mubr.f32.gmra.mxu0 %v886
        %v3607 = vpop.f32.mrf.mxu0
        %v3608 = vadd.f32 %v3514, %v3607
        %v3609 = vpop.f32.mrf.mxu0
        %3610 = vmatprep.mubr.f32.mxu0 0.0
        %3611 = vmatmul.mubr.f32.gmra.mxu0 %v889
        %v3612 = vpop.f32.mrf.mxu0
        %v3613 = vadd.f32 %v3514, %v3612
        %v3614 = vpop.f32.mrf.mxu0
        %3615 = vmatprep.mubr.f32.mxu0 0.0
        %3616 = vmatmul.mubr.f32.gmra.mxu0 %v892
        %v3617 = vpop.f32.mrf.mxu0
        %v3618 = vadd.f32 %v3514, %v3617
        %v3619 = vpop.f32.mrf.mxu0
        %3620 = vdwg.mxu0
        %s3621 = scalar_lea.vmem %s4, 224
        %v3622 = vld [vmem:[%s3621] sm:$0xff]
        %v3623 = vld [vmem:[%s3621 + $0x8] sm:$0xff]
        %v3624 = vld [vmem:[%s3621 + $0x10] sm:$0xff]
        %v3625 = vld [vmem:[%s3621 + $0x18] sm:$0xff]
        %s3626 = scalar_lea.vmem %s5, 7
        %v3627 = vld [vmem:[%s3626] sm:$0x1]
        %v3629 = vlaneseq
        %v3630 = vshrl.u32 %v3629, 7
        %v3631 = vsub.s32 0, %v3630
        %v3632 = vrot.slane %v3627, %v3631
        %3634 = vmatprep.subr.mxu0 0.0
        %3635 = vmatpush1.msra.mxu0 0.0
        %3636 = vmatprep.subr.mxu0 0.0
        %3637 = vmatpush1.msra.mxu0 0.0
        %3638 = vmatprep.subr.mxu0 0.0
        %3639 = vmatpush1.msra.mxu0 0.0
        %3640 = vmatprep.subr.mxu0 0.0
        %3641 = vmatpush1.msra.mxu0 0.0
        %3642 = vmatprep.subr.mxu0 0.0
        %3643 = vmatpush1.msra.mxu0 0.0
        %3644 = vmatprep.subr.mxu0 0.0
        %3645 = vmatpush1.msra.mxu0 0.0
        %3646 = vmatprep.subr.mxu0 0.0
        %3647 = vmatpush1.msra.mxu0 0.0
        %3648 = vmatprep.subr.mxu0 0.0
        %3649 = vmatpush1.msra.mxu0 0.0
        %3650 = vmatprep.subr.mxu0 0.0
        %3651 = vmatpush1.msra.mxu0 0.0
        %3652 = vmatprep.subr.mxu0 0.0
        %3653 = vmatpush1.msra.mxu0 0.0
        %3654 = vmatprep.subr.mxu0 0.0
        %3655 = vmatpush1.msra.mxu0 0.0
        %3656 = vmatprep.subr.mxu0 0.0
        %3657 = vmatpush1.msra.mxu0 0.0
        %3658 = vmatprep.subr.mxu0 0.0
        %3659 = vmatpush1.msra.mxu0 %v3625
        %3660 = vmatprep.subr.mxu0 0.0
        %3661 = vmatpush1.msra.mxu0 %v3624
        %3662 = vmatprep.subr.mxu0 0.0
        %3663 = vmatpush1.msra.mxu0 %v3623
        %3664 = vmatprep.subr.mxu0 0.0
        %3665 = vmatpush1.msra.mxu0 %v3622
        %3666 = vmatprep.subr.mxu0 0.0
        %3667 = vmatpush2.msra.mxu0 0.0
        %3668 = vmatprep.subr.mxu0 0.0
        %3669 = vmatpush2.msra.mxu0 0.0
        %3670 = vmatprep.subr.mxu0 0.0
        %3671 = vmatpush2.msra.mxu0 0.0
        %3672 = vmatprep.subr.mxu0 0.0
        %3673 = vmatpush2.msra.mxu0 0.0
        %3674 = vmatprep.subr.mxu0 0.0
        %3675 = vmatpush2.msra.mxu0 0.0
        %3676 = vmatprep.subr.mxu0 0.0
        %3677 = vmatpush2.msra.mxu0 0.0
        %3678 = vmatprep.subr.mxu0 0.0
        %3679 = vmatpush2.msra.mxu0 0.0
        %3680 = vmatprep.subr.mxu0 0.0
        %3681 = vmatpush2.msra.mxu0 0.0
        %3682 = vmatprep.subr.mxu0 0.0
        %3683 = vmatpush2.msra.mxu0 0.0
        %3684 = vmatprep.subr.mxu0 0.0
        %3685 = vmatpush2.msra.mxu0 0.0
        %3686 = vmatprep.subr.mxu0 0.0
        %3687 = vmatpush2.msra.mxu0 0.0
        %3688 = vmatprep.subr.mxu0 0.0
        %3689 = vmatpush2.msra.mxu0 0.0
        %3690 = vmatprep.subr.mxu0 0.0
        %3691 = vmatpush2.msra.mxu0 0.0
        %3692 = vmatprep.subr.mxu0 0.0
        %3693 = vmatpush2.msra.mxu0 0.0
        %3694 = vmatprep.subr.mxu0 0.0
        %3695 = vmatpush2.msra.mxu0 0.0
        %3696 = vmatprep.subr.mxu0 0.0
        %3697 = vmatpush2.msra.mxu0 0.0
        %3698 = vmatprep.mubr.f32.mxu0 0.0
        %3699 = vmatmul.mubr.f32.gmra.mxu0 %v1013
        %v3700 = vpop.f32.mrf.mxu0
        %v3701 = vadd.f32 %v3632, %v3700
        %v3702 = vpop.f32.mrf.mxu0
        %3703 = vmatprep.mubr.f32.mxu0 0.0
        %3704 = vmatmul.mubr.f32.gmra.mxu0 %v1016
        %v3705 = vpop.f32.mrf.mxu0
        %v3706 = vadd.f32 %v3632, %v3705
        %v3707 = vpop.f32.mrf.mxu0
        %3708 = vmatprep.mubr.f32.mxu0 0.0
        %3709 = vmatmul.mubr.f32.gmra.mxu0 %v1019
        %v3710 = vpop.f32.mrf.mxu0
        %v3711 = vadd.f32 %v3632, %v3710
        %v3712 = vpop.f32.mrf.mxu0
        %3713 = vmatprep.mubr.f32.mxu0 0.0
        %3714 = vmatmul.mubr.f32.gmra.mxu0 %v1022
        %v3715 = vpop.f32.mrf.mxu0
        %v3716 = vadd.f32 %v3632, %v3715
        %v3717 = vpop.f32.mrf.mxu0
        %3718 = vmatprep.mubr.f32.mxu0 0.0
        %3719 = vmatmul.mubr.f32.gmra.mxu0 %v1025
        %v3720 = vpop.f32.mrf.mxu0
        %v3721 = vadd.f32 %v3632, %v3720
        %v3722 = vpop.f32.mrf.mxu0
        %3723 = vmatprep.mubr.f32.mxu0 0.0
        %3724 = vmatmul.mubr.f32.gmra.mxu0 %v1028
        %v3725 = vpop.f32.mrf.mxu0
        %v3726 = vadd.f32 %v3632, %v3725
        %v3727 = vpop.f32.mrf.mxu0
        %3728 = vmatprep.mubr.f32.mxu0 0.0
        %3729 = vmatmul.mubr.f32.gmra.mxu0 %v1031
        %v3730 = vpop.f32.mrf.mxu0
        %v3731 = vadd.f32 %v3632, %v3730
        %v3732 = vpop.f32.mrf.mxu0
        %3733 = vmatprep.mubr.f32.mxu0 0.0
        %3734 = vmatmul.mubr.f32.gmra.mxu0 %v1034
        %v3735 = vpop.f32.mrf.mxu0
        %v3736 = vadd.f32 %v3632, %v3735
        %v3737 = vpop.f32.mrf.mxu0
        %3738 = vdwg.mxu0
        %s3739 = scalar_lea.vmem %s4, 352
        %v3740 = vld [vmem:[%s3739] sm:$0xff]
        %v3741 = vld [vmem:[%s3739 + $0x8] sm:$0xff]
        %v3742 = vld [vmem:[%s3739 + $0x10] sm:$0xff]
        %v3743 = vld [vmem:[%s3739 + $0x18] sm:$0xff]
        %s3744 = scalar_lea.vmem %s5, 11
        %v3745 = vld [vmem:[%s3744] sm:$0x1]
        %v3747 = vlaneseq
        %v3748 = vshrl.u32 %v3747, 7
        %v3749 = vsub.s32 0, %v3748
        %v3750 = vrot.slane %v3745, %v3749
        %3752 = vmatprep.subr.mxu0 0.0
        %3753 = vmatpush1.msra.mxu0 0.0
        %3754 = vmatprep.subr.mxu0 0.0
        %3755 = vmatpush1.msra.mxu0 0.0
        %3756 = vmatprep.subr.mxu0 0.0
        %3757 = vmatpush1.msra.mxu0 0.0
        %3758 = vmatprep.subr.mxu0 0.0
        %3759 = vmatpush1.msra.mxu0 0.0
        %3760 = vmatprep.subr.mxu0 0.0
        %3761 = vmatpush1.msra.mxu0 0.0
        %3762 = vmatprep.subr.mxu0 0.0
        %3763 = vmatpush1.msra.mxu0 0.0
        %3764 = vmatprep.subr.mxu0 0.0
        %3765 = vmatpush1.msra.mxu0 0.0
        %3766 = vmatprep.subr.mxu0 0.0
        %3767 = vmatpush1.msra.mxu0 0.0
        %3768 = vmatprep.subr.mxu0 0.0
        %3769 = vmatpush1.msra.mxu0 0.0
        %3770 = vmatprep.subr.mxu0 0.0
        %3771 = vmatpush1.msra.mxu0 0.0
        %3772 = vmatprep.subr.mxu0 0.0
        %3773 = vmatpush1.msra.mxu0 0.0
        %3774 = vmatprep.subr.mxu0 0.0
        %3775 = vmatpush1.msra.mxu0 0.0
        %3776 = vmatprep.subr.mxu0 0.0
        %3777 = vmatpush1.msra.mxu0 %v3743
        %3778 = vmatprep.subr.mxu0 0.0
        %3779 = vmatpush1.msra.mxu0 %v3742
        %3780 = vmatprep.subr.mxu0 0.0
        %3781 = vmatpush1.msra.mxu0 %v3741
        %3782 = vmatprep.subr.mxu0 0.0
        %3783 = vmatpush1.msra.mxu0 %v3740
        %3784 = vmatprep.subr.mxu0 0.0
        %3785 = vmatpush2.msra.mxu0 0.0
        %3786 = vmatprep.subr.mxu0 0.0
        %3787 = vmatpush2.msra.mxu0 0.0
        %3788 = vmatprep.subr.mxu0 0.0
        %3789 = vmatpush2.msra.mxu0 0.0
        %3790 = vmatprep.subr.mxu0 0.0
        %3791 = vmatpush2.msra.mxu0 0.0
        %3792 = vmatprep.subr.mxu0 0.0
        %3793 = vmatpush2.msra.mxu0 0.0
        %3794 = vmatprep.subr.mxu0 0.0
        %3795 = vmatpush2.msra.mxu0 0.0
        %3796 = vmatprep.subr.mxu0 0.0
        %3797 = vmatpush2.msra.mxu0 0.0
        %3798 = vmatprep.subr.mxu0 0.0
        %3799 = vmatpush2.msra.mxu0 0.0
        %3800 = vmatprep.subr.mxu0 0.0
        %3801 = vmatpush2.msra.mxu0 0.0
        %3802 = vmatprep.subr.mxu0 0.0
        %3803 = vmatpush2.msra.mxu0 0.0
        %3804 = vmatprep.subr.mxu0 0.0
        %3805 = vmatpush2.msra.mxu0 0.0
        %3806 = vmatprep.subr.mxu0 0.0
        %3807 = vmatpush2.msra.mxu0 0.0
        %3808 = vmatprep.subr.mxu0 0.0
        %3809 = vmatpush2.msra.mxu0 0.0
        %3810 = vmatprep.subr.mxu0 0.0
        %3811 = vmatpush2.msra.mxu0 0.0
        %3812 = vmatprep.subr.mxu0 0.0
        %3813 = vmatpush2.msra.mxu0 0.0
        %3814 = vmatprep.subr.mxu0 0.0
        %3815 = vmatpush2.msra.mxu0 0.0
        %3816 = vmatprep.mubr.f32.mxu0 0.0
        %3817 = vmatmul.mubr.f32.gmra.mxu0 %v1013
        %v3818 = vpop.f32.mrf.mxu0
        %v3819 = vadd.f32 %v3750, %v3818
        %v3820 = vpop.f32.mrf.mxu0
        %3821 = vmatprep.mubr.f32.mxu0 0.0
        %3822 = vmatmul.mubr.f32.gmra.mxu0 %v1016
        %v3823 = vpop.f32.mrf.mxu0
        %v3824 = vadd.f32 %v3750, %v3823
        %v3825 = vpop.f32.mrf.mxu0
        %3826 = vmatprep.mubr.f32.mxu0 0.0
        %3827 = vmatmul.mubr.f32.gmra.mxu0 %v1019
        %v3828 = vpop.f32.mrf.mxu0
        %v3829 = vadd.f32 %v3750, %v3828
        %v3830 = vpop.f32.mrf.mxu0
        %3831 = vmatprep.mubr.f32.mxu0 0.0
        %3832 = vmatmul.mubr.f32.gmra.mxu0 %v1022
        %v3833 = vpop.f32.mrf.mxu0
        %v3834 = vadd.f32 %v3750, %v3833
        %v3835 = vpop.f32.mrf.mxu0
        %3836 = vmatprep.mubr.f32.mxu0 0.0
        %3837 = vmatmul.mubr.f32.gmra.mxu0 %v1025
        %v3838 = vpop.f32.mrf.mxu0
        %v3839 = vadd.f32 %v3750, %v3838
        %v3840 = vpop.f32.mrf.mxu0
        %3841 = vmatprep.mubr.f32.mxu0 0.0
        %3842 = vmatmul.mubr.f32.gmra.mxu0 %v1028
        %v3843 = vpop.f32.mrf.mxu0
        %v3844 = vadd.f32 %v3750, %v3843
        %v3845 = vpop.f32.mrf.mxu0
        %3846 = vmatprep.mubr.f32.mxu0 0.0
        %3847 = vmatmul.mubr.f32.gmra.mxu0 %v1031
        %v3848 = vpop.f32.mrf.mxu0
        %v3849 = vadd.f32 %v3750, %v3848
        %v3850 = vpop.f32.mrf.mxu0
        %3851 = vmatprep.mubr.f32.mxu0 0.0
        %3852 = vmatmul.mubr.f32.gmra.mxu0 %v1034
        %v3853 = vpop.f32.mrf.mxu0
        %v3854 = vadd.f32 %v3750, %v3853
        %v3855 = vpop.f32.mrf.mxu0
        %3856 = vdwg.mxu0
        %v3858 = vsel %vm1259, %v3583, 0
        %v3861 = vsel %vm1259, %v3588, 0
        %v3864 = vsel %vm1259, %v3593, 0
        %v3867 = vsel %vm1259, %v3598, 0
        %v3870 = vsel %vm1259, %v3603, 0
        %v3873 = vsel %vm1259, %v3608, 0
        %v3876 = vsel %vm1259, %v3613, 0
        %v3879 = vsel %vm1259, %v3618, 0
        %v3882 = vsel %vm1259, %v3701, 0
        %v3885 = vsel %vm1259, %v3706, 0
        %v3888 = vsel %vm1259, %v3711, 0
        %v3891 = vsel %vm1259, %v3716, 0
        %v3894 = vsel %vm1259, %v3721, 0
        %v3897 = vsel %vm1259, %v3726, 0
        %v3900 = vsel %vm1259, %v3731, 0
        %v3903 = vsel %vm1259, %v3736, 0
        %3905 = vmatprep.subr.mxu0 0.0
        %3906 = vmatpush1.xpose.msra.mxu0 0.0
        %3907 = vmatprep.subr.mxu0 0.0
        %3908 = vmatpush1.xpose.msra.mxu0 0.0
        %3909 = vmatprep.subr.mxu0 0.0
        %3910 = vmatpush1.xpose.msra.mxu0 0.0
        %3911 = vmatprep.subr.mxu0 0.0
        %3912 = vmatpush1.xpose.msra.mxu0 0.0
        %3913 = vmatprep.subr.mxu0 0.0
        %3914 = vmatpush1.xpose.msra.mxu0 0.0
        %3915 = vmatprep.subr.mxu0 0.0
        %3916 = vmatpush1.xpose.msra.mxu0 0.0
        %3917 = vmatprep.subr.mxu0 0.0
        %3918 = vmatpush1.xpose.msra.mxu0 0.0
        %3919 = vmatprep.subr.mxu0 0.0
        %3920 = vmatpush1.xpose.msra.mxu0 0.0
        %3921 = vmatprep.subr.mxu0 0.0
        %3922 = vmatpush1.xpose.msra.mxu0 %v3903
        %3923 = vmatprep.subr.mxu0 0.0
        %3924 = vmatpush1.xpose.msra.mxu0 %v3900
        %3925 = vmatprep.subr.mxu0 0.0
        %3926 = vmatpush1.xpose.msra.mxu0 %v3897
        %3927 = vmatprep.subr.mxu0 0.0
        %3928 = vmatpush1.xpose.msra.mxu0 %v3894
        %3929 = vmatprep.subr.mxu0 0.0
        %3930 = vmatpush1.xpose.msra.mxu0 %v3891
        %3931 = vmatprep.subr.mxu0 0.0
        %3932 = vmatpush1.xpose.msra.mxu0 %v3888
        %3933 = vmatprep.subr.mxu0 0.0
        %3934 = vmatpush1.xpose.msra.mxu0 %v3885
        %3935 = vmatprep.subr.mxu0 0.0
        %3936 = vmatpush1.xpose.msra.mxu0 %v3882
        %3937 = vmatprep.subr.mxu0 0.0
        %3938 = vmatpush2.xpose.msra.mxu0 0.0
        %3939 = vmatprep.subr.mxu0 0.0
        %3940 = vmatpush2.xpose.msra.mxu0 0.0
        %3941 = vmatprep.subr.mxu0 0.0
        %3942 = vmatpush2.xpose.msra.mxu0 0.0
        %3943 = vmatprep.subr.mxu0 0.0
        %3944 = vmatpush2.xpose.msra.mxu0 0.0
        %3945 = vmatprep.subr.mxu0 0.0
        %3946 = vmatpush2.xpose.msra.mxu0 0.0
        %3947 = vmatprep.subr.mxu0 0.0
        %3948 = vmatpush2.xpose.msra.mxu0 0.0
        %3949 = vmatprep.subr.mxu0 0.0
        %3950 = vmatpush2.xpose.msra.mxu0 0.0
        %3951 = vmatprep.subr.mxu0 0.0
        %3952 = vmatpush2.xpose.msra.mxu0 0.0
        %3953 = vmatprep.subr.mxu0 0.0
        %3954 = vmatpush2.xpose.msra.mxu0 0.0
        %3955 = vmatprep.subr.mxu0 0.0
        %3956 = vmatpush2.xpose.msra.mxu0 0.0
        %3957 = vmatprep.subr.mxu0 0.0
        %3958 = vmatpush2.xpose.msra.mxu0 0.0
        %3959 = vmatprep.subr.mxu0 0.0
        %3960 = vmatpush2.xpose.msra.mxu0 0.0
        %3961 = vmatprep.subr.mxu0 0.0
        %3962 = vmatpush2.xpose.msra.mxu0 0.0
        %3963 = vmatprep.subr.mxu0 0.0
        %3964 = vmatpush2.xpose.msra.mxu0 0.0
        %3965 = vmatprep.subr.mxu0 0.0
        %3966 = vmatpush2.xpose.msra.mxu0 0.0
        %3967 = vmatprep.subr.mxu0 0.0
        %3968 = vmatpush2.xpose.msra.mxu0 0.0
        %3969 = vmatprep.mubr.f32.mxu0 0.0
        %3970 = vmatmul.mubr.f32.gmra.mxu0 %v3858
        %v3971 = vpop.f32.mrf.mxu0
        %v3972 = vadd.f32 0.0, %v3971
        %v3973 = vpop.f32.mrf.mxu0
        %3974 = vmatprep.mubr.f32.mxu0 0.0
        %3975 = vmatmul.mubr.f32.gmra.mxu0 %v3861
        %v3976 = vpop.f32.mrf.mxu0
        %v3977 = vadd.f32 0.0, %v3976
        %v3978 = vpop.f32.mrf.mxu0
        %3979 = vmatprep.mubr.f32.mxu0 0.0
        %3980 = vmatmul.mubr.f32.gmra.mxu0 %v3864
        %v3981 = vpop.f32.mrf.mxu0
        %v3982 = vadd.f32 0.0, %v3981
        %v3983 = vpop.f32.mrf.mxu0
        %3984 = vmatprep.mubr.f32.mxu0 0.0
        %3985 = vmatmul.mubr.f32.gmra.mxu0 %v3867
        %v3986 = vpop.f32.mrf.mxu0
        %v3987 = vadd.f32 0.0, %v3986
        %v3988 = vpop.f32.mrf.mxu0
        %3989 = vmatprep.mubr.f32.mxu0 0.0
        %3990 = vmatmul.mubr.f32.gmra.mxu0 %v3870
        %v3991 = vpop.f32.mrf.mxu0
        %v3992 = vadd.f32 0.0, %v3991
        %v3993 = vpop.f32.mrf.mxu0
        %3994 = vmatprep.mubr.f32.mxu0 0.0
        %3995 = vmatmul.mubr.f32.gmra.mxu0 %v3873
        %v3996 = vpop.f32.mrf.mxu0
        %v3997 = vadd.f32 0.0, %v3996
        %v3998 = vpop.f32.mrf.mxu0
        %3999 = vmatprep.mubr.f32.mxu0 0.0
        %4000 = vmatmul.mubr.f32.gmra.mxu0 %v3876
        %v4001 = vpop.f32.mrf.mxu0
        %v4002 = vadd.f32 0.0, %v4001
        %v4003 = vpop.f32.mrf.mxu0
        %4004 = vmatprep.mubr.f32.mxu0 0.0
        %4005 = vmatmul.mubr.f32.gmra.mxu0 %v3879
        %v4006 = vpop.f32.mrf.mxu0
        %v4007 = vadd.f32 0.0, %v4006
        %v4008 = vpop.f32.mrf.mxu0
        %4009 = vdwg.mxu0
        %v4010 = vmul.f32 %v3972, 0.35355338
        %v4011 = vmul.f32 %v3977, 0.35355338
        %v4012 = vmul.f32 %v3982, 0.35355338
        %v4013 = vmul.f32 %v3987, 0.35355338
        %v4014 = vmul.f32 %v3992, 0.35355338
        %v4015 = vmul.f32 %v3997, 0.35355338
        %v4016 = vmul.f32 %v4002, 0.35355338
        %v4017 = vmul.f32 %v4007, 0.35355338
        %v4018 = vsel %vm1421, %v4010, -inf
        %4019 = vmax.xlane.f32.xlu0 %v4018
        %v4020 = vpop.xlane.xlu0 %4019
        %v4021 = vsel %vm1421, %v4011, -inf
        %4022 = vmax.xlane.f32.xlu0 %v4021
        %v4023 = vpop.xlane.xlu0 %4022
        %v4024 = vsel %vm1421, %v4012, -inf
        %4025 = vmax.xlane.f32.xlu0 %v4024
        %v4026 = vpop.xlane.xlu0 %4025
        %v4027 = vsel %vm1421, %v4013, -inf
        %4028 = vmax.xlane.f32.xlu0 %v4027
        %v4029 = vpop.xlane.xlu0 %4028
        %v4030 = vsel %vm1421, %v4014, -inf
        %4031 = vmax.xlane.f32.xlu0 %v4030
        %v4032 = vpop.xlane.xlu0 %4031
        %v4033 = vsel %vm1421, %v4015, -inf
        %4034 = vmax.xlane.f32.xlu0 %v4033
        %v4035 = vpop.xlane.xlu0 %4034
        %v4036 = vsel %vm1421, %v4016, -inf
        %4037 = vmax.xlane.f32.xlu0 %v4036
        %v4038 = vpop.xlane.xlu0 %4037
        %v4039 = vsel %vm1421, %v4017, -inf
        %4040 = vmax.xlane.f32.xlu0 %v4039
        %v4041 = vpop.xlane.xlu0 %4040
        %v4042 = vsub.f32 %v4010, %v4020
        %v4043 = vsub.f32 %v4011, %v4023
        %v4044 = vsub.f32 %v4012, %v4026
        %v4045 = vsub.f32 %v4013, %v4029
        %v4046 = vsub.f32 %v4014, %v4032
        %v4047 = vsub.f32 %v4015, %v4035
        %v4048 = vsub.f32 %v4016, %v4038
        %v4049 = vsub.f32 %v4017, %v4041
        %v4050 = vmul.f32 %v4042, 1.442695
        %v4051 = vpow.pop %v4050
        %v4052 = vmul.f32 %v4043, 1.442695
        %v4053 = vpow.pop %v4052
        %v4054 = vmul.f32 %v4044, 1.442695
        %v4055 = vpow.pop %v4054
        %v4056 = vmul.f32 %v4045, 1.442695
        %v4057 = vpow.pop %v4056
        %v4058 = vmul.f32 %v4046, 1.442695
        %v4059 = vpow.pop %v4058
        %v4060 = vmul.f32 %v4047, 1.442695
        %v4061 = vpow.pop %v4060
        %v4062 = vmul.f32 %v4048, 1.442695
        %v4063 = vpow.pop %v4062
        %v4064 = vmul.f32 %v4049, 1.442695
        %v4065 = vpow.pop %v4064
        %v4066 = vsel %vm1421, %v4051, 0.0
        %4067 = vadd.xlane.f32.xlu0 %v4066
        %v4068 = vpop.xlane.xlu0 %4067
        %v4069 = vsel %vm1421, %v4053, 0.0
        %4070 = vadd.xlane.f32.xlu0 %v4069
        %v4071 = vpop.xlane.xlu0 %4070
        %v4072 = vsel %vm1421, %v4055, 0.0
        %4073 = vadd.xlane.f32.xlu0 %v4072
        %v4074 = vpop.xlane.xlu0 %4073
        %v4075 = vsel %vm1421, %v4057, 0.0
        %4076 = vadd.xlane.f32.xlu0 %v4075
        %v4077 = vpop.xlane.xlu0 %4076
        %v4078 = vsel %vm1421, %v4059, 0.0
        %4079 = vadd.xlane.f32.xlu0 %v4078
        %v4080 = vpop.xlane.xlu0 %4079
        %v4081 = vsel %vm1421, %v4061, 0.0
        %4082 = vadd.xlane.f32.xlu0 %v4081
        %v4083 = vpop.xlane.xlu0 %4082
        %v4084 = vsel %vm1421, %v4063, 0.0
        %4085 = vadd.xlane.f32.xlu0 %v4084
        %v4086 = vpop.xlane.xlu0 %4085
        %v4087 = vsel %vm1421, %v4065, 0.0
        %4088 = vadd.xlane.f32.xlu0 %v4087
        %v4089 = vpop.xlane.xlu0 %4088
        %v4090 = vrcp.pop %v4068
        %v4091 = vrcp.pop %v4071
        %v4092 = vrcp.pop %v4074
        %v4093 = vrcp.pop %v4077
        %v4094 = vrcp.pop %v4080
        %v4095 = vrcp.pop %v4083
        %v4096 = vrcp.pop %v4086
        %v4097 = vrcp.pop %v4089
        %v4098 = vmul.f32 %v4051, %v4090
        %v4099 = vmul.f32 %v4053, %v4091
        %v4100 = vmul.f32 %v4055, %v4092
        %v4101 = vmul.f32 %v4057, %v4093
        %v4102 = vmul.f32 %v4059, %v4094
        %v4103 = vmul.f32 %v4061, %v4095
        %v4104 = vmul.f32 %v4063, %v4096
        %v4105 = vmul.f32 %v4065, %v4097
        %v4107 = vsel %vm1421, %v4098, 0
        %v4110 = vsel %vm1421, %v4099, 0
        %v4113 = vsel %vm1421, %v4100, 0
        %v4116 = vsel %vm1421, %v4101, 0
        %v4119 = vsel %vm1421, %v4102, 0
        %v4122 = vsel %vm1421, %v4103, 0
        %v4125 = vsel %vm1421, %v4104, 0
        %v4128 = vsel %vm1421, %v4105, 0
        %4130 = vmatprep.subr.mxu0 0.0
        %4131 = vmatpush1.msra.mxu0 0.0
        %4132 = vmatprep.subr.mxu0 0.0
        %4133 = vmatpush1.msra.mxu0 0.0
        %4134 = vmatprep.subr.mxu0 0.0
        %4135 = vmatpush1.msra.mxu0 0.0
        %4136 = vmatprep.subr.mxu0 0.0
        %4137 = vmatpush1.msra.mxu0 0.0
        %4138 = vmatprep.subr.mxu0 0.0
        %4139 = vmatpush1.msra.mxu0 0.0
        %4140 = vmatprep.subr.mxu0 0.0
        %4141 = vmatpush1.msra.mxu0 0.0
        %4142 = vmatprep.subr.mxu0 0.0
        %4143 = vmatpush1.msra.mxu0 0.0
        %4144 = vmatprep.subr.mxu0 0.0
        %4145 = vmatpush1.msra.mxu0 0.0
        %4146 = vmatprep.subr.mxu0 0.0
        %4147 = vmatpush1.msra.mxu0 %v3854
        %4148 = vmatprep.subr.mxu0 0.0
        %4149 = vmatpush1.msra.mxu0 %v3849
        %4150 = vmatprep.subr.mxu0 0.0
        %4151 = vmatpush1.msra.mxu0 %v3844
        %4152 = vmatprep.subr.mxu0 0.0
        %4153 = vmatpush1.msra.mxu0 %v3839
        %4154 = vmatprep.subr.mxu0 0.0
        %4155 = vmatpush1.msra.mxu0 %v3834
        %4156 = vmatprep.subr.mxu0 0.0
        %4157 = vmatpush1.msra.mxu0 %v3829
        %4158 = vmatprep.subr.mxu0 0.0
        %4159 = vmatpush1.msra.mxu0 %v3824
        %4160 = vmatprep.subr.mxu0 0.0
        %4161 = vmatpush1.msra.mxu0 %v3819
        %4162 = vmatprep.subr.mxu0 0.0
        %4163 = vmatpush2.msra.mxu0 0.0
        %4164 = vmatprep.subr.mxu0 0.0
        %4165 = vmatpush2.msra.mxu0 0.0
        %4166 = vmatprep.subr.mxu0 0.0
        %4167 = vmatpush2.msra.mxu0 0.0
        %4168 = vmatprep.subr.mxu0 0.0
        %4169 = vmatpush2.msra.mxu0 0.0
        %4170 = vmatprep.subr.mxu0 0.0
        %4171 = vmatpush2.msra.mxu0 0.0
        %4172 = vmatprep.subr.mxu0 0.0
        %4173 = vmatpush2.msra.mxu0 0.0
        %4174 = vmatprep.subr.mxu0 0.0
        %4175 = vmatpush2.msra.mxu0 0.0
        %4176 = vmatprep.subr.mxu0 0.0
        %4177 = vmatpush2.msra.mxu0 0.0
        %4178 = vmatprep.subr.mxu0 0.0
        %4179 = vmatpush2.msra.mxu0 0.0
        %4180 = vmatprep.subr.mxu0 0.0
        %4181 = vmatpush2.msra.mxu0 0.0
        %4182 = vmatprep.subr.mxu0 0.0
        %4183 = vmatpush2.msra.mxu0 0.0
        %4184 = vmatprep.subr.mxu0 0.0
        %4185 = vmatpush2.msra.mxu0 0.0
        %4186 = vmatprep.subr.mxu0 0.0
        %4187 = vmatpush2.msra.mxu0 0.0
        %4188 = vmatprep.subr.mxu0 0.0
        %4189 = vmatpush2.msra.mxu0 0.0
        %4190 = vmatprep.subr.mxu0 0.0
        %4191 = vmatpush2.msra.mxu0 0.0
        %4192 = vmatprep.subr.mxu0 0.0
        %4193 = vmatpush2.msra.mxu0 0.0
        %4194 = vmatprep.mubr.f32.mxu0 0.0
        %4195 = vmatmul.mubr.f32.gmra.mxu0 %v4107
        %v4196 = vpop.f32.mrf.mxu0
        %v4197 = vadd.f32 0.0, %v4196
        %v4198 = vpop.f32.mrf.mxu0
        %4199 = vmatprep.mubr.f32.mxu0 0.0
        %4200 = vmatmul.mubr.f32.gmra.mxu0 %v4110
        %v4201 = vpop.f32.mrf.mxu0
        %v4202 = vadd.f32 0.0, %v4201
        %v4203 = vpop.f32.mrf.mxu0
        %4204 = vmatprep.mubr.f32.mxu0 0.0
        %4205 = vmatmul.mubr.f32.gmra.mxu0 %v4113
        %v4206 = vpop.f32.mrf.mxu0
        %v4207 = vadd.f32 0.0, %v4206
        %v4208 = vpop.f32.mrf.mxu0
        %4209 = vmatprep.mubr.f32.mxu0 0.0
        %4210 = vmatmul.mubr.f32.gmra.mxu0 %v4116
        %v4211 = vpop.f32.mrf.mxu0
        %v4212 = vadd.f32 0.0, %v4211
        %v4213 = vpop.f32.mrf.mxu0
        %4214 = vmatprep.mubr.f32.mxu0 0.0
        %4215 = vmatmul.mubr.f32.gmra.mxu0 %v4119
        %v4216 = vpop.f32.mrf.mxu0
        %v4217 = vadd.f32 0.0, %v4216
        %v4218 = vpop.f32.mrf.mxu0
        %4219 = vmatprep.mubr.f32.mxu0 0.0
        %4220 = vmatmul.mubr.f32.gmra.mxu0 %v4122
        %v4221 = vpop.f32.mrf.mxu0
        %v4222 = vadd.f32 0.0, %v4221
        %v4223 = vpop.f32.mrf.mxu0
        %4224 = vmatprep.mubr.f32.mxu0 0.0
        %4225 = vmatmul.mubr.f32.gmra.mxu0 %v4125
        %v4226 = vpop.f32.mrf.mxu0
        %v4227 = vadd.f32 0.0, %v4226
        %v4228 = vpop.f32.mrf.mxu0
        %4229 = vmatprep.mubr.f32.mxu0 0.0
        %4230 = vmatmul.mubr.f32.gmra.mxu0 %v4128
        %v4231 = vpop.f32.mrf.mxu0
        %v4232 = vadd.f32 0.0, %v4231
        %v4233 = vpop.f32.mrf.mxu0
        %4234 = vdwg.mxu0
        %s4235 = scalar_lea.vmem %s6, 24
        %v4236 = vld [vmem:[%s4235] sm:$0xff]
        %v4238 = vsel %vm1259, %v4197, 0
        %v4241 = vsel %vm1259, %v4202, 0
        %v4244 = vsel %vm1259, %v4207, 0
        %v4247 = vsel %vm1259, %v4212, 0
        %v4250 = vsel %vm1259, %v4217, 0
        %v4253 = vsel %vm1259, %v4222, 0
        %v4256 = vsel %vm1259, %v4227, 0
        %v4259 = vsel %vm1259, %v4232, 0
        %4261 = vmatprep.subr.mxu0 0.0
        %4262 = vmatpush1.msra.mxu0 0.0
        %4263 = vmatprep.subr.mxu0 0.0
        %4264 = vmatpush1.msra.mxu0 0.0
        %4265 = vmatprep.subr.mxu0 0.0
        %4266 = vmatpush1.msra.mxu0 0.0
        %4267 = vmatprep.subr.mxu0 0.0
        %4268 = vmatpush1.msra.mxu0 0.0
        %4269 = vmatprep.subr.mxu0 0.0
        %4270 = vmatpush1.msra.mxu0 0.0
        %4271 = vmatprep.subr.mxu0 0.0
        %4272 = vmatpush1.msra.mxu0 0.0
        %4273 = vmatprep.subr.mxu0 0.0
        %4274 = vmatpush1.msra.mxu0 0.0
        %4275 = vmatprep.subr.mxu0 0.0
        %4276 = vmatpush1.msra.mxu0 0.0
        %4277 = vmatprep.subr.mxu0 0.0
        %4278 = vmatpush1.msra.mxu0 0.0
        %4279 = vmatprep.subr.mxu0 0.0
        %4280 = vmatpush1.msra.mxu0 0.0
        %4281 = vmatprep.subr.mxu0 0.0
        %4282 = vmatpush1.msra.mxu0 0.0
        %4283 = vmatprep.subr.mxu0 0.0
        %4284 = vmatpush1.msra.mxu0 0.0
        %4285 = vmatprep.subr.mxu0 0.0
        %4286 = vmatpush1.msra.mxu0 0.0
        %4287 = vmatprep.subr.mxu0 0.0
        %4288 = vmatpush1.msra.mxu0 0.0
        %4289 = vmatprep.subr.mxu0 0.0
        %4290 = vmatpush1.msra.mxu0 0.0
        %4291 = vmatprep.subr.mxu0 0.0
        %4292 = vmatpush1.msra.mxu0 %v4236
        %4293 = vmatprep.subr.mxu0 0.0
        %4294 = vmatpush2.msra.mxu0 0.0
        %4295 = vmatprep.subr.mxu0 0.0
        %4296 = vmatpush2.msra.mxu0 0.0
        %4297 = vmatprep.subr.mxu0 0.0
        %4298 = vmatpush2.msra.mxu0 0.0
        %4299 = vmatprep.subr.mxu0 0.0
        %4300 = vmatpush2.msra.mxu0 0.0
        %4301 = vmatprep.subr.mxu0 0.0
        %4302 = vmatpush2.msra.mxu0 0.0
        %4303 = vmatprep.subr.mxu0 0.0
        %4304 = vmatpush2.msra.mxu0 0.0
        %4305 = vmatprep.subr.mxu0 0.0
        %4306 = vmatpush2.msra.mxu0 0.0
        %4307 = vmatprep.subr.mxu0 0.0
        %4308 = vmatpush2.msra.mxu0 0.0
        %4309 = vmatprep.subr.mxu0 0.0
        %4310 = vmatpush2.msra.mxu0 0.0
        %4311 = vmatprep.subr.mxu0 0.0
        %4312 = vmatpush2.msra.mxu0 0.0
        %4313 = vmatprep.subr.mxu0 0.0
        %4314 = vmatpush2.msra.mxu0 0.0
        %4315 = vmatprep.subr.mxu0 0.0
        %4316 = vmatpush2.msra.mxu0 0.0
        %4317 = vmatprep.subr.mxu0 0.0
        %4318 = vmatpush2.msra.mxu0 0.0
        %4319 = vmatprep.subr.mxu0 0.0
        %4320 = vmatpush2.msra.mxu0 0.0
        %4321 = vmatprep.subr.mxu0 0.0
        %4322 = vmatpush2.msra.mxu0 0.0
        %4323 = vmatprep.subr.mxu0 0.0
        %4324 = vmatpush2.msra.mxu0 0.0
        %4325 = vmatprep.mubr.f32.mxu0 0.0
        %4326 = vmatmul.mubr.f32.gmra.mxu0 %v4238
        %v4327 = vpop.f32.mrf.mxu0
        %v4328 = vadd.f32 0.0, %v4327
        %v4329 = vpop.f32.mrf.mxu0
        %4330 = vmatprep.mubr.f32.mxu0 0.0
        %4331 = vmatmul.mubr.f32.gmra.mxu0 %v4241
        %v4332 = vpop.f32.mrf.mxu0
        %v4333 = vadd.f32 0.0, %v4332
        %v4334 = vpop.f32.mrf.mxu0
        %4335 = vmatprep.mubr.f32.mxu0 0.0
        %4336 = vmatmul.mubr.f32.gmra.mxu0 %v4244
        %v4337 = vpop.f32.mrf.mxu0
        %v4338 = vadd.f32 0.0, %v4337
        %v4339 = vpop.f32.mrf.mxu0
        %4340 = vmatprep.mubr.f32.mxu0 0.0
        %4341 = vmatmul.mubr.f32.gmra.mxu0 %v4247
        %v4342 = vpop.f32.mrf.mxu0
        %v4343 = vadd.f32 0.0, %v4342
        %v4344 = vpop.f32.mrf.mxu0
        %4345 = vmatprep.mubr.f32.mxu0 0.0
        %4346 = vmatmul.mubr.f32.gmra.mxu0 %v4250
        %v4347 = vpop.f32.mrf.mxu0
        %v4348 = vadd.f32 0.0, %v4347
        %v4349 = vpop.f32.mrf.mxu0
        %4350 = vmatprep.mubr.f32.mxu0 0.0
        %4351 = vmatmul.mubr.f32.gmra.mxu0 %v4253
        %v4352 = vpop.f32.mrf.mxu0
        %v4353 = vadd.f32 0.0, %v4352
        %v4354 = vpop.f32.mrf.mxu0
        %4355 = vmatprep.mubr.f32.mxu0 0.0
        %4356 = vmatmul.mubr.f32.gmra.mxu0 %v4256
        %v4357 = vpop.f32.mrf.mxu0
        %v4358 = vadd.f32 0.0, %v4357
        %v4359 = vpop.f32.mrf.mxu0
        %4360 = vmatprep.mubr.f32.mxu0 0.0
        %4361 = vmatmul.mubr.f32.gmra.mxu0 %v4259
        %v4362 = vpop.f32.mrf.mxu0
        %v4363 = vadd.f32 0.0, %v4362
        %v4364 = vpop.f32.mrf.mxu0
        %4365 = vdwg.mxu0
        %v4366 = vadd.f32 %v3495, %v4328
        %v4367 = vadd.f32 %v3496, %v4333
        %v4368 = vadd.f32 %v3497, %v4338
        %v4369 = vadd.f32 %v3498, %v4343
        %v4370 = vadd.f32 %v3499, %v4348
        %v4371 = vadd.f32 %v3500, %v4353
        %v4372 = vadd.f32 %v3501, %v4358
        %v4373 = vadd.f32 %v3502, %v4363
        %v4374 = vld [vmem:[%s7] sm:$0x1]
        %v4376 = vlaneseq
        %v4377 = vshrl.u32 %v4376, 7
        %v4378 = vsub.s32 0, %v4377
        %v4379 = vrot.slane %v4374, %v4378
        %v4381 = vadd.f32 %v4366, %v4379
        %v4382 = vadd.f32 %v4367, %v4379
        %v4383 = vadd.f32 %v4368, %v4379
        %v4384 = vadd.f32 %v4369, %v4379
        %v4385 = vadd.f32 %v4370, %v4379
        %v4386 = vadd.f32 %v4371, %v4379
        %v4387 = vadd.f32 %v4372, %v4379
        %v4388 = vadd.f32 %v4373, %v4379
        %v4389 = vld [vmem:[%s4] sm:$0xff]
        %v4390 = vld [vmem:[%s4 + $0x8] sm:$0xff]
        %v4391 = vld [vmem:[%s4 + $0x10] sm:$0xff]
        %v4392 = vld [vmem:[%s4 + $0x18] sm:$0xff]
        %v4393 = vld [vmem:[%s5] sm:$0x1]
        %v4395 = vlaneseq
        %v4396 = vshrl.u32 %v4395, 7
        %v4397 = vsub.s32 0, %v4396
        %v4398 = vrot.slane %v4393, %v4397
        %4400 = vmatprep.subr.mxu0 0.0
        %4401 = vmatpush1.msra.mxu0 0.0
        %4402 = vmatprep.subr.mxu0 0.0
        %4403 = vmatpush1.msra.mxu0 0.0
        %4404 = vmatprep.subr.mxu0 0.0
        %4405 = vmatpush1.msra.mxu0 0.0
        %4406 = vmatprep.subr.mxu0 0.0
        %4407 = vmatpush1.msra.mxu0 0.0
        %4408 = vmatprep.subr.mxu0 0.0
        %4409 = vmatpush1.msra.mxu0 0.0
        %4410 = vmatprep.subr.mxu0 0.0
        %4411 = vmatpush1.msra.mxu0 0.0
        %4412 = vmatprep.subr.mxu0 0.0
        %4413 = vmatpush1.msra.mxu0 0.0
        %4414 = vmatprep.subr.mxu0 0.0
        %4415 = vmatpush1.msra.mxu0 0.0
        %4416 = vmatprep.subr.mxu0 0.0
        %4417 = vmatpush1.msra.mxu0 0.0
        %4418 = vmatprep.subr.mxu0 0.0
        %4419 = vmatpush1.msra.mxu0 0.0
        %4420 = vmatprep.subr.mxu0 0.0
        %4421 = vmatpush1.msra.mxu0 0.0
        %4422 = vmatprep.subr.mxu0 0.0
        %4423 = vmatpush1.msra.mxu0 0.0
        %4424 = vmatprep.subr.mxu0 0.0
        %4425 = vmatpush1.msra.mxu0 %v4392
        %4426 = vmatprep.subr.mxu0 0.0
        %4427 = vmatpush1.msra.mxu0 %v4391
        %4428 = vmatprep.subr.mxu0 0.0
        %4429 = vmatpush1.msra.mxu0 %v4390
        %4430 = vmatprep.subr.mxu0 0.0
        %4431 = vmatpush1.msra.mxu0 %v4389
        %4432 = vmatprep.subr.mxu0 0.0
        %4433 = vmatpush2.msra.mxu0 0.0
        %4434 = vmatprep.subr.mxu0 0.0
        %4435 = vmatpush2.msra.mxu0 0.0
        %4436 = vmatprep.subr.mxu0 0.0
        %4437 = vmatpush2.msra.mxu0 0.0
        %4438 = vmatprep.subr.mxu0 0.0
        %4439 = vmatpush2.msra.mxu0 0.0
        %4440 = vmatprep.subr.mxu0 0.0
        %4441 = vmatpush2.msra.mxu0 0.0
        %4442 = vmatprep.subr.mxu0 0.0
        %4443 = vmatpush2.msra.mxu0 0.0
        %4444 = vmatprep.subr.mxu0 0.0
        %4445 = vmatpush2.msra.mxu0 0.0
        %4446 = vmatprep.subr.mxu0 0.0
        %4447 = vmatpush2.msra.mxu0 0.0
        %4448 = vmatprep.subr.mxu0 0.0
        %4449 = vmatpush2.msra.mxu0 0.0
        %4450 = vmatprep.subr.mxu0 0.0
        %4451 = vmatpush2.msra.mxu0 0.0
        %4452 = vmatprep.subr.mxu0 0.0
        %4453 = vmatpush2.msra.mxu0 0.0
        %4454 = vmatprep.subr.mxu0 0.0
        %4455 = vmatpush2.msra.mxu0 0.0
        %4456 = vmatprep.subr.mxu0 0.0
        %4457 = vmatpush2.msra.mxu0 0.0
        %4458 = vmatprep.subr.mxu0 0.0
        %4459 = vmatpush2.msra.mxu0 0.0
        %4460 = vmatprep.subr.mxu0 0.0
        %4461 = vmatpush2.msra.mxu0 0.0
        %4462 = vmatprep.subr.mxu0 0.0
        %4463 = vmatpush2.msra.mxu0 0.0
        %4464 = vmatprep.mubr.f32.mxu0 0.0
        %4465 = vmatmul.mubr.f32.gmra.mxu0 %v1013
        %v4466 = vpop.f32.mrf.mxu0
        %v4467 = vadd.f32 %v4398, %v4466
        %v4468 = vpop.f32.mrf.mxu0
        %4469 = vmatprep.mubr.f32.mxu0 0.0
        %4470 = vmatmul.mubr.f32.gmra.mxu0 %v1016
        %v4471 = vpop.f32.mrf.mxu0
        %v4472 = vadd.f32 %v4398, %v4471
        %v4473 = vpop.f32.mrf.mxu0
        %4474 = vmatprep.mubr.f32.mxu0 0.0
        %4475 = vmatmul.mubr.f32.gmra.mxu0 %v1019
        %v4476 = vpop.f32.mrf.mxu0
        %v4477 = vadd.f32 %v4398, %v4476
        %v4478 = vpop.f32.mrf.mxu0
        %4479 = vmatprep.mubr.f32.mxu0 0.0
        %4480 = vmatmul.mubr.f32.gmra.mxu0 %v1022
        %v4481 = vpop.f32.mrf.mxu0
        %v4482 = vadd.f32 %v4398, %v4481
        %v4483 = vpop.f32.mrf.mxu0
        %4484 = vmatprep.mubr.f32.mxu0 0.0
        %4485 = vmatmul.mubr.f32.gmra.mxu0 %v1025
        %v4486 = vpop.f32.mrf.mxu0
        %v4487 = vadd.f32 %v4398, %v4486
        %v4488 = vpop.f32.mrf.mxu0
        %4489 = vmatprep.mubr.f32.mxu0 0.0
        %4490 = vmatmul.mubr.f32.gmra.mxu0 %v1028
        %v4491 = vpop.f32.mrf.mxu0
        %v4492 = vadd.f32 %v4398, %v4491
        %v4493 = vpop.f32.mrf.mxu0
        %4494 = vmatprep.mubr.f32.mxu0 0.0
        %4495 = vmatmul.mubr.f32.gmra.mxu0 %v1031
        %v4496 = vpop.f32.mrf.mxu0
        %v4497 = vadd.f32 %v4398, %v4496
        %v4498 = vpop.f32.mrf.mxu0
        %4499 = vmatprep.mubr.f32.mxu0 0.0
        %4500 = vmatmul.mubr.f32.gmra.mxu0 %v1034
        %v4501 = vpop.f32.mrf.mxu0
        %v4502 = vadd.f32 %v4398, %v4501
        %v4503 = vpop.f32.mrf.mxu0
        %4504 = vdwg.mxu0
        %s4505 = scalar_lea.vmem %s4, 512
        %v4506 = vld [vmem:[%s4505] sm:$0xff]
        %v4507 = vld [vmem:[%s4505 + $0x8] sm:$0xff]
        %v4508 = vld [vmem:[%s4505 + $0x10] sm:$0xff]
        %v4509 = vld [vmem:[%s4505 + $0x18] sm:$0xff]
        %s4510 = scalar_lea.vmem %s5, 16
        %v4511 = vld [vmem:[%s4510] sm:$0x1]
        %v4513 = vlaneseq
        %v4514 = vshrl.u32 %v4513, 7
        %v4515 = vsub.s32 0, %v4514
        %v4516 = vrot.slane %v4511, %v4515
        %4518 = vmatprep.subr.mxu0 0.0
        %4519 = vmatpush1.msra.mxu0 0.0
        %4520 = vmatprep.subr.mxu0 0.0
        %4521 = vmatpush1.msra.mxu0 0.0
        %4522 = vmatprep.subr.mxu0 0.0
        %4523 = vmatpush1.msra.mxu0 0.0
        %4524 = vmatprep.subr.mxu0 0.0
        %4525 = vmatpush1.msra.mxu0 0.0
        %4526 = vmatprep.subr.mxu0 0.0
        %4527 = vmatpush1.msra.mxu0 0.0
        %4528 = vmatprep.subr.mxu0 0.0
        %4529 = vmatpush1.msra.mxu0 0.0
        %4530 = vmatprep.subr.mxu0 0.0
        %4531 = vmatpush1.msra.mxu0 0.0
        %4532 = vmatprep.subr.mxu0 0.0
        %4533 = vmatpush1.msra.mxu0 0.0
        %4534 = vmatprep.subr.mxu0 0.0
        %4535 = vmatpush1.msra.mxu0 0.0
        %4536 = vmatprep.subr.mxu0 0.0
        %4537 = vmatpush1.msra.mxu0 0.0
        %4538 = vmatprep.subr.mxu0 0.0
        %4539 = vmatpush1.msra.mxu0 0.0
        %4540 = vmatprep.subr.mxu0 0.0
        %4541 = vmatpush1.msra.mxu0 0.0
        %4542 = vmatprep.subr.mxu0 0.0
        %4543 = vmatpush1.msra.mxu0 %v4509
        %4544 = vmatprep.subr.mxu0 0.0
        %4545 = vmatpush1.msra.mxu0 %v4508
        %4546 = vmatprep.subr.mxu0 0.0
        %4547 = vmatpush1.msra.mxu0 %v4507
        %4548 = vmatprep.subr.mxu0 0.0
        %4549 = vmatpush1.msra.mxu0 %v4506
        %4550 = vmatprep.subr.mxu0 0.0
        %4551 = vmatpush2.msra.mxu0 0.0
        %4552 = vmatprep.subr.mxu0 0.0
        %4553 = vmatpush2.msra.mxu0 0.0
        %4554 = vmatprep.subr.mxu0 0.0
        %4555 = vmatpush2.msra.mxu0 0.0
        %4556 = vmatprep.subr.mxu0 0.0
        %4557 = vmatpush2.msra.mxu0 0.0
        %4558 = vmatprep.subr.mxu0 0.0
        %4559 = vmatpush2.msra.mxu0 0.0
        %4560 = vmatprep.subr.mxu0 0.0
        %4561 = vmatpush2.msra.mxu0 0.0
        %4562 = vmatprep.subr.mxu0 0.0
        %4563 = vmatpush2.msra.mxu0 0.0
        %4564 = vmatprep.subr.mxu0 0.0
        %4565 = vmatpush2.msra.mxu0 0.0
        %4566 = vmatprep.subr.mxu0 0.0
        %4567 = vmatpush2.msra.mxu0 0.0
        %4568 = vmatprep.subr.mxu0 0.0
        %4569 = vmatpush2.msra.mxu0 0.0
        %4570 = vmatprep.subr.mxu0 0.0
        %4571 = vmatpush2.msra.mxu0 0.0
        %4572 = vmatprep.subr.mxu0 0.0
        %4573 = vmatpush2.msra.mxu0 0.0
        %4574 = vmatprep.subr.mxu0 0.0
        %4575 = vmatpush2.msra.mxu0 0.0
        %4576 = vmatprep.subr.mxu0 0.0
        %4577 = vmatpush2.msra.mxu0 0.0
        %4578 = vmatprep.subr.mxu0 0.0
        %4579 = vmatpush2.msra.mxu0 0.0
        %4580 = vmatprep.subr.mxu0 0.0
        %4581 = vmatpush2.msra.mxu0 0.0
        %4582 = vmatprep.mubr.f32.mxu0 0.0
        %4583 = vmatmul.mubr.f32.gmra.mxu0 %v871
        %v4584 = vpop.f32.mrf.mxu0
        %v4585 = vadd.f32 %v4516, %v4584
        %v4586 = vpop.f32.mrf.mxu0
        %4587 = vmatprep.mubr.f32.mxu0 0.0
        %4588 = vmatmul.mubr.f32.gmra.mxu0 %v874
        %v4589 = vpop.f32.mrf.mxu0
        %v4590 = vadd.f32 %v4516, %v4589
        %v4591 = vpop.f32.mrf.mxu0
        %4592 = vmatprep.mubr.f32.mxu0 0.0
        %4593 = vmatmul.mubr.f32.gmra.mxu0 %v877
        %v4594 = vpop.f32.mrf.mxu0
        %v4595 = vadd.f32 %v4516, %v4594
        %v4596 = vpop.f32.mrf.mxu0
        %4597 = vmatprep.mubr.f32.mxu0 0.0
        %4598 = vmatmul.mubr.f32.gmra.mxu0 %v880
        %v4599 = vpop.f32.mrf.mxu0
        %v4600 = vadd.f32 %v4516, %v4599
        %v4601 = vpop.f32.mrf.mxu0
        %4602 = vmatprep.mubr.f32.mxu0 0.0
        %4603 = vmatmul.mubr.f32.gmra.mxu0 %v883
        %v4604 = vpop.f32.mrf.mxu0
        %v4605 = vadd.f32 %v4516, %v4604
        %v4606 = vpop.f32.mrf.mxu0
        %4607 = vmatprep.mubr.f32.mxu0 0.0
        %4608 = vmatmul.mubr.f32.gmra.mxu0 %v886
        %v4609 = vpop.f32.mrf.mxu0
        %v4610 = vadd.f32 %v4516, %v4609
        %v4611 = vpop.f32.mrf.mxu0
        %4612 = vmatprep.mubr.f32.mxu0 0.0
        %4613 = vmatmul.mubr.f32.gmra.mxu0 %v889
        %v4614 = vpop.f32.mrf.mxu0
        %v4615 = vadd.f32 %v4516, %v4614
        %v4616 = vpop.f32.mrf.mxu0
        %4617 = vmatprep.mubr.f32.mxu0 0.0
        %4618 = vmatmul.mubr.f32.gmra.mxu0 %v892
        %v4619 = vpop.f32.mrf.mxu0
        %v4620 = vadd.f32 %v4516, %v4619
        %v4621 = vpop.f32.mrf.mxu0
        %4622 = vdwg.mxu0
        %s4623 = scalar_lea.vmem %s4, 640
        %v4624 = vld [vmem:[%s4623] sm:$0xff]
        %v4625 = vld [vmem:[%s4623 + $0x8] sm:$0xff]
        %v4626 = vld [vmem:[%s4623 + $0x10] sm:$0xff]
        %v4627 = vld [vmem:[%s4623 + $0x18] sm:$0xff]
        %s4628 = scalar_lea.vmem %s5, 20
        %v4629 = vld [vmem:[%s4628] sm:$0x1]
        %v4631 = vlaneseq
        %v4632 = vshrl.u32 %v4631, 7
        %v4633 = vsub.s32 0, %v4632
        %v4634 = vrot.slane %v4629, %v4633
        %4636 = vmatprep.subr.mxu0 0.0
        %4637 = vmatpush1.msra.mxu0 0.0
        %4638 = vmatprep.subr.mxu0 0.0
        %4639 = vmatpush1.msra.mxu0 0.0
        %4640 = vmatprep.subr.mxu0 0.0
        %4641 = vmatpush1.msra.mxu0 0.0
        %4642 = vmatprep.subr.mxu0 0.0
        %4643 = vmatpush1.msra.mxu0 0.0
        %4644 = vmatprep.subr.mxu0 0.0
        %4645 = vmatpush1.msra.mxu0 0.0
        %4646 = vmatprep.subr.mxu0 0.0
        %4647 = vmatpush1.msra.mxu0 0.0
        %4648 = vmatprep.subr.mxu0 0.0
        %4649 = vmatpush1.msra.mxu0 0.0
        %4650 = vmatprep.subr.mxu0 0.0
        %4651 = vmatpush1.msra.mxu0 0.0
        %4652 = vmatprep.subr.mxu0 0.0
        %4653 = vmatpush1.msra.mxu0 0.0
        %4654 = vmatprep.subr.mxu0 0.0
        %4655 = vmatpush1.msra.mxu0 0.0
        %4656 = vmatprep.subr.mxu0 0.0
        %4657 = vmatpush1.msra.mxu0 0.0
        %4658 = vmatprep.subr.mxu0 0.0
        %4659 = vmatpush1.msra.mxu0 0.0
        %4660 = vmatprep.subr.mxu0 0.0
        %4661 = vmatpush1.msra.mxu0 %v4627
        %4662 = vmatprep.subr.mxu0 0.0
        %4663 = vmatpush1.msra.mxu0 %v4626
        %4664 = vmatprep.subr.mxu0 0.0
        %4665 = vmatpush1.msra.mxu0 %v4625
        %4666 = vmatprep.subr.mxu0 0.0
        %4667 = vmatpush1.msra.mxu0 %v4624
        %4668 = vmatprep.subr.mxu0 0.0
        %4669 = vmatpush2.msra.mxu0 0.0
        %4670 = vmatprep.subr.mxu0 0.0
        %4671 = vmatpush2.msra.mxu0 0.0
        %4672 = vmatprep.subr.mxu0 0.0
        %4673 = vmatpush2.msra.mxu0 0.0
        %4674 = vmatprep.subr.mxu0 0.0
        %4675 = vmatpush2.msra.mxu0 0.0
        %4676 = vmatprep.subr.mxu0 0.0
        %4677 = vmatpush2.msra.mxu0 0.0
        %4678 = vmatprep.subr.mxu0 0.0
        %4679 = vmatpush2.msra.mxu0 0.0
        %4680 = vmatprep.subr.mxu0 0.0
        %4681 = vmatpush2.msra.mxu0 0.0
        %4682 = vmatprep.subr.mxu0 0.0
        %4683 = vmatpush2.msra.mxu0 0.0
        %4684 = vmatprep.subr.mxu0 0.0
        %4685 = vmatpush2.msra.mxu0 0.0
        %4686 = vmatprep.subr.mxu0 0.0
        %4687 = vmatpush2.msra.mxu0 0.0
        %4688 = vmatprep.subr.mxu0 0.0
        %4689 = vmatpush2.msra.mxu0 0.0
        %4690 = vmatprep.subr.mxu0 0.0
        %4691 = vmatpush2.msra.mxu0 0.0
        %4692 = vmatprep.subr.mxu0 0.0
        %4693 = vmatpush2.msra.mxu0 0.0
        %4694 = vmatprep.subr.mxu0 0.0
        %4695 = vmatpush2.msra.mxu0 0.0
        %4696 = vmatprep.subr.mxu0 0.0
        %4697 = vmatpush2.msra.mxu0 0.0
        %4698 = vmatprep.subr.mxu0 0.0
        %4699 = vmatpush2.msra.mxu0 0.0
        %4700 = vmatprep.mubr.f32.mxu0 0.0
        %4701 = vmatmul.mubr.f32.gmra.mxu0 %v871
        %v4702 = vpop.f32.mrf.mxu0
        %v4703 = vadd.f32 %v4634, %v4702
        %v4704 = vpop.f32.mrf.mxu0
        %4705 = vmatprep.mubr.f32.mxu0 0.0
        %4706 = vmatmul.mubr.f32.gmra.mxu0 %v874
        %v4707 = vpop.f32.mrf.mxu0
        %v4708 = vadd.f32 %v4634, %v4707
        %v4709 = vpop.f32.mrf.mxu0
        %4710 = vmatprep.mubr.f32.mxu0 0.0
        %4711 = vmatmul.mubr.f32.gmra.mxu0 %v877
        %v4712 = vpop.f32.mrf.mxu0
        %v4713 = vadd.f32 %v4634, %v4712
        %v4714 = vpop.f32.mrf.mxu0
        %4715 = vmatprep.mubr.f32.mxu0 0.0
        %4716 = vmatmul.mubr.f32.gmra.mxu0 %v880
        %v4717 = vpop.f32.mrf.mxu0
        %v4718 = vadd.f32 %v4634, %v4717
        %v4719 = vpop.f32.mrf.mxu0
        %4720 = vmatprep.mubr.f32.mxu0 0.0
        %4721 = vmatmul.mubr.f32.gmra.mxu0 %v883
        %v4722 = vpop.f32.mrf.mxu0
        %v4723 = vadd.f32 %v4634, %v4722
        %v4724 = vpop.f32.mrf.mxu0
        %4725 = vmatprep.mubr.f32.mxu0 0.0
        %4726 = vmatmul.mubr.f32.gmra.mxu0 %v886
        %v4727 = vpop.f32.mrf.mxu0
        %v4728 = vadd.f32 %v4634, %v4727
        %v4729 = vpop.f32.mrf.mxu0
        %4730 = vmatprep.mubr.f32.mxu0 0.0
        %4731 = vmatmul.mubr.f32.gmra.mxu0 %v889
        %v4732 = vpop.f32.mrf.mxu0
        %v4733 = vadd.f32 %v4634, %v4732
        %v4734 = vpop.f32.mrf.mxu0
        %4735 = vmatprep.mubr.f32.mxu0 0.0
        %4736 = vmatmul.mubr.f32.gmra.mxu0 %v892
        %v4737 = vpop.f32.mrf.mxu0
        %v4738 = vadd.f32 %v4634, %v4737
        %v4739 = vpop.f32.mrf.mxu0
        %4740 = vdwg.mxu0
        %v4742 = vsel %vm1259, %v4467, 0
        %v4745 = vsel %vm1259, %v4472, 0
        %v4748 = vsel %vm1259, %v4477, 0
        %v4751 = vsel %vm1259, %v4482, 0
        %v4754 = vsel %vm1259, %v4487, 0
        %v4757 = vsel %vm1259, %v4492, 0
        %v4760 = vsel %vm1259, %v4497, 0
        %v4763 = vsel %vm1259, %v4502, 0
        %v4766 = vsel %vm1259, %v4585, 0
        %v4769 = vsel %vm1259, %v4590, 0
        %v4772 = vsel %vm1259, %v4595, 0
        %v4775 = vsel %vm1259, %v4600, 0
        %v4778 = vsel %vm1259, %v4605, 0
        %v4781 = vsel %vm1259, %v4610, 0
        %v4784 = vsel %vm1259, %v4615, 0
        %v4787 = vsel %vm1259, %v4620, 0
        %4789 = vmatprep.subr.mxu0 0.0
        %4790 = vmatpush1.xpose.msra.mxu0 0.0
        %4791 = vmatprep.subr.mxu0 0.0
        %4792 = vmatpush1.xpose.msra.mxu0 0.0
        %4793 = vmatprep.subr.mxu0 0.0
        %4794 = vmatpush1.xpose.msra.mxu0 0.0
        %4795 = vmatprep.subr.mxu0 0.0
        %4796 = vmatpush1.xpose.msra.mxu0 0.0
        %4797 = vmatprep.subr.mxu0 0.0
        %4798 = vmatpush1.xpose.msra.mxu0 0.0
        %4799 = vmatprep.subr.mxu0 0.0
        %4800 = vmatpush1.xpose.msra.mxu0 0.0
        %4801 = vmatprep.subr.mxu0 0.0
        %4802 = vmatpush1.xpose.msra.mxu0 0.0
        %4803 = vmatprep.subr.mxu0 0.0
        %4804 = vmatpush1.xpose.msra.mxu0 0.0
        %4805 = vmatprep.subr.mxu0 0.0
        %4806 = vmatpush1.xpose.msra.mxu0 %v4787
        %4807 = vmatprep.subr.mxu0 0.0
        %4808 = vmatpush1.xpose.msra.mxu0 %v4784
        %4809 = vmatprep.subr.mxu0 0.0
        %4810 = vmatpush1.xpose.msra.mxu0 %v4781
        %4811 = vmatprep.subr.mxu0 0.0
        %4812 = vmatpush1.xpose.msra.mxu0 %v4778
        %4813 = vmatprep.subr.mxu0 0.0
        %4814 = vmatpush1.xpose.msra.mxu0 %v4775
        %4815 = vmatprep.subr.mxu0 0.0
        %4816 = vmatpush1.xpose.msra.mxu0 %v4772
        %4817 = vmatprep.subr.mxu0 0.0
        %4818 = vmatpush1.xpose.msra.mxu0 %v4769
        %4819 = vmatprep.subr.mxu0 0.0
        %4820 = vmatpush1.xpose.msra.mxu0 %v4766
        %4821 = vmatprep.subr.mxu0 0.0
        %4822 = vmatpush2.xpose.msra.mxu0 0.0
        %4823 = vmatprep.subr.mxu0 0.0
        %4824 = vmatpush2.xpose.msra.mxu0 0.0
        %4825 = vmatprep.subr.mxu0 0.0
        %4826 = vmatpush2.xpose.msra.mxu0 0.0
        %4827 = vmatprep.subr.mxu0 0.0
        %4828 = vmatpush2.xpose.msra.mxu0 0.0
        %4829 = vmatprep.subr.mxu0 0.0
        %4830 = vmatpush2.xpose.msra.mxu0 0.0
        %4831 = vmatprep.subr.mxu0 0.0
        %4832 = vmatpush2.xpose.msra.mxu0 0.0
        %4833 = vmatprep.subr.mxu0 0.0
        %4834 = vmatpush2.xpose.msra.mxu0 0.0
        %4835 = vmatprep.subr.mxu0 0.0
        %4836 = vmatpush2.xpose.msra.mxu0 0.0
        %4837 = vmatprep.subr.mxu0 0.0
        %4838 = vmatpush2.xpose.msra.mxu0 0.0
        %4839 = vmatprep.subr.mxu0 0.0
        %4840 = vmatpush2.xpose.msra.mxu0 0.0
        %4841 = vmatprep.subr.mxu0 0.0
        %4842 = vmatpush2.xpose.msra.mxu0 0.0
        %4843 = vmatprep.subr.mxu0 0.0
        %4844 = vmatpush2.xpose.msra.mxu0 0.0
        %4845 = vmatprep.subr.mxu0 0.0
        %4846 = vmatpush2.xpose.msra.mxu0 0.0
        %4847 = vmatprep.subr.mxu0 0.0
        %4848 = vmatpush2.xpose.msra.mxu0 0.0
        %4849 = vmatprep.subr.mxu0 0.0
        %4850 = vmatpush2.xpose.msra.mxu0 0.0
        %4851 = vmatprep.subr.mxu0 0.0
        %4852 = vmatpush2.xpose.msra.mxu0 0.0
        %4853 = vmatprep.mubr.f32.mxu0 0.0
        %4854 = vmatmul.mubr.f32.gmra.mxu0 %v4742
        %v4855 = vpop.f32.mrf.mxu0
        %v4856 = vadd.f32 0.0, %v4855
        %v4857 = vpop.f32.mrf.mxu0
        %4858 = vmatprep.mubr.f32.mxu0 0.0
        %4859 = vmatmul.mubr.f32.gmra.mxu0 %v4745
        %v4860 = vpop.f32.mrf.mxu0
        %v4861 = vadd.f32 0.0, %v4860
        %v4862 = vpop.f32.mrf.mxu0
        %4863 = vmatprep.mubr.f32.mxu0 0.0
        %4864 = vmatmul.mubr.f32.gmra.mxu0 %v4748
        %v4865 = vpop.f32.mrf.mxu0
        %v4866 = vadd.f32 0.0, %v4865
        %v4867 = vpop.f32.mrf.mxu0
        %4868 = vmatprep.mubr.f32.mxu0 0.0
        %4869 = vmatmul.mubr.f32.gmra.mxu0 %v4751
        %v4870 = vpop.f32.mrf.mxu0
        %v4871 = vadd.f32 0.0, %v4870
        %v4872 = vpop.f32.mrf.mxu0
        %4873 = vmatprep.mubr.f32.mxu0 0.0
        %4874 = vmatmul.mubr.f32.gmra.mxu0 %v4754
        %v4875 = vpop.f32.mrf.mxu0
        %v4876 = vadd.f32 0.0, %v4875
        %v4877 = vpop.f32.mrf.mxu0
        %4878 = vmatprep.mubr.f32.mxu0 0.0
        %4879 = vmatmul.mubr.f32.gmra.mxu0 %v4757
        %v4880 = vpop.f32.mrf.mxu0
        %v4881 = vadd.f32 0.0, %v4880
        %v4882 = vpop.f32.mrf.mxu0
        %4883 = vmatprep.mubr.f32.mxu0 0.0
        %4884 = vmatmul.mubr.f32.gmra.mxu0 %v4760
        %v4885 = vpop.f32.mrf.mxu0
        %v4886 = vadd.f32 0.0, %v4885
        %v4887 = vpop.f32.mrf.mxu0
        %4888 = vmatprep.mubr.f32.mxu0 0.0
        %4889 = vmatmul.mubr.f32.gmra.mxu0 %v4763
        %v4890 = vpop.f32.mrf.mxu0
        %v4891 = vadd.f32 0.0, %v4890
        %v4892 = vpop.f32.mrf.mxu0
        %4893 = vdwg.mxu0
        %v4894 = vmul.f32 %v4856, 0.35355338
        %v4895 = vmul.f32 %v4861, 0.35355338
        %v4896 = vmul.f32 %v4866, 0.35355338
        %v4897 = vmul.f32 %v4871, 0.35355338
        %v4898 = vmul.f32 %v4876, 0.35355338
        %v4899 = vmul.f32 %v4881, 0.35355338
        %v4900 = vmul.f32 %v4886, 0.35355338
        %v4901 = vmul.f32 %v4891, 0.35355338
        %v4902 = vsel %vm1421, %v4894, -inf
        %4903 = vmax.xlane.f32.xlu0 %v4902
        %v4904 = vpop.xlane.xlu0 %4903
        %v4905 = vsel %vm1421, %v4895, -inf
        %4906 = vmax.xlane.f32.xlu0 %v4905
        %v4907 = vpop.xlane.xlu0 %4906
        %v4908 = vsel %vm1421, %v4896, -inf
        %4909 = vmax.xlane.f32.xlu0 %v4908
        %v4910 = vpop.xlane.xlu0 %4909
        %v4911 = vsel %vm1421, %v4897, -inf
        %4912 = vmax.xlane.f32.xlu0 %v4911
        %v4913 = vpop.xlane.xlu0 %4912
        %v4914 = vsel %vm1421, %v4898, -inf
        %4915 = vmax.xlane.f32.xlu0 %v4914
        %v4916 = vpop.xlane.xlu0 %4915
        %v4917 = vsel %vm1421, %v4899, -inf
        %4918 = vmax.xlane.f32.xlu0 %v4917
        %v4919 = vpop.xlane.xlu0 %4918
        %v4920 = vsel %vm1421, %v4900, -inf
        %4921 = vmax.xlane.f32.xlu0 %v4920
        %v4922 = vpop.xlane.xlu0 %4921
        %v4923 = vsel %vm1421, %v4901, -inf
        %4924 = vmax.xlane.f32.xlu0 %v4923
        %v4925 = vpop.xlane.xlu0 %4924
        %v4926 = vsub.f32 %v4894, %v4904
        %v4927 = vsub.f32 %v4895, %v4907
        %v4928 = vsub.f32 %v4896, %v4910
        %v4929 = vsub.f32 %v4897, %v4913
        %v4930 = vsub.f32 %v4898, %v4916
        %v4931 = vsub.f32 %v4899, %v4919
        %v4932 = vsub.f32 %v4900, %v4922
        %v4933 = vsub.f32 %v4901, %v4925
        %v4934 = vmul.f32 %v4926, 1.442695
        %v4935 = vpow.pop %v4934
        %v4936 = vmul.f32 %v4927, 1.442695
        %v4937 = vpow.pop %v4936
        %v4938 = vmul.f32 %v4928, 1.442695
        %v4939 = vpow.pop %v4938
        %v4940 = vmul.f32 %v4929, 1.442695
        %v4941 = vpow.pop %v4940
        %v4942 = vmul.f32 %v4930, 1.442695
        %v4943 = vpow.pop %v4942
        %v4944 = vmul.f32 %v4931, 1.442695
        %v4945 = vpow.pop %v4944
        %v4946 = vmul.f32 %v4932, 1.442695
        %v4947 = vpow.pop %v4946
        %v4948 = vmul.f32 %v4933, 1.442695
        %v4949 = vpow.pop %v4948
        %v4950 = vsel %vm1421, %v4935, 0.0
        %4951 = vadd.xlane.f32.xlu0 %v4950
        %v4952 = vpop.xlane.xlu0 %4951
        %v4953 = vsel %vm1421, %v4937, 0.0
        %4954 = vadd.xlane.f32.xlu0 %v4953
        %v4955 = vpop.xlane.xlu0 %4954
        %v4956 = vsel %vm1421, %v4939, 0.0
        %4957 = vadd.xlane.f32.xlu0 %v4956
        %v4958 = vpop.xlane.xlu0 %4957
        %v4959 = vsel %vm1421, %v4941, 0.0
        %4960 = vadd.xlane.f32.xlu0 %v4959
        %v4961 = vpop.xlane.xlu0 %4960
        %v4962 = vsel %vm1421, %v4943, 0.0
        %4963 = vadd.xlane.f32.xlu0 %v4962
        %v4964 = vpop.xlane.xlu0 %4963
        %v4965 = vsel %vm1421, %v4945, 0.0
        %4966 = vadd.xlane.f32.xlu0 %v4965
        %v4967 = vpop.xlane.xlu0 %4966
        %v4968 = vsel %vm1421, %v4947, 0.0
        %4969 = vadd.xlane.f32.xlu0 %v4968
        %v4970 = vpop.xlane.xlu0 %4969
        %v4971 = vsel %vm1421, %v4949, 0.0
        %4972 = vadd.xlane.f32.xlu0 %v4971
        %v4973 = vpop.xlane.xlu0 %4972
        %v4974 = vrcp.pop %v4952
        %v4975 = vrcp.pop %v4955
        %v4976 = vrcp.pop %v4958
        %v4977 = vrcp.pop %v4961
        %v4978 = vrcp.pop %v4964
        %v4979 = vrcp.pop %v4967
        %v4980 = vrcp.pop %v4970
        %v4981 = vrcp.pop %v4973
        %v4982 = vmul.f32 %v4935, %v4974
        %v4983 = vmul.f32 %v4937, %v4975
        %v4984 = vmul.f32 %v4939, %v4976
        %v4985 = vmul.f32 %v4941, %v4977
        %v4986 = vmul.f32 %v4943, %v4978
        %v4987 = vmul.f32 %v4945, %v4979
        %v4988 = vmul.f32 %v4947, %v4980
        %v4989 = vmul.f32 %v4949, %v4981
        %v4991 = vsel %vm1421, %v4982, 0
        %v4994 = vsel %vm1421, %v4983, 0
        %v4997 = vsel %vm1421, %v4984, 0
        %v5000 = vsel %vm1421, %v4985, 0
        %v5003 = vsel %vm1421, %v4986, 0
        %v5006 = vsel %vm1421, %v4987, 0
        %v5009 = vsel %vm1421, %v4988, 0
        %v5012 = vsel %vm1421, %v4989, 0
        %5014 = vmatprep.subr.mxu0 0.0
        %5015 = vmatpush1.msra.mxu0 0.0
        %5016 = vmatprep.subr.mxu0 0.0
        %5017 = vmatpush1.msra.mxu0 0.0
        %5018 = vmatprep.subr.mxu0 0.0
        %5019 = vmatpush1.msra.mxu0 0.0
        %5020 = vmatprep.subr.mxu0 0.0
        %5021 = vmatpush1.msra.mxu0 0.0
        %5022 = vmatprep.subr.mxu0 0.0
        %5023 = vmatpush1.msra.mxu0 0.0
        %5024 = vmatprep.subr.mxu0 0.0
        %5025 = vmatpush1.msra.mxu0 0.0
        %5026 = vmatprep.subr.mxu0 0.0
        %5027 = vmatpush1.msra.mxu0 0.0
        %5028 = vmatprep.subr.mxu0 0.0
        %5029 = vmatpush1.msra.mxu0 0.0
        %5030 = vmatprep.subr.mxu0 0.0
        %5031 = vmatpush1.msra.mxu0 %v4738
        %5032 = vmatprep.subr.mxu0 0.0
        %5033 = vmatpush1.msra.mxu0 %v4733
        %5034 = vmatprep.subr.mxu0 0.0
        %5035 = vmatpush1.msra.mxu0 %v4728
        %5036 = vmatprep.subr.mxu0 0.0
        %5037 = vmatpush1.msra.mxu0 %v4723
        %5038 = vmatprep.subr.mxu0 0.0
        %5039 = vmatpush1.msra.mxu0 %v4718
        %5040 = vmatprep.subr.mxu0 0.0
        %5041 = vmatpush1.msra.mxu0 %v4713
        %5042 = vmatprep.subr.mxu0 0.0
        %5043 = vmatpush1.msra.mxu0 %v4708
        %5044 = vmatprep.subr.mxu0 0.0
        %5045 = vmatpush1.msra.mxu0 %v4703
        %5046 = vmatprep.subr.mxu0 0.0
        %5047 = vmatpush2.msra.mxu0 0.0
        %5048 = vmatprep.subr.mxu0 0.0
        %5049 = vmatpush2.msra.mxu0 0.0
        %5050 = vmatprep.subr.mxu0 0.0
        %5051 = vmatpush2.msra.mxu0 0.0
        %5052 = vmatprep.subr.mxu0 0.0
        %5053 = vmatpush2.msra.mxu0 0.0
        %5054 = vmatprep.subr.mxu0 0.0
        %5055 = vmatpush2.msra.mxu0 0.0
        %5056 = vmatprep.subr.mxu0 0.0
        %5057 = vmatpush2.msra.mxu0 0.0
        %5058 = vmatprep.subr.mxu0 0.0
        %5059 = vmatpush2.msra.mxu0 0.0
        %5060 = vmatprep.subr.mxu0 0.0
        %5061 = vmatpush2.msra.mxu0 0.0
        %5062 = vmatprep.subr.mxu0 0.0
        %5063 = vmatpush2.msra.mxu0 0.0
        %5064 = vmatprep.subr.mxu0 0.0
        %5065 = vmatpush2.msra.mxu0 0.0
        %5066 = vmatprep.subr.mxu0 0.0
        %5067 = vmatpush2.msra.mxu0 0.0
        %5068 = vmatprep.subr.mxu0 0.0
        %5069 = vmatpush2.msra.mxu0 0.0
        %5070 = vmatprep.subr.mxu0 0.0
        %5071 = vmatpush2.msra.mxu0 0.0
        %5072 = vmatprep.subr.mxu0 0.0
        %5073 = vmatpush2.msra.mxu0 0.0
        %5074 = vmatprep.subr.mxu0 0.0
        %5075 = vmatpush2.msra.mxu0 0.0
        %5076 = vmatprep.subr.mxu0 0.0
        %5077 = vmatpush2.msra.mxu0 0.0
        %5078 = vmatprep.mubr.f32.mxu0 0.0
        %5079 = vmatmul.mubr.f32.gmra.mxu0 %v4991
        %v5080 = vpop.f32.mrf.mxu0
        %v5081 = vadd.f32 0.0, %v5080
        %v5082 = vpop.f32.mrf.mxu0
        %5083 = vmatprep.mubr.f32.mxu0 0.0
        %5084 = vmatmul.mubr.f32.gmra.mxu0 %v4994
        %v5085 = vpop.f32.mrf.mxu0
        %v5086 = vadd.f32 0.0, %v5085
        %v5087 = vpop.f32.mrf.mxu0
        %5088 = vmatprep.mubr.f32.mxu0 0.0
        %5089 = vmatmul.mubr.f32.gmra.mxu0 %v4997
        %v5090 = vpop.f32.mrf.mxu0
        %v5091 = vadd.f32 0.0, %v5090
        %v5092 = vpop.f32.mrf.mxu0
        %5093 = vmatprep.mubr.f32.mxu0 0.0
        %5094 = vmatmul.mubr.f32.gmra.mxu0 %v5000
        %v5095 = vpop.f32.mrf.mxu0
        %v5096 = vadd.f32 0.0, %v5095
        %v5097 = vpop.f32.mrf.mxu0
        %5098 = vmatprep.mubr.f32.mxu0 0.0
        %5099 = vmatmul.mubr.f32.gmra.mxu0 %v5003
        %v5100 = vpop.f32.mrf.mxu0
        %v5101 = vadd.f32 0.0, %v5100
        %v5102 = vpop.f32.mrf.mxu0
        %5103 = vmatprep.mubr.f32.mxu0 0.0
        %5104 = vmatmul.mubr.f32.gmra.mxu0 %v5006
        %v5105 = vpop.f32.mrf.mxu0
        %v5106 = vadd.f32 0.0, %v5105
        %v5107 = vpop.f32.mrf.mxu0
        %5108 = vmatprep.mubr.f32.mxu0 0.0
        %5109 = vmatmul.mubr.f32.gmra.mxu0 %v5009
        %v5110 = vpop.f32.mrf.mxu0
        %v5111 = vadd.f32 0.0, %v5110
        %v5112 = vpop.f32.mrf.mxu0
        %5113 = vmatprep.mubr.f32.mxu0 0.0
        %5114 = vmatmul.mubr.f32.gmra.mxu0 %v5012
        %v5115 = vpop.f32.mrf.mxu0
        %v5116 = vadd.f32 0.0, %v5115
        %v5117 = vpop.f32.mrf.mxu0
        %5118 = vdwg.mxu0
        %s5119 = scalar_lea.vmem %s6, 32
        %v5120 = vld [vmem:[%s5119] sm:$0xff]
        %s5121 = scalar_lea.vmem %s4, 32
        %v5122 = vld [vmem:[%s5121] sm:$0xff]
        %v5123 = vld [vmem:[%s5121 + $0x8] sm:$0xff]
        %v5124 = vld [vmem:[%s5121 + $0x10] sm:$0xff]
        %v5125 = vld [vmem:[%s5121 + $0x18] sm:$0xff]
        %s5126 = scalar_lea.vmem %s5, 1
        %v5127 = vld [vmem:[%s5126] sm:$0x1]
        %v5129 = vlaneseq
        %v5130 = vshrl.u32 %v5129, 7
        %v5131 = vsub.s32 0, %v5130
        %v5132 = vrot.slane %v5127, %v5131
        %5134 = vmatprep.subr.mxu0 0.0
        %5135 = vmatpush1.msra.mxu0 0.0
        %5136 = vmatprep.subr.mxu0 0.0
        %5137 = vmatpush1.msra.mxu0 0.0
        %5138 = vmatprep.subr.mxu0 0.0
        %5139 = vmatpush1.msra.mxu0 0.0
        %5140 = vmatprep.subr.mxu0 0.0
        %5141 = vmatpush1.msra.mxu0 0.0
        %5142 = vmatprep.subr.mxu0 0.0
        %5143 = vmatpush1.msra.mxu0 0.0
        %5144 = vmatprep.subr.mxu0 0.0
        %5145 = vmatpush1.msra.mxu0 0.0
        %5146 = vmatprep.subr.mxu0 0.0
        %5147 = vmatpush1.msra.mxu0 0.0
        %5148 = vmatprep.subr.mxu0 0.0
        %5149 = vmatpush1.msra.mxu0 0.0
        %5150 = vmatprep.subr.mxu0 0.0
        %5151 = vmatpush1.msra.mxu0 0.0
        %5152 = vmatprep.subr.mxu0 0.0
        %5153 = vmatpush1.msra.mxu0 0.0
        %5154 = vmatprep.subr.mxu0 0.0
        %5155 = vmatpush1.msra.mxu0 0.0
        %5156 = vmatprep.subr.mxu0 0.0
        %5157 = vmatpush1.msra.mxu0 0.0
        %5158 = vmatprep.subr.mxu0 0.0
        %5159 = vmatpush1.msra.mxu0 %v5125
        %5160 = vmatprep.subr.mxu0 0.0
        %5161 = vmatpush1.msra.mxu0 %v5124
        %5162 = vmatprep.subr.mxu0 0.0
        %5163 = vmatpush1.msra.mxu0 %v5123
        %5164 = vmatprep.subr.mxu0 0.0
        %5165 = vmatpush1.msra.mxu0 %v5122
        %5166 = vmatprep.subr.mxu0 0.0
        %5167 = vmatpush2.msra.mxu0 0.0
        %5168 = vmatprep.subr.mxu0 0.0
        %5169 = vmatpush2.msra.mxu0 0.0
        %5170 = vmatprep.subr.mxu0 0.0
        %5171 = vmatpush2.msra.mxu0 0.0
        %5172 = vmatprep.subr.mxu0 0.0
        %5173 = vmatpush2.msra.mxu0 0.0
        %5174 = vmatprep.subr.mxu0 0.0
        %5175 = vmatpush2.msra.mxu0 0.0
        %5176 = vmatprep.subr.mxu0 0.0
        %5177 = vmatpush2.msra.mxu0 0.0
        %5178 = vmatprep.subr.mxu0 0.0
        %5179 = vmatpush2.msra.mxu0 0.0
        %5180 = vmatprep.subr.mxu0 0.0
        %5181 = vmatpush2.msra.mxu0 0.0
        %5182 = vmatprep.subr.mxu0 0.0
        %5183 = vmatpush2.msra.mxu0 0.0
        %5184 = vmatprep.subr.mxu0 0.0
        %5185 = vmatpush2.msra.mxu0 0.0
        %5186 = vmatprep.subr.mxu0 0.0
        %5187 = vmatpush2.msra.mxu0 0.0
        %5188 = vmatprep.subr.mxu0 0.0
        %5189 = vmatpush2.msra.mxu0 0.0
        %5190 = vmatprep.subr.mxu0 0.0
        %5191 = vmatpush2.msra.mxu0 0.0
        %5192 = vmatprep.subr.mxu0 0.0
        %5193 = vmatpush2.msra.mxu0 0.0
        %5194 = vmatprep.subr.mxu0 0.0
        %5195 = vmatpush2.msra.mxu0 0.0
        %5196 = vmatprep.subr.mxu0 0.0
        %5197 = vmatpush2.msra.mxu0 0.0
        %5198 = vmatprep.mubr.f32.mxu0 0.0
        %5199 = vmatmul.mubr.f32.gmra.mxu0 %v1013
        %v5200 = vpop.f32.mrf.mxu0
        %v5201 = vadd.f32 %v5132, %v5200
        %v5202 = vpop.f32.mrf.mxu0
        %5203 = vmatprep.mubr.f32.mxu0 0.0
        %5204 = vmatmul.mubr.f32.gmra.mxu0 %v1016
        %v5205 = vpop.f32.mrf.mxu0
        %v5206 = vadd.f32 %v5132, %v5205
        %v5207 = vpop.f32.mrf.mxu0
        %5208 = vmatprep.mubr.f32.mxu0 0.0
        %5209 = vmatmul.mubr.f32.gmra.mxu0 %v1019
        %v5210 = vpop.f32.mrf.mxu0
        %v5211 = vadd.f32 %v5132, %v5210
        %v5212 = vpop.f32.mrf.mxu0
        %5213 = vmatprep.mubr.f32.mxu0 0.0
        %5214 = vmatmul.mubr.f32.gmra.mxu0 %v1022
        %v5215 = vpop.f32.mrf.mxu0
        %v5216 = vadd.f32 %v5132, %v5215
        %v5217 = vpop.f32.mrf.mxu0
        %5218 = vmatprep.mubr.f32.mxu0 0.0
        %5219 = vmatmul.mubr.f32.gmra.mxu0 %v1025
        %v5220 = vpop.f32.mrf.mxu0
        %v5221 = vadd.f32 %v5132, %v5220
        %v5222 = vpop.f32.mrf.mxu0
        %5223 = vmatprep.mubr.f32.mxu0 0.0
        %5224 = vmatmul.mubr.f32.gmra.mxu0 %v1028
        %v5225 = vpop.f32.mrf.mxu0
        %v5226 = vadd.f32 %v5132, %v5225
        %v5227 = vpop.f32.mrf.mxu0
        %5228 = vmatprep.mubr.f32.mxu0 0.0
        %5229 = vmatmul.mubr.f32.gmra.mxu0 %v1031
        %v5230 = vpop.f32.mrf.mxu0
        %v5231 = vadd.f32 %v5132, %v5230
        %v5232 = vpop.f32.mrf.mxu0
        %5233 = vmatprep.mubr.f32.mxu0 0.0
        %5234 = vmatmul.mubr.f32.gmra.mxu0 %v1034
        %v5235 = vpop.f32.mrf.mxu0
        %v5236 = vadd.f32 %v5132, %v5235
        %v5237 = vpop.f32.mrf.mxu0
        %5238 = vdwg.mxu0
        %s5239 = scalar_lea.vmem %s4, 544
        %v5240 = vld [vmem:[%s5239] sm:$0xff]
        %v5241 = vld [vmem:[%s5239 + $0x8] sm:$0xff]
        %v5242 = vld [vmem:[%s5239 + $0x10] sm:$0xff]
        %v5243 = vld [vmem:[%s5239 + $0x18] sm:$0xff]
        %s5244 = scalar_lea.vmem %s5, 17
        %v5245 = vld [vmem:[%s5244] sm:$0x1]
        %v5247 = vlaneseq
        %v5248 = vshrl.u32 %v5247, 7
        %v5249 = vsub.s32 0, %v5248
        %v5250 = vrot.slane %v5245, %v5249
        %5252 = vmatprep.subr.mxu0 0.0
        %5253 = vmatpush1.msra.mxu0 0.0
        %5254 = vmatprep.subr.mxu0 0.0
        %5255 = vmatpush1.msra.mxu0 0.0
        %5256 = vmatprep.subr.mxu0 0.0
        %5257 = vmatpush1.msra.mxu0 0.0
        %5258 = vmatprep.subr.mxu0 0.0
        %5259 = vmatpush1.msra.mxu0 0.0
        %5260 = vmatprep.subr.mxu0 0.0
        %5261 = vmatpush1.msra.mxu0 0.0
        %5262 = vmatprep.subr.mxu0 0.0
        %5263 = vmatpush1.msra.mxu0 0.0
        %5264 = vmatprep.subr.mxu0 0.0
        %5265 = vmatpush1.msra.mxu0 0.0
        %5266 = vmatprep.subr.mxu0 0.0
        %5267 = vmatpush1.msra.mxu0 0.0
        %5268 = vmatprep.subr.mxu0 0.0
        %5269 = vmatpush1.msra.mxu0 0.0
        %5270 = vmatprep.subr.mxu0 0.0
        %5271 = vmatpush1.msra.mxu0 0.0
        %5272 = vmatprep.subr.mxu0 0.0
        %5273 = vmatpush1.msra.mxu0 0.0
        %5274 = vmatprep.subr.mxu0 0.0
        %5275 = vmatpush1.msra.mxu0 0.0
        %5276 = vmatprep.subr.mxu0 0.0
        %5277 = vmatpush1.msra.mxu0 %v5243
        %5278 = vmatprep.subr.mxu0 0.0
        %5279 = vmatpush1.msra.mxu0 %v5242
        %5280 = vmatprep.subr.mxu0 0.0
        %5281 = vmatpush1.msra.mxu0 %v5241
        %5282 = vmatprep.subr.mxu0 0.0
        %5283 = vmatpush1.msra.mxu0 %v5240
        %5284 = vmatprep.subr.mxu0 0.0
        %5285 = vmatpush2.msra.mxu0 0.0
        %5286 = vmatprep.subr.mxu0 0.0
        %5287 = vmatpush2.msra.mxu0 0.0
        %5288 = vmatprep.subr.mxu0 0.0
        %5289 = vmatpush2.msra.mxu0 0.0
        %5290 = vmatprep.subr.mxu0 0.0
        %5291 = vmatpush2.msra.mxu0 0.0
        %5292 = vmatprep.subr.mxu0 0.0
        %5293 = vmatpush2.msra.mxu0 0.0
        %5294 = vmatprep.subr.mxu0 0.0
        %5295 = vmatpush2.msra.mxu0 0.0
        %5296 = vmatprep.subr.mxu0 0.0
        %5297 = vmatpush2.msra.mxu0 0.0
        %5298 = vmatprep.subr.mxu0 0.0
        %5299 = vmatpush2.msra.mxu0 0.0
        %5300 = vmatprep.subr.mxu0 0.0
        %5301 = vmatpush2.msra.mxu0 0.0
        %5302 = vmatprep.subr.mxu0 0.0
        %5303 = vmatpush2.msra.mxu0 0.0
        %5304 = vmatprep.subr.mxu0 0.0
        %5305 = vmatpush2.msra.mxu0 0.0
        %5306 = vmatprep.subr.mxu0 0.0
        %5307 = vmatpush2.msra.mxu0 0.0
        %5308 = vmatprep.subr.mxu0 0.0
        %5309 = vmatpush2.msra.mxu0 0.0
        %5310 = vmatprep.subr.mxu0 0.0
        %5311 = vmatpush2.msra.mxu0 0.0
        %5312 = vmatprep.subr.mxu0 0.0
        %5313 = vmatpush2.msra.mxu0 0.0
        %5314 = vmatprep.subr.mxu0 0.0
        %5315 = vmatpush2.msra.mxu0 0.0
        %5316 = vmatprep.mubr.f32.mxu0 0.0
        %5317 = vmatmul.mubr.f32.gmra.mxu0 %v871
        %v5318 = vpop.f32.mrf.mxu0
        %v5319 = vadd.f32 %v5250, %v5318
        %v5320 = vpop.f32.mrf.mxu0
        %5321 = vmatprep.mubr.f32.mxu0 0.0
        %5322 = vmatmul.mubr.f32.gmra.mxu0 %v874
        %v5323 = vpop.f32.mrf.mxu0
        %v5324 = vadd.f32 %v5250, %v5323
        %v5325 = vpop.f32.mrf.mxu0
        %5326 = vmatprep.mubr.f32.mxu0 0.0
        %5327 = vmatmul.mubr.f32.gmra.mxu0 %v877
        %v5328 = vpop.f32.mrf.mxu0
        %v5329 = vadd.f32 %v5250, %v5328
        %v5330 = vpop.f32.mrf.mxu0
        %5331 = vmatprep.mubr.f32.mxu0 0.0
        %5332 = vmatmul.mubr.f32.gmra.mxu0 %v880
        %v5333 = vpop.f32.mrf.mxu0
        %v5334 = vadd.f32 %v5250, %v5333
        %v5335 = vpop.f32.mrf.mxu0
        %5336 = vmatprep.mubr.f32.mxu0 0.0
        %5337 = vmatmul.mubr.f32.gmra.mxu0 %v883
        %v5338 = vpop.f32.mrf.mxu0
        %v5339 = vadd.f32 %v5250, %v5338
        %v5340 = vpop.f32.mrf.mxu0
        %5341 = vmatprep.mubr.f32.mxu0 0.0
        %5342 = vmatmul.mubr.f32.gmra.mxu0 %v886
        %v5343 = vpop.f32.mrf.mxu0
        %v5344 = vadd.f32 %v5250, %v5343
        %v5345 = vpop.f32.mrf.mxu0
        %5346 = vmatprep.mubr.f32.mxu0 0.0
        %5347 = vmatmul.mubr.f32.gmra.mxu0 %v889
        %v5348 = vpop.f32.mrf.mxu0
        %v5349 = vadd.f32 %v5250, %v5348
        %v5350 = vpop.f32.mrf.mxu0
        %5351 = vmatprep.mubr.f32.mxu0 0.0
        %5352 = vmatmul.mubr.f32.gmra.mxu0 %v892
        %v5353 = vpop.f32.mrf.mxu0
        %v5354 = vadd.f32 %v5250, %v5353
        %v5355 = vpop.f32.mrf.mxu0
        %5356 = vdwg.mxu0
        %s5357 = scalar_lea.vmem %s4, 672
        %v5358 = vld [vmem:[%s5357] sm:$0xff]
        %v5359 = vld [vmem:[%s5357 + $0x8] sm:$0xff]
        %v5360 = vld [vmem:[%s5357 + $0x10] sm:$0xff]
        %v5361 = vld [vmem:[%s5357 + $0x18] sm:$0xff]
        %s5362 = scalar_lea.vmem %s5, 21
        %v5363 = vld [vmem:[%s5362] sm:$0x1]
        %v5365 = vlaneseq
        %v5366 = vshrl.u32 %v5365, 7
        %v5367 = vsub.s32 0, %v5366
        %v5368 = vrot.slane %v5363, %v5367
        %5370 = vmatprep.subr.mxu0 0.0
        %5371 = vmatpush1.msra.mxu0 0.0
        %5372 = vmatprep.subr.mxu0 0.0
        %5373 = vmatpush1.msra.mxu0 0.0
        %5374 = vmatprep.subr.mxu0 0.0
        %5375 = vmatpush1.msra.mxu0 0.0
        %5376 = vmatprep.subr.mxu0 0.0
        %5377 = vmatpush1.msra.mxu0 0.0
        %5378 = vmatprep.subr.mxu0 0.0
        %5379 = vmatpush1.msra.mxu0 0.0
        %5380 = vmatprep.subr.mxu0 0.0
        %5381 = vmatpush1.msra.mxu0 0.0
        %5382 = vmatprep.subr.mxu0 0.0
        %5383 = vmatpush1.msra.mxu0 0.0
        %5384 = vmatprep.subr.mxu0 0.0
        %5385 = vmatpush1.msra.mxu0 0.0
        %5386 = vmatprep.subr.mxu0 0.0
        %5387 = vmatpush1.msra.mxu0 0.0
        %5388 = vmatprep.subr.mxu0 0.0
        %5389 = vmatpush1.msra.mxu0 0.0
        %5390 = vmatprep.subr.mxu0 0.0
        %5391 = vmatpush1.msra.mxu0 0.0
        %5392 = vmatprep.subr.mxu0 0.0
        %5393 = vmatpush1.msra.mxu0 0.0
        %5394 = vmatprep.subr.mxu0 0.0
        %5395 = vmatpush1.msra.mxu0 %v5361
        %5396 = vmatprep.subr.mxu0 0.0
        %5397 = vmatpush1.msra.mxu0 %v5360
        %5398 = vmatprep.subr.mxu0 0.0
        %5399 = vmatpush1.msra.mxu0 %v5359
        %5400 = vmatprep.subr.mxu0 0.0
        %5401 = vmatpush1.msra.mxu0 %v5358
        %5402 = vmatprep.subr.mxu0 0.0
        %5403 = vmatpush2.msra.mxu0 0.0
        %5404 = vmatprep.subr.mxu0 0.0
        %5405 = vmatpush2.msra.mxu0 0.0
        %5406 = vmatprep.subr.mxu0 0.0
        %5407 = vmatpush2.msra.mxu0 0.0
        %5408 = vmatprep.subr.mxu0 0.0
        %5409 = vmatpush2.msra.mxu0 0.0
        %5410 = vmatprep.subr.mxu0 0.0
        %5411 = vmatpush2.msra.mxu0 0.0
        %5412 = vmatprep.subr.mxu0 0.0
        %5413 = vmatpush2.msra.mxu0 0.0
        %5414 = vmatprep.subr.mxu0 0.0
        %5415 = vmatpush2.msra.mxu0 0.0
        %5416 = vmatprep.subr.mxu0 0.0
        %5417 = vmatpush2.msra.mxu0 0.0
        %5418 = vmatprep.subr.mxu0 0.0
        %5419 = vmatpush2.msra.mxu0 0.0
        %5420 = vmatprep.subr.mxu0 0.0
        %5421 = vmatpush2.msra.mxu0 0.0
        %5422 = vmatprep.subr.mxu0 0.0
        %5423 = vmatpush2.msra.mxu0 0.0
        %5424 = vmatprep.subr.mxu0 0.0
        %5425 = vmatpush2.msra.mxu0 0.0
        %5426 = vmatprep.subr.mxu0 0.0
        %5427 = vmatpush2.msra.mxu0 0.0
        %5428 = vmatprep.subr.mxu0 0.0
        %5429 = vmatpush2.msra.mxu0 0.0
        %5430 = vmatprep.subr.mxu0 0.0
        %5431 = vmatpush2.msra.mxu0 0.0
        %5432 = vmatprep.subr.mxu0 0.0
        %5433 = vmatpush2.msra.mxu0 0.0
        %5434 = vmatprep.mubr.f32.mxu0 0.0
        %5435 = vmatmul.mubr.f32.gmra.mxu0 %v871
        %v5436 = vpop.f32.mrf.mxu0
        %v5437 = vadd.f32 %v5368, %v5436
        %v5438 = vpop.f32.mrf.mxu0
        %5439 = vmatprep.mubr.f32.mxu0 0.0
        %5440 = vmatmul.mubr.f32.gmra.mxu0 %v874
        %v5441 = vpop.f32.mrf.mxu0
        %v5442 = vadd.f32 %v5368, %v5441
        %v5443 = vpop.f32.mrf.mxu0
        %5444 = vmatprep.mubr.f32.mxu0 0.0
        %5445 = vmatmul.mubr.f32.gmra.mxu0 %v877
        %v5446 = vpop.f32.mrf.mxu0
        %v5447 = vadd.f32 %v5368, %v5446
        %v5448 = vpop.f32.mrf.mxu0
        %5449 = vmatprep.mubr.f32.mxu0 0.0
        %5450 = vmatmul.mubr.f32.gmra.mxu0 %v880
        %v5451 = vpop.f32.mrf.mxu0
        %v5452 = vadd.f32 %v5368, %v5451
        %v5453 = vpop.f32.mrf.mxu0
        %5454 = vmatprep.mubr.f32.mxu0 0.0
        %5455 = vmatmul.mubr.f32.gmra.mxu0 %v883
        %v5456 = vpop.f32.mrf.mxu0
        %v5457 = vadd.f32 %v5368, %v5456
        %v5458 = vpop.f32.mrf.mxu0
        %5459 = vmatprep.mubr.f32.mxu0 0.0
        %5460 = vmatmul.mubr.f32.gmra.mxu0 %v886
        %v5461 = vpop.f32.mrf.mxu0
        %v5462 = vadd.f32 %v5368, %v5461
        %v5463 = vpop.f32.mrf.mxu0
        %5464 = vmatprep.mubr.f32.mxu0 0.0
        %5465 = vmatmul.mubr.f32.gmra.mxu0 %v889
        %v5466 = vpop.f32.mrf.mxu0
        %v5467 = vadd.f32 %v5368, %v5466
        %v5468 = vpop.f32.mrf.mxu0
        %5469 = vmatprep.mubr.f32.mxu0 0.0
        %5470 = vmatmul.mubr.f32.gmra.mxu0 %v892
        %v5471 = vpop.f32.mrf.mxu0
        %v5472 = vadd.f32 %v5368, %v5471
        %v5473 = vpop.f32.mrf.mxu0
        %5474 = vdwg.mxu0
        %v5476 = vsel %vm1259, %v5201, 0
        %v5479 = vsel %vm1259, %v5206, 0
        %v5482 = vsel %vm1259, %v5211, 0
        %v5485 = vsel %vm1259, %v5216, 0
        %v5488 = vsel %vm1259, %v5221, 0
        %v5491 = vsel %vm1259, %v5226, 0
        %v5494 = vsel %vm1259, %v5231, 0
        %v5497 = vsel %vm1259, %v5236, 0
        %v5500 = vsel %vm1259, %v5319, 0
        %v5503 = vsel %vm1259, %v5324, 0
        %v5506 = vsel %vm1259, %v5329, 0
        %v5509 = vsel %vm1259, %v5334, 0
        %v5512 = vsel %vm1259, %v5339, 0
        %v5515 = vsel %vm1259, %v5344, 0
        %v5518 = vsel %vm1259, %v5349, 0
        %v5521 = vsel %vm1259, %v5354, 0
        %5523 = vmatprep.subr.mxu0 0.0
        %5524 = vmatpush1.xpose.msra.mxu0 0.0
        %5525 = vmatprep.subr.mxu0 0.0
        %5526 = vmatpush1.xpose.msra.mxu0 0.0
        %5527 = vmatprep.subr.mxu0 0.0
        %5528 = vmatpush1.xpose.msra.mxu0 0.0
        %5529 = vmatprep.subr.mxu0 0.0
        %5530 = vmatpush1.xpose.msra.mxu0 0.0
        %5531 = vmatprep.subr.mxu0 0.0
        %5532 = vmatpush1.xpose.msra.mxu0 0.0
        %5533 = vmatprep.subr.mxu0 0.0
        %5534 = vmatpush1.xpose.msra.mxu0 0.0
        %5535 = vmatprep.subr.mxu0 0.0
        %5536 = vmatpush1.xpose.msra.mxu0 0.0
        %5537 = vmatprep.subr.mxu0 0.0
        %5538 = vmatpush1.xpose.msra.mxu0 0.0
        %5539 = vmatprep.subr.mxu0 0.0
        %5540 = vmatpush1.xpose.msra.mxu0 %v5521
        %5541 = vmatprep.subr.mxu0 0.0
        %5542 = vmatpush1.xpose.msra.mxu0 %v5518
        %5543 = vmatprep.subr.mxu0 0.0
        %5544 = vmatpush1.xpose.msra.mxu0 %v5515
        %5545 = vmatprep.subr.mxu0 0.0
        %5546 = vmatpush1.xpose.msra.mxu0 %v5512
        %5547 = vmatprep.subr.mxu0 0.0
        %5548 = vmatpush1.xpose.msra.mxu0 %v5509
        %5549 = vmatprep.subr.mxu0 0.0
        %5550 = vmatpush1.xpose.msra.mxu0 %v5506
        %5551 = vmatprep.subr.mxu0 0.0
        %5552 = vmatpush1.xpose.msra.mxu0 %v5503
        %5553 = vmatprep.subr.mxu0 0.0
        %5554 = vmatpush1.xpose.msra.mxu0 %v5500
        %5555 = vmatprep.subr.mxu0 0.0
        %5556 = vmatpush2.xpose.msra.mxu0 0.0
        %5557 = vmatprep.subr.mxu0 0.0
        %5558 = vmatpush2.xpose.msra.mxu0 0.0
        %5559 = vmatprep.subr.mxu0 0.0
        %5560 = vmatpush2.xpose.msra.mxu0 0.0
        %5561 = vmatprep.subr.mxu0 0.0
        %5562 = vmatpush2.xpose.msra.mxu0 0.0
        %5563 = vmatprep.subr.mxu0 0.0
        %5564 = vmatpush2.xpose.msra.mxu0 0.0
        %5565 = vmatprep.subr.mxu0 0.0
        %5566 = vmatpush2.xpose.msra.mxu0 0.0
        %5567 = vmatprep.subr.mxu0 0.0
        %5568 = vmatpush2.xpose.msra.mxu0 0.0
        %5569 = vmatprep.subr.mxu0 0.0
        %5570 = vmatpush2.xpose.msra.mxu0 0.0
        %5571 = vmatprep.subr.mxu0 0.0
        %5572 = vmatpush2.xpose.msra.mxu0 0.0
        %5573 = vmatprep.subr.mxu0 0.0
        %5574 = vmatpush2.xpose.msra.mxu0 0.0
        %5575 = vmatprep.subr.mxu0 0.0
        %5576 = vmatpush2.xpose.msra.mxu0 0.0
        %5577 = vmatprep.subr.mxu0 0.0
        %5578 = vmatpush2.xpose.msra.mxu0 0.0
        %5579 = vmatprep.subr.mxu0 0.0
        %5580 = vmatpush2.xpose.msra.mxu0 0.0
        %5581 = vmatprep.subr.mxu0 0.0
        %5582 = vmatpush2.xpose.msra.mxu0 0.0
        %5583 = vmatprep.subr.mxu0 0.0
        %5584 = vmatpush2.xpose.msra.mxu0 0.0
        %5585 = vmatprep.subr.mxu0 0.0
        %5586 = vmatpush2.xpose.msra.mxu0 0.0
        %5587 = vmatprep.mubr.f32.mxu0 0.0
        %5588 = vmatmul.mubr.f32.gmra.mxu0 %v5476
        %v5589 = vpop.f32.mrf.mxu0
        %v5590 = vadd.f32 0.0, %v5589
        %v5591 = vpop.f32.mrf.mxu0
        %5592 = vmatprep.mubr.f32.mxu0 0.0
        %5593 = vmatmul.mubr.f32.gmra.mxu0 %v5479
        %v5594 = vpop.f32.mrf.mxu0
        %v5595 = vadd.f32 0.0, %v5594
        %v5596 = vpop.f32.mrf.mxu0
        %5597 = vmatprep.mubr.f32.mxu0 0.0
        %5598 = vmatmul.mubr.f32.gmra.mxu0 %v5482
        %v5599 = vpop.f32.mrf.mxu0
        %v5600 = vadd.f32 0.0, %v5599
        %v5601 = vpop.f32.mrf.mxu0
        %5602 = vmatprep.mubr.f32.mxu0 0.0
        %5603 = vmatmul.mubr.f32.gmra.mxu0 %v5485
        %v5604 = vpop.f32.mrf.mxu0
        %v5605 = vadd.f32 0.0, %v5604
        %v5606 = vpop.f32.mrf.mxu0
        %5607 = vmatprep.mubr.f32.mxu0 0.0
        %5608 = vmatmul.mubr.f32.gmra.mxu0 %v5488
        %v5609 = vpop.f32.mrf.mxu0
        %v5610 = vadd.f32 0.0, %v5609
        %v5611 = vpop.f32.mrf.mxu0
        %5612 = vmatprep.mubr.f32.mxu0 0.0
        %5613 = vmatmul.mubr.f32.gmra.mxu0 %v5491
        %v5614 = vpop.f32.mrf.mxu0
        %v5615 = vadd.f32 0.0, %v5614
        %v5616 = vpop.f32.mrf.mxu0
        %5617 = vmatprep.mubr.f32.mxu0 0.0
        %5618 = vmatmul.mubr.f32.gmra.mxu0 %v5494
        %v5619 = vpop.f32.mrf.mxu0
        %v5620 = vadd.f32 0.0, %v5619
        %v5621 = vpop.f32.mrf.mxu0
        %5622 = vmatprep.mubr.f32.mxu0 0.0
        %5623 = vmatmul.mubr.f32.gmra.mxu0 %v5497
        %v5624 = vpop.f32.mrf.mxu0
        %v5625 = vadd.f32 0.0, %v5624
        %v5626 = vpop.f32.mrf.mxu0
        %5627 = vdwg.mxu0
        %v5628 = vmul.f32 %v5590, 0.35355338
        %v5629 = vmul.f32 %v5595, 0.35355338
        %v5630 = vmul.f32 %v5600, 0.35355338
        %v5631 = vmul.f32 %v5605, 0.35355338
        %v5632 = vmul.f32 %v5610, 0.35355338
        %v5633 = vmul.f32 %v5615, 0.35355338
        %v5634 = vmul.f32 %v5620, 0.35355338
        %v5635 = vmul.f32 %v5625, 0.35355338
        %v5636 = vsel %vm1421, %v5628, -inf
        %5637 = vmax.xlane.f32.xlu0 %v5636
        %v5638 = vpop.xlane.xlu0 %5637
        %v5639 = vsel %vm1421, %v5629, -inf
        %5640 = vmax.xlane.f32.xlu0 %v5639
        %v5641 = vpop.xlane.xlu0 %5640
        %v5642 = vsel %vm1421, %v5630, -inf
        %5643 = vmax.xlane.f32.xlu0 %v5642
        %v5644 = vpop.xlane.xlu0 %5643
        %v5645 = vsel %vm1421, %v5631, -inf
        %5646 = vmax.xlane.f32.xlu0 %v5645
        %v5647 = vpop.xlane.xlu0 %5646
        %v5648 = vsel %vm1421, %v5632, -inf
        %5649 = vmax.xlane.f32.xlu0 %v5648
        %v5650 = vpop.xlane.xlu0 %5649
        %v5651 = vsel %vm1421, %v5633, -inf
        %5652 = vmax.xlane.f32.xlu0 %v5651
        %v5653 = vpop.xlane.xlu0 %5652
        %v5654 = vsel %vm1421, %v5634, -inf
        %5655 = vmax.xlane.f32.xlu0 %v5654
        %v5656 = vpop.xlane.xlu0 %5655
        %v5657 = vsel %vm1421, %v5635, -inf
        %5658 = vmax.xlane.f32.xlu0 %v5657
        %v5659 = vpop.xlane.xlu0 %5658
        %v5660 = vsub.f32 %v5628, %v5638
        %v5661 = vsub.f32 %v5629, %v5641
        %v5662 = vsub.f32 %v5630, %v5644
        %v5663 = vsub.f32 %v5631, %v5647
        %v5664 = vsub.f32 %v5632, %v5650
        %v5665 = vsub.f32 %v5633, %v5653
        %v5666 = vsub.f32 %v5634, %v5656
        %v5667 = vsub.f32 %v5635, %v5659
        %v5668 = vmul.f32 %v5660, 1.442695
        %v5669 = vpow.pop %v5668
        %v5670 = vmul.f32 %v5661, 1.442695
        %v5671 = vpow.pop %v5670
        %v5672 = vmul.f32 %v5662, 1.442695
        %v5673 = vpow.pop %v5672
        %v5674 = vmul.f32 %v5663, 1.442695
        %v5675 = vpow.pop %v5674
        %v5676 = vmul.f32 %v5664, 1.442695
        %v5677 = vpow.pop %v5676
        %v5678 = vmul.f32 %v5665, 1.442695
        %v5679 = vpow.pop %v5678
        %v5680 = vmul.f32 %v5666, 1.442695
        %v5681 = vpow.pop %v5680
        %v5682 = vmul.f32 %v5667, 1.442695
        %v5683 = vpow.pop %v5682
        %v5684 = vsel %vm1421, %v5669, 0.0
        %5685 = vadd.xlane.f32.xlu0 %v5684
        %v5686 = vpop.xlane.xlu0 %5685
        %v5687 = vsel %vm1421, %v5671, 0.0
        %5688 = vadd.xlane.f32.xlu0 %v5687
        %v5689 = vpop.xlane.xlu0 %5688
        %v5690 = vsel %vm1421, %v5673, 0.0
        %5691 = vadd.xlane.f32.xlu0 %v5690
        %v5692 = vpop.xlane.xlu0 %5691
        %v5693 = vsel %vm1421, %v5675, 0.0
        %5694 = vadd.xlane.f32.xlu0 %v5693
        %v5695 = vpop.xlane.xlu0 %5694
        %v5696 = vsel %vm1421, %v5677, 0.0
        %5697 = vadd.xlane.f32.xlu0 %v5696
        %v5698 = vpop.xlane.xlu0 %5697
        %v5699 = vsel %vm1421, %v5679, 0.0
        %5700 = vadd.xlane.f32.xlu0 %v5699
        %v5701 = vpop.xlane.xlu0 %5700
        %v5702 = vsel %vm1421, %v5681, 0.0
        %5703 = vadd.xlane.f32.xlu0 %v5702
        %v5704 = vpop.xlane.xlu0 %5703
        %v5705 = vsel %vm1421, %v5683, 0.0
        %5706 = vadd.xlane.f32.xlu0 %v5705
        %v5707 = vpop.xlane.xlu0 %5706
        %v5708 = vrcp.pop %v5686
        %v5709 = vrcp.pop %v5689
        %v5710 = vrcp.pop %v5692
        %v5711 = vrcp.pop %v5695
        %v5712 = vrcp.pop %v5698
        %v5713 = vrcp.pop %v5701
        %v5714 = vrcp.pop %v5704
        %v5715 = vrcp.pop %v5707
        %v5716 = vmul.f32 %v5669, %v5708
        %v5717 = vmul.f32 %v5671, %v5709
        %v5718 = vmul.f32 %v5673, %v5710
        %v5719 = vmul.f32 %v5675, %v5711
        %v5720 = vmul.f32 %v5677, %v5712
        %v5721 = vmul.f32 %v5679, %v5713
        %v5722 = vmul.f32 %v5681, %v5714
        %v5723 = vmul.f32 %v5683, %v5715
        %v5725 = vsel %vm1421, %v5716, 0
        %v5728 = vsel %vm1421, %v5717, 0
        %v5731 = vsel %vm1421, %v5718, 0
        %v5734 = vsel %vm1421, %v5719, 0
        %v5737 = vsel %vm1421, %v5720, 0
        %v5740 = vsel %vm1421, %v5721, 0
        %v5743 = vsel %vm1421, %v5722, 0
        %v5746 = vsel %vm1421, %v5723, 0
        %5748 = vmatprep.subr.mxu0 0.0
        %5749 = vmatpush1.msra.mxu0 0.0
        %5750 = vmatprep.subr.mxu0 0.0
        %5751 = vmatpush1.msra.mxu0 0.0
        %5752 = vmatprep.subr.mxu0 0.0
        %5753 = vmatpush1.msra.mxu0 0.0
        %5754 = vmatprep.subr.mxu0 0.0
        %5755 = vmatpush1.msra.mxu0 0.0
        %5756 = vmatprep.subr.mxu0 0.0
        %5757 = vmatpush1.msra.mxu0 0.0
        %5758 = vmatprep.subr.mxu0 0.0
        %5759 = vmatpush1.msra.mxu0 0.0
        %5760 = vmatprep.subr.mxu0 0.0
        %5761 = vmatpush1.msra.mxu0 0.0
        %5762 = vmatprep.subr.mxu0 0.0
        %5763 = vmatpush1.msra.mxu0 0.0
        %5764 = vmatprep.subr.mxu0 0.0
        %5765 = vmatpush1.msra.mxu0 %v5472
        %5766 = vmatprep.subr.mxu0 0.0
        %5767 = vmatpush1.msra.mxu0 %v5467
        %5768 = vmatprep.subr.mxu0 0.0
        %5769 = vmatpush1.msra.mxu0 %v5462
        %5770 = vmatprep.subr.mxu0 0.0
        %5771 = vmatpush1.msra.mxu0 %v5457
        %5772 = vmatprep.subr.mxu0 0.0
        %5773 = vmatpush1.msra.mxu0 %v5452
        %5774 = vmatprep.subr.mxu0 0.0
        %5775 = vmatpush1.msra.mxu0 %v5447
        %5776 = vmatprep.subr.mxu0 0.0
        %5777 = vmatpush1.msra.mxu0 %v5442
        %5778 = vmatprep.subr.mxu0 0.0
        %5779 = vmatpush1.msra.mxu0 %v5437
        %5780 = vmatprep.subr.mxu0 0.0
        %5781 = vmatpush2.msra.mxu0 0.0
        %5782 = vmatprep.subr.mxu0 0.0
        %5783 = vmatpush2.msra.mxu0 0.0
        %5784 = vmatprep.subr.mxu0 0.0
        %5785 = vmatpush2.msra.mxu0 0.0
        %5786 = vmatprep.subr.mxu0 0.0
        %5787 = vmatpush2.msra.mxu0 0.0
        %5788 = vmatprep.subr.mxu0 0.0
        %5789 = vmatpush2.msra.mxu0 0.0
        %5790 = vmatprep.subr.mxu0 0.0
        %5791 = vmatpush2.msra.mxu0 0.0
        %5792 = vmatprep.subr.mxu0 0.0
        %5793 = vmatpush2.msra.mxu0 0.0
        %5794 = vmatprep.subr.mxu0 0.0
        %5795 = vmatpush2.msra.mxu0 0.0
        %5796 = vmatprep.subr.mxu0 0.0
        %5797 = vmatpush2.msra.mxu0 0.0
        %5798 = vmatprep.subr.mxu0 0.0
        %5799 = vmatpush2.msra.mxu0 0.0
        %5800 = vmatprep.subr.mxu0 0.0
        %5801 = vmatpush2.msra.mxu0 0.0
        %5802 = vmatprep.subr.mxu0 0.0
        %5803 = vmatpush2.msra.mxu0 0.0
        %5804 = vmatprep.subr.mxu0 0.0
        %5805 = vmatpush2.msra.mxu0 0.0
        %5806 = vmatprep.subr.mxu0 0.0
        %5807 = vmatpush2.msra.mxu0 0.0
        %5808 = vmatprep.subr.mxu0 0.0
        %5809 = vmatpush2.msra.mxu0 0.0
        %5810 = vmatprep.subr.mxu0 0.0
        %5811 = vmatpush2.msra.mxu0 0.0
        %5812 = vmatprep.mubr.f32.mxu0 0.0
        %5813 = vmatmul.mubr.f32.gmra.mxu0 %v5725
        %v5814 = vpop.f32.mrf.mxu0
        %v5815 = vadd.f32 0.0, %v5814
        %v5816 = vpop.f32.mrf.mxu0
        %5817 = vmatprep.mubr.f32.mxu0 0.0
        %5818 = vmatmul.mubr.f32.gmra.mxu0 %v5728
        %v5819 = vpop.f32.mrf.mxu0
        %v5820 = vadd.f32 0.0, %v5819
        %v5821 = vpop.f32.mrf.mxu0
        %5822 = vmatprep.mubr.f32.mxu0 0.0
        %5823 = vmatmul.mubr.f32.gmra.mxu0 %v5731
        %v5824 = vpop.f32.mrf.mxu0
        %v5825 = vadd.f32 0.0, %v5824
        %v5826 = vpop.f32.mrf.mxu0
        %5827 = vmatprep.mubr.f32.mxu0 0.0
        %5828 = vmatmul.mubr.f32.gmra.mxu0 %v5734
        %v5829 = vpop.f32.mrf.mxu0
        %v5830 = vadd.f32 0.0, %v5829
        %v5831 = vpop.f32.mrf.mxu0
        %5832 = vmatprep.mubr.f32.mxu0 0.0
        %5833 = vmatmul.mubr.f32.gmra.mxu0 %v5737
        %v5834 = vpop.f32.mrf.mxu0
        %v5835 = vadd.f32 0.0, %v5834
        %v5836 = vpop.f32.mrf.mxu0
        %5837 = vmatprep.mubr.f32.mxu0 0.0
        %5838 = vmatmul.mubr.f32.gmra.mxu0 %v5740
        %v5839 = vpop.f32.mrf.mxu0
        %v5840 = vadd.f32 0.0, %v5839
        %v5841 = vpop.f32.mrf.mxu0
        %5842 = vmatprep.mubr.f32.mxu0 0.0
        %5843 = vmatmul.mubr.f32.gmra.mxu0 %v5743
        %v5844 = vpop.f32.mrf.mxu0
        %v5845 = vadd.f32 0.0, %v5844
        %v5846 = vpop.f32.mrf.mxu0
        %5847 = vmatprep.mubr.f32.mxu0 0.0
        %5848 = vmatmul.mubr.f32.gmra.mxu0 %v5746
        %v5849 = vpop.f32.mrf.mxu0
        %v5850 = vadd.f32 0.0, %v5849
        %v5851 = vpop.f32.mrf.mxu0
        %5852 = vdwg.mxu0
        %s5853 = scalar_lea.vmem %s6, 40
        %v5854 = vld [vmem:[%s5853] sm:$0xff]
        %v5856 = vsel %vm1259, %v5815, 0
        %v5859 = vsel %vm1259, %v5820, 0
        %v5862 = vsel %vm1259, %v5825, 0
        %v5865 = vsel %vm1259, %v5830, 0
        %v5868 = vsel %vm1259, %v5835, 0
        %v5871 = vsel %vm1259, %v5840, 0
        %v5874 = vsel %vm1259, %v5845, 0
        %v5877 = vsel %vm1259, %v5850, 0
        %5879 = vmatprep.subr.mxu0 0.0
        %5880 = vmatpush1.msra.mxu0 0.0
        %5881 = vmatprep.subr.mxu0 0.0
        %5882 = vmatpush1.msra.mxu0 0.0
        %5883 = vmatprep.subr.mxu0 0.0
        %5884 = vmatpush1.msra.mxu0 0.0
        %5885 = vmatprep.subr.mxu0 0.0
        %5886 = vmatpush1.msra.mxu0 0.0
        %5887 = vmatprep.subr.mxu0 0.0
        %5888 = vmatpush1.msra.mxu0 0.0
        %5889 = vmatprep.subr.mxu0 0.0
        %5890 = vmatpush1.msra.mxu0 0.0
        %5891 = vmatprep.subr.mxu0 0.0
        %5892 = vmatpush1.msra.mxu0 0.0
        %5893 = vmatprep.subr.mxu0 0.0
        %5894 = vmatpush1.msra.mxu0 0.0
        %5895 = vmatprep.subr.mxu0 0.0
        %5896 = vmatpush1.msra.mxu0 0.0
        %5897 = vmatprep.subr.mxu0 0.0
        %5898 = vmatpush1.msra.mxu0 0.0
        %5899 = vmatprep.subr.mxu0 0.0
        %5900 = vmatpush1.msra.mxu0 0.0
        %5901 = vmatprep.subr.mxu0 0.0
        %5902 = vmatpush1.msra.mxu0 0.0
        %5903 = vmatprep.subr.mxu0 0.0
        %5904 = vmatpush1.msra.mxu0 0.0
        %5905 = vmatprep.subr.mxu0 0.0
        %5906 = vmatpush1.msra.mxu0 0.0
        %5907 = vmatprep.subr.mxu0 0.0
        %5908 = vmatpush1.msra.mxu0 0.0
        %5909 = vmatprep.subr.mxu0 0.0
        %5910 = vmatpush1.msra.mxu0 %v5854
        %5911 = vmatprep.subr.mxu0 0.0
        %5912 = vmatpush2.msra.mxu0 0.0
        %5913 = vmatprep.subr.mxu0 0.0
        %5914 = vmatpush2.msra.mxu0 0.0
        %5915 = vmatprep.subr.mxu0 0.0
        %5916 = vmatpush2.msra.mxu0 0.0
        %5917 = vmatprep.subr.mxu0 0.0
        %5918 = vmatpush2.msra.mxu0 0.0
        %5919 = vmatprep.subr.mxu0 0.0
        %5920 = vmatpush2.msra.mxu0 0.0
        %5921 = vmatprep.subr.mxu0 0.0
        %5922 = vmatpush2.msra.mxu0 0.0
        %5923 = vmatprep.subr.mxu0 0.0
        %5924 = vmatpush2.msra.mxu0 0.0
        %5925 = vmatprep.subr.mxu0 0.0
        %5926 = vmatpush2.msra.mxu0 0.0
        %5927 = vmatprep.subr.mxu0 0.0
        %5928 = vmatpush2.msra.mxu0 0.0
        %5929 = vmatprep.subr.mxu0 0.0
        %5930 = vmatpush2.msra.mxu0 0.0
        %5931 = vmatprep.subr.mxu0 0.0
        %5932 = vmatpush2.msra.mxu0 0.0
        %5933 = vmatprep.subr.mxu0 0.0
        %5934 = vmatpush2.msra.mxu0 0.0
        %5935 = vmatprep.subr.mxu0 0.0
        %5936 = vmatpush2.msra.mxu0 0.0
        %5937 = vmatprep.subr.mxu0 0.0
        %5938 = vmatpush2.msra.mxu0 0.0
        %5939 = vmatprep.subr.mxu0 0.0
        %5940 = vmatpush2.msra.mxu0 0.0
        %5941 = vmatprep.subr.mxu0 0.0
        %5942 = vmatpush2.msra.mxu0 0.0
        %5943 = vmatprep.mubr.f32.mxu0 0.0
        %5944 = vmatmul.mubr.f32.gmra.mxu0 %v5856
        %v5945 = vpop.f32.mrf.mxu0
        %v5946 = vadd.f32 0.0, %v5945
        %v5947 = vpop.f32.mrf.mxu0
        %5948 = vmatprep.mubr.f32.mxu0 0.0
        %5949 = vmatmul.mubr.f32.gmra.mxu0 %v5859
        %v5950 = vpop.f32.mrf.mxu0
        %v5951 = vadd.f32 0.0, %v5950
        %v5952 = vpop.f32.mrf.mxu0
        %5953 = vmatprep.mubr.f32.mxu0 0.0
        %5954 = vmatmul.mubr.f32.gmra.mxu0 %v5862
        %v5955 = vpop.f32.mrf.mxu0
        %v5956 = vadd.f32 0.0, %v5955
        %v5957 = vpop.f32.mrf.mxu0
        %5958 = vmatprep.mubr.f32.mxu0 0.0
        %5959 = vmatmul.mubr.f32.gmra.mxu0 %v5865
        %v5960 = vpop.f32.mrf.mxu0
        %v5961 = vadd.f32 0.0, %v5960
        %v5962 = vpop.f32.mrf.mxu0
        %5963 = vmatprep.mubr.f32.mxu0 0.0
        %5964 = vmatmul.mubr.f32.gmra.mxu0 %v5868
        %v5965 = vpop.f32.mrf.mxu0
        %v5966 = vadd.f32 0.0, %v5965
        %v5967 = vpop.f32.mrf.mxu0
        %5968 = vmatprep.mubr.f32.mxu0 0.0
        %5969 = vmatmul.mubr.f32.gmra.mxu0 %v5871
        %v5970 = vpop.f32.mrf.mxu0
        %v5971 = vadd.f32 0.0, %v5970
        %v5972 = vpop.f32.mrf.mxu0
        %5973 = vmatprep.mubr.f32.mxu0 0.0
        %5974 = vmatmul.mubr.f32.gmra.mxu0 %v5874
        %v5975 = vpop.f32.mrf.mxu0
        %v5976 = vadd.f32 0.0, %v5975
        %v5977 = vpop.f32.mrf.mxu0
        %5978 = vmatprep.mubr.f32.mxu0 0.0
        %5979 = vmatmul.mubr.f32.gmra.mxu0 %v5877
        %v5980 = vpop.f32.mrf.mxu0
        %v5981 = vadd.f32 0.0, %v5980
        %v5982 = vpop.f32.mrf.mxu0
        %5983 = vdwg.mxu0
        %v5985 = vsel %vm1259, %v5081, 0
        %v5988 = vsel %vm1259, %v5086, 0
        %v5991 = vsel %vm1259, %v5091, 0
        %v5994 = vsel %vm1259, %v5096, 0
        %v5997 = vsel %vm1259, %v5101, 0
        %v6000 = vsel %vm1259, %v5106, 0
        %v6003 = vsel %vm1259, %v5111, 0
        %v6006 = vsel %vm1259, %v5116, 0
        %6008 = vmatprep.subr.mxu0 0.0
        %6009 = vmatpush1.msra.mxu0 0.0
        %6010 = vmatprep.subr.mxu0 0.0
        %6011 = vmatpush1.msra.mxu0 0.0
        %6012 = vmatprep.subr.mxu0 0.0
        %6013 = vmatpush1.msra.mxu0 0.0
        %6014 = vmatprep.subr.mxu0 0.0
        %6015 = vmatpush1.msra.mxu0 0.0
        %6016 = vmatprep.subr.mxu0 0.0
        %6017 = vmatpush1.msra.mxu0 0.0
        %6018 = vmatprep.subr.mxu0 0.0
        %6019 = vmatpush1.msra.mxu0 0.0
        %6020 = vmatprep.subr.mxu0 0.0
        %6021 = vmatpush1.msra.mxu0 0.0
        %6022 = vmatprep.subr.mxu0 0.0
        %6023 = vmatpush1.msra.mxu0 0.0
        %6024 = vmatprep.subr.mxu0 0.0
        %6025 = vmatpush1.msra.mxu0 0.0
        %6026 = vmatprep.subr.mxu0 0.0
        %6027 = vmatpush1.msra.mxu0 0.0
        %6028 = vmatprep.subr.mxu0 0.0
        %6029 = vmatpush1.msra.mxu0 0.0
        %6030 = vmatprep.subr.mxu0 0.0
        %6031 = vmatpush1.msra.mxu0 0.0
        %6032 = vmatprep.subr.mxu0 0.0
        %6033 = vmatpush1.msra.mxu0 0.0
        %6034 = vmatprep.subr.mxu0 0.0
        %6035 = vmatpush1.msra.mxu0 0.0
        %6036 = vmatprep.subr.mxu0 0.0
        %6037 = vmatpush1.msra.mxu0 0.0
        %6038 = vmatprep.subr.mxu0 0.0
        %6039 = vmatpush1.msra.mxu0 %v5120
        %6040 = vmatprep.subr.mxu0 0.0
        %6041 = vmatpush2.msra.mxu0 0.0
        %6042 = vmatprep.subr.mxu0 0.0
        %6043 = vmatpush2.msra.mxu0 0.0
        %6044 = vmatprep.subr.mxu0 0.0
        %6045 = vmatpush2.msra.mxu0 0.0
        %6046 = vmatprep.subr.mxu0 0.0
        %6047 = vmatpush2.msra.mxu0 0.0
        %6048 = vmatprep.subr.mxu0 0.0
        %6049 = vmatpush2.msra.mxu0 0.0
        %6050 = vmatprep.subr.mxu0 0.0
        %6051 = vmatpush2.msra.mxu0 0.0
        %6052 = vmatprep.subr.mxu0 0.0
        %6053 = vmatpush2.msra.mxu0 0.0
        %6054 = vmatprep.subr.mxu0 0.0
        %6055 = vmatpush2.msra.mxu0 0.0
        %6056 = vmatprep.subr.mxu0 0.0
        %6057 = vmatpush2.msra.mxu0 0.0
        %6058 = vmatprep.subr.mxu0 0.0
        %6059 = vmatpush2.msra.mxu0 0.0
        %6060 = vmatprep.subr.mxu0 0.0
        %6061 = vmatpush2.msra.mxu0 0.0
        %6062 = vmatprep.subr.mxu0 0.0
        %6063 = vmatpush2.msra.mxu0 0.0
        %6064 = vmatprep.subr.mxu0 0.0
        %6065 = vmatpush2.msra.mxu0 0.0
        %6066 = vmatprep.subr.mxu0 0.0
        %6067 = vmatpush2.msra.mxu0 0.0
        %6068 = vmatprep.subr.mxu0 0.0
        %6069 = vmatpush2.msra.mxu0 0.0
        %6070 = vmatprep.subr.mxu0 0.0
        %6071 = vmatpush2.msra.mxu0 0.0
        %6072 = vmatprep.mubr.f32.mxu0 0.0
        %6073 = vmatmul.mubr.f32.gmra.mxu0 %v5985
        %v6074 = vpop.f32.mrf.mxu0
        %v6075 = vadd.f32 %v5946, %v6074
        %v6076 = vpop.f32.mrf.mxu0
        %6077 = vmatprep.mubr.f32.mxu0 0.0
        %6078 = vmatmul.mubr.f32.gmra.mxu0 %v5988
        %v6079 = vpop.f32.mrf.mxu0
        %v6080 = vadd.f32 %v5951, %v6079
        %v6081 = vpop.f32.mrf.mxu0
        %6082 = vmatprep.mubr.f32.mxu0 0.0
        %6083 = vmatmul.mubr.f32.gmra.mxu0 %v5991
        %v6084 = vpop.f32.mrf.mxu0
        %v6085 = vadd.f32 %v5956, %v6084
        %v6086 = vpop.f32.mrf.mxu0
        %6087 = vmatprep.mubr.f32.mxu0 0.0
        %6088 = vmatmul.mubr.f32.gmra.mxu0 %v5994
        %v6089 = vpop.f32.mrf.mxu0
        %v6090 = vadd.f32 %v5961, %v6089
        %v6091 = vpop.f32.mrf.mxu0
        %6092 = vmatprep.mubr.f32.mxu0 0.0
        %6093 = vmatmul.mubr.f32.gmra.mxu0 %v5997
        %v6094 = vpop.f32.mrf.mxu0
        %v6095 = vadd.f32 %v5966, %v6094
        %v6096 = vpop.f32.mrf.mxu0
        %6097 = vmatprep.mubr.f32.mxu0 0.0
        %6098 = vmatmul.mubr.f32.gmra.mxu0 %v6000
        %v6099 = vpop.f32.mrf.mxu0
        %v6100 = vadd.f32 %v5971, %v6099
        %v6101 = vpop.f32.mrf.mxu0
        %6102 = vmatprep.mubr.f32.mxu0 0.0
        %6103 = vmatmul.mubr.f32.gmra.mxu0 %v6003
        %v6104 = vpop.f32.mrf.mxu0
        %v6105 = vadd.f32 %v5976, %v6104
        %v6106 = vpop.f32.mrf.mxu0
        %6107 = vmatprep.mubr.f32.mxu0 0.0
        %6108 = vmatmul.mubr.f32.gmra.mxu0 %v6006
        %v6109 = vpop.f32.mrf.mxu0
        %v6110 = vadd.f32 %v5981, %v6109
        %v6111 = vpop.f32.mrf.mxu0
        %6112 = vdwg.mxu0
        %s6113 = scalar_lea.vmem %s4, 64
        %v6114 = vld [vmem:[%s6113] sm:$0xff]
        %v6115 = vld [vmem:[%s6113 + $0x8] sm:$0xff]
        %v6116 = vld [vmem:[%s6113 + $0x10] sm:$0xff]
        %v6117 = vld [vmem:[%s6113 + $0x18] sm:$0xff]
        %s6118 = scalar_lea.vmem %s5, 2
        %v6119 = vld [vmem:[%s6118] sm:$0x1]
        %v6121 = vlaneseq
        %v6122 = vshrl.u32 %v6121, 7
        %v6123 = vsub.s32 0, %v6122
        %v6124 = vrot.slane %v6119, %v6123
        %6126 = vmatprep.subr.mxu0 0.0
        %6127 = vmatpush1.msra.mxu0 0.0
        %6128 = vmatprep.subr.mxu0 0.0
        %6129 = vmatpush1.msra.mxu0 0.0
        %6130 = vmatprep.subr.mxu0 0.0
        %6131 = vmatpush1.msra.mxu0 0.0
        %6132 = vmatprep.subr.mxu0 0.0
        %6133 = vmatpush1.msra.mxu0 0.0
        %6134 = vmatprep.subr.mxu0 0.0
        %6135 = vmatpush1.msra.mxu0 0.0
        %6136 = vmatprep.subr.mxu0 0.0
        %6137 = vmatpush1.msra.mxu0 0.0
        %6138 = vmatprep.subr.mxu0 0.0
        %6139 = vmatpush1.msra.mxu0 0.0
        %6140 = vmatprep.subr.mxu0 0.0
        %6141 = vmatpush1.msra.mxu0 0.0
        %6142 = vmatprep.subr.mxu0 0.0
        %6143 = vmatpush1.msra.mxu0 0.0
        %6144 = vmatprep.subr.mxu0 0.0
        %6145 = vmatpush1.msra.mxu0 0.0
        %6146 = vmatprep.subr.mxu0 0.0
        %6147 = vmatpush1.msra.mxu0 0.0
        %6148 = vmatprep.subr.mxu0 0.0
        %6149 = vmatpush1.msra.mxu0 0.0
        %6150 = vmatprep.subr.mxu0 0.0
        %6151 = vmatpush1.msra.mxu0 %v6117
        %6152 = vmatprep.subr.mxu0 0.0
        %6153 = vmatpush1.msra.mxu0 %v6116
        %6154 = vmatprep.subr.mxu0 0.0
        %6155 = vmatpush1.msra.mxu0 %v6115
        %6156 = vmatprep.subr.mxu0 0.0
        %6157 = vmatpush1.msra.mxu0 %v6114
        %6158 = vmatprep.subr.mxu0 0.0
        %6159 = vmatpush2.msra.mxu0 0.0
        %6160 = vmatprep.subr.mxu0 0.0
        %6161 = vmatpush2.msra.mxu0 0.0
        %6162 = vmatprep.subr.mxu0 0.0
        %6163 = vmatpush2.msra.mxu0 0.0
        %6164 = vmatprep.subr.mxu0 0.0
        %6165 = vmatpush2.msra.mxu0 0.0
        %6166 = vmatprep.subr.mxu0 0.0
        %6167 = vmatpush2.msra.mxu0 0.0
        %6168 = vmatprep.subr.mxu0 0.0
        %6169 = vmatpush2.msra.mxu0 0.0
        %6170 = vmatprep.subr.mxu0 0.0
        %6171 = vmatpush2.msra.mxu0 0.0
        %6172 = vmatprep.subr.mxu0 0.0
        %6173 = vmatpush2.msra.mxu0 0.0
        %6174 = vmatprep.subr.mxu0 0.0
        %6175 = vmatpush2.msra.mxu0 0.0
        %6176 = vmatprep.subr.mxu0 0.0
        %6177 = vmatpush2.msra.mxu0 0.0
        %6178 = vmatprep.subr.mxu0 0.0
        %6179 = vmatpush2.msra.mxu0 0.0
        %6180 = vmatprep.subr.mxu0 0.0
        %6181 = vmatpush2.msra.mxu0 0.0
        %6182 = vmatprep.subr.mxu0 0.0
        %6183 = vmatpush2.msra.mxu0 0.0
        %6184 = vmatprep.subr.mxu0 0.0
        %6185 = vmatpush2.msra.mxu0 0.0
        %6186 = vmatprep.subr.mxu0 0.0
        %6187 = vmatpush2.msra.mxu0 0.0
        %6188 = vmatprep.subr.mxu0 0.0
        %6189 = vmatpush2.msra.mxu0 0.0
        %6190 = vmatprep.mubr.f32.mxu0 0.0
        %6191 = vmatmul.mubr.f32.gmra.mxu0 %v1013
        %v6192 = vpop.f32.mrf.mxu0
        %v6193 = vadd.f32 %v6124, %v6192
        %v6194 = vpop.f32.mrf.mxu0
        %6195 = vmatprep.mubr.f32.mxu0 0.0
        %6196 = vmatmul.mubr.f32.gmra.mxu0 %v1016
        %v6197 = vpop.f32.mrf.mxu0
        %v6198 = vadd.f32 %v6124, %v6197
        %v6199 = vpop.f32.mrf.mxu0
        %6200 = vmatprep.mubr.f32.mxu0 0.0
        %6201 = vmatmul.mubr.f32.gmra.mxu0 %v1019
        %v6202 = vpop.f32.mrf.mxu0
        %v6203 = vadd.f32 %v6124, %v6202
        %v6204 = vpop.f32.mrf.mxu0
        %6205 = vmatprep.mubr.f32.mxu0 0.0
        %6206 = vmatmul.mubr.f32.gmra.mxu0 %v1022
        %v6207 = vpop.f32.mrf.mxu0
        %v6208 = vadd.f32 %v6124, %v6207
        %v6209 = vpop.f32.mrf.mxu0
        %6210 = vmatprep.mubr.f32.mxu0 0.0
        %6211 = vmatmul.mubr.f32.gmra.mxu0 %v1025
        %v6212 = vpop.f32.mrf.mxu0
        %v6213 = vadd.f32 %v6124, %v6212
        %v6214 = vpop.f32.mrf.mxu0
        %6215 = vmatprep.mubr.f32.mxu0 0.0
        %6216 = vmatmul.mubr.f32.gmra.mxu0 %v1028
        %v6217 = vpop.f32.mrf.mxu0
        %v6218 = vadd.f32 %v6124, %v6217
        %v6219 = vpop.f32.mrf.mxu0
        %6220 = vmatprep.mubr.f32.mxu0 0.0
        %6221 = vmatmul.mubr.f32.gmra.mxu0 %v1031
        %v6222 = vpop.f32.mrf.mxu0
        %v6223 = vadd.f32 %v6124, %v6222
        %v6224 = vpop.f32.mrf.mxu0
        %6225 = vmatprep.mubr.f32.mxu0 0.0
        %6226 = vmatmul.mubr.f32.gmra.mxu0 %v1034
        %v6227 = vpop.f32.mrf.mxu0
        %v6228 = vadd.f32 %v6124, %v6227
        %v6229 = vpop.f32.mrf.mxu0
        %6230 = vdwg.mxu0
        %s6231 = scalar_lea.vmem %s4, 576
        %v6232 = vld [vmem:[%s6231] sm:$0xff]
        %v6233 = vld [vmem:[%s6231 + $0x8] sm:$0xff]
        %v6234 = vld [vmem:[%s6231 + $0x10] sm:$0xff]
        %v6235 = vld [vmem:[%s6231 + $0x18] sm:$0xff]
        %s6236 = scalar_lea.vmem %s5, 18
        %v6237 = vld [vmem:[%s6236] sm:$0x1]
        %v6239 = vlaneseq
        %v6240 = vshrl.u32 %v6239, 7
        %v6241 = vsub.s32 0, %v6240
        %v6242 = vrot.slane %v6237, %v6241
        %6244 = vmatprep.subr.mxu0 0.0
        %6245 = vmatpush1.msra.mxu0 0.0
        %6246 = vmatprep.subr.mxu0 0.0
        %6247 = vmatpush1.msra.mxu0 0.0
        %6248 = vmatprep.subr.mxu0 0.0
        %6249 = vmatpush1.msra.mxu0 0.0
        %6250 = vmatprep.subr.mxu0 0.0
        %6251 = vmatpush1.msra.mxu0 0.0
        %6252 = vmatprep.subr.mxu0 0.0
        %6253 = vmatpush1.msra.mxu0 0.0
        %6254 = vmatprep.subr.mxu0 0.0
        %6255 = vmatpush1.msra.mxu0 0.0
        %6256 = vmatprep.subr.mxu0 0.0
        %6257 = vmatpush1.msra.mxu0 0.0
        %6258 = vmatprep.subr.mxu0 0.0
        %6259 = vmatpush1.msra.mxu0 0.0
        %6260 = vmatprep.subr.mxu0 0.0
        %6261 = vmatpush1.msra.mxu0 0.0
        %6262 = vmatprep.subr.mxu0 0.0
        %6263 = vmatpush1.msra.mxu0 0.0
        %6264 = vmatprep.subr.mxu0 0.0
        %6265 = vmatpush1.msra.mxu0 0.0
        %6266 = vmatprep.subr.mxu0 0.0
        %6267 = vmatpush1.msra.mxu0 0.0
        %6268 = vmatprep.subr.mxu0 0.0
        %6269 = vmatpush1.msra.mxu0 %v6235
        %6270 = vmatprep.subr.mxu0 0.0
        %6271 = vmatpush1.msra.mxu0 %v6234
        %6272 = vmatprep.subr.mxu0 0.0
        %6273 = vmatpush1.msra.mxu0 %v6233
        %6274 = vmatprep.subr.mxu0 0.0
        %6275 = vmatpush1.msra.mxu0 %v6232
        %6276 = vmatprep.subr.mxu0 0.0
        %6277 = vmatpush2.msra.mxu0 0.0
        %6278 = vmatprep.subr.mxu0 0.0
        %6279 = vmatpush2.msra.mxu0 0.0
        %6280 = vmatprep.subr.mxu0 0.0
        %6281 = vmatpush2.msra.mxu0 0.0
        %6282 = vmatprep.subr.mxu0 0.0
        %6283 = vmatpush2.msra.mxu0 0.0
        %6284 = vmatprep.subr.mxu0 0.0
        %6285 = vmatpush2.msra.mxu0 0.0
        %6286 = vmatprep.subr.mxu0 0.0
        %6287 = vmatpush2.msra.mxu0 0.0
        %6288 = vmatprep.subr.mxu0 0.0
        %6289 = vmatpush2.msra.mxu0 0.0
        %6290 = vmatprep.subr.mxu0 0.0
        %6291 = vmatpush2.msra.mxu0 0.0
        %6292 = vmatprep.subr.mxu0 0.0
        %6293 = vmatpush2.msra.mxu0 0.0
        %6294 = vmatprep.subr.mxu0 0.0
        %6295 = vmatpush2.msra.mxu0 0.0
        %6296 = vmatprep.subr.mxu0 0.0
        %6297 = vmatpush2.msra.mxu0 0.0
        %6298 = vmatprep.subr.mxu0 0.0
        %6299 = vmatpush2.msra.mxu0 0.0
        %6300 = vmatprep.subr.mxu0 0.0
        %6301 = vmatpush2.msra.mxu0 0.0
        %6302 = vmatprep.subr.mxu0 0.0
        %6303 = vmatpush2.msra.mxu0 0.0
        %6304 = vmatprep.subr.mxu0 0.0
        %6305 = vmatpush2.msra.mxu0 0.0
        %6306 = vmatprep.subr.mxu0 0.0
        %6307 = vmatpush2.msra.mxu0 0.0
        %6308 = vmatprep.mubr.f32.mxu0 0.0
        %6309 = vmatmul.mubr.f32.gmra.mxu0 %v871
        %v6310 = vpop.f32.mrf.mxu0
        %v6311 = vadd.f32 %v6242, %v6310
        %v6312 = vpop.f32.mrf.mxu0
        %6313 = vmatprep.mubr.f32.mxu0 0.0
        %6314 = vmatmul.mubr.f32.gmra.mxu0 %v874
        %v6315 = vpop.f32.mrf.mxu0
        %v6316 = vadd.f32 %v6242, %v6315
        %v6317 = vpop.f32.mrf.mxu0
        %6318 = vmatprep.mubr.f32.mxu0 0.0
        %6319 = vmatmul.mubr.f32.gmra.mxu0 %v877
        %v6320 = vpop.f32.mrf.mxu0
        %v6321 = vadd.f32 %v6242, %v6320
        %v6322 = vpop.f32.mrf.mxu0
        %6323 = vmatprep.mubr.f32.mxu0 0.0
        %6324 = vmatmul.mubr.f32.gmra.mxu0 %v880
        %v6325 = vpop.f32.mrf.mxu0
        %v6326 = vadd.f32 %v6242, %v6325
        %v6327 = vpop.f32.mrf.mxu0
        %6328 = vmatprep.mubr.f32.mxu0 0.0
        %6329 = vmatmul.mubr.f32.gmra.mxu0 %v883
        %v6330 = vpop.f32.mrf.mxu0
        %v6331 = vadd.f32 %v6242, %v6330
        %v6332 = vpop.f32.mrf.mxu0
        %6333 = vmatprep.mubr.f32.mxu0 0.0
        %6334 = vmatmul.mubr.f32.gmra.mxu0 %v886
        %v6335 = vpop.f32.mrf.mxu0
        %v6336 = vadd.f32 %v6242, %v6335
        %v6337 = vpop.f32.mrf.mxu0
        %6338 = vmatprep.mubr.f32.mxu0 0.0
        %6339 = vmatmul.mubr.f32.gmra.mxu0 %v889
        %v6340 = vpop.f32.mrf.mxu0
        %v6341 = vadd.f32 %v6242, %v6340
        %v6342 = vpop.f32.mrf.mxu0
        %6343 = vmatprep.mubr.f32.mxu0 0.0
        %6344 = vmatmul.mubr.f32.gmra.mxu0 %v892
        %v6345 = vpop.f32.mrf.mxu0
        %v6346 = vadd.f32 %v6242, %v6345
        %v6347 = vpop.f32.mrf.mxu0
        %6348 = vdwg.mxu0
        %s6349 = scalar_lea.vmem %s4, 704
        %v6350 = vld [vmem:[%s6349] sm:$0xff]
        %v6351 = vld [vmem:[%s6349 + $0x8] sm:$0xff]
        %v6352 = vld [vmem:[%s6349 + $0x10] sm:$0xff]
        %v6353 = vld [vmem:[%s6349 + $0x18] sm:$0xff]
        %s6354 = scalar_lea.vmem %s5, 22
        %v6355 = vld [vmem:[%s6354] sm:$0x1]
        %v6357 = vlaneseq
        %v6358 = vshrl.u32 %v6357, 7
        %v6359 = vsub.s32 0, %v6358
        %v6360 = vrot.slane %v6355, %v6359
        %6362 = vmatprep.subr.mxu0 0.0
        %6363 = vmatpush1.msra.mxu0 0.0
        %6364 = vmatprep.subr.mxu0 0.0
        %6365 = vmatpush1.msra.mxu0 0.0
        %6366 = vmatprep.subr.mxu0 0.0
        %6367 = vmatpush1.msra.mxu0 0.0
        %6368 = vmatprep.subr.mxu0 0.0
        %6369 = vmatpush1.msra.mxu0 0.0
        %6370 = vmatprep.subr.mxu0 0.0
        %6371 = vmatpush1.msra.mxu0 0.0
        %6372 = vmatprep.subr.mxu0 0.0
        %6373 = vmatpush1.msra.mxu0 0.0
        %6374 = vmatprep.subr.mxu0 0.0
        %6375 = vmatpush1.msra.mxu0 0.0
        %6376 = vmatprep.subr.mxu0 0.0
        %6377 = vmatpush1.msra.mxu0 0.0
        %6378 = vmatprep.subr.mxu0 0.0
        %6379 = vmatpush1.msra.mxu0 0.0
        %6380 = vmatprep.subr.mxu0 0.0
        %6381 = vmatpush1.msra.mxu0 0.0
        %6382 = vmatprep.subr.mxu0 0.0
        %6383 = vmatpush1.msra.mxu0 0.0
        %6384 = vmatprep.subr.mxu0 0.0
        %6385 = vmatpush1.msra.mxu0 0.0
        %6386 = vmatprep.subr.mxu0 0.0
        %6387 = vmatpush1.msra.mxu0 %v6353
        %6388 = vmatprep.subr.mxu0 0.0
        %6389 = vmatpush1.msra.mxu0 %v6352
        %6390 = vmatprep.subr.mxu0 0.0
        %6391 = vmatpush1.msra.mxu0 %v6351
        %6392 = vmatprep.subr.mxu0 0.0
        %6393 = vmatpush1.msra.mxu0 %v6350
        %6394 = vmatprep.subr.mxu0 0.0
        %6395 = vmatpush2.msra.mxu0 0.0
        %6396 = vmatprep.subr.mxu0 0.0
        %6397 = vmatpush2.msra.mxu0 0.0
        %6398 = vmatprep.subr.mxu0 0.0
        %6399 = vmatpush2.msra.mxu0 0.0
        %6400 = vmatprep.subr.mxu0 0.0
        %6401 = vmatpush2.msra.mxu0 0.0
        %6402 = vmatprep.subr.mxu0 0.0
        %6403 = vmatpush2.msra.mxu0 0.0
        %6404 = vmatprep.subr.mxu0 0.0
        %6405 = vmatpush2.msra.mxu0 0.0
        %6406 = vmatprep.subr.mxu0 0.0
        %6407 = vmatpush2.msra.mxu0 0.0
        %6408 = vmatprep.subr.mxu0 0.0
        %6409 = vmatpush2.msra.mxu0 0.0
        %6410 = vmatprep.subr.mxu0 0.0
        %6411 = vmatpush2.msra.mxu0 0.0
        %6412 = vmatprep.subr.mxu0 0.0
        %6413 = vmatpush2.msra.mxu0 0.0
        %6414 = vmatprep.subr.mxu0 0.0
        %6415 = vmatpush2.msra.mxu0 0.0
        %6416 = vmatprep.subr.mxu0 0.0
        %6417 = vmatpush2.msra.mxu0 0.0
        %6418 = vmatprep.subr.mxu0 0.0
        %6419 = vmatpush2.msra.mxu0 0.0
        %6420 = vmatprep.subr.mxu0 0.0
        %6421 = vmatpush2.msra.mxu0 0.0
        %6422 = vmatprep.subr.mxu0 0.0
        %6423 = vmatpush2.msra.mxu0 0.0
        %6424 = vmatprep.subr.mxu0 0.0
        %6425 = vmatpush2.msra.mxu0 0.0
        %6426 = vmatprep.mubr.f32.mxu0 0.0
        %6427 = vmatmul.mubr.f32.gmra.mxu0 %v871
        %v6428 = vpop.f32.mrf.mxu0
        %v6429 = vadd.f32 %v6360, %v6428
        %v6430 = vpop.f32.mrf.mxu0
        %6431 = vmatprep.mubr.f32.mxu0 0.0
        %6432 = vmatmul.mubr.f32.gmra.mxu0 %v874
        %v6433 = vpop.f32.mrf.mxu0
        %v6434 = vadd.f32 %v6360, %v6433
        %v6435 = vpop.f32.mrf.mxu0
        %6436 = vmatprep.mubr.f32.mxu0 0.0
        %6437 = vmatmul.mubr.f32.gmra.mxu0 %v877
        %v6438 = vpop.f32.mrf.mxu0
        %v6439 = vadd.f32 %v6360, %v6438
        %v6440 = vpop.f32.mrf.mxu0
        %6441 = vmatprep.mubr.f32.mxu0 0.0
        %6442 = vmatmul.mubr.f32.gmra.mxu0 %v880
        %v6443 = vpop.f32.mrf.mxu0
        %v6444 = vadd.f32 %v6360, %v6443
        %v6445 = vpop.f32.mrf.mxu0
        %6446 = vmatprep.mubr.f32.mxu0 0.0
        %6447 = vmatmul.mubr.f32.gmra.mxu0 %v883
        %v6448 = vpop.f32.mrf.mxu0
        %v6449 = vadd.f32 %v6360, %v6448
        %v6450 = vpop.f32.mrf.mxu0
        %6451 = vmatprep.mubr.f32.mxu0 0.0
        %6452 = vmatmul.mubr.f32.gmra.mxu0 %v886
        %v6453 = vpop.f32.mrf.mxu0
        %v6454 = vadd.f32 %v6360, %v6453
        %v6455 = vpop.f32.mrf.mxu0
        %6456 = vmatprep.mubr.f32.mxu0 0.0
        %6457 = vmatmul.mubr.f32.gmra.mxu0 %v889
        %v6458 = vpop.f32.mrf.mxu0
        %v6459 = vadd.f32 %v6360, %v6458
        %v6460 = vpop.f32.mrf.mxu0
        %6461 = vmatprep.mubr.f32.mxu0 0.0
        %6462 = vmatmul.mubr.f32.gmra.mxu0 %v892
        %v6463 = vpop.f32.mrf.mxu0
        %v6464 = vadd.f32 %v6360, %v6463
        %v6465 = vpop.f32.mrf.mxu0
        %6466 = vdwg.mxu0
        %v6468 = vsel %vm1259, %v6193, 0
        %v6471 = vsel %vm1259, %v6198, 0
        %v6474 = vsel %vm1259, %v6203, 0
        %v6477 = vsel %vm1259, %v6208, 0
        %v6480 = vsel %vm1259, %v6213, 0
        %v6483 = vsel %vm1259, %v6218, 0
        %v6486 = vsel %vm1259, %v6223, 0
        %v6489 = vsel %vm1259, %v6228, 0
        %v6492 = vsel %vm1259, %v6311, 0
        %v6495 = vsel %vm1259, %v6316, 0
        %v6498 = vsel %vm1259, %v6321, 0
        %v6501 = vsel %vm1259, %v6326, 0
        %v6504 = vsel %vm1259, %v6331, 0
        %v6507 = vsel %vm1259, %v6336, 0
        %v6510 = vsel %vm1259, %v6341, 0
        %v6513 = vsel %vm1259, %v6346, 0
        %6515 = vmatprep.subr.mxu0 0.0
        %6516 = vmatpush1.xpose.msra.mxu0 0.0
        %6517 = vmatprep.subr.mxu0 0.0
        %6518 = vmatpush1.xpose.msra.mxu0 0.0
        %6519 = vmatprep.subr.mxu0 0.0
        %6520 = vmatpush1.xpose.msra.mxu0 0.0
        %6521 = vmatprep.subr.mxu0 0.0
        %6522 = vmatpush1.xpose.msra.mxu0 0.0
        %6523 = vmatprep.subr.mxu0 0.0
        %6524 = vmatpush1.xpose.msra.mxu0 0.0
        %6525 = vmatprep.subr.mxu0 0.0
        %6526 = vmatpush1.xpose.msra.mxu0 0.0
        %6527 = vmatprep.subr.mxu0 0.0
        %6528 = vmatpush1.xpose.msra.mxu0 0.0
        %6529 = vmatprep.subr.mxu0 0.0
        %6530 = vmatpush1.xpose.msra.mxu0 0.0
        %6531 = vmatprep.subr.mxu0 0.0
        %6532 = vmatpush1.xpose.msra.mxu0 %v6513
        %6533 = vmatprep.subr.mxu0 0.0
        %6534 = vmatpush1.xpose.msra.mxu0 %v6510
        %6535 = vmatprep.subr.mxu0 0.0
        %6536 = vmatpush1.xpose.msra.mxu0 %v6507
        %6537 = vmatprep.subr.mxu0 0.0
        %6538 = vmatpush1.xpose.msra.mxu0 %v6504
        %6539 = vmatprep.subr.mxu0 0.0
        %6540 = vmatpush1.xpose.msra.mxu0 %v6501
        %6541 = vmatprep.subr.mxu0 0.0
        %6542 = vmatpush1.xpose.msra.mxu0 %v6498
        %6543 = vmatprep.subr.mxu0 0.0
        %6544 = vmatpush1.xpose.msra.mxu0 %v6495
        %6545 = vmatprep.subr.mxu0 0.0
        %6546 = vmatpush1.xpose.msra.mxu0 %v6492
        %6547 = vmatprep.subr.mxu0 0.0
        %6548 = vmatpush2.xpose.msra.mxu0 0.0
        %6549 = vmatprep.subr.mxu0 0.0
        %6550 = vmatpush2.xpose.msra.mxu0 0.0
        %6551 = vmatprep.subr.mxu0 0.0
        %6552 = vmatpush2.xpose.msra.mxu0 0.0
        %6553 = vmatprep.subr.mxu0 0.0
        %6554 = vmatpush2.xpose.msra.mxu0 0.0
        %6555 = vmatprep.subr.mxu0 0.0
        %6556 = vmatpush2.xpose.msra.mxu0 0.0
        %6557 = vmatprep.subr.mxu0 0.0
        %6558 = vmatpush2.xpose.msra.mxu0 0.0
        %6559 = vmatprep.subr.mxu0 0.0
        %6560 = vmatpush2.xpose.msra.mxu0 0.0
        %6561 = vmatprep.subr.mxu0 0.0
        %6562 = vmatpush2.xpose.msra.mxu0 0.0
        %6563 = vmatprep.subr.mxu0 0.0
        %6564 = vmatpush2.xpose.msra.mxu0 0.0
        %6565 = vmatprep.subr.mxu0 0.0
        %6566 = vmatpush2.xpose.msra.mxu0 0.0
        %6567 = vmatprep.subr.mxu0 0.0
        %6568 = vmatpush2.xpose.msra.mxu0 0.0
        %6569 = vmatprep.subr.mxu0 0.0
        %6570 = vmatpush2.xpose.msra.mxu0 0.0
        %6571 = vmatprep.subr.mxu0 0.0
        %6572 = vmatpush2.xpose.msra.mxu0 0.0
        %6573 = vmatprep.subr.mxu0 0.0
        %6574 = vmatpush2.xpose.msra.mxu0 0.0
        %6575 = vmatprep.subr.mxu0 0.0
        %6576 = vmatpush2.xpose.msra.mxu0 0.0
        %6577 = vmatprep.subr.mxu0 0.0
        %6578 = vmatpush2.xpose.msra.mxu0 0.0
        %6579 = vmatprep.mubr.f32.mxu0 0.0
        %6580 = vmatmul.mubr.f32.gmra.mxu0 %v6468
        %v6581 = vpop.f32.mrf.mxu0
        %v6582 = vadd.f32 0.0, %v6581
        %v6583 = vpop.f32.mrf.mxu0
        %6584 = vmatprep.mubr.f32.mxu0 0.0
        %6585 = vmatmul.mubr.f32.gmra.mxu0 %v6471
        %v6586 = vpop.f32.mrf.mxu0
        %v6587 = vadd.f32 0.0, %v6586
        %v6588 = vpop.f32.mrf.mxu0
        %6589 = vmatprep.mubr.f32.mxu0 0.0
        %6590 = vmatmul.mubr.f32.gmra.mxu0 %v6474
        %v6591 = vpop.f32.mrf.mxu0
        %v6592 = vadd.f32 0.0, %v6591
        %v6593 = vpop.f32.mrf.mxu0
        %6594 = vmatprep.mubr.f32.mxu0 0.0
        %6595 = vmatmul.mubr.f32.gmra.mxu0 %v6477
        %v6596 = vpop.f32.mrf.mxu0
        %v6597 = vadd.f32 0.0, %v6596
        %v6598 = vpop.f32.mrf.mxu0
        %6599 = vmatprep.mubr.f32.mxu0 0.0
        %6600 = vmatmul.mubr.f32.gmra.mxu0 %v6480
        %v6601 = vpop.f32.mrf.mxu0
        %v6602 = vadd.f32 0.0, %v6601
        %v6603 = vpop.f32.mrf.mxu0
        %6604 = vmatprep.mubr.f32.mxu0 0.0
        %6605 = vmatmul.mubr.f32.gmra.mxu0 %v6483
        %v6606 = vpop.f32.mrf.mxu0
        %v6607 = vadd.f32 0.0, %v6606
        %v6608 = vpop.f32.mrf.mxu0
        %6609 = vmatprep.mubr.f32.mxu0 0.0
        %6610 = vmatmul.mubr.f32.gmra.mxu0 %v6486
        %v6611 = vpop.f32.mrf.mxu0
        %v6612 = vadd.f32 0.0, %v6611
        %v6613 = vpop.f32.mrf.mxu0
        %6614 = vmatprep.mubr.f32.mxu0 0.0
        %6615 = vmatmul.mubr.f32.gmra.mxu0 %v6489
        %v6616 = vpop.f32.mrf.mxu0
        %v6617 = vadd.f32 0.0, %v6616
        %v6618 = vpop.f32.mrf.mxu0
        %6619 = vdwg.mxu0
        %v6620 = vmul.f32 %v6582, 0.35355338
        %v6621 = vmul.f32 %v6587, 0.35355338
        %v6622 = vmul.f32 %v6592, 0.35355338
        %v6623 = vmul.f32 %v6597, 0.35355338
        %v6624 = vmul.f32 %v6602, 0.35355338
        %v6625 = vmul.f32 %v6607, 0.35355338
        %v6626 = vmul.f32 %v6612, 0.35355338
        %v6627 = vmul.f32 %v6617, 0.35355338
        %v6628 = vsel %vm1421, %v6620, -inf
        %6629 = vmax.xlane.f32.xlu0 %v6628
        %v6630 = vpop.xlane.xlu0 %6629
        %v6631 = vsel %vm1421, %v6621, -inf
        %6632 = vmax.xlane.f32.xlu0 %v6631
        %v6633 = vpop.xlane.xlu0 %6632
        %v6634 = vsel %vm1421, %v6622, -inf
        %6635 = vmax.xlane.f32.xlu0 %v6634
        %v6636 = vpop.xlane.xlu0 %6635
        %v6637 = vsel %vm1421, %v6623, -inf
        %6638 = vmax.xlane.f32.xlu0 %v6637
        %v6639 = vpop.xlane.xlu0 %6638
        %v6640 = vsel %vm1421, %v6624, -inf
        %6641 = vmax.xlane.f32.xlu0 %v6640
        %v6642 = vpop.xlane.xlu0 %6641
        %v6643 = vsel %vm1421, %v6625, -inf
        %6644 = vmax.xlane.f32.xlu0 %v6643
        %v6645 = vpop.xlane.xlu0 %6644
        %v6646 = vsel %vm1421, %v6626, -inf
        %6647 = vmax.xlane.f32.xlu0 %v6646
        %v6648 = vpop.xlane.xlu0 %6647
        %v6649 = vsel %vm1421, %v6627, -inf
        %6650 = vmax.xlane.f32.xlu0 %v6649
        %v6651 = vpop.xlane.xlu0 %6650
        %v6652 = vsub.f32 %v6620, %v6630
        %v6653 = vsub.f32 %v6621, %v6633
        %v6654 = vsub.f32 %v6622, %v6636
        %v6655 = vsub.f32 %v6623, %v6639
        %v6656 = vsub.f32 %v6624, %v6642
        %v6657 = vsub.f32 %v6625, %v6645
        %v6658 = vsub.f32 %v6626, %v6648
        %v6659 = vsub.f32 %v6627, %v6651
        %v6660 = vmul.f32 %v6652, 1.442695
        %v6661 = vpow.pop %v6660
        %v6662 = vmul.f32 %v6653, 1.442695
        %v6663 = vpow.pop %v6662
        %v6664 = vmul.f32 %v6654, 1.442695
        %v6665 = vpow.pop %v6664
        %v6666 = vmul.f32 %v6655, 1.442695
        %v6667 = vpow.pop %v6666
        %v6668 = vmul.f32 %v6656, 1.442695
        %v6669 = vpow.pop %v6668
        %v6670 = vmul.f32 %v6657, 1.442695
        %v6671 = vpow.pop %v6670
        %v6672 = vmul.f32 %v6658, 1.442695
        %v6673 = vpow.pop %v6672
        %v6674 = vmul.f32 %v6659, 1.442695
        %v6675 = vpow.pop %v6674
        %v6676 = vsel %vm1421, %v6661, 0.0
        %6677 = vadd.xlane.f32.xlu0 %v6676
        %v6678 = vpop.xlane.xlu0 %6677
        %v6679 = vsel %vm1421, %v6663, 0.0
        %6680 = vadd.xlane.f32.xlu0 %v6679
        %v6681 = vpop.xlane.xlu0 %6680
        %v6682 = vsel %vm1421, %v6665, 0.0
        %6683 = vadd.xlane.f32.xlu0 %v6682
        %v6684 = vpop.xlane.xlu0 %6683
        %v6685 = vsel %vm1421, %v6667, 0.0
        %6686 = vadd.xlane.f32.xlu0 %v6685
        %v6687 = vpop.xlane.xlu0 %6686
        %v6688 = vsel %vm1421, %v6669, 0.0
        %6689 = vadd.xlane.f32.xlu0 %v6688
        %v6690 = vpop.xlane.xlu0 %6689
        %v6691 = vsel %vm1421, %v6671, 0.0
        %6692 = vadd.xlane.f32.xlu0 %v6691
        %v6693 = vpop.xlane.xlu0 %6692
        %v6694 = vsel %vm1421, %v6673, 0.0
        %6695 = vadd.xlane.f32.xlu0 %v6694
        %v6696 = vpop.xlane.xlu0 %6695
        %v6697 = vsel %vm1421, %v6675, 0.0
        %6698 = vadd.xlane.f32.xlu0 %v6697
        %v6699 = vpop.xlane.xlu0 %6698
        %v6700 = vrcp.pop %v6678
        %v6701 = vrcp.pop %v6681
        %v6702 = vrcp.pop %v6684
        %v6703 = vrcp.pop %v6687
        %v6704 = vrcp.pop %v6690
        %v6705 = vrcp.pop %v6693
        %v6706 = vrcp.pop %v6696
        %v6707 = vrcp.pop %v6699
        %v6708 = vmul.f32 %v6661, %v6700
        %v6709 = vmul.f32 %v6663, %v6701
        %v6710 = vmul.f32 %v6665, %v6702
        %v6711 = vmul.f32 %v6667, %v6703
        %v6712 = vmul.f32 %v6669, %v6704
        %v6713 = vmul.f32 %v6671, %v6705
        %v6714 = vmul.f32 %v6673, %v6706
        %v6715 = vmul.f32 %v6675, %v6707
        %v6717 = vsel %vm1421, %v6708, 0
        %v6720 = vsel %vm1421, %v6709, 0
        %v6723 = vsel %vm1421, %v6710, 0
        %v6726 = vsel %vm1421, %v6711, 0
        %v6729 = vsel %vm1421, %v6712, 0
        %v6732 = vsel %vm1421, %v6713, 0
        %v6735 = vsel %vm1421, %v6714, 0
        %v6738 = vsel %vm1421, %v6715, 0
        %6740 = vmatprep.subr.mxu0 0.0
        %6741 = vmatpush1.msra.mxu0 0.0
        %6742 = vmatprep.subr.mxu0 0.0
        %6743 = vmatpush1.msra.mxu0 0.0
        %6744 = vmatprep.subr.mxu0 0.0
        %6745 = vmatpush1.msra.mxu0 0.0
        %6746 = vmatprep.subr.mxu0 0.0
        %6747 = vmatpush1.msra.mxu0 0.0
        %6748 = vmatprep.subr.mxu0 0.0
        %6749 = vmatpush1.msra.mxu0 0.0
        %6750 = vmatprep.subr.mxu0 0.0
        %6751 = vmatpush1.msra.mxu0 0.0
        %6752 = vmatprep.subr.mxu0 0.0
        %6753 = vmatpush1.msra.mxu0 0.0
        %6754 = vmatprep.subr.mxu0 0.0
        %6755 = vmatpush1.msra.mxu0 0.0
        %6756 = vmatprep.subr.mxu0 0.0
        %6757 = vmatpush1.msra.mxu0 %v6464
        %6758 = vmatprep.subr.mxu0 0.0
        %6759 = vmatpush1.msra.mxu0 %v6459
        %6760 = vmatprep.subr.mxu0 0.0
        %6761 = vmatpush1.msra.mxu0 %v6454
        %6762 = vmatprep.subr.mxu0 0.0
        %6763 = vmatpush1.msra.mxu0 %v6449
        %6764 = vmatprep.subr.mxu0 0.0
        %6765 = vmatpush1.msra.mxu0 %v6444
        %6766 = vmatprep.subr.mxu0 0.0
        %6767 = vmatpush1.msra.mxu0 %v6439
        %6768 = vmatprep.subr.mxu0 0.0
        %6769 = vmatpush1.msra.mxu0 %v6434
        %6770 = vmatprep.subr.mxu0 0.0
        %6771 = vmatpush1.msra.mxu0 %v6429
        %6772 = vmatprep.subr.mxu0 0.0
        %6773 = vmatpush2.msra.mxu0 0.0
        %6774 = vmatprep.subr.mxu0 0.0
        %6775 = vmatpush2.msra.mxu0 0.0
        %6776 = vmatprep.subr.mxu0 0.0
        %6777 = vmatpush2.msra.mxu0 0.0
        %6778 = vmatprep.subr.mxu0 0.0
        %6779 = vmatpush2.msra.mxu0 0.0
        %6780 = vmatprep.subr.mxu0 0.0
        %6781 = vmatpush2.msra.mxu0 0.0
        %6782 = vmatprep.subr.mxu0 0.0
        %6783 = vmatpush2.msra.mxu0 0.0
        %6784 = vmatprep.subr.mxu0 0.0
        %6785 = vmatpush2.msra.mxu0 0.0
        %6786 = vmatprep.subr.mxu0 0.0
        %6787 = vmatpush2.msra.mxu0 0.0
        %6788 = vmatprep.subr.mxu0 0.0
        %6789 = vmatpush2.msra.mxu0 0.0
        %6790 = vmatprep.subr.mxu0 0.0
        %6791 = vmatpush2.msra.mxu0 0.0
        %6792 = vmatprep.subr.mxu0 0.0
        %6793 = vmatpush2.msra.mxu0 0.0
        %6794 = vmatprep.subr.mxu0 0.0
        %6795 = vmatpush2.msra.mxu0 0.0
        %6796 = vmatprep.subr.mxu0 0.0
        %6797 = vmatpush2.msra.mxu0 0.0
        %6798 = vmatprep.subr.mxu0 0.0
        %6799 = vmatpush2.msra.mxu0 0.0
        %6800 = vmatprep.subr.mxu0 0.0
        %6801 = vmatpush2.msra.mxu0 0.0
        %6802 = vmatprep.subr.mxu0 0.0
        %6803 = vmatpush2.msra.mxu0 0.0
        %6804 = vmatprep.mubr.f32.mxu0 0.0
        %6805 = vmatmul.mubr.f32.gmra.mxu0 %v6717
        %v6806 = vpop.f32.mrf.mxu0
        %v6807 = vadd.f32 0.0, %v6806
        %v6808 = vpop.f32.mrf.mxu0
        %6809 = vmatprep.mubr.f32.mxu0 0.0
        %6810 = vmatmul.mubr.f32.gmra.mxu0 %v6720
        %v6811 = vpop.f32.mrf.mxu0
        %v6812 = vadd.f32 0.0, %v6811
        %v6813 = vpop.f32.mrf.mxu0
        %6814 = vmatprep.mubr.f32.mxu0 0.0
        %6815 = vmatmul.mubr.f32.gmra.mxu0 %v6723
        %v6816 = vpop.f32.mrf.mxu0
        %v6817 = vadd.f32 0.0, %v6816
        %v6818 = vpop.f32.mrf.mxu0
        %6819 = vmatprep.mubr.f32.mxu0 0.0
        %6820 = vmatmul.mubr.f32.gmra.mxu0 %v6726
        %v6821 = vpop.f32.mrf.mxu0
        %v6822 = vadd.f32 0.0, %v6821
        %v6823 = vpop.f32.mrf.mxu0
        %6824 = vmatprep.mubr.f32.mxu0 0.0
        %6825 = vmatmul.mubr.f32.gmra.mxu0 %v6729
        %v6826 = vpop.f32.mrf.mxu0
        %v6827 = vadd.f32 0.0, %v6826
        %v6828 = vpop.f32.mrf.mxu0
        %6829 = vmatprep.mubr.f32.mxu0 0.0
        %6830 = vmatmul.mubr.f32.gmra.mxu0 %v6732
        %v6831 = vpop.f32.mrf.mxu0
        %v6832 = vadd.f32 0.0, %v6831
        %v6833 = vpop.f32.mrf.mxu0
        %6834 = vmatprep.mubr.f32.mxu0 0.0
        %6835 = vmatmul.mubr.f32.gmra.mxu0 %v6735
        %v6836 = vpop.f32.mrf.mxu0
        %v6837 = vadd.f32 0.0, %v6836
        %v6838 = vpop.f32.mrf.mxu0
        %6839 = vmatprep.mubr.f32.mxu0 0.0
        %6840 = vmatmul.mubr.f32.gmra.mxu0 %v6738
        %v6841 = vpop.f32.mrf.mxu0
        %v6842 = vadd.f32 0.0, %v6841
        %v6843 = vpop.f32.mrf.mxu0
        %6844 = vdwg.mxu0
        %s6845 = scalar_lea.vmem %s6, 48
        %v6846 = vld [vmem:[%s6845] sm:$0xff]
        %v6848 = vsel %vm1259, %v6807, 0
        %v6851 = vsel %vm1259, %v6812, 0
        %v6854 = vsel %vm1259, %v6817, 0
        %v6857 = vsel %vm1259, %v6822, 0
        %v6860 = vsel %vm1259, %v6827, 0
        %v6863 = vsel %vm1259, %v6832, 0
        %v6866 = vsel %vm1259, %v6837, 0
        %v6869 = vsel %vm1259, %v6842, 0
        %6871 = vmatprep.subr.mxu0 0.0
        %6872 = vmatpush1.msra.mxu0 0.0
        %6873 = vmatprep.subr.mxu0 0.0
        %6874 = vmatpush1.msra.mxu0 0.0
        %6875 = vmatprep.subr.mxu0 0.0
        %6876 = vmatpush1.msra.mxu0 0.0
        %6877 = vmatprep.subr.mxu0 0.0
        %6878 = vmatpush1.msra.mxu0 0.0
        %6879 = vmatprep.subr.mxu0 0.0
        %6880 = vmatpush1.msra.mxu0 0.0
        %6881 = vmatprep.subr.mxu0 0.0
        %6882 = vmatpush1.msra.mxu0 0.0
        %6883 = vmatprep.subr.mxu0 0.0
        %6884 = vmatpush1.msra.mxu0 0.0
        %6885 = vmatprep.subr.mxu0 0.0
        %6886 = vmatpush1.msra.mxu0 0.0
        %6887 = vmatprep.subr.mxu0 0.0
        %6888 = vmatpush1.msra.mxu0 0.0
        %6889 = vmatprep.subr.mxu0 0.0
        %6890 = vmatpush1.msra.mxu0 0.0
        %6891 = vmatprep.subr.mxu0 0.0
        %6892 = vmatpush1.msra.mxu0 0.0
        %6893 = vmatprep.subr.mxu0 0.0
        %6894 = vmatpush1.msra.mxu0 0.0
        %6895 = vmatprep.subr.mxu0 0.0
        %6896 = vmatpush1.msra.mxu0 0.0
        %6897 = vmatprep.subr.mxu0 0.0
        %6898 = vmatpush1.msra.mxu0 0.0
        %6899 = vmatprep.subr.mxu0 0.0
        %6900 = vmatpush1.msra.mxu0 0.0
        %6901 = vmatprep.subr.mxu0 0.0
        %6902 = vmatpush1.msra.mxu0 %v6846
        %6903 = vmatprep.subr.mxu0 0.0
        %6904 = vmatpush2.msra.mxu0 0.0
        %6905 = vmatprep.subr.mxu0 0.0
        %6906 = vmatpush2.msra.mxu0 0.0
        %6907 = vmatprep.subr.mxu0 0.0
        %6908 = vmatpush2.msra.mxu0 0.0
        %6909 = vmatprep.subr.mxu0 0.0
        %6910 = vmatpush2.msra.mxu0 0.0
        %6911 = vmatprep.subr.mxu0 0.0
        %6912 = vmatpush2.msra.mxu0 0.0
        %6913 = vmatprep.subr.mxu0 0.0
        %6914 = vmatpush2.msra.mxu0 0.0
        %6915 = vmatprep.subr.mxu0 0.0
        %6916 = vmatpush2.msra.mxu0 0.0
        %6917 = vmatprep.subr.mxu0 0.0
        %6918 = vmatpush2.msra.mxu0 0.0
        %6919 = vmatprep.subr.mxu0 0.0
        %6920 = vmatpush2.msra.mxu0 0.0
        %6921 = vmatprep.subr.mxu0 0.0
        %6922 = vmatpush2.msra.mxu0 0.0
        %6923 = vmatprep.subr.mxu0 0.0
        %6924 = vmatpush2.msra.mxu0 0.0
        %6925 = vmatprep.subr.mxu0 0.0
        %6926 = vmatpush2.msra.mxu0 0.0
        %6927 = vmatprep.subr.mxu0 0.0
        %6928 = vmatpush2.msra.mxu0 0.0
        %6929 = vmatprep.subr.mxu0 0.0
        %6930 = vmatpush2.msra.mxu0 0.0
        %6931 = vmatprep.subr.mxu0 0.0
        %6932 = vmatpush2.msra.mxu0 0.0
        %6933 = vmatprep.subr.mxu0 0.0
        %6934 = vmatpush2.msra.mxu0 0.0
        %6935 = vmatprep.mubr.f32.mxu0 0.0
        %6936 = vmatmul.mubr.f32.gmra.mxu0 %v6848
        %v6937 = vpop.f32.mrf.mxu0
        %v6938 = vadd.f32 0.0, %v6937
        %v6939 = vpop.f32.mrf.mxu0
        %6940 = vmatprep.mubr.f32.mxu0 0.0
        %6941 = vmatmul.mubr.f32.gmra.mxu0 %v6851
        %v6942 = vpop.f32.mrf.mxu0
        %v6943 = vadd.f32 0.0, %v6942
        %v6944 = vpop.f32.mrf.mxu0
        %6945 = vmatprep.mubr.f32.mxu0 0.0
        %6946 = vmatmul.mubr.f32.gmra.mxu0 %v6854
        %v6947 = vpop.f32.mrf.mxu0
        %v6948 = vadd.f32 0.0, %v6947
        %v6949 = vpop.f32.mrf.mxu0
        %6950 = vmatprep.mubr.f32.mxu0 0.0
        %6951 = vmatmul.mubr.f32.gmra.mxu0 %v6857
        %v6952 = vpop.f32.mrf.mxu0
        %v6953 = vadd.f32 0.0, %v6952
        %v6954 = vpop.f32.mrf.mxu0
        %6955 = vmatprep.mubr.f32.mxu0 0.0
        %6956 = vmatmul.mubr.f32.gmra.mxu0 %v6860
        %v6957 = vpop.f32.mrf.mxu0
        %v6958 = vadd.f32 0.0, %v6957
        %v6959 = vpop.f32.mrf.mxu0
        %6960 = vmatprep.mubr.f32.mxu0 0.0
        %6961 = vmatmul.mubr.f32.gmra.mxu0 %v6863
        %v6962 = vpop.f32.mrf.mxu0
        %v6963 = vadd.f32 0.0, %v6962
        %v6964 = vpop.f32.mrf.mxu0
        %6965 = vmatprep.mubr.f32.mxu0 0.0
        %6966 = vmatmul.mubr.f32.gmra.mxu0 %v6866
        %v6967 = vpop.f32.mrf.mxu0
        %v6968 = vadd.f32 0.0, %v6967
        %v6969 = vpop.f32.mrf.mxu0
        %6970 = vmatprep.mubr.f32.mxu0 0.0
        %6971 = vmatmul.mubr.f32.gmra.mxu0 %v6869
        %v6972 = vpop.f32.mrf.mxu0
        %v6973 = vadd.f32 0.0, %v6972
        %v6974 = vpop.f32.mrf.mxu0
        %6975 = vdwg.mxu0
        %v6976 = vadd.f32 %v6075, %v6938
        %v6977 = vadd.f32 %v6080, %v6943
        %v6978 = vadd.f32 %v6085, %v6948
        %v6979 = vadd.f32 %v6090, %v6953
        %v6980 = vadd.f32 %v6095, %v6958
        %v6981 = vadd.f32 %v6100, %v6963
        %v6982 = vadd.f32 %v6105, %v6968
        %v6983 = vadd.f32 %v6110, %v6973
        %s6984 = scalar_lea.vmem %s4, 96
        %v6985 = vld [vmem:[%s6984] sm:$0xff]
        %v6986 = vld [vmem:[%s6984 + $0x8] sm:$0xff]
        %v6987 = vld [vmem:[%s6984 + $0x10] sm:$0xff]
        %v6988 = vld [vmem:[%s6984 + $0x18] sm:$0xff]
        %s6989 = scalar_lea.vmem %s5, 3
        %v6990 = vld [vmem:[%s6989] sm:$0x1]
        %v6992 = vlaneseq
        %v6993 = vshrl.u32 %v6992, 7
        %v6994 = vsub.s32 0, %v6993
        %v6995 = vrot.slane %v6990, %v6994
        %6997 = vmatprep.subr.mxu0 0.0
        %6998 = vmatpush1.msra.mxu0 0.0
        %6999 = vmatprep.subr.mxu0 0.0
        %7000 = vmatpush1.msra.mxu0 0.0
        %7001 = vmatprep.subr.mxu0 0.0
        %7002 = vmatpush1.msra.mxu0 0.0
        %7003 = vmatprep.subr.mxu0 0.0
        %7004 = vmatpush1.msra.mxu0 0.0
        %7005 = vmatprep.subr.mxu0 0.0
        %7006 = vmatpush1.msra.mxu0 0.0
        %7007 = vmatprep.subr.mxu0 0.0
        %7008 = vmatpush1.msra.mxu0 0.0
        %7009 = vmatprep.subr.mxu0 0.0
        %7010 = vmatpush1.msra.mxu0 0.0
        %7011 = vmatprep.subr.mxu0 0.0
        %7012 = vmatpush1.msra.mxu0 0.0
        %7013 = vmatprep.subr.mxu0 0.0
        %7014 = vmatpush1.msra.mxu0 0.0
        %7015 = vmatprep.subr.mxu0 0.0
        %7016 = vmatpush1.msra.mxu0 0.0
        %7017 = vmatprep.subr.mxu0 0.0
        %7018 = vmatpush1.msra.mxu0 0.0
        %7019 = vmatprep.subr.mxu0 0.0
        %7020 = vmatpush1.msra.mxu0 0.0
        %7021 = vmatprep.subr.mxu0 0.0
        %7022 = vmatpush1.msra.mxu0 %v6988
        %7023 = vmatprep.subr.mxu0 0.0
        %7024 = vmatpush1.msra.mxu0 %v6987
        %7025 = vmatprep.subr.mxu0 0.0
        %7026 = vmatpush1.msra.mxu0 %v6986
        %7027 = vmatprep.subr.mxu0 0.0
        %7028 = vmatpush1.msra.mxu0 %v6985
        %7029 = vmatprep.subr.mxu0 0.0
        %7030 = vmatpush2.msra.mxu0 0.0
        %7031 = vmatprep.subr.mxu0 0.0
        %7032 = vmatpush2.msra.mxu0 0.0
        %7033 = vmatprep.subr.mxu0 0.0
        %7034 = vmatpush2.msra.mxu0 0.0
        %7035 = vmatprep.subr.mxu0 0.0
        %7036 = vmatpush2.msra.mxu0 0.0
        %7037 = vmatprep.subr.mxu0 0.0
        %7038 = vmatpush2.msra.mxu0 0.0
        %7039 = vmatprep.subr.mxu0 0.0
        %7040 = vmatpush2.msra.mxu0 0.0
        %7041 = vmatprep.subr.mxu0 0.0
        %7042 = vmatpush2.msra.mxu0 0.0
        %7043 = vmatprep.subr.mxu0 0.0
        %7044 = vmatpush2.msra.mxu0 0.0
        %7045 = vmatprep.subr.mxu0 0.0
        %7046 = vmatpush2.msra.mxu0 0.0
        %7047 = vmatprep.subr.mxu0 0.0
        %7048 = vmatpush2.msra.mxu0 0.0
        %7049 = vmatprep.subr.mxu0 0.0
        %7050 = vmatpush2.msra.mxu0 0.0
        %7051 = vmatprep.subr.mxu0 0.0
        %7052 = vmatpush2.msra.mxu0 0.0
        %7053 = vmatprep.subr.mxu0 0.0
        %7054 = vmatpush2.msra.mxu0 0.0
        %7055 = vmatprep.subr.mxu0 0.0
        %7056 = vmatpush2.msra.mxu0 0.0
        %7057 = vmatprep.subr.mxu0 0.0
        %7058 = vmatpush2.msra.mxu0 0.0
        %7059 = vmatprep.subr.mxu0 0.0
        %7060 = vmatpush2.msra.mxu0 0.0
        %7061 = vmatprep.mubr.f32.mxu0 0.0
        %7062 = vmatmul.mubr.f32.gmra.mxu0 %v1013
        %v7063 = vpop.f32.mrf.mxu0
        %v7064 = vadd.f32 %v6995, %v7063
        %v7065 = vpop.f32.mrf.mxu0
        %7066 = vmatprep.mubr.f32.mxu0 0.0
        %7067 = vmatmul.mubr.f32.gmra.mxu0 %v1016
        %v7068 = vpop.f32.mrf.mxu0
        %v7069 = vadd.f32 %v6995, %v7068
        %v7070 = vpop.f32.mrf.mxu0
        %7071 = vmatprep.mubr.f32.mxu0 0.0
        %7072 = vmatmul.mubr.f32.gmra.mxu0 %v1019
        %v7073 = vpop.f32.mrf.mxu0
        %v7074 = vadd.f32 %v6995, %v7073
        %v7075 = vpop.f32.mrf.mxu0
        %7076 = vmatprep.mubr.f32.mxu0 0.0
        %7077 = vmatmul.mubr.f32.gmra.mxu0 %v1022
        %v7078 = vpop.f32.mrf.mxu0
        %v7079 = vadd.f32 %v6995, %v7078
        %v7080 = vpop.f32.mrf.mxu0
        %7081 = vmatprep.mubr.f32.mxu0 0.0
        %7082 = vmatmul.mubr.f32.gmra.mxu0 %v1025
        %v7083 = vpop.f32.mrf.mxu0
        %v7084 = vadd.f32 %v6995, %v7083
        %v7085 = vpop.f32.mrf.mxu0
        %7086 = vmatprep.mubr.f32.mxu0 0.0
        %7087 = vmatmul.mubr.f32.gmra.mxu0 %v1028
        %v7088 = vpop.f32.mrf.mxu0
        %v7089 = vadd.f32 %v6995, %v7088
        %v7090 = vpop.f32.mrf.mxu0
        %7091 = vmatprep.mubr.f32.mxu0 0.0
        %7092 = vmatmul.mubr.f32.gmra.mxu0 %v1031
        %v7093 = vpop.f32.mrf.mxu0
        %v7094 = vadd.f32 %v6995, %v7093
        %v7095 = vpop.f32.mrf.mxu0
        %7096 = vmatprep.mubr.f32.mxu0 0.0
        %7097 = vmatmul.mubr.f32.gmra.mxu0 %v1034
        %v7098 = vpop.f32.mrf.mxu0
        %v7099 = vadd.f32 %v6995, %v7098
        %v7100 = vpop.f32.mrf.mxu0
        %7101 = vdwg.mxu0
        %s7102 = scalar_lea.vmem %s4, 608
        %v7103 = vld [vmem:[%s7102] sm:$0xff]
        %v7104 = vld [vmem:[%s7102 + $0x8] sm:$0xff]
        %v7105 = vld [vmem:[%s7102 + $0x10] sm:$0xff]
        %v7106 = vld [vmem:[%s7102 + $0x18] sm:$0xff]
        %s7107 = scalar_lea.vmem %s5, 19
        %v7108 = vld [vmem:[%s7107] sm:$0x1]
        %v7110 = vlaneseq
        %v7111 = vshrl.u32 %v7110, 7
        %v7112 = vsub.s32 0, %v7111
        %v7113 = vrot.slane %v7108, %v7112
        %7115 = vmatprep.subr.mxu0 0.0
        %7116 = vmatpush1.msra.mxu0 0.0
        %7117 = vmatprep.subr.mxu0 0.0
        %7118 = vmatpush1.msra.mxu0 0.0
        %7119 = vmatprep.subr.mxu0 0.0
        %7120 = vmatpush1.msra.mxu0 0.0
        %7121 = vmatprep.subr.mxu0 0.0
        %7122 = vmatpush1.msra.mxu0 0.0
        %7123 = vmatprep.subr.mxu0 0.0
        %7124 = vmatpush1.msra.mxu0 0.0
        %7125 = vmatprep.subr.mxu0 0.0
        %7126 = vmatpush1.msra.mxu0 0.0
        %7127 = vmatprep.subr.mxu0 0.0
        %7128 = vmatpush1.msra.mxu0 0.0
        %7129 = vmatprep.subr.mxu0 0.0
        %7130 = vmatpush1.msra.mxu0 0.0
        %7131 = vmatprep.subr.mxu0 0.0
        %7132 = vmatpush1.msra.mxu0 0.0
        %7133 = vmatprep.subr.mxu0 0.0
        %7134 = vmatpush1.msra.mxu0 0.0
        %7135 = vmatprep.subr.mxu0 0.0
        %7136 = vmatpush1.msra.mxu0 0.0
        %7137 = vmatprep.subr.mxu0 0.0
        %7138 = vmatpush1.msra.mxu0 0.0
        %7139 = vmatprep.subr.mxu0 0.0
        %7140 = vmatpush1.msra.mxu0 %v7106
        %7141 = vmatprep.subr.mxu0 0.0
        %7142 = vmatpush1.msra.mxu0 %v7105
        %7143 = vmatprep.subr.mxu0 0.0
        %7144 = vmatpush1.msra.mxu0 %v7104
        %7145 = vmatprep.subr.mxu0 0.0
        %7146 = vmatpush1.msra.mxu0 %v7103
        %7147 = vmatprep.subr.mxu0 0.0
        %7148 = vmatpush2.msra.mxu0 0.0
        %7149 = vmatprep.subr.mxu0 0.0
        %7150 = vmatpush2.msra.mxu0 0.0
        %7151 = vmatprep.subr.mxu0 0.0
        %7152 = vmatpush2.msra.mxu0 0.0
        %7153 = vmatprep.subr.mxu0 0.0
        %7154 = vmatpush2.msra.mxu0 0.0
        %7155 = vmatprep.subr.mxu0 0.0
        %7156 = vmatpush2.msra.mxu0 0.0
        %7157 = vmatprep.subr.mxu0 0.0
        %7158 = vmatpush2.msra.mxu0 0.0
        %7159 = vmatprep.subr.mxu0 0.0
        %7160 = vmatpush2.msra.mxu0 0.0
        %7161 = vmatprep.subr.mxu0 0.0
        %7162 = vmatpush2.msra.mxu0 0.0
        %7163 = vmatprep.subr.mxu0 0.0
        %7164 = vmatpush2.msra.mxu0 0.0
        %7165 = vmatprep.subr.mxu0 0.0
        %7166 = vmatpush2.msra.mxu0 0.0
        %7167 = vmatprep.subr.mxu0 0.0
        %7168 = vmatpush2.msra.mxu0 0.0
        %7169 = vmatprep.subr.mxu0 0.0
        %7170 = vmatpush2.msra.mxu0 0.0
        %7171 = vmatprep.subr.mxu0 0.0
        %7172 = vmatpush2.msra.mxu0 0.0
        %7173 = vmatprep.subr.mxu0 0.0
        %7174 = vmatpush2.msra.mxu0 0.0
        %7175 = vmatprep.subr.mxu0 0.0
        %7176 = vmatpush2.msra.mxu0 0.0
        %7177 = vmatprep.subr.mxu0 0.0
        %7178 = vmatpush2.msra.mxu0 0.0
        %7179 = vmatprep.mubr.f32.mxu0 0.0
        %7180 = vmatmul.mubr.f32.gmra.mxu0 %v871
        %v7181 = vpop.f32.mrf.mxu0
        %v7182 = vadd.f32 %v7113, %v7181
        %v7183 = vpop.f32.mrf.mxu0
        %7184 = vmatprep.mubr.f32.mxu0 0.0
        %7185 = vmatmul.mubr.f32.gmra.mxu0 %v874
        %v7186 = vpop.f32.mrf.mxu0
        %v7187 = vadd.f32 %v7113, %v7186
        %v7188 = vpop.f32.mrf.mxu0
        %7189 = vmatprep.mubr.f32.mxu0 0.0
        %7190 = vmatmul.mubr.f32.gmra.mxu0 %v877
        %v7191 = vpop.f32.mrf.mxu0
        %v7192 = vadd.f32 %v7113, %v7191
        %v7193 = vpop.f32.mrf.mxu0
        %7194 = vmatprep.mubr.f32.mxu0 0.0
        %7195 = vmatmul.mubr.f32.gmra.mxu0 %v880
        %v7196 = vpop.f32.mrf.mxu0
        %v7197 = vadd.f32 %v7113, %v7196
        %v7198 = vpop.f32.mrf.mxu0
        %7199 = vmatprep.mubr.f32.mxu0 0.0
        %7200 = vmatmul.mubr.f32.gmra.mxu0 %v883
        %v7201 = vpop.f32.mrf.mxu0
        %v7202 = vadd.f32 %v7113, %v7201
        %v7203 = vpop.f32.mrf.mxu0
        %7204 = vmatprep.mubr.f32.mxu0 0.0
        %7205 = vmatmul.mubr.f32.gmra.mxu0 %v886
        %v7206 = vpop.f32.mrf.mxu0
        %v7207 = vadd.f32 %v7113, %v7206
        %v7208 = vpop.f32.mrf.mxu0
        %7209 = vmatprep.mubr.f32.mxu0 0.0
        %7210 = vmatmul.mubr.f32.gmra.mxu0 %v889
        %v7211 = vpop.f32.mrf.mxu0
        %v7212 = vadd.f32 %v7113, %v7211
        %v7213 = vpop.f32.mrf.mxu0
        %7214 = vmatprep.mubr.f32.mxu0 0.0
        %7215 = vmatmul.mubr.f32.gmra.mxu0 %v892
        %v7216 = vpop.f32.mrf.mxu0
        %v7217 = vadd.f32 %v7113, %v7216
        %v7218 = vpop.f32.mrf.mxu0
        %7219 = vdwg.mxu0
        %s7220 = scalar_lea.vmem %s4, 736
        %v7221 = vld [vmem:[%s7220] sm:$0xff]
        %v7222 = vld [vmem:[%s7220 + $0x8] sm:$0xff]
        %v7223 = vld [vmem:[%s7220 + $0x10] sm:$0xff]
        %v7224 = vld [vmem:[%s7220 + $0x18] sm:$0xff]
        %s7225 = scalar_lea.vmem %s5, 23
        %v7226 = vld [vmem:[%s7225] sm:$0x1]
        %v7228 = vlaneseq
        %v7229 = vshrl.u32 %v7228, 7
        %v7230 = vsub.s32 0, %v7229
        %v7231 = vrot.slane %v7226, %v7230
        %7233 = vmatprep.subr.mxu0 0.0
        %7234 = vmatpush1.msra.mxu0 0.0
        %7235 = vmatprep.subr.mxu0 0.0
        %7236 = vmatpush1.msra.mxu0 0.0
        %7237 = vmatprep.subr.mxu0 0.0
        %7238 = vmatpush1.msra.mxu0 0.0
        %7239 = vmatprep.subr.mxu0 0.0
        %7240 = vmatpush1.msra.mxu0 0.0
        %7241 = vmatprep.subr.mxu0 0.0
        %7242 = vmatpush1.msra.mxu0 0.0
        %7243 = vmatprep.subr.mxu0 0.0
        %7244 = vmatpush1.msra.mxu0 0.0
        %7245 = vmatprep.subr.mxu0 0.0
        %7246 = vmatpush1.msra.mxu0 0.0
        %7247 = vmatprep.subr.mxu0 0.0
        %7248 = vmatpush1.msra.mxu0 0.0
        %7249 = vmatprep.subr.mxu0 0.0
        %7250 = vmatpush1.msra.mxu0 0.0
        %7251 = vmatprep.subr.mxu0 0.0
        %7252 = vmatpush1.msra.mxu0 0.0
        %7253 = vmatprep.subr.mxu0 0.0
        %7254 = vmatpush1.msra.mxu0 0.0
        %7255 = vmatprep.subr.mxu0 0.0
        %7256 = vmatpush1.msra.mxu0 0.0
        %7257 = vmatprep.subr.mxu0 0.0
        %7258 = vmatpush1.msra.mxu0 %v7224
        %7259 = vmatprep.subr.mxu0 0.0
        %7260 = vmatpush1.msra.mxu0 %v7223
        %7261 = vmatprep.subr.mxu0 0.0
        %7262 = vmatpush1.msra.mxu0 %v7222
        %7263 = vmatprep.subr.mxu0 0.0
        %7264 = vmatpush1.msra.mxu0 %v7221
        %7265 = vmatprep.subr.mxu0 0.0
        %7266 = vmatpush2.msra.mxu0 0.0
        %7267 = vmatprep.subr.mxu0 0.0
        %7268 = vmatpush2.msra.mxu0 0.0
        %7269 = vmatprep.subr.mxu0 0.0
        %7270 = vmatpush2.msra.mxu0 0.0
        %7271 = vmatprep.subr.mxu0 0.0
        %7272 = vmatpush2.msra.mxu0 0.0
        %7273 = vmatprep.subr.mxu0 0.0
        %7274 = vmatpush2.msra.mxu0 0.0
        %7275 = vmatprep.subr.mxu0 0.0
        %7276 = vmatpush2.msra.mxu0 0.0
        %7277 = vmatprep.subr.mxu0 0.0
        %7278 = vmatpush2.msra.mxu0 0.0
        %7279 = vmatprep.subr.mxu0 0.0
        %7280 = vmatpush2.msra.mxu0 0.0
        %7281 = vmatprep.subr.mxu0 0.0
        %7282 = vmatpush2.msra.mxu0 0.0
        %7283 = vmatprep.subr.mxu0 0.0
        %7284 = vmatpush2.msra.mxu0 0.0
        %7285 = vmatprep.subr.mxu0 0.0
        %7286 = vmatpush2.msra.mxu0 0.0
        %7287 = vmatprep.subr.mxu0 0.0
        %7288 = vmatpush2.msra.mxu0 0.0
        %7289 = vmatprep.subr.mxu0 0.0
        %7290 = vmatpush2.msra.mxu0 0.0
        %7291 = vmatprep.subr.mxu0 0.0
        %7292 = vmatpush2.msra.mxu0 0.0
        %7293 = vmatprep.subr.mxu0 0.0
        %7294 = vmatpush2.msra.mxu0 0.0
        %7295 = vmatprep.subr.mxu0 0.0
        %7296 = vmatpush2.msra.mxu0 0.0
        %7297 = vmatprep.mubr.f32.mxu0 0.0
        %7298 = vmatmul.mubr.f32.gmra.mxu0 %v871
        %v7299 = vpop.f32.mrf.mxu0
        %v7300 = vadd.f32 %v7231, %v7299
        %v7301 = vpop.f32.mrf.mxu0
        %7302 = vmatprep.mubr.f32.mxu0 0.0
        %7303 = vmatmul.mubr.f32.gmra.mxu0 %v874
        %v7304 = vpop.f32.mrf.mxu0
        %v7305 = vadd.f32 %v7231, %v7304
        %v7306 = vpop.f32.mrf.mxu0
        %7307 = vmatprep.mubr.f32.mxu0 0.0
        %7308 = vmatmul.mubr.f32.gmra.mxu0 %v877
        %v7309 = vpop.f32.mrf.mxu0
        %v7310 = vadd.f32 %v7231, %v7309
        %v7311 = vpop.f32.mrf.mxu0
        %7312 = vmatprep.mubr.f32.mxu0 0.0
        %7313 = vmatmul.mubr.f32.gmra.mxu0 %v880
        %v7314 = vpop.f32.mrf.mxu0
        %v7315 = vadd.f32 %v7231, %v7314
        %v7316 = vpop.f32.mrf.mxu0
        %7317 = vmatprep.mubr.f32.mxu0 0.0
        %7318 = vmatmul.mubr.f32.gmra.mxu0 %v883
        %v7319 = vpop.f32.mrf.mxu0
        %v7320 = vadd.f32 %v7231, %v7319
        %v7321 = vpop.f32.mrf.mxu0
        %7322 = vmatprep.mubr.f32.mxu0 0.0
        %7323 = vmatmul.mubr.f32.gmra.mxu0 %v886
        %v7324 = vpop.f32.mrf.mxu0
        %v7325 = vadd.f32 %v7231, %v7324
        %v7326 = vpop.f32.mrf.mxu0
        %7327 = vmatprep.mubr.f32.mxu0 0.0
        %7328 = vmatmul.mubr.f32.gmra.mxu0 %v889
        %v7329 = vpop.f32.mrf.mxu0
        %v7330 = vadd.f32 %v7231, %v7329
        %v7331 = vpop.f32.mrf.mxu0
        %7332 = vmatprep.mubr.f32.mxu0 0.0
        %7333 = vmatmul.mubr.f32.gmra.mxu0 %v892
        %v7334 = vpop.f32.mrf.mxu0
        %v7335 = vadd.f32 %v7231, %v7334
        %v7336 = vpop.f32.mrf.mxu0
        %7337 = vdwg.mxu0
        %v7339 = vsel %vm1259, %v7064, 0
        %v7342 = vsel %vm1259, %v7069, 0
        %v7345 = vsel %vm1259, %v7074, 0
        %v7348 = vsel %vm1259, %v7079, 0
        %v7351 = vsel %vm1259, %v7084, 0
        %v7354 = vsel %vm1259, %v7089, 0
        %v7357 = vsel %vm1259, %v7094, 0
        %v7360 = vsel %vm1259, %v7099, 0
        %v7363 = vsel %vm1259, %v7182, 0
        %v7366 = vsel %vm1259, %v7187, 0
        %v7369 = vsel %vm1259, %v7192, 0
        %v7372 = vsel %vm1259, %v7197, 0
        %v7375 = vsel %vm1259, %v7202, 0
        %v7378 = vsel %vm1259, %v7207, 0
        %v7381 = vsel %vm1259, %v7212, 0
        %v7384 = vsel %vm1259, %v7217, 0
        %7386 = vmatprep.subr.mxu0 0.0
        %7387 = vmatpush1.xpose.msra.mxu0 0.0
        %7388 = vmatprep.subr.mxu0 0.0
        %7389 = vmatpush1.xpose.msra.mxu0 0.0
        %7390 = vmatprep.subr.mxu0 0.0
        %7391 = vmatpush1.xpose.msra.mxu0 0.0
        %7392 = vmatprep.subr.mxu0 0.0
        %7393 = vmatpush1.xpose.msra.mxu0 0.0
        %7394 = vmatprep.subr.mxu0 0.0
        %7395 = vmatpush1.xpose.msra.mxu0 0.0
        %7396 = vmatprep.subr.mxu0 0.0
        %7397 = vmatpush1.xpose.msra.mxu0 0.0
        %7398 = vmatprep.subr.mxu0 0.0
        %7399 = vmatpush1.xpose.msra.mxu0 0.0
        %7400 = vmatprep.subr.mxu0 0.0
        %7401 = vmatpush1.xpose.msra.mxu0 0.0
        %7402 = vmatprep.subr.mxu0 0.0
        %7403 = vmatpush1.xpose.msra.mxu0 %v7384
        %7404 = vmatprep.subr.mxu0 0.0
        %7405 = vmatpush1.xpose.msra.mxu0 %v7381
        %7406 = vmatprep.subr.mxu0 0.0
        %7407 = vmatpush1.xpose.msra.mxu0 %v7378
        %7408 = vmatprep.subr.mxu0 0.0
        %7409 = vmatpush1.xpose.msra.mxu0 %v7375
        %7410 = vmatprep.subr.mxu0 0.0
        %7411 = vmatpush1.xpose.msra.mxu0 %v7372
        %7412 = vmatprep.subr.mxu0 0.0
        %7413 = vmatpush1.xpose.msra.mxu0 %v7369
        %7414 = vmatprep.subr.mxu0 0.0
        %7415 = vmatpush1.xpose.msra.mxu0 %v7366
        %7416 = vmatprep.subr.mxu0 0.0
        %7417 = vmatpush1.xpose.msra.mxu0 %v7363
        %7418 = vmatprep.subr.mxu0 0.0
        %7419 = vmatpush2.xpose.msra.mxu0 0.0
        %7420 = vmatprep.subr.mxu0 0.0
        %7421 = vmatpush2.xpose.msra.mxu0 0.0
        %7422 = vmatprep.subr.mxu0 0.0
        %7423 = vmatpush2.xpose.msra.mxu0 0.0
        %7424 = vmatprep.subr.mxu0 0.0
        %7425 = vmatpush2.xpose.msra.mxu0 0.0
        %7426 = vmatprep.subr.mxu0 0.0
        %7427 = vmatpush2.xpose.msra.mxu0 0.0
        %7428 = vmatprep.subr.mxu0 0.0
        %7429 = vmatpush2.xpose.msra.mxu0 0.0
        %7430 = vmatprep.subr.mxu0 0.0
        %7431 = vmatpush2.xpose.msra.mxu0 0.0
        %7432 = vmatprep.subr.mxu0 0.0
        %7433 = vmatpush2.xpose.msra.mxu0 0.0
        %7434 = vmatprep.subr.mxu0 0.0
        %7435 = vmatpush2.xpose.msra.mxu0 0.0
        %7436 = vmatprep.subr.mxu0 0.0
        %7437 = vmatpush2.xpose.msra.mxu0 0.0
        %7438 = vmatprep.subr.mxu0 0.0
        %7439 = vmatpush2.xpose.msra.mxu0 0.0
        %7440 = vmatprep.subr.mxu0 0.0
        %7441 = vmatpush2.xpose.msra.mxu0 0.0
        %7442 = vmatprep.subr.mxu0 0.0
        %7443 = vmatpush2.xpose.msra.mxu0 0.0
        %7444 = vmatprep.subr.mxu0 0.0
        %7445 = vmatpush2.xpose.msra.mxu0 0.0
        %7446 = vmatprep.subr.mxu0 0.0
        %7447 = vmatpush2.xpose.msra.mxu0 0.0
        %7448 = vmatprep.subr.mxu0 0.0
        %7449 = vmatpush2.xpose.msra.mxu0 0.0
        %7450 = vmatprep.mubr.f32.mxu0 0.0
        %7451 = vmatmul.mubr.f32.gmra.mxu0 %v7339
        %v7452 = vpop.f32.mrf.mxu0
        %v7453 = vadd.f32 0.0, %v7452
        %v7454 = vpop.f32.mrf.mxu0
        %7455 = vmatprep.mubr.f32.mxu0 0.0
        %7456 = vmatmul.mubr.f32.gmra.mxu0 %v7342
        %v7457 = vpop.f32.mrf.mxu0
        %v7458 = vadd.f32 0.0, %v7457
        %v7459 = vpop.f32.mrf.mxu0
        %7460 = vmatprep.mubr.f32.mxu0 0.0
        %7461 = vmatmul.mubr.f32.gmra.mxu0 %v7345
        %v7462 = vpop.f32.mrf.mxu0
        %v7463 = vadd.f32 0.0, %v7462
        %v7464 = vpop.f32.mrf.mxu0
        %7465 = vmatprep.mubr.f32.mxu0 0.0
        %7466 = vmatmul.mubr.f32.gmra.mxu0 %v7348
        %v7467 = vpop.f32.mrf.mxu0
        %v7468 = vadd.f32 0.0, %v7467
        %v7469 = vpop.f32.mrf.mxu0
        %7470 = vmatprep.mubr.f32.mxu0 0.0
        %7471 = vmatmul.mubr.f32.gmra.mxu0 %v7351
        %v7472 = vpop.f32.mrf.mxu0
        %v7473 = vadd.f32 0.0, %v7472
        %v7474 = vpop.f32.mrf.mxu0
        %7475 = vmatprep.mubr.f32.mxu0 0.0
        %7476 = vmatmul.mubr.f32.gmra.mxu0 %v7354
        %v7477 = vpop.f32.mrf.mxu0
        %v7478 = vadd.f32 0.0, %v7477
        %v7479 = vpop.f32.mrf.mxu0
        %7480 = vmatprep.mubr.f32.mxu0 0.0
        %7481 = vmatmul.mubr.f32.gmra.mxu0 %v7357
        %v7482 = vpop.f32.mrf.mxu0
        %v7483 = vadd.f32 0.0, %v7482
        %v7484 = vpop.f32.mrf.mxu0
        %7485 = vmatprep.mubr.f32.mxu0 0.0
        %7486 = vmatmul.mubr.f32.gmra.mxu0 %v7360
        %v7487 = vpop.f32.mrf.mxu0
        %v7488 = vadd.f32 0.0, %v7487
        %v7489 = vpop.f32.mrf.mxu0
        %7490 = vdwg.mxu0
        %v7491 = vmul.f32 %v7453, 0.35355338
        %v7492 = vmul.f32 %v7458, 0.35355338
        %v7493 = vmul.f32 %v7463, 0.35355338
        %v7494 = vmul.f32 %v7468, 0.35355338
        %v7495 = vmul.f32 %v7473, 0.35355338
        %v7496 = vmul.f32 %v7478, 0.35355338
        %v7497 = vmul.f32 %v7483, 0.35355338
        %v7498 = vmul.f32 %v7488, 0.35355338
        %v7499 = vsel %vm1421, %v7491, -inf
        %7500 = vmax.xlane.f32.xlu0 %v7499
        %v7501 = vpop.xlane.xlu0 %7500
        %v7502 = vsel %vm1421, %v7492, -inf
        %7503 = vmax.xlane.f32.xlu0 %v7502
        %v7504 = vpop.xlane.xlu0 %7503
        %v7505 = vsel %vm1421, %v7493, -inf
        %7506 = vmax.xlane.f32.xlu0 %v7505
        %v7507 = vpop.xlane.xlu0 %7506
        %v7508 = vsel %vm1421, %v7494, -inf
        %7509 = vmax.xlane.f32.xlu0 %v7508
        %v7510 = vpop.xlane.xlu0 %7509
        %v7511 = vsel %vm1421, %v7495, -inf
        %7512 = vmax.xlane.f32.xlu0 %v7511
        %v7513 = vpop.xlane.xlu0 %7512
        %v7514 = vsel %vm1421, %v7496, -inf
        %7515 = vmax.xlane.f32.xlu0 %v7514
        %v7516 = vpop.xlane.xlu0 %7515
        %v7517 = vsel %vm1421, %v7497, -inf
        %7518 = vmax.xlane.f32.xlu0 %v7517
        %v7519 = vpop.xlane.xlu0 %7518
        %v7520 = vsel %vm1421, %v7498, -inf
        %7521 = vmax.xlane.f32.xlu0 %v7520
        %v7522 = vpop.xlane.xlu0 %7521
        %v7523 = vsub.f32 %v7491, %v7501
        %v7524 = vsub.f32 %v7492, %v7504
        %v7525 = vsub.f32 %v7493, %v7507
        %v7526 = vsub.f32 %v7494, %v7510
        %v7527 = vsub.f32 %v7495, %v7513
        %v7528 = vsub.f32 %v7496, %v7516
        %v7529 = vsub.f32 %v7497, %v7519
        %v7530 = vsub.f32 %v7498, %v7522
        %v7531 = vmul.f32 %v7523, 1.442695
        %v7532 = vpow.pop %v7531
        %v7533 = vmul.f32 %v7524, 1.442695
        %v7534 = vpow.pop %v7533
        %v7535 = vmul.f32 %v7525, 1.442695
        %v7536 = vpow.pop %v7535
        %v7537 = vmul.f32 %v7526, 1.442695
        %v7538 = vpow.pop %v7537
        %v7539 = vmul.f32 %v7527, 1.442695
        %v7540 = vpow.pop %v7539
        %v7541 = vmul.f32 %v7528, 1.442695
        %v7542 = vpow.pop %v7541
        %v7543 = vmul.f32 %v7529, 1.442695
        %v7544 = vpow.pop %v7543
        %v7545 = vmul.f32 %v7530, 1.442695
        %v7546 = vpow.pop %v7545
        %v7547 = vsel %vm1421, %v7532, 0.0
        %7548 = vadd.xlane.f32.xlu0 %v7547
        %v7549 = vpop.xlane.xlu0 %7548
        %v7550 = vsel %vm1421, %v7534, 0.0
        %7551 = vadd.xlane.f32.xlu0 %v7550
        %v7552 = vpop.xlane.xlu0 %7551
        %v7553 = vsel %vm1421, %v7536, 0.0
        %7554 = vadd.xlane.f32.xlu0 %v7553
        %v7555 = vpop.xlane.xlu0 %7554
        %v7556 = vsel %vm1421, %v7538, 0.0
        %7557 = vadd.xlane.f32.xlu0 %v7556
        %v7558 = vpop.xlane.xlu0 %7557
        %v7559 = vsel %vm1421, %v7540, 0.0
        %7560 = vadd.xlane.f32.xlu0 %v7559
        %v7561 = vpop.xlane.xlu0 %7560
        %v7562 = vsel %vm1421, %v7542, 0.0
        %7563 = vadd.xlane.f32.xlu0 %v7562
        %v7564 = vpop.xlane.xlu0 %7563
        %v7565 = vsel %vm1421, %v7544, 0.0
        %7566 = vadd.xlane.f32.xlu0 %v7565
        %v7567 = vpop.xlane.xlu0 %7566
        %v7568 = vsel %vm1421, %v7546, 0.0
        %7569 = vadd.xlane.f32.xlu0 %v7568
        %v7570 = vpop.xlane.xlu0 %7569
        %v7571 = vrcp.pop %v7549
        %v7572 = vrcp.pop %v7552
        %v7573 = vrcp.pop %v7555
        %v7574 = vrcp.pop %v7558
        %v7575 = vrcp.pop %v7561
        %v7576 = vrcp.pop %v7564
        %v7577 = vrcp.pop %v7567
        %v7578 = vrcp.pop %v7570
        %v7579 = vmul.f32 %v7532, %v7571
        %v7580 = vmul.f32 %v7534, %v7572
        %v7581 = vmul.f32 %v7536, %v7573
        %v7582 = vmul.f32 %v7538, %v7574
        %v7583 = vmul.f32 %v7540, %v7575
        %v7584 = vmul.f32 %v7542, %v7576
        %v7585 = vmul.f32 %v7544, %v7577
        %v7586 = vmul.f32 %v7546, %v7578
        %v7588 = vsel %vm1421, %v7579, 0
        %v7591 = vsel %vm1421, %v7580, 0
        %v7594 = vsel %vm1421, %v7581, 0
        %v7597 = vsel %vm1421, %v7582, 0
        %v7600 = vsel %vm1421, %v7583, 0
        %v7603 = vsel %vm1421, %v7584, 0
        %v7606 = vsel %vm1421, %v7585, 0
        %v7609 = vsel %vm1421, %v7586, 0
        %7611 = vmatprep.subr.mxu0 0.0
        %7612 = vmatpush1.msra.mxu0 0.0
        %7613 = vmatprep.subr.mxu0 0.0
        %7614 = vmatpush1.msra.mxu0 0.0
        %7615 = vmatprep.subr.mxu0 0.0
        %7616 = vmatpush1.msra.mxu0 0.0
        %7617 = vmatprep.subr.mxu0 0.0
        %7618 = vmatpush1.msra.mxu0 0.0
        %7619 = vmatprep.subr.mxu0 0.0
        %7620 = vmatpush1.msra.mxu0 0.0
        %7621 = vmatprep.subr.mxu0 0.0
        %7622 = vmatpush1.msra.mxu0 0.0
        %7623 = vmatprep.subr.mxu0 0.0
        %7624 = vmatpush1.msra.mxu0 0.0
        %7625 = vmatprep.subr.mxu0 0.0
        %7626 = vmatpush1.msra.mxu0 0.0
        %7627 = vmatprep.subr.mxu0 0.0
        %7628 = vmatpush1.msra.mxu0 %v7335
        %7629 = vmatprep.subr.mxu0 0.0
        %7630 = vmatpush1.msra.mxu0 %v7330
        %7631 = vmatprep.subr.mxu0 0.0
        %7632 = vmatpush1.msra.mxu0 %v7325
        %7633 = vmatprep.subr.mxu0 0.0
        %7634 = vmatpush1.msra.mxu0 %v7320
        %7635 = vmatprep.subr.mxu0 0.0
        %7636 = vmatpush1.msra.mxu0 %v7315
        %7637 = vmatprep.subr.mxu0 0.0
        %7638 = vmatpush1.msra.mxu0 %v7310
        %7639 = vmatprep.subr.mxu0 0.0
        %7640 = vmatpush1.msra.mxu0 %v7305
        %7641 = vmatprep.subr.mxu0 0.0
        %7642 = vmatpush1.msra.mxu0 %v7300
        %7643 = vmatprep.subr.mxu0 0.0
        %7644 = vmatpush2.msra.mxu0 0.0
        %7645 = vmatprep.subr.mxu0 0.0
        %7646 = vmatpush2.msra.mxu0 0.0
        %7647 = vmatprep.subr.mxu0 0.0
        %7648 = vmatpush2.msra.mxu0 0.0
        %7649 = vmatprep.subr.mxu0 0.0
        %7650 = vmatpush2.msra.mxu0 0.0
        %7651 = vmatprep.subr.mxu0 0.0
        %7652 = vmatpush2.msra.mxu0 0.0
        %7653 = vmatprep.subr.mxu0 0.0
        %7654 = vmatpush2.msra.mxu0 0.0
        %7655 = vmatprep.subr.mxu0 0.0
        %7656 = vmatpush2.msra.mxu0 0.0
        %7657 = vmatprep.subr.mxu0 0.0
        %7658 = vmatpush2.msra.mxu0 0.0
        %7659 = vmatprep.subr.mxu0 0.0
        %7660 = vmatpush2.msra.mxu0 0.0
        %7661 = vmatprep.subr.mxu0 0.0
        %7662 = vmatpush2.msra.mxu0 0.0
        %7663 = vmatprep.subr.mxu0 0.0
        %7664 = vmatpush2.msra.mxu0 0.0
        %7665 = vmatprep.subr.mxu0 0.0
        %7666 = vmatpush2.msra.mxu0 0.0
        %7667 = vmatprep.subr.mxu0 0.0
        %7668 = vmatpush2.msra.mxu0 0.0
        %7669 = vmatprep.subr.mxu0 0.0
        %7670 = vmatpush2.msra.mxu0 0.0
        %7671 = vmatprep.subr.mxu0 0.0
        %7672 = vmatpush2.msra.mxu0 0.0
        %7673 = vmatprep.subr.mxu0 0.0
        %7674 = vmatpush2.msra.mxu0 0.0
        %7675 = vmatprep.mubr.f32.mxu0 0.0
        %7676 = vmatmul.mubr.f32.gmra.mxu0 %v7588
        %v7677 = vpop.f32.mrf.mxu0
        %v7678 = vadd.f32 0.0, %v7677
        %v7679 = vpop.f32.mrf.mxu0
        %7680 = vmatprep.mubr.f32.mxu0 0.0
        %7681 = vmatmul.mubr.f32.gmra.mxu0 %v7591
        %v7682 = vpop.f32.mrf.mxu0
        %v7683 = vadd.f32 0.0, %v7682
        %v7684 = vpop.f32.mrf.mxu0
        %7685 = vmatprep.mubr.f32.mxu0 0.0
        %7686 = vmatmul.mubr.f32.gmra.mxu0 %v7594
        %v7687 = vpop.f32.mrf.mxu0
        %v7688 = vadd.f32 0.0, %v7687
        %v7689 = vpop.f32.mrf.mxu0
        %7690 = vmatprep.mubr.f32.mxu0 0.0
        %7691 = vmatmul.mubr.f32.gmra.mxu0 %v7597
        %v7692 = vpop.f32.mrf.mxu0
        %v7693 = vadd.f32 0.0, %v7692
        %v7694 = vpop.f32.mrf.mxu0
        %7695 = vmatprep.mubr.f32.mxu0 0.0
        %7696 = vmatmul.mubr.f32.gmra.mxu0 %v7600
        %v7697 = vpop.f32.mrf.mxu0
        %v7698 = vadd.f32 0.0, %v7697
        %v7699 = vpop.f32.mrf.mxu0
        %7700 = vmatprep.mubr.f32.mxu0 0.0
        %7701 = vmatmul.mubr.f32.gmra.mxu0 %v7603
        %v7702 = vpop.f32.mrf.mxu0
        %v7703 = vadd.f32 0.0, %v7702
        %v7704 = vpop.f32.mrf.mxu0
        %7705 = vmatprep.mubr.f32.mxu0 0.0
        %7706 = vmatmul.mubr.f32.gmra.mxu0 %v7606
        %v7707 = vpop.f32.mrf.mxu0
        %v7708 = vadd.f32 0.0, %v7707
        %v7709 = vpop.f32.mrf.mxu0
        %7710 = vmatprep.mubr.f32.mxu0 0.0
        %7711 = vmatmul.mubr.f32.gmra.mxu0 %v7609
        %v7712 = vpop.f32.mrf.mxu0
        %v7713 = vadd.f32 0.0, %v7712
        %v7714 = vpop.f32.mrf.mxu0
        %7715 = vdwg.mxu0
        %s7716 = scalar_lea.vmem %s6, 56
        %v7717 = vld [vmem:[%s7716] sm:$0xff]
        %v7719 = vsel %vm1259, %v7678, 0
        %v7722 = vsel %vm1259, %v7683, 0
        %v7725 = vsel %vm1259, %v7688, 0
        %v7728 = vsel %vm1259, %v7693, 0
        %v7731 = vsel %vm1259, %v7698, 0
        %v7734 = vsel %vm1259, %v7703, 0
        %v7737 = vsel %vm1259, %v7708, 0
        %v7740 = vsel %vm1259, %v7713, 0
        %7742 = vmatprep.subr.mxu0 0.0
        %7743 = vmatpush1.msra.mxu0 0.0
        %7744 = vmatprep.subr.mxu0 0.0
        %7745 = vmatpush1.msra.mxu0 0.0
        %7746 = vmatprep.subr.mxu0 0.0
        %7747 = vmatpush1.msra.mxu0 0.0
        %7748 = vmatprep.subr.mxu0 0.0
        %7749 = vmatpush1.msra.mxu0 0.0
        %7750 = vmatprep.subr.mxu0 0.0
        %7751 = vmatpush1.msra.mxu0 0.0
        %7752 = vmatprep.subr.mxu0 0.0
        %7753 = vmatpush1.msra.mxu0 0.0
        %7754 = vmatprep.subr.mxu0 0.0
        %7755 = vmatpush1.msra.mxu0 0.0
        %7756 = vmatprep.subr.mxu0 0.0
        %7757 = vmatpush1.msra.mxu0 0.0
        %7758 = vmatprep.subr.mxu0 0.0
        %7759 = vmatpush1.msra.mxu0 0.0
        %7760 = vmatprep.subr.mxu0 0.0
        %7761 = vmatpush1.msra.mxu0 0.0
        %7762 = vmatprep.subr.mxu0 0.0
        %7763 = vmatpush1.msra.mxu0 0.0
        %7764 = vmatprep.subr.mxu0 0.0
        %7765 = vmatpush1.msra.mxu0 0.0
        %7766 = vmatprep.subr.mxu0 0.0
        %7767 = vmatpush1.msra.mxu0 0.0
        %7768 = vmatprep.subr.mxu0 0.0
        %7769 = vmatpush1.msra.mxu0 0.0
        %7770 = vmatprep.subr.mxu0 0.0
        %7771 = vmatpush1.msra.mxu0 0.0
        %7772 = vmatprep.subr.mxu0 0.0
        %7773 = vmatpush1.msra.mxu0 %v7717
        %7774 = vmatprep.subr.mxu0 0.0
        %7775 = vmatpush2.msra.mxu0 0.0
        %7776 = vmatprep.subr.mxu0 0.0
        %7777 = vmatpush2.msra.mxu0 0.0
        %7778 = vmatprep.subr.mxu0 0.0
        %7779 = vmatpush2.msra.mxu0 0.0
        %7780 = vmatprep.subr.mxu0 0.0
        %7781 = vmatpush2.msra.mxu0 0.0
        %7782 = vmatprep.subr.mxu0 0.0
        %7783 = vmatpush2.msra.mxu0 0.0
        %7784 = vmatprep.subr.mxu0 0.0
        %7785 = vmatpush2.msra.mxu0 0.0
        %7786 = vmatprep.subr.mxu0 0.0
        %7787 = vmatpush2.msra.mxu0 0.0
        %7788 = vmatprep.subr.mxu0 0.0
        %7789 = vmatpush2.msra.mxu0 0.0
        %7790 = vmatprep.subr.mxu0 0.0
        %7791 = vmatpush2.msra.mxu0 0.0
        %7792 = vmatprep.subr.mxu0 0.0
        %7793 = vmatpush2.msra.mxu0 0.0
        %7794 = vmatprep.subr.mxu0 0.0
        %7795 = vmatpush2.msra.mxu0 0.0
        %7796 = vmatprep.subr.mxu0 0.0
        %7797 = vmatpush2.msra.mxu0 0.0
        %7798 = vmatprep.subr.mxu0 0.0
        %7799 = vmatpush2.msra.mxu0 0.0
        %7800 = vmatprep.subr.mxu0 0.0
        %7801 = vmatpush2.msra.mxu0 0.0
        %7802 = vmatprep.subr.mxu0 0.0
        %7803 = vmatpush2.msra.mxu0 0.0
        %7804 = vmatprep.subr.mxu0 0.0
        %7805 = vmatpush2.msra.mxu0 0.0
        %7806 = vmatprep.mubr.f32.mxu0 0.0
        %7807 = vmatmul.mubr.f32.gmra.mxu0 %v7719
        %v7808 = vpop.f32.mrf.mxu0
        %v7809 = vadd.f32 0.0, %v7808
        %v7810 = vpop.f32.mrf.mxu0
        %7811 = vmatprep.mubr.f32.mxu0 0.0
        %7812 = vmatmul.mubr.f32.gmra.mxu0 %v7722
        %v7813 = vpop.f32.mrf.mxu0
        %v7814 = vadd.f32 0.0, %v7813
        %v7815 = vpop.f32.mrf.mxu0
        %7816 = vmatprep.mubr.f32.mxu0 0.0
        %7817 = vmatmul.mubr.f32.gmra.mxu0 %v7725
        %v7818 = vpop.f32.mrf.mxu0
        %v7819 = vadd.f32 0.0, %v7818
        %v7820 = vpop.f32.mrf.mxu0
        %7821 = vmatprep.mubr.f32.mxu0 0.0
        %7822 = vmatmul.mubr.f32.gmra.mxu0 %v7728
        %v7823 = vpop.f32.mrf.mxu0
        %v7824 = vadd.f32 0.0, %v7823
        %v7825 = vpop.f32.mrf.mxu0
        %7826 = vmatprep.mubr.f32.mxu0 0.0
        %7827 = vmatmul.mubr.f32.gmra.mxu0 %v7731
        %v7828 = vpop.f32.mrf.mxu0
        %v7829 = vadd.f32 0.0, %v7828
        %v7830 = vpop.f32.mrf.mxu0
        %7831 = vmatprep.mubr.f32.mxu0 0.0
        %7832 = vmatmul.mubr.f32.gmra.mxu0 %v7734
        %v7833 = vpop.f32.mrf.mxu0
        %v7834 = vadd.f32 0.0, %v7833
        %v7835 = vpop.f32.mrf.mxu0
        %7836 = vmatprep.mubr.f32.mxu0 0.0
        %7837 = vmatmul.mubr.f32.gmra.mxu0 %v7737
        %v7838 = vpop.f32.mrf.mxu0
        %v7839 = vadd.f32 0.0, %v7838
        %v7840 = vpop.f32.mrf.mxu0
        %7841 = vmatprep.mubr.f32.mxu0 0.0
        %7842 = vmatmul.mubr.f32.gmra.mxu0 %v7740
        %v7843 = vpop.f32.mrf.mxu0
        %v7844 = vadd.f32 0.0, %v7843
        %v7845 = vpop.f32.mrf.mxu0
        %7846 = vdwg.mxu0
        %v7847 = vadd.f32 %v6976, %v7809
        %v7848 = vadd.f32 %v6977, %v7814
        %v7849 = vadd.f32 %v6978, %v7819
        %v7850 = vadd.f32 %v6979, %v7824
        %v7851 = vadd.f32 %v6980, %v7829
        %v7852 = vadd.f32 %v6981, %v7834
        %v7853 = vadd.f32 %v6982, %v7839
        %v7854 = vadd.f32 %v6983, %v7844
        %s7855 = scalar_lea.vmem %s7, 1
        %v7856 = vld [vmem:[%s7855] sm:$0x1]
        %v7858 = vlaneseq
        %v7859 = vshrl.u32 %v7858, 7
        %v7860 = vsub.s32 0, %v7859
        %v7861 = vrot.slane %v7856, %v7860
        %v7863 = vadd.f32 %v7847, %v7861
        %v7864 = vadd.f32 %v7848, %v7861
        %v7865 = vadd.f32 %v7849, %v7861
        %v7866 = vadd.f32 %v7850, %v7861
        %v7867 = vadd.f32 %v7851, %v7861
        %v7868 = vadd.f32 %v7852, %v7861
        %v7869 = vadd.f32 %v7853, %v7861
        %v7870 = vadd.f32 %v7854, %v7861
        %s7871 = sld [smem:[#allocation2]]
        %s7872 = sld [smem:[#allocation2 + $0x1]]
        %s7873 = sld [smem:[#allocation2 + $0x2]]
        %s7874 = sld [smem:[#allocation2 + $0x3]]
        %v7875 = vstv %s7871
        %v7876 = vmul.f32 %v7875, %v569
        %v7877 = vmul.f32 %v7875, %v570
        %v7878 = vmul.f32 %v7875, %v571
        %v7879 = vmul.f32 %v7875, %v572
        %v7880 = vmul.f32 %v7875, %v573
        %v7881 = vmul.f32 %v7875, %v574
        %v7882 = vmul.f32 %v7875, %v575
        %v7883 = vmul.f32 %v7875, %v576
        %v7884 = vstv %s7872
        %v7885 = vmul.f32 %v7884, %v4381
        %v7886 = vmul.f32 %v7884, %v4382
        %v7887 = vmul.f32 %v7884, %v4383
        %v7888 = vmul.f32 %v7884, %v4384
        %v7889 = vmul.f32 %v7884, %v4385
        %v7890 = vmul.f32 %v7884, %v4386
        %v7891 = vmul.f32 %v7884, %v4387
        %v7892 = vmul.f32 %v7884, %v4388
        %v7893 = vadd.f32 %v7876, %v7885
        %v7894 = vadd.f32 %v7877, %v7886
        %v7895 = vadd.f32 %v7878, %v7887
        %v7896 = vadd.f32 %v7879, %v7888
        %v7897 = vadd.f32 %v7880, %v7889
        %v7898 = vadd.f32 %v7881, %v7890
        %v7899 = vadd.f32 %v7882, %v7891
        %v7900 = vadd.f32 %v7883, %v7892
        %v7901 = vld [vmem:[%s8] sm:$0x1]
        %v7902 = vld [vmem:[%s9] sm:$0x1]
        %v7903 = vsel %vm587, %v7893, 0.0
        %7904 = vadd.xlane.f32.xlu0 %v7903
        %v7905 = vpop.xlane.xlu0 %7904
        %v7906 = vsel %vm587, %v7894, 0.0
        %7907 = vadd.xlane.f32.xlu0 %v7906
        %v7908 = vpop.xlane.xlu0 %7907
        %v7909 = vsel %vm587, %v7895, 0.0
        %7910 = vadd.xlane.f32.xlu0 %v7909
        %v7911 = vpop.xlane.xlu0 %7910
        %v7912 = vsel %vm587, %v7896, 0.0
        %7913 = vadd.xlane.f32.xlu0 %v7912
        %v7914 = vpop.xlane.xlu0 %7913
        %v7915 = vsel %vm587, %v7897, 0.0
        %7916 = vadd.xlane.f32.xlu0 %v7915
        %v7917 = vpop.xlane.xlu0 %7916
        %v7918 = vsel %vm587, %v7898, 0.0
        %7919 = vadd.xlane.f32.xlu0 %v7918
        %v7920 = vpop.xlane.xlu0 %7919
        %v7921 = vsel %vm587, %v7899, 0.0
        %7922 = vadd.xlane.f32.xlu0 %v7921
        %v7923 = vpop.xlane.xlu0 %7922
        %v7924 = vsel %vm587, %v7900, 0.0
        %7925 = vadd.xlane.f32.xlu0 %v7924
        %v7926 = vpop.xlane.xlu0 %7925
        %v7927 = vmul.f32 %v7905, %v612
        %v7928 = vmul.f32 %v7908, %v612
        %v7929 = vmul.f32 %v7911, %v612
        %v7930 = vmul.f32 %v7914, %v612
        %v7931 = vmul.f32 %v7917, %v612
        %v7932 = vmul.f32 %v7920, %v612
        %v7933 = vmul.f32 %v7923, %v612
        %v7934 = vmul.f32 %v7926, %v612
        %v7935 = vsub.f32 %v7893, %v7927
        %v7936 = vsub.f32 %v7894, %v7928
        %v7937 = vsub.f32 %v7895, %v7929
        %v7938 = vsub.f32 %v7896, %v7930
        %v7939 = vsub.f32 %v7897, %v7931
        %v7940 = vsub.f32 %v7898, %v7932
        %v7941 = vsub.f32 %v7899, %v7933
        %v7942 = vsub.f32 %v7900, %v7934
        %v7943 = vmul.f32 %v7935, %v7935
        %v7944 = vmul.f32 %v7936, %v7936
        %v7945 = vmul.f32 %v7937, %v7937
        %v7946 = vmul.f32 %v7938, %v7938
        %v7947 = vmul.f32 %v7939, %v7939
        %v7948 = vmul.f32 %v7940, %v7940
        %v7949 = vmul.f32 %v7941, %v7941
        %v7950 = vmul.f32 %v7942, %v7942
        %v7951 = vsel %vm587, %v7943, 0.0
        %7952 = vadd.xlane.f32.xlu0 %v7951
        %v7953 = vpop.xlane.xlu0 %7952
        %v7954 = vsel %vm587, %v7944, 0.0
        %7955 = vadd.xlane.f32.xlu0 %v7954
        %v7956 = vpop.xlane.xlu0 %7955
        %v7957 = vsel %vm587, %v7945, 0.0
        %7958 = vadd.xlane.f32.xlu0 %v7957
        %v7959 = vpop.xlane.xlu0 %7958
        %v7960 = vsel %vm587, %v7946, 0.0
        %7961 = vadd.xlane.f32.xlu0 %v7960
        %v7962 = vpop.xlane.xlu0 %7961
        %v7963 = vsel %vm587, %v7947, 0.0
        %7964 = vadd.xlane.f32.xlu0 %v7963
        %v7965 = vpop.xlane.xlu0 %7964
        %v7966 = vsel %vm587, %v7948, 0.0
        %7967 = vadd.xlane.f32.xlu0 %v7966
        %v7968 = vpop.xlane.xlu0 %7967
        %v7969 = vsel %vm587, %v7949, 0.0
        %7970 = vadd.xlane.f32.xlu0 %v7969
        %v7971 = vpop.xlane.xlu0 %7970
        %v7972 = vsel %vm587, %v7950, 0.0
        %7973 = vadd.xlane.f32.xlu0 %v7972
        %v7974 = vpop.xlane.xlu0 %7973
        %v7975 = vmul.f32 %v7953, %v612
        %v7976 = vmul.f32 %v7956, %v612
        %v7977 = vmul.f32 %v7959, %v612
        %v7978 = vmul.f32 %v7962, %v612
        %v7979 = vmul.f32 %v7965, %v612
        %v7980 = vmul.f32 %v7968, %v612
        %v7981 = vmul.f32 %v7971, %v612
        %v7982 = vmul.f32 %v7974, %v612
        %v7983 = vadd.f32 %v7975, 1e-05
        %v7984 = vadd.f32 %v7976, 1e-05
        %v7985 = vadd.f32 %v7977, 1e-05
        %v7986 = vadd.f32 %v7978, 1e-05
        %v7987 = vadd.f32 %v7979, 1e-05
        %v7988 = vadd.f32 %v7980, 1e-05
        %v7989 = vadd.f32 %v7981, 1e-05
        %v7990 = vadd.f32 %v7982, 1e-05
        %v7991 = vrsqrt.pop %v7983
        %v7992 = vrsqrt.pop %v7984
        %v7993 = vrsqrt.pop %v7985
        %v7994 = vrsqrt.pop %v7986
        %v7995 = vrsqrt.pop %v7987
        %v7996 = vrsqrt.pop %v7988
        %v7997 = vrsqrt.pop %v7989
        %v7998 = vrsqrt.pop %v7990
        %v7999 = vmul.f32 %v7935, %v7991
        %v8000 = vmul.f32 %v7936, %v7992
        %v8001 = vmul.f32 %v7937, %v7993
        %v8002 = vmul.f32 %v7938, %v7994
        %v8003 = vmul.f32 %v7939, %v7995
        %v8004 = vmul.f32 %v7940, %v7996
        %v8005 = vmul.f32 %v7941, %v7997
        %v8006 = vmul.f32 %v7942, %v7998
        %v8008 = vlaneseq
        %v8009 = vshrl.u32 %v8008, 7
        %v8010 = vsub.s32 0, %v8009
        %v8011 = vrot.slane %v7901, %v8010
        %v8013 = vmul.f32 %v7999, %v8011
        %v8014 = vmul.f32 %v8000, %v8011
        %v8015 = vmul.f32 %v8001, %v8011
        %v8016 = vmul.f32 %v8002, %v8011
        %v8017 = vmul.f32 %v8003, %v8011
        %v8018 = vmul.f32 %v8004, %v8011
        %v8019 = vmul.f32 %v8005, %v8011
        %v8020 = vmul.f32 %v8006, %v8011
        %v8022 = vlaneseq
        %v8023 = vshrl.u32 %v8022, 7
        %v8024 = vsub.s32 0, %v8023
        %v8025 = vrot.slane %v7902, %v8024
        %v8027 = vadd.f32 %v8013, %v8025
        %v8028 = vadd.f32 %v8014, %v8025
        %v8029 = vadd.f32 %v8015, %v8025
        %v8030 = vadd.f32 %v8016, %v8025
        %v8031 = vadd.f32 %v8017, %v8025
        %v8032 = vadd.f32 %v8018, %v8025
        %v8033 = vadd.f32 %v8019, %v8025
        %v8034 = vadd.f32 %v8020, %v8025
        %v8035 = vld [vmem:[%s10] sm:$0xff]
        %v8036 = vld [vmem:[%s10 + $0x8] sm:$0xff]
        %v8037 = vld [vmem:[%s10 + $0x10] sm:$0xff]
        %v8038 = vld [vmem:[%s10 + $0x18] sm:$0xff]
        %v8039 = vld [vmem:[%s11] sm:$0x1]
        %v8041 = vlaneseq
        %v8042 = vshrl.u32 %v8041, 7
        %v8043 = vsub.s32 0, %v8042
        %v8044 = vrot.slane %v8039, %v8043
        %v8047 = vsel %vm587, %v8027, 0
        %v8050 = vsel %vm587, %v8028, 0
        %v8053 = vsel %vm587, %v8029, 0
        %v8056 = vsel %vm587, %v8030, 0
        %v8059 = vsel %vm587, %v8031, 0
        %v8062 = vsel %vm587, %v8032, 0
        %v8065 = vsel %vm587, %v8033, 0
        %v8068 = vsel %vm587, %v8034, 0
        %8070 = vmatprep.subr.mxu0 0.0
        %8071 = vmatpush1.msra.mxu0 0.0
        %8072 = vmatprep.subr.mxu0 0.0
        %8073 = vmatpush1.msra.mxu0 0.0
        %8074 = vmatprep.subr.mxu0 0.0
        %8075 = vmatpush1.msra.mxu0 0.0
        %8076 = vmatprep.subr.mxu0 0.0
        %8077 = vmatpush1.msra.mxu0 0.0
        %8078 = vmatprep.subr.mxu0 0.0
        %8079 = vmatpush1.msra.mxu0 0.0
        %8080 = vmatprep.subr.mxu0 0.0
        %8081 = vmatpush1.msra.mxu0 0.0
        %8082 = vmatprep.subr.mxu0 0.0
        %8083 = vmatpush1.msra.mxu0 0.0
        %8084 = vmatprep.subr.mxu0 0.0
        %8085 = vmatpush1.msra.mxu0 0.0
        %8086 = vmatprep.subr.mxu0 0.0
        %8087 = vmatpush1.msra.mxu0 0.0
        %8088 = vmatprep.subr.mxu0 0.0
        %8089 = vmatpush1.msra.mxu0 0.0
        %8090 = vmatprep.subr.mxu0 0.0
        %8091 = vmatpush1.msra.mxu0 0.0
        %8092 = vmatprep.subr.mxu0 0.0
        %8093 = vmatpush1.msra.mxu0 0.0
        %8094 = vmatprep.subr.mxu0 0.0
        %8095 = vmatpush1.msra.mxu0 %v8038
        %8096 = vmatprep.subr.mxu0 0.0
        %8097 = vmatpush1.msra.mxu0 %v8037
        %8098 = vmatprep.subr.mxu0 0.0
        %8099 = vmatpush1.msra.mxu0 %v8036
        %8100 = vmatprep.subr.mxu0 0.0
        %8101 = vmatpush1.msra.mxu0 %v8035
        %8102 = vmatprep.subr.mxu0 0.0
        %8103 = vmatpush2.msra.mxu0 0.0
        %8104 = vmatprep.subr.mxu0 0.0
        %8105 = vmatpush2.msra.mxu0 0.0
        %8106 = vmatprep.subr.mxu0 0.0
        %8107 = vmatpush2.msra.mxu0 0.0
        %8108 = vmatprep.subr.mxu0 0.0
        %8109 = vmatpush2.msra.mxu0 0.0
        %8110 = vmatprep.subr.mxu0 0.0
        %8111 = vmatpush2.msra.mxu0 0.0
        %8112 = vmatprep.subr.mxu0 0.0
        %8113 = vmatpush2.msra.mxu0 0.0
        %8114 = vmatprep.subr.mxu0 0.0
        %8115 = vmatpush2.msra.mxu0 0.0
        %8116 = vmatprep.subr.mxu0 0.0
        %8117 = vmatpush2.msra.mxu0 0.0
        %8118 = vmatprep.subr.mxu0 0.0
        %8119 = vmatpush2.msra.mxu0 0.0
        %8120 = vmatprep.subr.mxu0 0.0
        %8121 = vmatpush2.msra.mxu0 0.0
        %8122 = vmatprep.subr.mxu0 0.0
        %8123 = vmatpush2.msra.mxu0 0.0
        %8124 = vmatprep.subr.mxu0 0.0
        %8125 = vmatpush2.msra.mxu0 0.0
        %8126 = vmatprep.subr.mxu0 0.0
        %8127 = vmatpush2.msra.mxu0 0.0
        %8128 = vmatprep.subr.mxu0 0.0
        %8129 = vmatpush2.msra.mxu0 0.0
        %8130 = vmatprep.subr.mxu0 0.0
        %8131 = vmatpush2.msra.mxu0 0.0
        %8132 = vmatprep.subr.mxu0 0.0
        %8133 = vmatpush2.msra.mxu0 0.0
        %8134 = vmatprep.mubr.f32.mxu0 0.0
        %8135 = vmatmul.mubr.f32.gmra.mxu0 %v8047
        %v8136 = vpop.f32.mrf.mxu0
        %v8137 = vadd.f32 %v8044, %v8136
        %v8138 = vpop.f32.mrf.mxu0
        %8139 = vmatprep.mubr.f32.mxu0 0.0
        %8140 = vmatmul.mubr.f32.gmra.mxu0 %v8050
        %v8141 = vpop.f32.mrf.mxu0
        %v8142 = vadd.f32 %v8044, %v8141
        %v8143 = vpop.f32.mrf.mxu0
        %8144 = vmatprep.mubr.f32.mxu0 0.0
        %8145 = vmatmul.mubr.f32.gmra.mxu0 %v8053
        %v8146 = vpop.f32.mrf.mxu0
        %v8147 = vadd.f32 %v8044, %v8146
        %v8148 = vpop.f32.mrf.mxu0
        %8149 = vmatprep.mubr.f32.mxu0 0.0
        %8150 = vmatmul.mubr.f32.gmra.mxu0 %v8056
        %v8151 = vpop.f32.mrf.mxu0
        %v8152 = vadd.f32 %v8044, %v8151
        %v8153 = vpop.f32.mrf.mxu0
        %8154 = vmatprep.mubr.f32.mxu0 0.0
        %8155 = vmatmul.mubr.f32.gmra.mxu0 %v8059
        %v8156 = vpop.f32.mrf.mxu0
        %v8157 = vadd.f32 %v8044, %v8156
        %v8158 = vpop.f32.mrf.mxu0
        %8159 = vmatprep.mubr.f32.mxu0 0.0
        %8160 = vmatmul.mubr.f32.gmra.mxu0 %v8062
        %v8161 = vpop.f32.mrf.mxu0
        %v8162 = vadd.f32 %v8044, %v8161
        %v8163 = vpop.f32.mrf.mxu0
        %8164 = vmatprep.mubr.f32.mxu0 0.0
        %8165 = vmatmul.mubr.f32.gmra.mxu0 %v8065
        %v8166 = vpop.f32.mrf.mxu0
        %v8167 = vadd.f32 %v8044, %v8166
        %v8168 = vpop.f32.mrf.mxu0
        %8169 = vmatprep.mubr.f32.mxu0 0.0
        %8170 = vmatmul.mubr.f32.gmra.mxu0 %v8068
        %v8171 = vpop.f32.mrf.mxu0
        %v8172 = vadd.f32 %v8044, %v8171
        %v8173 = vpop.f32.mrf.mxu0
        %8174 = vdwg.mxu0
        %v8175 = vmul.f32 %v8137, 0.5
        %v8176 = vmul.f32 %v8142, 0.5
        %v8177 = vmul.f32 %v8147, 0.5
        %v8178 = vmul.f32 %v8152, 0.5
        %v8179 = vmul.f32 %v8157, 0.5
        %v8180 = vmul.f32 %v8162, 0.5
        %v8181 = vmul.f32 %v8167, 0.5
        %v8182 = vmul.f32 %v8172, 0.5
        %v8183 = vmul.f32 %v8137, 0.044715
        %v8184 = vmul.f32 %v8142, 0.044715
        %v8185 = vmul.f32 %v8147, 0.044715
        %v8186 = vmul.f32 %v8152, 0.044715
        %v8187 = vmul.f32 %v8157, 0.044715
        %v8188 = vmul.f32 %v8162, 0.044715
        %v8189 = vmul.f32 %v8167, 0.044715
        %v8190 = vmul.f32 %v8172, 0.044715
        %v8191 = vmul.f32 %v8183, %v8137
        %v8192 = vmul.f32 %v8184, %v8142
        %v8193 = vmul.f32 %v8185, %v8147
        %v8194 = vmul.f32 %v8186, %v8152
        %v8195 = vmul.f32 %v8187, %v8157
        %v8196 = vmul.f32 %v8188, %v8162
        %v8197 = vmul.f32 %v8189, %v8167
        %v8198 = vmul.f32 %v8190, %v8172
        %v8199 = vmul.f32 %v8191, %v8137
        %v8200 = vmul.f32 %v8192, %v8142
        %v8201 = vmul.f32 %v8193, %v8147
        %v8202 = vmul.f32 %v8194, %v8152
        %v8203 = vmul.f32 %v8195, %v8157
        %v8204 = vmul.f32 %v8196, %v8162
        %v8205 = vmul.f32 %v8197, %v8167
        %v8206 = vmul.f32 %v8198, %v8172
        %v8207 = vadd.f32 %v8137, %v8199
        %v8208 = vadd.f32 %v8142, %v8200
        %v8209 = vadd.f32 %v8147, %v8201
        %v8210 = vadd.f32 %v8152, %v8202
        %v8211 = vadd.f32 %v8157, %v8203
        %v8212 = vadd.f32 %v8162, %v8204
        %v8213 = vadd.f32 %v8167, %v8205
        %v8214 = vadd.f32 %v8172, %v8206
        %v8215 = vmul.f32 %v8207, 0.7978846
        %v8216 = vmul.f32 %v8208, 0.7978846
        %v8217 = vmul.f32 %v8209, 0.7978846
        %v8218 = vmul.f32 %v8210, 0.7978846
        %v8219 = vmul.f32 %v8211, 0.7978846
        %v8220 = vmul.f32 %v8212, 0.7978846
        %v8221 = vmul.f32 %v8213, 0.7978846
        %v8222 = vmul.f32 %v8214, 0.7978846
        %v8223 = vtanh.pop %v8215
        %v8224 = vtanh.pop %v8216
        %v8225 = vtanh.pop %v8217
        %v8226 = vtanh.pop %v8218
        %v8227 = vtanh.pop %v8219
        %v8228 = vtanh.pop %v8220
        %v8229 = vtanh.pop %v8221
        %v8230 = vtanh.pop %v8222
        %v8231 = vadd.f32 %v8223, 1.0
        %v8232 = vadd.f32 %v8224, 1.0
        %v8233 = vadd.f32 %v8225, 1.0
        %v8234 = vadd.f32 %v8226, 1.0
        %v8235 = vadd.f32 %v8227, 1.0
        %v8236 = vadd.f32 %v8228, 1.0
        %v8237 = vadd.f32 %v8229, 1.0
        %v8238 = vadd.f32 %v8230, 1.0
        %v8239 = vmul.f32 %v8175, %v8231
        %v8240 = vmul.f32 %v8176, %v8232
        %v8241 = vmul.f32 %v8177, %v8233
        %v8242 = vmul.f32 %v8178, %v8234
        %v8243 = vmul.f32 %v8179, %v8235
        %v8244 = vmul.f32 %v8180, %v8236
        %v8245 = vmul.f32 %v8181, %v8237
        %v8246 = vmul.f32 %v8182, %v8238
        %v8247 = vld [vmem:[%s12] sm:$0xff]
        %v8248 = vld [vmem:[%s12 + $0x8] sm:$0xff]
        %v8249 = vld [vmem:[%s12 + $0x10] sm:$0xff]
        %v8250 = vld [vmem:[%s12 + $0x18] sm:$0xff]
        %v8251 = vld [vmem:[%s12 + $0x20] sm:$0xff]
        %v8252 = vld [vmem:[%s12 + $0x28] sm:$0xff]
        %v8253 = vld [vmem:[%s12 + $0x30] sm:$0xff]
        %v8254 = vld [vmem:[%s12 + $0x38] sm:$0xff]
        %v8255 = vld [vmem:[%s12 + $0x40] sm:$0xff]
        %v8256 = vld [vmem:[%s12 + $0x48] sm:$0xff]
        %v8257 = vld [vmem:[%s12 + $0x50] sm:$0xff]
        %v8258 = vld [vmem:[%s12 + $0x58] sm:$0xff]
        %v8259 = vld [vmem:[%s12 + $0x60] sm:$0xff]
        %v8260 = vld [vmem:[%s12 + $0x68] sm:$0xff]
        %v8261 = vld [vmem:[%s12 + $0x70] sm:$0xff]
        %v8262 = vld [vmem:[%s12 + $0x78] sm:$0xff]
        %v8263 = vld [vmem:[%s13] sm:$0x1]
        %v8265 = vlaneseq
        %v8266 = vshrl.u32 %v8265, 7
        %v8267 = vsub.s32 0, %v8266
        %v8268 = vrot.slane %v8263, %v8267
        %8270 = vmatprep.subr.mxu0 0.0
        %8271 = vmatpush1.msra.mxu0 %v8262
        %8272 = vmatprep.subr.mxu0 0.0
        %8273 = vmatpush1.msra.mxu0 %v8261
        %8274 = vmatprep.subr.mxu0 0.0
        %8275 = vmatpush1.msra.mxu0 %v8260
        %8276 = vmatprep.subr.mxu0 0.0
        %8277 = vmatpush1.msra.mxu0 %v8259
        %8278 = vmatprep.subr.mxu0 0.0
        %8279 = vmatpush1.msra.mxu0 %v8258
        %8280 = vmatprep.subr.mxu0 0.0
        %8281 = vmatpush1.msra.mxu0 %v8257
        %8282 = vmatprep.subr.mxu0 0.0
        %8283 = vmatpush1.msra.mxu0 %v8256
        %8284 = vmatprep.subr.mxu0 0.0
        %8285 = vmatpush1.msra.mxu0 %v8255
        %8286 = vmatprep.subr.mxu0 0.0
        %8287 = vmatpush1.msra.mxu0 %v8254
        %8288 = vmatprep.subr.mxu0 0.0
        %8289 = vmatpush1.msra.mxu0 %v8253
        %8290 = vmatprep.subr.mxu0 0.0
        %8291 = vmatpush1.msra.mxu0 %v8252
        %8292 = vmatprep.subr.mxu0 0.0
        %8293 = vmatpush1.msra.mxu0 %v8251
        %8294 = vmatprep.subr.mxu0 0.0
        %8295 = vmatpush1.msra.mxu0 %v8250
        %8296 = vmatprep.subr.mxu0 0.0
        %8297 = vmatpush1.msra.mxu0 %v8249
        %8298 = vmatprep.subr.mxu0 0.0
        %8299 = vmatpush1.msra.mxu0 %v8248
        %8300 = vmatprep.subr.mxu0 0.0
        %8301 = vmatpush1.msra.mxu0 %v8247
        %8302 = vmatprep.subr.mxu0 0.0
        %8303 = vmatpush2.msra.mxu0 0.0
        %8304 = vmatprep.subr.mxu0 0.0
        %8305 = vmatpush2.msra.mxu0 0.0
        %8306 = vmatprep.subr.mxu0 0.0
        %8307 = vmatpush2.msra.mxu0 0.0
        %8308 = vmatprep.subr.mxu0 0.0
        %8309 = vmatpush2.msra.mxu0 0.0
        %8310 = vmatprep.subr.mxu0 0.0
        %8311 = vmatpush2.msra.mxu0 0.0
        %8312 = vmatprep.subr.mxu0 0.0
        %8313 = vmatpush2.msra.mxu0 0.0
        %8314 = vmatprep.subr.mxu0 0.0
        %8315 = vmatpush2.msra.mxu0 0.0
        %8316 = vmatprep.subr.mxu0 0.0
        %8317 = vmatpush2.msra.mxu0 0.0
        %8318 = vmatprep.subr.mxu0 0.0
        %8319 = vmatpush2.msra.mxu0 0.0
        %8320 = vmatprep.subr.mxu0 0.0
        %8321 = vmatpush2.msra.mxu0 0.0
        %8322 = vmatprep.subr.mxu0 0.0
        %8323 = vmatpush2.msra.mxu0 0.0
        %8324 = vmatprep.subr.mxu0 0.0
        %8325 = vmatpush2.msra.mxu0 0.0
        %8326 = vmatprep.subr.mxu0 0.0
        %8327 = vmatpush2.msra.mxu0 0.0
        %8328 = vmatprep.subr.mxu0 0.0
        %8329 = vmatpush2.msra.mxu0 0.0
        %8330 = vmatprep.subr.mxu0 0.0
        %8331 = vmatpush2.msra.mxu0 0.0
        %8332 = vmatprep.subr.mxu0 0.0
        %8333 = vmatpush2.msra.mxu0 0.0
        %8334 = vmatprep.mubr.f32.mxu0 0.0
        %8335 = vmatmul.mubr.f32.gmra.mxu0 %v8239
        %v8336 = vpop.f32.mrf.mxu0
        %v8337 = vadd.f32 %v8268, %v8336
        %v8338 = vpop.f32.mrf.mxu0
        %8339 = vmatprep.mubr.f32.mxu0 0.0
        %8340 = vmatmul.mubr.f32.gmra.mxu0 %v8240
        %v8341 = vpop.f32.mrf.mxu0
        %v8342 = vadd.f32 %v8268, %v8341
        %v8343 = vpop.f32.mrf.mxu0
        %8344 = vmatprep.mubr.f32.mxu0 0.0
        %8345 = vmatmul.mubr.f32.gmra.mxu0 %v8241
        %v8346 = vpop.f32.mrf.mxu0
        %v8347 = vadd.f32 %v8268, %v8346
        %v8348 = vpop.f32.mrf.mxu0
        %8349 = vmatprep.mubr.f32.mxu0 0.0
        %8350 = vmatmul.mubr.f32.gmra.mxu0 %v8242
        %v8351 = vpop.f32.mrf.mxu0
        %v8352 = vadd.f32 %v8268, %v8351
        %v8353 = vpop.f32.mrf.mxu0
        %8354 = vmatprep.mubr.f32.mxu0 0.0
        %8355 = vmatmul.mubr.f32.gmra.mxu0 %v8243
        %v8356 = vpop.f32.mrf.mxu0
        %v8357 = vadd.f32 %v8268, %v8356
        %v8358 = vpop.f32.mrf.mxu0
        %8359 = vmatprep.mubr.f32.mxu0 0.0
        %8360 = vmatmul.mubr.f32.gmra.mxu0 %v8244
        %v8361 = vpop.f32.mrf.mxu0
        %v8362 = vadd.f32 %v8268, %v8361
        %v8363 = vpop.f32.mrf.mxu0
        %8364 = vmatprep.mubr.f32.mxu0 0.0
        %8365 = vmatmul.mubr.f32.gmra.mxu0 %v8245
        %v8366 = vpop.f32.mrf.mxu0
        %v8367 = vadd.f32 %v8268, %v8366
        %v8368 = vpop.f32.mrf.mxu0
        %8369 = vmatprep.mubr.f32.mxu0 0.0
        %8370 = vmatmul.mubr.f32.gmra.mxu0 %v8246
        %v8371 = vpop.f32.mrf.mxu0
        %v8372 = vadd.f32 %v8268, %v8371
        %v8373 = vpop.f32.mrf.mxu0
        %8374 = vdwg.mxu0
        %v8375 = vstv %s7873
        %v8376 = vmul.f32 %v8375, %v7893
        %v8377 = vmul.f32 %v8375, %v7894
        %v8378 = vmul.f32 %v8375, %v7895
        %v8379 = vmul.f32 %v8375, %v7896
        %v8380 = vmul.f32 %v8375, %v7897
        %v8381 = vmul.f32 %v8375, %v7898
        %v8382 = vmul.f32 %v8375, %v7899
        %v8383 = vmul.f32 %v8375, %v7900
        %v8384 = vstv %s7874
        %v8385 = vmul.f32 %v8384, %v8337
        %v8386 = vmul.f32 %v8384, %v8342
        %v8387 = vmul.f32 %v8384, %v8347
        %v8388 = vmul.f32 %v8384, %v8352
        %v8389 = vmul.f32 %v8384, %v8357
        %v8390 = vmul.f32 %v8384, %v8362
        %v8391 = vmul.f32 %v8384, %v8367
        %v8392 = vmul.f32 %v8384, %v8372
        %v8393 = vadd.f32 %v8376, %v8385
        %v8394 = vadd.f32 %v8377, %v8386
        %v8395 = vadd.f32 %v8378, %v8387
        %v8396 = vadd.f32 %v8379, %v8388
        %v8397 = vadd.f32 %v8380, %v8389
        %v8398 = vadd.f32 %v8381, %v8390
        %v8399 = vadd.f32 %v8382, %v8391
        %v8400 = vadd.f32 %v8383, %v8392
        %8401 = vst.msk [vmem:[%s563] sm:$0xff] %vm587, %v8393
        %8402 = vst.msk [vmem:[%s563 + $0x8] sm:$0xff] %vm587, %v8394
        %8403 = vst.msk [vmem:[%s563 + $0x10] sm:$0xff] %vm587, %v8395
        %8404 = vst.msk [vmem:[%s563 + $0x18] sm:$0xff] %vm587, %v8396
        %8405 = vst.msk [vmem:[%s563 + $0x20] sm:$0xff] %vm587, %v8397
        %8406 = vst.msk [vmem:[%s563 + $0x28] sm:$0xff] %vm587, %v8398
        %8407 = vst.msk [vmem:[%s563 + $0x30] sm:$0xff] %vm587, %v8399
        %8408 = vst.msk [vmem:[%s563 + $0x38] sm:$0xff] %vm587, %v8400
        %s8409 = sld [smem:[#allocation2 + $0x4]]
        %s8410 = sld [smem:[#allocation2 + $0x5]]
        %s8411 = sld [smem:[#allocation2 + $0x6]]
        %s8412 = sld [smem:[#allocation2 + $0x7]]
        %v8413 = vstv %s8409
        %v8414 = vmul.f32 %v8413, %v577
        %v8415 = vmul.f32 %v8413, %v578
        %v8416 = vmul.f32 %v8413, %v579
        %v8417 = vmul.f32 %v8413, %v580
        %v8418 = vmul.f32 %v8413, %v581
        %v8419 = vmul.f32 %v8413, %v582
        %v8420 = vmul.f32 %v8413, %v583
        %v8421 = vmul.f32 %v8413, %v584
        %v8422 = vstv %s8410
        %v8423 = vmul.f32 %v8422, %v7863
        %v8424 = vmul.f32 %v8422, %v7864
        %v8425 = vmul.f32 %v8422, %v7865
        %v8426 = vmul.f32 %v8422, %v7866
        %v8427 = vmul.f32 %v8422, %v7867
        %v8428 = vmul.f32 %v8422, %v7868
        %v8429 = vmul.f32 %v8422, %v7869
        %v8430 = vmul.f32 %v8422, %v7870
        %v8431 = vadd.f32 %v8414, %v8423
        %v8432 = vadd.f32 %v8415, %v8424
        %v8433 = vadd.f32 %v8416, %v8425
        %v8434 = vadd.f32 %v8417, %v8426
        %v8435 = vadd.f32 %v8418, %v8427
        %v8436 = vadd.f32 %v8419, %v8428
        %v8437 = vadd.f32 %v8420, %v8429
        %v8438 = vadd.f32 %v8421, %v8430
        %v8439 = vld [vmem:[%s8] sm:$0x1]
        %v8440 = vld [vmem:[%s9] sm:$0x1]
        %v8441 = vsel %vm587, %v8431, 0.0
        %8442 = vadd.xlane.f32.xlu0 %v8441
        %v8443 = vpop.xlane.xlu0 %8442
        %v8444 = vsel %vm587, %v8432, 0.0
        %8445 = vadd.xlane.f32.xlu0 %v8444
        %v8446 = vpop.xlane.xlu0 %8445
        %v8447 = vsel %vm587, %v8433, 0.0
        %8448 = vadd.xlane.f32.xlu0 %v8447
        %v8449 = vpop.xlane.xlu0 %8448
        %v8450 = vsel %vm587, %v8434, 0.0
        %8451 = vadd.xlane.f32.xlu0 %v8450
        %v8452 = vpop.xlane.xlu0 %8451
        %v8453 = vsel %vm587, %v8435, 0.0
        %8454 = vadd.xlane.f32.xlu0 %v8453
        %v8455 = vpop.xlane.xlu0 %8454
        %v8456 = vsel %vm587, %v8436, 0.0
        %8457 = vadd.xlane.f32.xlu0 %v8456
        %v8458 = vpop.xlane.xlu0 %8457
        %v8459 = vsel %vm587, %v8437, 0.0
        %8460 = vadd.xlane.f32.xlu0 %v8459
        %v8461 = vpop.xlane.xlu0 %8460
        %v8462 = vsel %vm587, %v8438, 0.0
        %8463 = vadd.xlane.f32.xlu0 %v8462
        %v8464 = vpop.xlane.xlu0 %8463
        %v8465 = vmul.f32 %v8443, %v612
        %v8466 = vmul.f32 %v8446, %v612
        %v8467 = vmul.f32 %v8449, %v612
        %v8468 = vmul.f32 %v8452, %v612
        %v8469 = vmul.f32 %v8455, %v612
        %v8470 = vmul.f32 %v8458, %v612
        %v8471 = vmul.f32 %v8461, %v612
        %v8472 = vmul.f32 %v8464, %v612
        %v8473 = vsub.f32 %v8431, %v8465
        %v8474 = vsub.f32 %v8432, %v8466
        %v8475 = vsub.f32 %v8433, %v8467
        %v8476 = vsub.f32 %v8434, %v8468
        %v8477 = vsub.f32 %v8435, %v8469
        %v8478 = vsub.f32 %v8436, %v8470
        %v8479 = vsub.f32 %v8437, %v8471
        %v8480 = vsub.f32 %v8438, %v8472
        %v8481 = vmul.f32 %v8473, %v8473
        %v8482 = vmul.f32 %v8474, %v8474
        %v8483 = vmul.f32 %v8475, %v8475
        %v8484 = vmul.f32 %v8476, %v8476
        %v8485 = vmul.f32 %v8477, %v8477
        %v8486 = vmul.f32 %v8478, %v8478
        %v8487 = vmul.f32 %v8479, %v8479
        %v8488 = vmul.f32 %v8480, %v8480
        %v8489 = vsel %vm587, %v8481, 0.0
        %8490 = vadd.xlane.f32.xlu0 %v8489
        %v8491 = vpop.xlane.xlu0 %8490
        %v8492 = vsel %vm587, %v8482, 0.0
        %8493 = vadd.xlane.f32.xlu0 %v8492
        %v8494 = vpop.xlane.xlu0 %8493
        %v8495 = vsel %vm587, %v8483, 0.0
        %8496 = vadd.xlane.f32.xlu0 %v8495
        %v8497 = vpop.xlane.xlu0 %8496
        %v8498 = vsel %vm587, %v8484, 0.0
        %8499 = vadd.xlane.f32.xlu0 %v8498
        %v8500 = vpop.xlane.xlu0 %8499
        %v8501 = vsel %vm587, %v8485, 0.0
        %8502 = vadd.xlane.f32.xlu0 %v8501
        %v8503 = vpop.xlane.xlu0 %8502
        %v8504 = vsel %vm587, %v8486, 0.0
        %8505 = vadd.xlane.f32.xlu0 %v8504
        %v8506 = vpop.xlane.xlu0 %8505
        %v8507 = vsel %vm587, %v8487, 0.0
        %8508 = vadd.xlane.f32.xlu0 %v8507
        %v8509 = vpop.xlane.xlu0 %8508
        %v8510 = vsel %vm587, %v8488, 0.0
        %8511 = vadd.xlane.f32.xlu0 %v8510
        %v8512 = vpop.xlane.xlu0 %8511
        %v8513 = vmul.f32 %v8491, %v612
        %v8514 = vmul.f32 %v8494, %v612
        %v8515 = vmul.f32 %v8497, %v612
        %v8516 = vmul.f32 %v8500, %v612
        %v8517 = vmul.f32 %v8503, %v612
        %v8518 = vmul.f32 %v8506, %v612
        %v8519 = vmul.f32 %v8509, %v612
        %v8520 = vmul.f32 %v8512, %v612
        %v8521 = vadd.f32 %v8513, 1e-05
        %v8522 = vadd.f32 %v8514, 1e-05
        %v8523 = vadd.f32 %v8515, 1e-05
        %v8524 = vadd.f32 %v8516, 1e-05
        %v8525 = vadd.f32 %v8517, 1e-05
        %v8526 = vadd.f32 %v8518, 1e-05
        %v8527 = vadd.f32 %v8519, 1e-05
        %v8528 = vadd.f32 %v8520, 1e-05
        %v8529 = vrsqrt.pop %v8521
        %v8530 = vrsqrt.pop %v8522
        %v8531 = vrsqrt.pop %v8523
        %v8532 = vrsqrt.pop %v8524
        %v8533 = vrsqrt.pop %v8525
        %v8534 = vrsqrt.pop %v8526
        %v8535 = vrsqrt.pop %v8527
        %v8536 = vrsqrt.pop %v8528
        %v8537 = vmul.f32 %v8473, %v8529
        %v8538 = vmul.f32 %v8474, %v8530
        %v8539 = vmul.f32 %v8475, %v8531
        %v8540 = vmul.f32 %v8476, %v8532
        %v8541 = vmul.f32 %v8477, %v8533
        %v8542 = vmul.f32 %v8478, %v8534
        %v8543 = vmul.f32 %v8479, %v8535
        %v8544 = vmul.f32 %v8480, %v8536
        %v8546 = vlaneseq
        %v8547 = vshrl.u32 %v8546, 7
        %v8548 = vsub.s32 0, %v8547
        %v8549 = vrot.slane %v8439, %v8548
        %v8551 = vmul.f32 %v8537, %v8549
        %v8552 = vmul.f32 %v8538, %v8549
        %v8553 = vmul.f32 %v8539, %v8549
        %v8554 = vmul.f32 %v8540, %v8549
        %v8555 = vmul.f32 %v8541, %v8549
        %v8556 = vmul.f32 %v8542, %v8549
        %v8557 = vmul.f32 %v8543, %v8549
        %v8558 = vmul.f32 %v8544, %v8549
        %v8560 = vlaneseq
        %v8561 = vshrl.u32 %v8560, 7
        %v8562 = vsub.s32 0, %v8561
        %v8563 = vrot.slane %v8440, %v8562
        %v8565 = vadd.f32 %v8551, %v8563
        %v8566 = vadd.f32 %v8552, %v8563
        %v8567 = vadd.f32 %v8553, %v8563
        %v8568 = vadd.f32 %v8554, %v8563
        %v8569 = vadd.f32 %v8555, %v8563
        %v8570 = vadd.f32 %v8556, %v8563
        %v8571 = vadd.f32 %v8557, %v8563
        %v8572 = vadd.f32 %v8558, %v8563
        %s8573 = scalar_lea.vmem %s10, 32
        %v8574 = vld [vmem:[%s8573] sm:$0xff]
        %v8575 = vld [vmem:[%s8573 + $0x8] sm:$0xff]
        %v8576 = vld [vmem:[%s8573 + $0x10] sm:$0xff]
        %v8577 = vld [vmem:[%s8573 + $0x18] sm:$0xff]
        %s8578 = scalar_lea.vmem %s11, 1
        %v8579 = vld [vmem:[%s8578] sm:$0x1]
        %v8581 = vlaneseq
        %v8582 = vshrl.u32 %v8581, 7
        %v8583 = vsub.s32 0, %v8582
        %v8584 = vrot.slane %v8579, %v8583
        %v8587 = vsel %vm587, %v8565, 0
        %v8590 = vsel %vm587, %v8566, 0
        %v8593 = vsel %vm587, %v8567, 0
        %v8596 = vsel %vm587, %v8568, 0
        %v8599 = vsel %vm587, %v8569, 0
        %v8602 = vsel %vm587, %v8570, 0
        %v8605 = vsel %vm587, %v8571, 0
        %v8608 = vsel %vm587, %v8572, 0
        %8610 = vmatprep.subr.mxu0 0.0
        %8611 = vmatpush1.msra.mxu0 0.0
        %8612 = vmatprep.subr.mxu0 0.0
        %8613 = vmatpush1.msra.mxu0 0.0
        %8614 = vmatprep.subr.mxu0 0.0
        %8615 = vmatpush1.msra.mxu0 0.0
        %8616 = vmatprep.subr.mxu0 0.0
        %8617 = vmatpush1.msra.mxu0 0.0
        %8618 = vmatprep.subr.mxu0 0.0
        %8619 = vmatpush1.msra.mxu0 0.0
        %8620 = vmatprep.subr.mxu0 0.0
        %8621 = vmatpush1.msra.mxu0 0.0
        %8622 = vmatprep.subr.mxu0 0.0
        %8623 = vmatpush1.msra.mxu0 0.0
        %8624 = vmatprep.subr.mxu0 0.0
        %8625 = vmatpush1.msra.mxu0 0.0
        %8626 = vmatprep.subr.mxu0 0.0
        %8627 = vmatpush1.msra.mxu0 0.0
        %8628 = vmatprep.subr.mxu0 0.0
        %8629 = vmatpush1.msra.mxu0 0.0
        %8630 = vmatprep.subr.mxu0 0.0
        %8631 = vmatpush1.msra.mxu0 0.0
        %8632 = vmatprep.subr.mxu0 0.0
        %8633 = vmatpush1.msra.mxu0 0.0
        %8634 = vmatprep.subr.mxu0 0.0
        %8635 = vmatpush1.msra.mxu0 %v8577
        %8636 = vmatprep.subr.mxu0 0.0
        %8637 = vmatpush1.msra.mxu0 %v8576
        %8638 = vmatprep.subr.mxu0 0.0
        %8639 = vmatpush1.msra.mxu0 %v8575
        %8640 = vmatprep.subr.mxu0 0.0
        %8641 = vmatpush1.msra.mxu0 %v8574
        %8642 = vmatprep.subr.mxu0 0.0
        %8643 = vmatpush2.msra.mxu0 0.0
        %8644 = vmatprep.subr.mxu0 0.0
        %8645 = vmatpush2.msra.mxu0 0.0
        %8646 = vmatprep.subr.mxu0 0.0
        %8647 = vmatpush2.msra.mxu0 0.0
        %8648 = vmatprep.subr.mxu0 0.0
        %8649 = vmatpush2.msra.mxu0 0.0
        %8650 = vmatprep.subr.mxu0 0.0
        %8651 = vmatpush2.msra.mxu0 0.0
        %8652 = vmatprep.subr.mxu0 0.0
        %8653 = vmatpush2.msra.mxu0 0.0
        %8654 = vmatprep.subr.mxu0 0.0
        %8655 = vmatpush2.msra.mxu0 0.0
        %8656 = vmatprep.subr.mxu0 0.0
        %8657 = vmatpush2.msra.mxu0 0.0
        %8658 = vmatprep.subr.mxu0 0.0
        %8659 = vmatpush2.msra.mxu0 0.0
        %8660 = vmatprep.subr.mxu0 0.0
        %8661 = vmatpush2.msra.mxu0 0.0
        %8662 = vmatprep.subr.mxu0 0.0
        %8663 = vmatpush2.msra.mxu0 0.0
        %8664 = vmatprep.subr.mxu0 0.0
        %8665 = vmatpush2.msra.mxu0 0.0
        %8666 = vmatprep.subr.mxu0 0.0
        %8667 = vmatpush2.msra.mxu0 0.0
        %8668 = vmatprep.subr.mxu0 0.0
        %8669 = vmatpush2.msra.mxu0 0.0
        %8670 = vmatprep.subr.mxu0 0.0
        %8671 = vmatpush2.msra.mxu0 0.0
        %8672 = vmatprep.subr.mxu0 0.0
        %8673 = vmatpush2.msra.mxu0 0.0
        %8674 = vmatprep.mubr.f32.mxu0 0.0
        %8675 = vmatmul.mubr.f32.gmra.mxu0 %v8587
        %v8676 = vpop.f32.mrf.mxu0
        %v8677 = vadd.f32 %v8584, %v8676
        %v8678 = vpop.f32.mrf.mxu0
        %8679 = vmatprep.mubr.f32.mxu0 0.0
        %8680 = vmatmul.mubr.f32.gmra.mxu0 %v8590
        %v8681 = vpop.f32.mrf.mxu0
        %v8682 = vadd.f32 %v8584, %v8681
        %v8683 = vpop.f32.mrf.mxu0
        %8684 = vmatprep.mubr.f32.mxu0 0.0
        %8685 = vmatmul.mubr.f32.gmra.mxu0 %v8593
        %v8686 = vpop.f32.mrf.mxu0
        %v8687 = vadd.f32 %v8584, %v8686
        %v8688 = vpop.f32.mrf.mxu0
        %8689 = vmatprep.mubr.f32.mxu0 0.0
        %8690 = vmatmul.mubr.f32.gmra.mxu0 %v8596
        %v8691 = vpop.f32.mrf.mxu0
        %v8692 = vadd.f32 %v8584, %v8691
        %v8693 = vpop.f32.mrf.mxu0
        %8694 = vmatprep.mubr.f32.mxu0 0.0
        %8695 = vmatmul.mubr.f32.gmra.mxu0 %v8599
        %v8696 = vpop.f32.mrf.mxu0
        %v8697 = vadd.f32 %v8584, %v8696
        %v8698 = vpop.f32.mrf.mxu0
        %8699 = vmatprep.mubr.f32.mxu0 0.0
        %8700 = vmatmul.mubr.f32.gmra.mxu0 %v8602
        %v8701 = vpop.f32.mrf.mxu0
        %v8702 = vadd.f32 %v8584, %v8701
        %v8703 = vpop.f32.mrf.mxu0
        %8704 = vmatprep.mubr.f32.mxu0 0.0
        %8705 = vmatmul.mubr.f32.gmra.mxu0 %v8605
        %v8706 = vpop.f32.mrf.mxu0
        %v8707 = vadd.f32 %v8584, %v8706
        %v8708 = vpop.f32.mrf.mxu0
        %8709 = vmatprep.mubr.f32.mxu0 0.0
        %8710 = vmatmul.mubr.f32.gmra.mxu0 %v8608
        %v8711 = vpop.f32.mrf.mxu0
        %v8712 = vadd.f32 %v8584, %v8711
        %v8713 = vpop.f32.mrf.mxu0
        %8714 = vdwg.mxu0
        %v8715 = vmul.f32 %v8677, 0.5
        %v8716 = vmul.f32 %v8682, 0.5
        %v8717 = vmul.f32 %v8687, 0.5
        %v8718 = vmul.f32 %v8692, 0.5
        %v8719 = vmul.f32 %v8697, 0.5
        %v8720 = vmul.f32 %v8702, 0.5
        %v8721 = vmul.f32 %v8707, 0.5
        %v8722 = vmul.f32 %v8712, 0.5
        %v8723 = vmul.f32 %v8677, 0.044715
        %v8724 = vmul.f32 %v8682, 0.044715
        %v8725 = vmul.f32 %v8687, 0.044715
        %v8726 = vmul.f32 %v8692, 0.044715
        %v8727 = vmul.f32 %v8697, 0.044715
        %v8728 = vmul.f32 %v8702, 0.044715
        %v8729 = vmul.f32 %v8707, 0.044715
        %v8730 = vmul.f32 %v8712, 0.044715
        %v8731 = vmul.f32 %v8723, %v8677
        %v8732 = vmul.f32 %v8724, %v8682
        %v8733 = vmul.f32 %v8725, %v8687
        %v8734 = vmul.f32 %v8726, %v8692
        %v8735 = vmul.f32 %v8727, %v8697
        %v8736 = vmul.f32 %v8728, %v8702
        %v8737 = vmul.f32 %v8729, %v8707
        %v8738 = vmul.f32 %v8730, %v8712
        %v8739 = vmul.f32 %v8731, %v8677
        %v8740 = vmul.f32 %v8732, %v8682
        %v8741 = vmul.f32 %v8733, %v8687
        %v8742 = vmul.f32 %v8734, %v8692
        %v8743 = vmul.f32 %v8735, %v8697
        %v8744 = vmul.f32 %v8736, %v8702
        %v8745 = vmul.f32 %v8737, %v8707
        %v8746 = vmul.f32 %v8738, %v8712
        %v8747 = vadd.f32 %v8677, %v8739
        %v8748 = vadd.f32 %v8682, %v8740
        %v8749 = vadd.f32 %v8687, %v8741
        %v8750 = vadd.f32 %v8692, %v8742
        %v8751 = vadd.f32 %v8697, %v8743
        %v8752 = vadd.f32 %v8702, %v8744
        %v8753 = vadd.f32 %v8707, %v8745
        %v8754 = vadd.f32 %v8712, %v8746
        %v8755 = vmul.f32 %v8747, 0.7978846
        %v8756 = vmul.f32 %v8748, 0.7978846
        %v8757 = vmul.f32 %v8749, 0.7978846
        %v8758 = vmul.f32 %v8750, 0.7978846
        %v8759 = vmul.f32 %v8751, 0.7978846
        %v8760 = vmul.f32 %v8752, 0.7978846
        %v8761 = vmul.f32 %v8753, 0.7978846
        %v8762 = vmul.f32 %v8754, 0.7978846
        %v8763 = vtanh.pop %v8755
        %v8764 = vtanh.pop %v8756
        %v8765 = vtanh.pop %v8757
        %v8766 = vtanh.pop %v8758
        %v8767 = vtanh.pop %v8759
        %v8768 = vtanh.pop %v8760
        %v8769 = vtanh.pop %v8761
        %v8770 = vtanh.pop %v8762
        %v8771 = vadd.f32 %v8763, 1.0
        %v8772 = vadd.f32 %v8764, 1.0
        %v8773 = vadd.f32 %v8765, 1.0
        %v8774 = vadd.f32 %v8766, 1.0
        %v8775 = vadd.f32 %v8767, 1.0
        %v8776 = vadd.f32 %v8768, 1.0
        %v8777 = vadd.f32 %v8769, 1.0
        %v8778 = vadd.f32 %v8770, 1.0
        %v8779 = vmul.f32 %v8715, %v8771
        %v8780 = vmul.f32 %v8716, %v8772
        %v8781 = vmul.f32 %v8717, %v8773
        %v8782 = vmul.f32 %v8718, %v8774
        %v8783 = vmul.f32 %v8719, %v8775
        %v8784 = vmul.f32 %v8720, %v8776
        %v8785 = vmul.f32 %v8721, %v8777
        %v8786 = vmul.f32 %v8722, %v8778
        %s8787 = scalar_lea.vmem %s12, 128
        %v8788 = vld [vmem:[%s8787] sm:$0xff]
        %v8789 = vld [vmem:[%s8787 + $0x8] sm:$0xff]
        %v8790 = vld [vmem:[%s8787 + $0x10] sm:$0xff]
        %v8791 = vld [vmem:[%s8787 + $0x18] sm:$0xff]
        %v8792 = vld [vmem:[%s8787 + $0x20] sm:$0xff]
        %v8793 = vld [vmem:[%s8787 + $0x28] sm:$0xff]
        %v8794 = vld [vmem:[%s8787 + $0x30] sm:$0xff]
        %v8795 = vld [vmem:[%s8787 + $0x38] sm:$0xff]
        %v8796 = vld [vmem:[%s8787 + $0x40] sm:$0xff]
        %v8797 = vld [vmem:[%s8787 + $0x48] sm:$0xff]
        %v8798 = vld [vmem:[%s8787 + $0x50] sm:$0xff]
        %v8799 = vld [vmem:[%s8787 + $0x58] sm:$0xff]
        %v8800 = vld [vmem:[%s8787 + $0x60] sm:$0xff]
        %v8801 = vld [vmem:[%s8787 + $0x68] sm:$0xff]
        %v8802 = vld [vmem:[%s8787 + $0x70] sm:$0xff]
        %v8803 = vld [vmem:[%s8787 + $0x78] sm:$0xff]
        %s8804 = scalar_lea.vmem %s13, 1
        %v8805 = vld [vmem:[%s8804] sm:$0x1]
        %v8807 = vlaneseq
        %v8808 = vshrl.u32 %v8807, 7
        %v8809 = vsub.s32 0, %v8808
        %v8810 = vrot.slane %v8805, %v8809
        %8812 = vmatprep.subr.mxu0 0.0
        %8813 = vmatpush1.msra.mxu0 %v8803
        %8814 = vmatprep.subr.mxu0 0.0
        %8815 = vmatpush1.msra.mxu0 %v8802
        %8816 = vmatprep.subr.mxu0 0.0
        %8817 = vmatpush1.msra.mxu0 %v8801
        %8818 = vmatprep.subr.mxu0 0.0
        %8819 = vmatpush1.msra.mxu0 %v8800
        %8820 = vmatprep.subr.mxu0 0.0
        %8821 = vmatpush1.msra.mxu0 %v8799
        %8822 = vmatprep.subr.mxu0 0.0
        %8823 = vmatpush1.msra.mxu0 %v8798
        %8824 = vmatprep.subr.mxu0 0.0
        %8825 = vmatpush1.msra.mxu0 %v8797
        %8826 = vmatprep.subr.mxu0 0.0
        %8827 = vmatpush1.msra.mxu0 %v8796
        %8828 = vmatprep.subr.mxu0 0.0
        %8829 = vmatpush1.msra.mxu0 %v8795
        %8830 = vmatprep.subr.mxu0 0.0
        %8831 = vmatpush1.msra.mxu0 %v8794
        %8832 = vmatprep.subr.mxu0 0.0
        %8833 = vmatpush1.msra.mxu0 %v8793
        %8834 = vmatprep.subr.mxu0 0.0
        %8835 = vmatpush1.msra.mxu0 %v8792
        %8836 = vmatprep.subr.mxu0 0.0
        %8837 = vmatpush1.msra.mxu0 %v8791
        %8838 = vmatprep.subr.mxu0 0.0
        %8839 = vmatpush1.msra.mxu0 %v8790
        %8840 = vmatprep.subr.mxu0 0.0
        %8841 = vmatpush1.msra.mxu0 %v8789
        %8842 = vmatprep.subr.mxu0 0.0
        %8843 = vmatpush1.msra.mxu0 %v8788
        %8844 = vmatprep.subr.mxu0 0.0
        %8845 = vmatpush2.msra.mxu0 0.0
        %8846 = vmatprep.subr.mxu0 0.0
        %8847 = vmatpush2.msra.mxu0 0.0
        %8848 = vmatprep.subr.mxu0 0.0
        %8849 = vmatpush2.msra.mxu0 0.0
        %8850 = vmatprep.subr.mxu0 0.0
        %8851 = vmatpush2.msra.mxu0 0.0
        %8852 = vmatprep.subr.mxu0 0.0
        %8853 = vmatpush2.msra.mxu0 0.0
        %8854 = vmatprep.subr.mxu0 0.0
        %8855 = vmatpush2.msra.mxu0 0.0
        %8856 = vmatprep.subr.mxu0 0.0
        %8857 = vmatpush2.msra.mxu0 0.0
        %8858 = vmatprep.subr.mxu0 0.0
        %8859 = vmatpush2.msra.mxu0 0.0
        %8860 = vmatprep.subr.mxu0 0.0
        %8861 = vmatpush2.msra.mxu0 0.0
        %8862 = vmatprep.subr.mxu0 0.0
        %8863 = vmatpush2.msra.mxu0 0.0
        %8864 = vmatprep.subr.mxu0 0.0
        %8865 = vmatpush2.msra.mxu0 0.0
        %8866 = vmatprep.subr.mxu0 0.0
        %8867 = vmatpush2.msra.mxu0 0.0
        %8868 = vmatprep.subr.mxu0 0.0
        %8869 = vmatpush2.msra.mxu0 0.0
        %8870 = vmatprep.subr.mxu0 0.0
        %8871 = vmatpush2.msra.mxu0 0.0
        %8872 = vmatprep.subr.mxu0 0.0
        %8873 = vmatpush2.msra.mxu0 0.0
        %8874 = vmatprep.subr.mxu0 0.0
        %8875 = vmatpush2.msra.mxu0 0.0
        %8876 = vmatprep.mubr.f32.mxu0 0.0
        %8877 = vmatmul.mubr.f32.gmra.mxu0 %v8779
        %v8878 = vpop.f32.mrf.mxu0
        %v8879 = vadd.f32 %v8810, %v8878
        %v8880 = vpop.f32.mrf.mxu0
        %8881 = vmatprep.mubr.f32.mxu0 0.0
        %8882 = vmatmul.mubr.f32.gmra.mxu0 %v8780
        %v8883 = vpop.f32.mrf.mxu0
        %v8884 = vadd.f32 %v8810, %v8883
        %v8885 = vpop.f32.mrf.mxu0
        %8886 = vmatprep.mubr.f32.mxu0 0.0
        %8887 = vmatmul.mubr.f32.gmra.mxu0 %v8781
        %v8888 = vpop.f32.mrf.mxu0
        %v8889 = vadd.f32 %v8810, %v8888
        %v8890 = vpop.f32.mrf.mxu0
        %8891 = vmatprep.mubr.f32.mxu0 0.0
        %8892 = vmatmul.mubr.f32.gmra.mxu0 %v8782
        %v8893 = vpop.f32.mrf.mxu0
        %v8894 = vadd.f32 %v8810, %v8893
        %v8895 = vpop.f32.mrf.mxu0
        %8896 = vmatprep.mubr.f32.mxu0 0.0
        %8897 = vmatmul.mubr.f32.gmra.mxu0 %v8783
        %v8898 = vpop.f32.mrf.mxu0
        %v8899 = vadd.f32 %v8810, %v8898
        %v8900 = vpop.f32.mrf.mxu0
        %8901 = vmatprep.mubr.f32.mxu0 0.0
        %8902 = vmatmul.mubr.f32.gmra.mxu0 %v8784
        %v8903 = vpop.f32.mrf.mxu0
        %v8904 = vadd.f32 %v8810, %v8903
        %v8905 = vpop.f32.mrf.mxu0
        %8906 = vmatprep.mubr.f32.mxu0 0.0
        %8907 = vmatmul.mubr.f32.gmra.mxu0 %v8785
        %v8908 = vpop.f32.mrf.mxu0
        %v8909 = vadd.f32 %v8810, %v8908
        %v8910 = vpop.f32.mrf.mxu0
        %8911 = vmatprep.mubr.f32.mxu0 0.0
        %8912 = vmatmul.mubr.f32.gmra.mxu0 %v8786
        %v8913 = vpop.f32.mrf.mxu0
        %v8914 = vadd.f32 %v8810, %v8913
        %v8915 = vpop.f32.mrf.mxu0
        %8916 = vdwg.mxu0
        %v8917 = vstv %s8411
        %v8918 = vmul.f32 %v8917, %v8431
        %v8919 = vmul.f32 %v8917, %v8432
        %v8920 = vmul.f32 %v8917, %v8433
        %v8921 = vmul.f32 %v8917, %v8434
        %v8922 = vmul.f32 %v8917, %v8435
        %v8923 = vmul.f32 %v8917, %v8436
        %v8924 = vmul.f32 %v8917, %v8437
        %v8925 = vmul.f32 %v8917, %v8438
        %v8926 = vstv %s8412
        %v8927 = vmul.f32 %v8926, %v8879
        %v8928 = vmul.f32 %v8926, %v8884
        %v8929 = vmul.f32 %v8926, %v8889
        %v8930 = vmul.f32 %v8926, %v8894
        %v8931 = vmul.f32 %v8926, %v8899
        %v8932 = vmul.f32 %v8926, %v8904
        %v8933 = vmul.f32 %v8926, %v8909
        %v8934 = vmul.f32 %v8926, %v8914
        %v8935 = vadd.f32 %v8918, %v8927
        %v8936 = vadd.f32 %v8919, %v8928
        %v8937 = vadd.f32 %v8920, %v8929
        %v8938 = vadd.f32 %v8921, %v8930
        %v8939 = vadd.f32 %v8922, %v8931
        %v8940 = vadd.f32 %v8923, %v8932
        %v8941 = vadd.f32 %v8924, %v8933
        %v8942 = vadd.f32 %v8925, %v8934
        %8943 = vst.msk [vmem:[%s568] sm:$0xff] %vm587, %v8935
        %8944 = vst.msk [vmem:[%s568 + $0x8] sm:$0xff] %vm587, %v8936
        %8945 = vst.msk [vmem:[%s568 + $0x10] sm:$0xff] %vm587, %v8937
        %8946 = vst.msk [vmem:[%s568 + $0x18] sm:$0xff] %vm587, %v8938
        %8947 = vst.msk [vmem:[%s568 + $0x20] sm:$0xff] %vm587, %v8939
        %8948 = vst.msk [vmem:[%s568 + $0x28] sm:$0xff] %vm587, %v8940
        %8949 = vst.msk [vmem:[%s568 + $0x30] sm:$0xff] %vm587, %v8941
        %8950 = vst.msk [vmem:[%s568 + $0x38] sm:$0xff] %vm587, %v8942
        %p8951 = scmp.lt.s32.totalorder %s29, 1
        %s8952 = scalar_select %p8951, %s29, 1
        %s8953 = smul.addr %s8952, 8
        %s8954 = smul.addr %s8953, 8
        %s8955 = scalar_lea.vmem %s15, %s8954
        %p8956 = scmp.lt.s32.totalorder %s29, 1
        %s8957 = scalar_select %p8956, %s29, 1
        %s8958 = smul.addr %s8957, 8
        %s8959 = smul.addr %s8958, 8
        %s8960 = scalar_lea.vmem %s16, %s8959
        // Predicated region
        $region85: #{cross_transformer_block.1} parent=79 // pred_check
          %p8961 = pneg %p372
        $region86: #{cross_transformer_block.1} parent=79 // pred_check_branch
          %8963 = sbr.rel (%p8961) target = $region88
        $region87: #{cross_transformer_block.1} parent=79 // pred_region
          _
        $region88: #{cross_transformer_block.1} parent=79 // pred_fallthru
          _
        // Predicated region
        $region89: #{cross_transformer_block.1} parent=79 // pred_check
          %p8964 = pneg %p398
        $region90: #{cross_transformer_block.1} parent=79 // pred_check_branch
          %8966 = sbr.rel (%p8964) target = $region92
        $region91: #{cross_transformer_block.1} parent=79 // pred_region
          _
        $region92: #{cross_transformer_block.1} parent=79 // pred_fallthru
          _
      $region80: #{cross_transformer_block.1} parent=5 // pred_fallthru
        _
      %p8967 = scmp.le.s32.totalorder 2, %s24
      // Predicated region
      $region93: #{cross_transformer_block.1} parent=5 // pred_check
        %p8968 = pneg %p8967
      $region94: #{cross_transformer_block.1} parent=5 // pred_check_branch
        %8970 = sbr.rel (%p8968) target = $region96
      $region95: #{cross_transformer_block.1} parent=5 // pred_region
        %s8971 = ssub.s32 %s24, 2
        // Predicated region
        $region97: #{cross_transformer_block.1} parent=95 // pred_check
          %p8972 = pneg %p378
        $region98: #{cross_transformer_block.1} parent=95 // pred_check_branch
          %8974 = sbr.rel (%p8972) target = $region100
        $region99: #{cross_transformer_block.1} parent=95 // pred_region
          %p8975 = scmp.lt.s32.totalorder %s30, 1
          %s8976 = scalar_select %p8975, %s30, 1
          %s8977 = smul.addr %s8976, 8
          %s8978 = smul.addr %s8977, 8
          %s8979 = scalar_lea.vmem %s15, %s8978
        $region100: #{cross_transformer_block.1} parent=95 // pred_fallthru
          _
        // Predicated region
        $region101: #{cross_transformer_block.1} parent=95 // pred_check
          %p8980 = pneg %p404
        $region102: #{cross_transformer_block.1} parent=95 // pred_check_branch
          %8982 = sbr.rel (%p8980) target = $region104
        $region103: #{cross_transformer_block.1} parent=95 // pred_region
          %p8983 = scmp.lt.s32.totalorder %s30, 1
          %s8984 = scalar_select %p8983, %s30, 1
          %s8985 = smul.addr %s8984, 8
          %s8986 = smul.addr %s8985, 8
          %s8987 = scalar_lea.vmem %s16, %s8986
        $region104: #{cross_transformer_block.1} parent=95 // pred_fallthru
          _
      $region96: #{cross_transformer_block.1} parent=5 // pred_fallthru
        _
    $region6: #{cross_transformer_block.1} parent=1 // loop_footer
      %s28 = sadd.s32 1, %s24
    $region7: #{cross_transformer_block.1} parent=1 // loop_footer_branch
      %23 = sbr.rel target = $region3
    $region8: #{cross_transformer_block.1} parent=1 // loop_exit
      _
    %8988 = vsyncpa [#allocation3], 1
    %s8989 = scalar_lea.sflag [#allocation3], 1
    %8990 = vsyncpa %s8989, 1

</llo_original>
